<compile_context>
chip_gen: v6e
topology: v6e:2x2x1
jax: 0.10.0
libtpu: 0.0.40
codegen_flags: <defaults>
</compile_context>

<pallas_src>
import functools

import jax
import jax.numpy as jnp
from jax.experimental import pallas as pl
from jax.experimental.pallas import tpu as pltpu


# ----------------------------------------------------------------------------
# Fused InceptionB kernel (one grid step == one image)
# ----------------------------------------------------------------------------
def _inception_b_kernel(x_ref, mask_ref, wred_ref, bred_ref, w23_ref, b23_ref,
                        w32_ref, b32_ref, o_ref, t3g_ref, *, H, W):
    Hp1, Wp1 = H + 2, W + 2          # frame = image + 1-pixel zero pad ring
    Rp1 = Hp1 * Wp1                  # frame rows (flattened)
    g = ((Wp1 + 1 + 7) // 8) * 8     # 8-aligned guard rows (>= Wp1 + 1)
    Rg = Rp1 + 2 * g                 # guarded rows
    s0 = g - Wp1 - 1                 # tap base offset

    # Zero the persistent t3-frame scratch ONCE (hoisted out of the per-image
    # loop).  Interior rows [g, g+Rp1) are fully rewritten (masked) every grid
    # step, so stale data cannot leak into kept output pixels.  On megacore the
    # second core never executes program_id 0, but its guard rows only feed
    # output rows the wrapper crops away.
    @pl.when(pl.program_id(0) == 0)
    def _():
        t3g_ref[...] = jnp.zeros_like(t3g_ref)

    xg = x_ref[0]                    # (Rg, 72) bf16, zero at pad/guard rows
    mask_g = mask_ref[...]           # (Rg, 1) f32, 1.0 only at image pixels
    mask_int = mask_g[g:g + Rp1, :]  # (Rp1, 1)

    # ---- fused 1x1 stage:  [out1 | r2 | r3 | y4]  in one K=72 -> 64 matmul ----
    z = jnp.dot(xg, wred_ref[...], preferred_element_type=jnp.float32)
    z = z + bred_ref[...]                                   # (Rg, 64) f32
    zr = jnp.maximum(z, 0.0)

    out1 = zr[g:g + Rp1, 0:16]                               # (Rp1, 16)
    # r2|r3 slab (branch-2 / branch-3 reduces): zero outside the image (conv
    # zero padding) and cast to bf16 BEFORE building patches.
    r23 = (zr[:, 16:48] * mask_g).astype(jnp.bfloat16)       # (Rg, 32) bf16
    # y4 = pool-proj 1x1 with bias, NO relu and NO mask: at pad/guard rows
    # y4 == bias, so the 9-tap sum contributes 9*b and the /9 restores exactly
    # one +b -- this is AvgPool2d(count_include_pad=True) followed by the 1x1.
    # (Invariant breaks if count_include_pad changes or if y4 is ever masked.)
    y4 = z[:, 48:64]                                          # (Rg, 16) f32

    def taps(arr):
        return [arr[s0 + kh * Wp1 + kw: s0 + kh * Wp1 + kw + Rp1, :]
                for kh in range(3) for kw in range(3)]

    # ---- branch 4: separable 3x3 box filter on y4 (4 adds, 6 slices) ----
    h4 = y4[0:Rg - 2, :] + y4[1:Rg - 1, :] + y4[2:Rg, :]      # horizontal 3-tap
    acc4 = (h4[s0:s0 + Rp1, :]
            + h4[s0 + Wp1:s0 + Wp1 + Rp1, :]
            + h4[s0 + 2 * Wp1:s0 + 2 * Wp1 + Rp1, :])          # vertical 3-tap
    out4 = jnp.maximum(acc4 * (1.0 / 9.0), 0.0)               # (Rp1, 16)

    # ---- branch-2 3x3 + branch-3 first 3x3: ONE block-diagonal matmul ----
    # bf16 patches of the 32-channel r2|r3 slab; K = 288, N = 64.
    p23 = jnp.concatenate(taps(r23), axis=1)                  # (Rp1, 288) bf16
    y23 = jnp.maximum(
        jnp.dot(p23, w23_ref[...], preferred_element_type=jnp.float32)
        + b23_ref[...], 0.0)                                   # (Rp1, 64)
    out2 = y23[:, 0:32]
    t3 = y23[:, 32:64]

    # ---- branch-3 second 3x3: masked bf16 store into the guarded t3 frame ----
    # (mask keeps the pad-ring rows inside [g, g+Rp1) zero every step)
    t3g_ref[g:g + Rp1, :] = (t3 * mask_int).astype(jnp.bfloat16)
    t3g = t3g_ref[...]                                        # (Rg, 32) bf16
    p32 = jnp.concatenate(taps(t3g), axis=1)                  # (Rp1, 288) bf16
    out3 = jnp.maximum(
        jnp.dot(p32, w32_ref[...], preferred_element_type=jnp.float32)
        + b32_ref[...], 0.0)                                   # (Rp1, 32)

    # ---- direct lane-slice stores (no in-register concat), bf16 output ----
    o_ref[0, :, 0:16] = out1.astype(jnp.bfloat16)
    o_ref[0, :, 16:48] = out2.astype(jnp.bfloat16)
    o_ref[0, :, 48:80] = out3.astype(jnp.bfloat16)
    o_ref[0, :, 80:96] = out4.astype(jnp.bfloat16)


# ----------------------------------------------------------------------------
# Parameter construction (deterministic, BN folded in eval mode)
# ----------------------------------------------------------------------------
def im2col_3x3(x_nhwc):
    """Zero-pad by 1 and gather 3x3 patches -> (N*H*W, 9*C), (kh,kw) outer, C inner."""
    N, H, W, C = x_nhwc.shape
    xp = jnp.pad(x_nhwc, ((0, 0), (1, 1), (1, 1), (0, 0)))
    patches = [xp[:, kh:kh + H, kw:kw + W, :] for kh in range(3) for kw in range(3)]
    return jnp.concatenate(patches, axis=-1).reshape(N * H * W, 9 * C)


def conv_init(key, cout, cin, kh, kw):
    k1, k2 = jax.random.split(key)
    w = jax.random.normal(k1, (cout, cin, kh, kw), jnp.float32) * 0.1
    b = jax.random.normal(k2, (cout,), jnp.float32) * 0.1
    return w, b


def bn_init(key, c):
    k1, k2, k3, k4 = jax.random.split(key, 4)
    gamma = 1.0 + 0.1 * jax.random.normal(k1, (c,), jnp.float32)
    beta = 0.1 * jax.random.normal(k2, (c,), jnp.float32)
    mean = 0.1 * jax.random.normal(k3, (c,), jnp.float32)
    var = 0.9 + 0.1 * jnp.abs(jax.random.normal(k4, (c,), jnp.float32))
    return gamma, beta, mean, var


def fold_conv_bn(w, b, bn, eps=1e-5):
    """Fold eval-mode BatchNorm into conv weight/bias.

    w: (Cout, Cin, KH, KW) -> matmul weight (KH*KW*Cin, Cout), rows ordered
    (kh, kw, cin) to match the kernel's in-VMEM patch layout.
    """
    gamma, beta, mean, var = bn
    scale = gamma / jnp.sqrt(var + eps)
    cout = w.shape[0]
    w_mat = jnp.transpose(w, (2, 3, 1, 0)).reshape(-1, cout) * scale[None, :]
    b_f = (b - mean) * scale + beta
    return w_mat, b_f


def make_inception_b_params(key):
    keys = jax.random.split(key, 16)
    p = {}
    p["b1"] = fold_conv_bn(*conv_init(keys[0], 16, 72, 1, 1), bn_init(keys[1], 16))
    p["b2_reduce"] = fold_conv_bn(*conv_init(keys[2], 16, 72, 1, 1), bn_init(keys[3], 16))
    p["b2_3x3"] = fold_conv_bn(*conv_init(keys[4], 32, 16, 3, 3), bn_init(keys[5], 32))
    p["b3_reduce"] = fold_conv_bn(*conv_init(keys[6], 16, 72, 1, 1), bn_init(keys[7], 16))
    p["b3_3x3_1"] = fold_conv_bn(*conv_init(keys[8], 32, 16, 3, 3), bn_init(keys[9], 32))
    p["b3_3x3_2"] = fold_conv_bn(*conv_init(keys[10], 32, 32, 3, 3), bn_init(keys[11], 32))
    p["b4_proj"] = fold_conv_bn(*conv_init(keys[12], 16, 72, 1, 1), bn_init(keys[13], 16))
    return p


# ----------------------------------------------------------------------------
# Forward wrapper
# ----------------------------------------------------------------------------
def inception_b_forward(x_nchw, params):
    N, C, H, W = x_nchw.shape
    assert C == 72
    Hp1, Wp1 = H + 2, W + 2
    Rp1 = Hp1 * Wp1
    g = ((Wp1 + 1 + 7) // 8) * 8
    Rg = Rp1 + 2 * g

    # NHWC, 1-pixel zero pad ring, flatten frame, add zero guard rows, bf16.
    x = jnp.transpose(x_nchw, (0, 2, 3, 1))
    xp = jnp.pad(x, ((0, 0), (1, 1), (1, 1), (0, 0)))
    xg = jnp.pad(xp.reshape(N, Rp1, C),
                 ((0, 0), (g, g), (0, 0))).astype(jnp.bfloat16)

    mask2 = jnp.zeros((Hp1, Wp1), jnp.float32).at[1:H + 1, 1:W + 1].set(1.0)
    mask_g = jnp.pad(mask2.reshape(Rp1, 1), ((g, g), (0, 0)))

    # fused 1x1 weights: [branch1 | branch2-reduce | branch3-reduce | pool-proj]
    w1, b1 = params["b1"]
    w2r, b2r = params["b2_reduce"]
    w3r, b3r = params["b3_reduce"]
    w4p, b4p = params["b4_proj"]
    w_red = jnp.concatenate([w1, w2r, w3r, w4p], axis=1).astype(jnp.bfloat16)
    b_red = jnp.concatenate([b1, b2r, b3r, b4p]).reshape(1, 64)

    # Block-diagonal fusion of branch-2 3x3 and branch-3 first 3x3:
    # per-tap block diag(w2_tap (16x32), w31_tap (16x32)) stacked -> (288, 64).
    w2, b2 = params["b2_3x3"]
    w31, b31 = params["b3_3x3_1"]
    w2t = w2.reshape(9, 16, 32)
    w31t = w31.reshape(9, 16, 32)
    zero = jnp.zeros((9, 16, 32), jnp.float32)
    top = jnp.concatenate([w2t, zero], axis=2)      # (9, 16, 64)  [w2 | 0]
    bot = jnp.concatenate([zero, w31t], axis=2)     # (9, 16, 64)  [0 | w31]
    w23 = jnp.concatenate([top, bot], axis=1).reshape(288, 64).astype(jnp.bfloat16)
    b23 = jnp.concatenate([b2, b31]).reshape(1, 64)

    w32, b32 = params["b3_3x3_2"]
    w32 = w32.astype(jnp.bfloat16)
    b32 = b32.reshape(1, 32)

    kernel = functools.partial(_inception_b_kernel, H=H, W=W)
    out_frame = pl.pallas_call(
        kernel,
        out_shape=jax.ShapeDtypeStruct((N, Rp1, 96), jnp.bfloat16),
        grid_spec=pltpu.PrefetchScalarGridSpec(
            num_scalar_prefetch=0,
            grid=(N,),
            in_specs=[
                pl.BlockSpec((1, Rg, C), lambda n: (n, 0, 0)),   # xg
                pl.BlockSpec((Rg, 1), lambda n: (0, 0)),         # mask
                pl.BlockSpec((C, 64), lambda n: (0, 0)),         # fused 1x1 W
                pl.BlockSpec((1, 64), lambda n: (0, 0)),         # fused 1x1 b
                pl.BlockSpec((288, 64), lambda n: (0, 0)),       # block-diag 3x3 W
                pl.BlockSpec((1, 64), lambda n: (0, 0)),
                pl.BlockSpec((288, 32), lambda n: (0, 0)),       # branch3 3x3 #2 W
                pl.BlockSpec((1, 32), lambda n: (0, 0)),
            ],
            out_specs=pl.BlockSpec((1, Rp1, 96), lambda n: (n, 0, 0)),
            scratch_shapes=[pltpu.VMEM((Rg, 32), jnp.bfloat16)],  # guarded t3 frame
        ),
        compiler_params=pltpu.CompilerParams(
            dimension_semantics=("parallel",),
            vmem_limit_bytes=32 * 1024 * 1024),
    )(xg, mask_g, w_red, b_red, w23, b23, w32, b32)

    # crop the pad ring, back to f32 NCHW (fused by XLA into one pass)
    out = out_frame.reshape(N, Hp1, Wp1, 96)[:, 1:H + 1, 1:W + 1, :]
    return jnp.transpose(out.astype(jnp.float32), (0, 3, 1, 2))


# ----------------------------------------------------------------------------
# Pure-JAX reference (f32) for a sanity check
# ----------------------------------------------------------------------------
def _ref_forward(x_nchw, params):
    x = jnp.transpose(x_nchw, (0, 2, 3, 1)).astype(jnp.float32)
    N, H, W, C = x.shape

    def mm_relu(xf, w, b):
        return jnp.maximum(xf @ w + b[None, :], 0.0)

    xf = x.reshape(-1, C)
    o1 = mm_relu(xf, *params["b1"])
    r2 = mm_relu(xf, *params["b2_reduce"])
    o2 = mm_relu(im2col_3x3(r2.reshape(N, H, W, 16)), *params["b2_3x3"])
    r3 = mm_relu(xf, *params["b3_reduce"])
    t3 = mm_relu(im2col_3x3(r3.reshape(N, H, W, 16)), *params["b3_3x3_1"])
    o3 = mm_relu(im2col_3x3(t3.reshape(N, H, W, 32)), *params["b3_3x3_2"])
    pooled = im2col_3x3(x).reshape(-1, 9, C).mean(axis=1)   # count_include_pad
    o4 = mm_relu(pooled, *params["b4_proj"])
    out = jnp.concatenate([o1, o2, o3, o4], axis=-1).reshape(N, H, W, 96)
    return jnp.transpose(out, (0, 3, 1, 2))


if __name__ == "__main__":
    key = jax.random.PRNGKey(0)
    kx, kp = jax.random.split(key)

    # channel count 72 is fixed by the module; small deterministic input
    x = jax.random.normal(kx, (2, 72, 16, 16), jnp.float32)  # NCHW
    params = make_inception_b_params(kp)

    fwd = jax.jit(functools.partial(inception_b_forward, params=params))
    out = jax.block_until_ready(fwd(x))
    assert out.shape == (2, 96, 16, 16), out.shape

    ref = _ref_forward(x, params)
    assert jnp.allclose(out, ref, rtol=5e-2, atol=5e-2), \
        float(jnp.max(jnp.abs(out - ref)))

    print("KERNEL_OK")
</pallas_src>

<mosaic_0001>
module attributes {stable_mosaic.version = 11 : i64} {
  func.func @_inception_b_kernel(%arg0: i32, %arg1: memref<1x372x72xbf16, #tpu.memory_space<vmem>>, %arg2: memref<372x1xf32, #tpu.memory_space<vmem>>, %arg3: memref<72x64xbf16, #tpu.memory_space<vmem>>, %arg4: memref<1x64xf32, #tpu.memory_space<vmem>>, %arg5: memref<288x64xbf16, #tpu.memory_space<vmem>>, %arg6: memref<1x64xf32, #tpu.memory_space<vmem>>, %arg7: memref<288x32xbf16, #tpu.memory_space<vmem>>, %arg8: memref<1x32xf32, #tpu.memory_space<vmem>>, %arg9: memref<1x324x96xbf16, #tpu.memory_space<vmem>>, %arg10: memref<372x32xbf16, #tpu.memory_space<vmem>>) attributes {dimension_semantics = [#tpu.dimension_semantics<parallel>], iteration_bounds = array<i64: 2>, scalar_prefetch = 0 : i64, scratch_operands = 1 : i64, tpu.core_type = #tpu.core_type<tc>, window_params = [{transform_indices = @transform_0, window_bounds = array<i64: 1, 372, 72>}, {pipeline_mode = #tpu.pipeline_mode<synchronous>, transform_indices = @transform_1, window_bounds = array<i64: 372, 1>}, {pipeline_mode = #tpu.pipeline_mode<synchronous>, transform_indices = @transform_2, window_bounds = array<i64: 72, 64>}, {pipeline_mode = #tpu.pipeline_mode<synchronous>, transform_indices = @transform_3, window_bounds = array<i64: 1, 64>}, {pipeline_mode = #tpu.pipeline_mode<synchronous>, transform_indices = @transform_4, window_bounds = array<i64: 288, 64>}, {pipeline_mode = #tpu.pipeline_mode<synchronous>, transform_indices = @transform_5, window_bounds = array<i64: 1, 64>}, {pipeline_mode = #tpu.pipeline_mode<synchronous>, transform_indices = @transform_6, window_bounds = array<i64: 288, 32>}, {pipeline_mode = #tpu.pipeline_mode<synchronous>, transform_indices = @transform_7, window_bounds = array<i64: 1, 32>}, {transform_indices = @transform_8, window_bounds = array<i64: 1, 324, 96>}]} {
    %c0_i32 = arith.constant 0 : i32
    %0 = arith.cmpi eq, %arg0, %c0_i32 : i32
    %1 = arith.extui %0 : i1 to i32
    %c0_i32_0 = arith.constant 0 : i32
    %2 = arith.cmpi ne, %1, %c0_i32_0 : i32
    scf.if %2 {
      %cst_36 = arith.constant 0.000000e+00 : bf16
      %91 = vector.broadcast %cst_36 : bf16 to vector<372x32xbf16>
      %c0_37 = arith.constant 0 : index
      %c0_38 = arith.constant 0 : index
      %92 = vector.load %arg10[%c0_37, %c0_38] : memref<372x32xbf16, #tpu.memory_space<vmem>>, vector<372x32xbf16>
      tpu.vector_store %arg10[%c0_37, %c0_38], %91 {strides = array<i32>} : memref<372x32xbf16, #tpu.memory_space<vmem>>, vector<372x32xbf16>,
    } else {
    }
    %c0 = arith.constant 0 : index
    %c0_1 = arith.constant 0 : index
    %c0_2 = arith.constant 0 : index
    %3 = vector.load %arg1[%c0, %c0_1, %c0_2] : memref<1x372x72xbf16, #tpu.memory_space<vmem>>, vector<1x372x72xbf16>
    %4 = vector.shape_cast %3 : vector<1x372x72xbf16> to vector<372x72xbf16>
    %c0_3 = arith.constant 0 : index
    %c0_4 = arith.constant 0 : index
    %5 = vector.load %arg2[%c0_3, %c0_4] : memref<372x1xf32, #tpu.memory_space<vmem>>, vector<372x1xf32>
    %6 = vector.extract_strided_slice %5 {offsets = [24, 0], sizes = [324, 1], strides = [1, 1]} : vector<372x1xf32> to vector<324x1xf32>
    %c0_5 = arith.constant 0 : index
    %c0_6 = arith.constant 0 : index
    %7 = vector.load %arg3[%c0_5, %c0_6] : memref<72x64xbf16, #tpu.memory_space<vmem>>, vector<72x64xbf16>
    %cst = arith.constant dense<0.000000e+00> : vector<372x64xf32>
    %8 = tpu.matmul %4, %7, %cst {dimension_numbers = #tpu.dot_dimension_numbers<[1], [0], [0], [1], [0, 0, 1, 1], [], []>} : vector<372x72xbf16>, vector<72x64xbf16>, vector<372x64xf32> -> vector<372x64xf32>
    %c0_7 = arith.constant 0 : index
    %c0_8 = arith.constant 0 : index
    %9 = vector.load %arg4[%c0_7, %c0_8] : memref<1x64xf32, #tpu.memory_space<vmem>>, vector<1x64xf32>
    %10 = vector.broadcast %9 : vector<1x64xf32> to vector<372x64xf32>
    %11 = arith.addf %8, %10 : vector<372x64xf32>
    %cst_9 = arith.constant 0.000000e+00 : f32
    %12 = vector.broadcast %cst_9 : f32 to vector<372x64xf32>
    %13 = arith.maximumf %11, %12 : vector<372x64xf32>
    %14 = vector.extract_strided_slice %13 {offsets = [24, 0], sizes = [324, 16], strides = [1, 1]} : vector<372x64xf32> to vector<324x16xf32>
    %15 = vector.extract_strided_slice %13 {offsets = [0, 16], sizes = [372, 32], strides = [1, 1]} : vector<372x64xf32> to vector<372x32xf32>
    %16 = vector.broadcast %5 : vector<372x1xf32> to vector<372x32xf32>
    %17 = arith.mulf %15, %16 : vector<372x32xf32>
    %18 = arith.truncf %17 : vector<372x32xf32> to vector<372x32xbf16>
    %19 = vector.extract_strided_slice %11 {offsets = [0, 48], sizes = [372, 16], strides = [1, 1]} : vector<372x64xf32> to vector<372x16xf32>
    %20 = vector.extract_strided_slice %19 {offsets = [0, 0], sizes = [370, 16], strides = [1, 1]} : vector<372x16xf32> to vector<370x16xf32>
    %21 = vector.extract_strided_slice %19 {offsets = [1, 0], sizes = [370, 16], strides = [1, 1]} : vector<372x16xf32> to vector<370x16xf32>
    %22 = arith.addf %20, %21 : vector<370x16xf32>
    %23 = vector.extract_strided_slice %19 {offsets = [2, 0], sizes = [370, 16], strides = [1, 1]} : vector<372x16xf32> to vector<370x16xf32>
    %24 = arith.addf %22, %23 : vector<370x16xf32>
    %25 = vector.extract_strided_slice %24 {offsets = [5, 0], sizes = [324, 16], strides = [1, 1]} : vector<370x16xf32> to vector<324x16xf32>
    %26 = vector.extract_strided_slice %24 {offsets = [23, 0], sizes = [324, 16], strides = [1, 1]} : vector<370x16xf32> to vector<324x16xf32>
    %27 = arith.addf %25, %26 : vector<324x16xf32>
    %28 = vector.extract_strided_slice %24 {offsets = [41, 0], sizes = [324, 16], strides = [1, 1]} : vector<370x16xf32> to vector<324x16xf32>
    %29 = arith.addf %27, %28 : vector<324x16xf32>
    %cst_10 = arith.constant 0.111111112 : f32
    %30 = vector.broadcast %cst_10 : f32 to vector<324x16xf32>
    %31 = arith.mulf %29, %30 : vector<324x16xf32>
    %cst_11 = arith.constant 0.000000e+00 : f32
    %32 = vector.broadcast %cst_11 : f32 to vector<324x16xf32>
    %33 = arith.maximumf %31, %32 : vector<324x16xf32>
    %34 = vector.extract_strided_slice %18 {offsets = [5, 0], sizes = [324, 32], strides = [1, 1]} : vector<372x32xbf16> to vector<324x32xbf16>
    %35 = vector.extract_strided_slice %18 {offsets = [6, 0], sizes = [324, 32], strides = [1, 1]} : vector<372x32xbf16> to vector<324x32xbf16>
    %36 = vector.extract_strided_slice %18 {offsets = [7, 0], sizes = [324, 32], strides = [1, 1]} : vector<372x32xbf16> to vector<324x32xbf16>
    %37 = vector.extract_strided_slice %18 {offsets = [23, 0], sizes = [324, 32], strides = [1, 1]} : vector<372x32xbf16> to vector<324x32xbf16>
    %38 = vector.extract_strided_slice %18 {offsets = [24, 0], sizes = [324, 32], strides = [1, 1]} : vector<372x32xbf16> to vector<324x32xbf16>
    %39 = vector.extract_strided_slice %18 {offsets = [25, 0], sizes = [324, 32], strides = [1, 1]} : vector<372x32xbf16> to vector<324x32xbf16>
    %40 = vector.extract_strided_slice %18 {offsets = [41, 0], sizes = [324, 32], strides = [1, 1]} : vector<372x32xbf16> to vector<324x32xbf16>
    %41 = vector.extract_strided_slice %18 {offsets = [42, 0], sizes = [324, 32], strides = [1, 1]} : vector<372x32xbf16> to vector<324x32xbf16>
    %42 = vector.extract_strided_slice %18 {offsets = [43, 0], sizes = [324, 32], strides = [1, 1]} : vector<372x32xbf16> to vector<324x32xbf16>
    %43 = tpu.concatenate %34, %35, %36, %37, %38, %39, %40, %41, %42 in 1 : vector<324x32xbf16>, vector<324x32xbf16>, vector<324x32xbf16>, vector<324x32xbf16>, vector<324x32xbf16>, vector<324x32xbf16>, vector<324x32xbf16>, vector<324x32xbf16>, vector<324x32xbf16> -> vector<324x288xbf16>
    %c0_12 = arith.constant 0 : index
    %c0_13 = arith.constant 0 : index
    %44 = vector.load %arg5[%c0_12, %c0_13] : memref<288x64xbf16, #tpu.memory_space<vmem>>, vector<288x64xbf16>
    %cst_14 = arith.constant dense<0.000000e+00> : vector<324x64xf32>
    %45 = tpu.matmul %43, %44, %cst_14 {dimension_numbers = #tpu.dot_dimension_numbers<[1], [0], [0], [1], [0, 0, 1, 1], [], []>} : vector<324x288xbf16>, vector<288x64xbf16>, vector<324x64xf32> -> vector<324x64xf32>
    %c0_15 = arith.constant 0 : index
    %c0_16 = arith.constant 0 : index
    %46 = vector.load %arg6[%c0_15, %c0_16] : memref<1x64xf32, #tpu.memory_space<vmem>>, vector<1x64xf32>
    %47 = vector.broadcast %46 : vector<1x64xf32> to vector<324x64xf32>
    %48 = arith.addf %45, %47 : vector<324x64xf32>
    %cst_17 = arith.constant 0.000000e+00 : f32
    %49 = vector.broadcast %cst_17 : f32 to vector<324x64xf32>
    %50 = arith.maximumf %48, %49 : vector<324x64xf32>
    %51 = vector.extract_strided_slice %50 {offsets = [0, 0], sizes = [324, 32], strides = [1, 1]} : vector<324x64xf32> to vector<324x32xf32>
    %52 = vector.extract_strided_slice %50 {offsets = [0, 32], sizes = [324, 32], strides = [1, 1]} : vector<324x64xf32> to vector<324x32xf32>
    %53 = vector.broadcast %6 : vector<324x1xf32> to vector<324x32xf32>
    %54 = arith.mulf %52, %53 : vector<324x32xf32>
    %55 = arith.truncf %54 : vector<324x32xf32> to vector<324x32xbf16>
    %c24 = arith.constant 24 : index
    %c0_18 = arith.constant 0 : index
    %56 = vector.load %arg10[%c24, %c0_18] : memref<372x32xbf16, #tpu.memory_space<vmem>>, vector<324x32xbf16>
    tpu.vector_store %arg10[%c24, %c0_18], %55 {strides = array<i32>} : memref<372x32xbf16, #tpu.memory_space<vmem>>, vector<324x32xbf16>,
    %c0_19 = arith.constant 0 : index
    %c0_20 = arith.constant 0 : index
    %57 = vector.load %arg10[%c0_19, %c0_20] : memref<372x32xbf16, #tpu.memory_space<vmem>>, vector<372x32xbf16>
    %58 = vector.extract_strided_slice %57 {offsets = [5, 0], sizes = [324, 32], strides = [1, 1]} : vector<372x32xbf16> to vector<324x32xbf16>
    %59 = vector.extract_strided_slice %57 {offsets = [6, 0], sizes = [324, 32], strides = [1, 1]} : vector<372x32xbf16> to vector<324x32xbf16>
    %60 = vector.extract_strided_slice %57 {offsets = [7, 0], sizes = [324, 32], strides = [1, 1]} : vector<372x32xbf16> to vector<324x32xbf16>
    %61 = vector.extract_strided_slice %57 {offsets = [23, 0], sizes = [324, 32], strides = [1, 1]} : vector<372x32xbf16> to vector<324x32xbf16>
    %62 = vector.extract_strided_slice %57 {offsets = [24, 0], sizes = [324, 32], strides = [1, 1]} : vector<372x32xbf16> to vector<324x32xbf16>
    %63 = vector.extract_strided_slice %57 {offsets = [25, 0], sizes = [324, 32], strides = [1, 1]} : vector<372x32xbf16> to vector<324x32xbf16>
    %64 = vector.extract_strided_slice %57 {offsets = [41, 0], sizes = [324, 32], strides = [1, 1]} : vector<372x32xbf16> to vector<324x32xbf16>
    %65 = vector.extract_strided_slice %57 {offsets = [42, 0], sizes = [324, 32], strides = [1, 1]} : vector<372x32xbf16> to vector<324x32xbf16>
    %66 = vector.extract_strided_slice %57 {offsets = [43, 0], sizes = [324, 32], strides = [1, 1]} : vector<372x32xbf16> to vector<324x32xbf16>
    %67 = tpu.concatenate %58, %59, %60, %61, %62, %63, %64, %65, %66 in 1 : vector<324x32xbf16>, vector<324x32xbf16>, vector<324x32xbf16>, vector<324x32xbf16>, vector<324x32xbf16>, vector<324x32xbf16>, vector<324x32xbf16>, vector<324x32xbf16>, vector<324x32xbf16> -> vector<324x288xbf16>
    %c0_21 = arith.constant 0 : index
    %c0_22 = arith.constant 0 : index
    %68 = vector.load %arg7[%c0_21, %c0_22] : memref<288x32xbf16, #tpu.memory_space<vmem>>, vector<288x32xbf16>
    %cst_23 = arith.constant dense<0.000000e+00> : vector<324x32xf32>
    %69 = tpu.matmul %67, %68, %cst_23 {dimension_numbers = #tpu.dot_dimension_numbers<[1], [0], [0], [1], [0, 0, 1, 1], [], []>} : vector<324x288xbf16>, vector<288x32xbf16>, vector<324x32xf32> -> vector<324x32xf32>
    %c0_24 = arith.constant 0 : index
    %c0_25 = arith.constant 0 : index
    %70 = vector.load %arg8[%c0_24, %c0_25] : memref<1x32xf32, #tpu.memory_space<vmem>>, vector<1x32xf32>
    %71 = vector.broadcast %70 : vector<1x32xf32> to vector<324x32xf32>
    %72 = arith.addf %69, %71 : vector<324x32xf32>
    %cst_26 = arith.constant 0.000000e+00 : f32
    %73 = vector.broadcast %cst_26 : f32 to vector<324x32xf32>
    %74 = arith.maximumf %72, %73 : vector<324x32xf32>
    %75 = arith.truncf %14 : vector<324x16xf32> to vector<324x16xbf16>
    %c0_27 = arith.constant 0 : index
    %c0_28 = arith.constant 0 : index
    %c0_29 = arith.constant 0 : index
    %76 = vector.load %arg9[%c0_27, %c0_28, %c0_29] : memref<1x324x96xbf16, #tpu.memory_space<vmem>>, vector<1x324x16xbf16>
    %77 = vector.shape_cast %76 : vector<1x324x16xbf16> to vector<324x16xbf16>
    %78 = vector.shape_cast %75 : vector<324x16xbf16> to vector<1x324x16xbf16>
    tpu.vector_store %arg9[%c0_27, %c0_28, %c0_29], %78 {strides = array<i32>} : memref<1x324x96xbf16, #tpu.memory_space<vmem>>, vector<1x324x16xbf16>,
    %79 = arith.truncf %51 : vector<324x32xf32> to vector<324x32xbf16>
    %c0_30 = arith.constant 0 : index
    %c0_31 = arith.constant 0 : index
    %c16 = arith.constant 16 : index
    %80 = vector.load %arg9[%c0_30, %c0_31, %c16] : memref<1x324x96xbf16, #tpu.memory_space<vmem>>, vector<1x324x32xbf16>
    %81 = vector.shape_cast %80 : vector<1x324x32xbf16> to vector<324x32xbf16>
    %82 = vector.shape_cast %79 : vector<324x32xbf16> to vector<1x324x32xbf16>
    tpu.vector_store %arg9[%c0_30, %c0_31, %c16], %82 {strides = array<i32>} : memref<1x324x96xbf16, #tpu.memory_space<vmem>>, vector<1x324x32xbf16>,
    %83 = arith.truncf %74 : vector<324x32xf32> to vector<324x32xbf16>
    %c0_32 = arith.constant 0 : index
    %c0_33 = arith.constant 0 : index
    %c48 = arith.constant 48 : index
    %84 = vector.load %arg9[%c0_32, %c0_33, %c48] : memref<1x324x96xbf16, #tpu.memory_space<vmem>>, vector<1x324x32xbf16>
    %85 = vector.shape_cast %84 : vector<1x324x32xbf16> to vector<324x32xbf16>
    %86 = vector.shape_cast %83 : vector<324x32xbf16> to vector<1x324x32xbf16>
    tpu.vector_store %arg9[%c0_32, %c0_33, %c48], %86 {strides = array<i32>} : memref<1x324x96xbf16, #tpu.memory_space<vmem>>, vector<1x324x32xbf16>,
    %87 = arith.truncf %33 : vector<324x16xf32> to vector<324x16xbf16>
    %c0_34 = arith.constant 0 : index
    %c0_35 = arith.constant 0 : index
    %c80 = arith.constant 80 : index
    %88 = vector.load %arg9[%c0_34, %c0_35, %c80] : memref<1x324x96xbf16, #tpu.memory_space<vmem>>, vector<1x324x16xbf16>
    %89 = vector.shape_cast %88 : vector<1x324x16xbf16> to vector<324x16xbf16>
    %90 = vector.shape_cast %87 : vector<324x16xbf16> to vector<1x324x16xbf16>
    tpu.vector_store %arg9[%c0_34, %c0_35, %c80], %90 {strides = array<i32>} : memref<1x324x96xbf16, #tpu.memory_space<vmem>>, vector<1x324x16xbf16>,
    return
  }
  func.func @transform_0(%arg0: i32) -> (i32, i32, i32) {
    %c0_i32 = arith.constant 0 : i32
    %c0_i32_0 = arith.constant 0 : i32
    %c0_i32_1 = arith.constant 0 : i32
    return %arg0, %c0_i32, %c0_i32_0 : i32, i32, i32
  }
  func.func @transform_1(%arg0: i32) -> (i32, i32) {
    %c0_i32 = arith.constant 0 : i32
    %c0_i32_0 = arith.constant 0 : i32
    %c0_i32_1 = arith.constant 0 : i32
    return %c0_i32, %c0_i32_0 : i32, i32
  }
  func.func @transform_2(%arg0: i32) -> (i32, i32) {
    %c0_i32 = arith.constant 0 : i32
    %c0_i32_0 = arith.constant 0 : i32
    %c0_i32_1 = arith.constant 0 : i32
    return %c0_i32, %c0_i32_0 : i32, i32
  }
  func.func @transform_3(%arg0: i32) -> (i32, i32) {
    %c0_i32 = arith.constant 0 : i32
    %c0_i32_0 = arith.constant 0 : i32
    %c0_i32_1 = arith.constant 0 : i32
    return %c0_i32, %c0_i32_0 : i32, i32
  }
  func.func @transform_4(%arg0: i32) -> (i32, i32) {
    %c0_i32 = arith.constant 0 : i32
    %c0_i32_0 = arith.constant 0 : i32
    %c0_i32_1 = arith.constant 0 : i32
    return %c0_i32, %c0_i32_0 : i32, i32
  }
  func.func @transform_5(%arg0: i32) -> (i32, i32) {
    %c0_i32 = arith.constant 0 : i32
    %c0_i32_0 = arith.constant 0 : i32
    %c0_i32_1 = arith.constant 0 : i32
    return %c0_i32, %c0_i32_0 : i32, i32
  }
  func.func @transform_6(%arg0: i32) -> (i32, i32) {
    %c0_i32 = arith.constant 0 : i32
    %c0_i32_0 = arith.constant 0 : i32
    %c0_i32_1 = arith.constant 0 : i32
    return %c0_i32, %c0_i32_0 : i32, i32
  }
  func.func @transform_7(%arg0: i32) -> (i32, i32) {
    %c0_i32 = arith.constant 0 : i32
    %c0_i32_0 = arith.constant 0 : i32
    %c0_i32_1 = arith.constant 0 : i32
    return %c0_i32, %c0_i32_0 : i32, i32
  }
  func.func @transform_8(%arg0: i32) -> (i32, i32, i32) {
    %c0_i32 = arith.constant 0 : i32
    %c0_i32_0 = arith.constant 0 : i32
    %c0_i32_1 = arith.constant 0 : i32
    return %arg0, %c0_i32, %c0_i32_0 : i32, i32, i32
  }
}

</mosaic_0001>

<llo_original>
// kernel: inception_b_forward.1
$region0: #{inception_b_forward.1}
  #allocation0 [shape = 'u32[]', space=smem, size = 0x4, offset = 0x4, fixed_abs, tag = 'smem constant byte address 0x4 - core index']
  #allocation1 [shape = 'u32[144,128]{1,0:T(1,128)}', space=vmem, size = 0x12000, scoped, tag = 'internal scratch']
  #allocation2 [shape = 'bf16[372,32]{1,0:T(8,128)(2,1)}', space=vmem, size = 0x17800, scoped, tag = 'scratch operand']
  %s0 = inlined_call_operand.vmem [shape: bf16[2,372,72], index: 0, kind: input, shape index: {}]
  %s1 = inlined_call_operand.vmem [shape: f32[372,1], index: 1, kind: input, shape index: {}]
  %s2 = inlined_call_operand.vmem [shape: bf16[72,64], index: 2, kind: input, shape index: {}]
  %s3 = inlined_call_operand.vmem [shape: f32[1,64], index: 3, kind: input, shape index: {}]
  %s4 = inlined_call_operand.vmem [shape: bf16[288,64], index: 4, kind: input, shape index: {}]
  %s5 = inlined_call_operand.vmem [shape: f32[1,64], index: 5, kind: input, shape index: {}]
  %s6 = inlined_call_operand.vmem [shape: bf16[288,32], index: 6, kind: input, shape index: {}]
  %s7 = inlined_call_operand.vmem [shape: f32[1,32], index: 7, kind: input, shape index: {}]
  %s8 = inlined_call_operand.vmem [shape: bf16[2,324,96], index: 8, kind: output, shape index: {}]
  %s9 = sld [smem:[#allocation0]]
  $region69: #{inception_b_forward.1} parent=0
    _
  %s11 = ssub.s32 1, %s9
  %s12 = scalar_select 0, %s11, %s9
  loop: start=0, step=1, limit=4
  $region2: #{inception_b_forward.1} parent=0 // loop_pre_header
    _
  $region3: #{inception_b_forward.1} parent=0 // loop_header
    %s14 = sphi 0, %s18
    %p15 = scmp.ge.s32.totalorder %s14, 4
    %s24 = sphi 0, %s26
    %s27 = sphi 0, %s24
    %s28 = sphi 0, %s27
    %s44 = sphi 0, %s28
    %s48 = sphi 0, %s48
    %s50 = sphi 0, %s48
    %s51 = sphi 0, %s50
    %s65 = sphi 0, %s51
    %s69 = sphi 0, %s69
    %s71 = sphi 0, %s69
    %s72 = sphi 0, %s71
    %s86 = sphi 0, %s72
    %s90 = sphi 0, %s90
    %s92 = sphi 0, %s90
    %s93 = sphi 0, %s92
    %s107 = sphi 0, %s93
    %s111 = sphi 0, %s111
    %s113 = sphi 0, %s111
    %s114 = sphi 0, %s113
    %s128 = sphi 0, %s114
    %s132 = sphi 0, %s132
    %s134 = sphi 0, %s132
    %s135 = sphi 0, %s134
    %s149 = sphi 0, %s135
    %s153 = sphi 0, %s153
    %s155 = sphi 0, %s153
    %s156 = sphi 0, %s155
    %s170 = sphi 0, %s156
    %s174 = sphi 0, %s174
    %s176 = sphi 0, %s174
    %s177 = sphi 0, %s176
    %s191 = sphi 0, %s177
    %s197 = sphi 0, %s199
    %s200 = sphi 0, %s197
    %s201 = sphi 0, %s200
    %s217 = sphi 0, %s201
  $region4: #{inception_b_forward.1} parent=0 // loop_header_branch
    %17 = sbr.rel (%p15) target = $region8
  $region5: #{inception_b_forward.1} parent=0 // loop_body
    %s19 = ssub.s32 %s14, 1
    %s20 = ssub.s32 %s14, 2
    %s21 = sadd.s32 %s14, 1
    %s22 = ssub.s32 %s14, %s21
    %p23 = scmp.eq.s32.totalorder %s22, 0
    %s25 = sadd.s32 %s24, 1
    %s26 = scalar_select %p23, %s24, %s25
    %p29 = pneg %p23
    %p30 = scmp.eq.s32.totalorder %s14, 1
    %p31 = por %p29, %p30
    %p32 = scmp.ne.s32.totalorder %s24, %s27
    %p33 = scmp.eq.s32.totalorder %s14, 0
    %p34 = por %p32, %p33
    %p35 = scmp.ne.s32.totalorder %s24, %s27
    %p36 = scmp.eq.s32.totalorder %s19, 1
    %p37 = por %p35, %p36
    %p38 = scmp.ne.s32.totalorder %s27, %s28
    %p39 = scmp.eq.s32.totalorder %s19, 0
    %p40 = por %p38, %p39
    %p41 = scmp.ne.s32.totalorder %s27, %s28
    %p42 = scmp.eq.s32.totalorder %s20, 1
    %p43 = por %p41, %p42
    %p45 = scmp.ne.s32.totalorder %s28, %s44
    %p46 = scmp.eq.s32.totalorder %s20, 0
    %p47 = por %p45, %p46
    %s49 = sadd.s32 %s48, 1
    %p52 = scmp.eq.s32.totalorder %s14, 1
    %p53 = scmp.ne.s32.totalorder %s48, %s50
    %p54 = scmp.eq.s32.totalorder %s14, 0
    %p55 = por %p53, %p54
    %p56 = scmp.ne.s32.totalorder %s48, %s50
    %p57 = scmp.eq.s32.totalorder %s19, 1
    %p58 = por %p56, %p57
    %p59 = scmp.ne.s32.totalorder %s50, %s51
    %p60 = scmp.eq.s32.totalorder %s19, 0
    %p61 = por %p59, %p60
    %p62 = scmp.ne.s32.totalorder %s50, %s51
    %p63 = scmp.eq.s32.totalorder %s20, 1
    %p64 = por %p62, %p63
    %p66 = scmp.ne.s32.totalorder %s51, %s65
    %p67 = scmp.eq.s32.totalorder %s20, 0
    %p68 = por %p66, %p67
    %s70 = sadd.s32 %s69, 1
    %p73 = scmp.eq.s32.totalorder %s14, 1
    %p74 = scmp.ne.s32.totalorder %s69, %s71
    %p75 = scmp.eq.s32.totalorder %s14, 0
    %p76 = por %p74, %p75
    %p77 = scmp.ne.s32.totalorder %s69, %s71
    %p78 = scmp.eq.s32.totalorder %s19, 1
    %p79 = por %p77, %p78
    %p80 = scmp.ne.s32.totalorder %s71, %s72
    %p81 = scmp.eq.s32.totalorder %s19, 0
    %p82 = por %p80, %p81
    %p83 = scmp.ne.s32.totalorder %s71, %s72
    %p84 = scmp.eq.s32.totalorder %s20, 1
    %p85 = por %p83, %p84
    %p87 = scmp.ne.s32.totalorder %s72, %s86
    %p88 = scmp.eq.s32.totalorder %s20, 0
    %p89 = por %p87, %p88
    %s91 = sadd.s32 %s90, 1
    %p94 = scmp.eq.s32.totalorder %s14, 1
    %p95 = scmp.ne.s32.totalorder %s90, %s92
    %p96 = scmp.eq.s32.totalorder %s14, 0
    %p97 = por %p95, %p96
    %p98 = scmp.ne.s32.totalorder %s90, %s92
    %p99 = scmp.eq.s32.totalorder %s19, 1
    %p100 = por %p98, %p99
    %p101 = scmp.ne.s32.totalorder %s92, %s93
    %p102 = scmp.eq.s32.totalorder %s19, 0
    %p103 = por %p101, %p102
    %p104 = scmp.ne.s32.totalorder %s92, %s93
    %p105 = scmp.eq.s32.totalorder %s20, 1
    %p106 = por %p104, %p105
    %p108 = scmp.ne.s32.totalorder %s93, %s107
    %p109 = scmp.eq.s32.totalorder %s20, 0
    %p110 = por %p108, %p109
    %s112 = sadd.s32 %s111, 1
    %p115 = scmp.eq.s32.totalorder %s14, 1
    %p116 = scmp.ne.s32.totalorder %s111, %s113
    %p117 = scmp.eq.s32.totalorder %s14, 0
    %p118 = por %p116, %p117
    %p119 = scmp.ne.s32.totalorder %s111, %s113
    %p120 = scmp.eq.s32.totalorder %s19, 1
    %p121 = por %p119, %p120
    %p122 = scmp.ne.s32.totalorder %s113, %s114
    %p123 = scmp.eq.s32.totalorder %s19, 0
    %p124 = por %p122, %p123
    %p125 = scmp.ne.s32.totalorder %s113, %s114
    %p126 = scmp.eq.s32.totalorder %s20, 1
    %p127 = por %p125, %p126
    %p129 = scmp.ne.s32.totalorder %s114, %s128
    %p130 = scmp.eq.s32.totalorder %s20, 0
    %p131 = por %p129, %p130
    %s133 = sadd.s32 %s132, 1
    %p136 = scmp.eq.s32.totalorder %s14, 1
    %p137 = scmp.ne.s32.totalorder %s132, %s134
    %p138 = scmp.eq.s32.totalorder %s14, 0
    %p139 = por %p137, %p138
    %p140 = scmp.ne.s32.totalorder %s132, %s134
    %p141 = scmp.eq.s32.totalorder %s19, 1
    %p142 = por %p140, %p141
    %p143 = scmp.ne.s32.totalorder %s134, %s135
    %p144 = scmp.eq.s32.totalorder %s19, 0
    %p145 = por %p143, %p144
    %p146 = scmp.ne.s32.totalorder %s134, %s135
    %p147 = scmp.eq.s32.totalorder %s20, 1
    %p148 = por %p146, %p147
    %p150 = scmp.ne.s32.totalorder %s135, %s149
    %p151 = scmp.eq.s32.totalorder %s20, 0
    %p152 = por %p150, %p151
    %s154 = sadd.s32 %s153, 1
    %p157 = scmp.eq.s32.totalorder %s14, 1
    %p158 = scmp.ne.s32.totalorder %s153, %s155
    %p159 = scmp.eq.s32.totalorder %s14, 0
    %p160 = por %p158, %p159
    %p161 = scmp.ne.s32.totalorder %s153, %s155
    %p162 = scmp.eq.s32.totalorder %s19, 1
    %p163 = por %p161, %p162
    %p164 = scmp.ne.s32.totalorder %s155, %s156
    %p165 = scmp.eq.s32.totalorder %s19, 0
    %p166 = por %p164, %p165
    %p167 = scmp.ne.s32.totalorder %s155, %s156
    %p168 = scmp.eq.s32.totalorder %s20, 1
    %p169 = por %p167, %p168
    %p171 = scmp.ne.s32.totalorder %s156, %s170
    %p172 = scmp.eq.s32.totalorder %s20, 0
    %p173 = por %p171, %p172
    %s175 = sadd.s32 %s174, 1
    %p178 = scmp.eq.s32.totalorder %s14, 1
    %p179 = scmp.ne.s32.totalorder %s174, %s176
    %p180 = scmp.eq.s32.totalorder %s14, 0
    %p181 = por %p179, %p180
    %p182 = scmp.ne.s32.totalorder %s174, %s176
    %p183 = scmp.eq.s32.totalorder %s19, 1
    %p184 = por %p182, %p183
    %p185 = scmp.ne.s32.totalorder %s176, %s177
    %p186 = scmp.eq.s32.totalorder %s19, 0
    %p187 = por %p185, %p186
    %p188 = scmp.ne.s32.totalorder %s176, %s177
    %p189 = scmp.eq.s32.totalorder %s20, 1
    %p190 = por %p188, %p189
    %p192 = scmp.ne.s32.totalorder %s177, %s191
    %p193 = scmp.eq.s32.totalorder %s20, 0
    %p194 = por %p192, %p193
    %s195 = ssub.s32 %s14, %s21
    %p196 = scmp.eq.s32.totalorder %s195, 0
    %s198 = sadd.s32 %s197, 1
    %s199 = scalar_select %p196, %s197, %s198
    %p202 = pneg %p196
    %p203 = scmp.eq.s32.totalorder %s14, 1
    %p204 = por %p202, %p203
    %p205 = scmp.ne.s32.totalorder %s197, %s200
    %p206 = scmp.eq.s32.totalorder %s14, 0
    %p207 = por %p205, %p206
    %p208 = scmp.ne.s32.totalorder %s197, %s200
    %p209 = scmp.eq.s32.totalorder %s19, 1
    %p210 = por %p208, %p209
    %p211 = scmp.ne.s32.totalorder %s200, %s201
    %p212 = scmp.eq.s32.totalorder %s19, 0
    %p213 = por %p211, %p212
    %p214 = scmp.ne.s32.totalorder %s200, %s201
    %p215 = scmp.eq.s32.totalorder %s20, 1
    %p216 = por %p214, %p215
    %p218 = scmp.ne.s32.totalorder %s201, %s217
    %p219 = scmp.eq.s32.totalorder %s20, 0
    %p220 = por %p218, %p219
    %p221 = scmp.le.s32.totalorder 1, %s14
    %p222 = scmp.lt.s32.totalorder %s14, 3
    %p223 = pnand %p221, %p222
    %p224 = pneg %p223
    // Predicated region
    $region9: #{inception_b_forward.1} parent=5 // pred_check
      _
    $region10: #{inception_b_forward.1} parent=5 // pred_check_branch
      %226 = sbr.rel (%p223) target = $region12
    $region11: #{inception_b_forward.1} parent=5 // pred_region
      %s227 = ssub.s32 %s14, 1
      // Predicated region
      $region13: #{inception_b_forward.1} parent=11 // pred_check
        %p228 = pneg %p61
      $region14: #{inception_b_forward.1} parent=11 // pred_check_branch
        %230 = sbr.rel (%p228) target = $region16
      $region15: #{inception_b_forward.1} parent=11 // pred_region
        _
      $region16: #{inception_b_forward.1} parent=11 // pred_fallthru
        _
      // Predicated region
      $region17: #{inception_b_forward.1} parent=11 // pred_check
        %p231 = pneg %p82
      $region18: #{inception_b_forward.1} parent=11 // pred_check_branch
        %233 = sbr.rel (%p231) target = $region20
      $region19: #{inception_b_forward.1} parent=11 // pred_region
        _
      $region20: #{inception_b_forward.1} parent=11 // pred_fallthru
        _
      // Predicated region
      $region21: #{inception_b_forward.1} parent=11 // pred_check
        %p234 = pneg %p103
      $region22: #{inception_b_forward.1} parent=11 // pred_check_branch
        %236 = sbr.rel (%p234) target = $region24
      $region23: #{inception_b_forward.1} parent=11 // pred_region
        _
      $region24: #{inception_b_forward.1} parent=11 // pred_fallthru
        _
      // Predicated region
      $region25: #{inception_b_forward.1} parent=11 // pred_check
        %p237 = pneg %p124
      $region26: #{inception_b_forward.1} parent=11 // pred_check_branch
        %239 = sbr.rel (%p237) target = $region28
      $region27: #{inception_b_forward.1} parent=11 // pred_region
        _
      $region28: #{inception_b_forward.1} parent=11 // pred_fallthru
        _
      // Predicated region
      $region29: #{inception_b_forward.1} parent=11 // pred_check
        %p240 = pneg %p145
      $region30: #{inception_b_forward.1} parent=11 // pred_check_branch
        %242 = sbr.rel (%p240) target = $region32
      $region31: #{inception_b_forward.1} parent=11 // pred_region
        _
      $region32: #{inception_b_forward.1} parent=11 // pred_fallthru
        _
      // Predicated region
      $region33: #{inception_b_forward.1} parent=11 // pred_check
        %p243 = pneg %p166
      $region34: #{inception_b_forward.1} parent=11 // pred_check_branch
        %245 = sbr.rel (%p243) target = $region36
      $region35: #{inception_b_forward.1} parent=11 // pred_region
        _
      $region36: #{inception_b_forward.1} parent=11 // pred_fallthru
        _
      // Predicated region
      $region37: #{inception_b_forward.1} parent=11 // pred_check
        %p246 = pneg %p187
      $region38: #{inception_b_forward.1} parent=11 // pred_check_branch
        %248 = sbr.rel (%p246) target = $region40
      $region39: #{inception_b_forward.1} parent=11 // pred_region
        _
      $region40: #{inception_b_forward.1} parent=11 // pred_fallthru
        _
    $region12: #{inception_b_forward.1} parent=5 // pred_fallthru
      _
    %p249 = scmp.lt.s32.totalorder %s14, 2
    // Predicated region
    $region41: #{inception_b_forward.1} parent=5 // pred_check
      %p250 = pneg %p249
    $region42: #{inception_b_forward.1} parent=5 // pred_check_branch
      %252 = sbr.rel (%p250) target = $region44
    $region43: #{inception_b_forward.1} parent=5 // pred_region
      // Predicated region
      $region45: #{inception_b_forward.1} parent=43 // pred_check
        %p253 = pneg %p34
      $region46: #{inception_b_forward.1} parent=43 // pred_check_branch
        %255 = sbr.rel (%p253) target = $region48
      $region47: #{inception_b_forward.1} parent=43 // pred_region
        %p256 = scmp.lt.s32.totalorder %s14, 1
        %s257 = scalar_select %p256, %s14, 1
        %s258 = smul.addr %s257, 47
        %s259 = smul.addr %s258, 4
        %s260 = scalar_lea.vmem %s0, %s259
      $region48: #{inception_b_forward.1} parent=43 // pred_fallthru
        _
    $region44: #{inception_b_forward.1} parent=5 // pred_fallthru
      _
    %p261 = scmp.le.s32.totalorder 1, %s14
    %p262 = scmp.lt.s32.totalorder %s14, 3
    %p263 = pnand %p261, %p262
    %p264 = pneg %p263
    // Predicated region
    $region49: #{inception_b_forward.1} parent=5 // pred_check
      _
    $region50: #{inception_b_forward.1} parent=5 // pred_check_branch
      %266 = sbr.rel (%p263) target = $region52
    $region51: #{inception_b_forward.1} parent=5 // pred_region
      %s267 = ssub.s32 %s14, 1
      %p268 = scmp.lt.s32.totalorder %s19, 1
      %s269 = scalar_select %p268, %s19, 1
      %s270 = smul.addr %s269, 47
      %s271 = smul.addr %s270, 4
      %s272 = scalar_lea.vmem %s0, %s271
      %p273 = pneg %p40
      %p274 = pneg %p37
      %p275 = pneg %p61
      %p276 = pneg %p58
      %p277 = pneg %p82
      %p278 = pneg %p79
      %p279 = pneg %p103
      %p280 = pneg %p100
      %p281 = pneg %p124
      %p282 = pneg %p121
      %p283 = pneg %p145
      %p284 = pneg %p142
      %p285 = pneg %p166
      %p286 = pneg %p163
      %p287 = pneg %p187
      %p288 = pneg %p184
      %p289 = pneg %p213
      %p290 = pneg %p210
      %p291 = scmp.lt.s32.totalorder %s19, 1
      %s292 = scalar_select %p291, %s19, 1
      %s293 = smul.addr %s292, 41
      %s294 = smul.addr %s293, 4
      %s295 = scalar_lea.vmem %s8, %s294
      %p296 = scmp.lt.s32.totalorder %s19, 1
      %s297 = scalar_select %p296, %s19, 1
      %s298 = smul.addr %s297, 47
      %s299 = smul.addr %s298, 4
      %s300 = scalar_lea.vmem %s0, %s299
      %p301 = scmp.lt.s32.totalorder %s19, 1
      %s302 = scalar_select %p301, %s19, 1
      %s303 = smul.addr %s302, 41
      %s304 = smul.addr %s303, 4
      %s305 = scalar_lea.vmem %s8, %s304
      %p307 = scmp.eq.s32.totalorder %s19, 0
      // Predicated region
      $region53: #{inception_b_forward.1} parent=51 // pred_check
        %p308 = pneg %p307
      $region54: #{inception_b_forward.1} parent=51 // pred_check_branch
        %310 = sbr.rel (%p308) target = $region56
      $region55: #{inception_b_forward.1} parent=51 // pred_region
        %vm311 = vcmask 257024
        %312 = vst.msk [vmem:[#allocation2] sm:$0xf] %vm311, 0
        %313 = vst.msk [vmem:[#allocation2 + $0x4] sm:$0xf] %vm311, 0
        %314 = vst.msk [vmem:[#allocation2 + $0x8] sm:$0xf] %vm311, 0
        %315 = vst.msk [vmem:[#allocation2 + $0xc] sm:$0xf] %vm311, 0
        %316 = vst.msk [vmem:[#allocation2 + $0x10] sm:$0xf] %vm311, 0
        %317 = vst.msk [vmem:[#allocation2 + $0x14] sm:$0xf] %vm311, 0
        %318 = vst.msk [vmem:[#allocation2 + $0x18] sm:$0xf] %vm311, 0
        %319 = vst.msk [vmem:[#allocation2 + $0x1c] sm:$0xf] %vm311, 0
        %320 = vst.msk [vmem:[#allocation2 + $0x20] sm:$0xf] %vm311, 0
        %321 = vst.msk [vmem:[#allocation2 + $0x24] sm:$0xf] %vm311, 0
        %322 = vst.msk [vmem:[#allocation2 + $0x28] sm:$0xf] %vm311, 0
        %323 = vst.msk [vmem:[#allocation2 + $0x2c] sm:$0xf] %vm311, 0
        %324 = vst.msk [vmem:[#allocation2 + $0x30] sm:$0xf] %vm311, 0
        %325 = vst.msk [vmem:[#allocation2 + $0x34] sm:$0xf] %vm311, 0
        %326 = vst.msk [vmem:[#allocation2 + $0x38] sm:$0xf] %vm311, 0
        %327 = vst.msk [vmem:[#allocation2 + $0x3c] sm:$0xf] %vm311, 0
        %328 = vst.msk [vmem:[#allocation2 + $0x40] sm:$0xf] %vm311, 0
        %329 = vst.msk [vmem:[#allocation2 + $0x44] sm:$0xf] %vm311, 0
        %330 = vst.msk [vmem:[#allocation2 + $0x48] sm:$0xf] %vm311, 0
        %331 = vst.msk [vmem:[#allocation2 + $0x4c] sm:$0xf] %vm311, 0
        %332 = vst.msk [vmem:[#allocation2 + $0x50] sm:$0xf] %vm311, 0
        %333 = vst.msk [vmem:[#allocation2 + $0x54] sm:$0xf] %vm311, 0
        %334 = vst.msk [vmem:[#allocation2 + $0x58] sm:$0xf] %vm311, 0
        %335 = vst.msk [vmem:[#allocation2 + $0x5c] sm:$0xf] %vm311, 0
        %336 = vst.msk [vmem:[#allocation2 + $0x60] sm:$0xf] %vm311, 0
        %337 = vst.msk [vmem:[#allocation2 + $0x64] sm:$0xf] %vm311, 0
        %338 = vst.msk [vmem:[#allocation2 + $0x68] sm:$0xf] %vm311, 0
        %339 = vst.msk [vmem:[#allocation2 + $0x6c] sm:$0xf] %vm311, 0
        %340 = vst.msk [vmem:[#allocation2 + $0x70] sm:$0xf] %vm311, 0
        %341 = vst.msk [vmem:[#allocation2 + $0x74] sm:$0xf] %vm311, 0
        %342 = vst.msk [vmem:[#allocation2 + $0x78] sm:$0xf] %vm311, 0
        %343 = vst.msk [vmem:[#allocation2 + $0x7c] sm:$0xf] %vm311, 0
        %344 = vst.msk [vmem:[#allocation2 + $0x80] sm:$0xf] %vm311, 0
        %345 = vst.msk [vmem:[#allocation2 + $0x84] sm:$0xf] %vm311, 0
        %346 = vst.msk [vmem:[#allocation2 + $0x88] sm:$0xf] %vm311, 0
        %347 = vst.msk [vmem:[#allocation2 + $0x8c] sm:$0xf] %vm311, 0
        %348 = vst.msk [vmem:[#allocation2 + $0x90] sm:$0xf] %vm311, 0
        %349 = vst.msk [vmem:[#allocation2 + $0x94] sm:$0xf] %vm311, 0
        %350 = vst.msk [vmem:[#allocation2 + $0x98] sm:$0xf] %vm311, 0
        %351 = vst.msk [vmem:[#allocation2 + $0x9c] sm:$0xf] %vm311, 0
        %352 = vst.msk [vmem:[#allocation2 + $0xa0] sm:$0xf] %vm311, 0
        %353 = vst.msk [vmem:[#allocation2 + $0xa4] sm:$0xf] %vm311, 0
        %354 = vst.msk [vmem:[#allocation2 + $0xa8] sm:$0xf] %vm311, 0
        %355 = vst.msk [vmem:[#allocation2 + $0xac] sm:$0xf] %vm311, 0
        %356 = vst.msk [vmem:[#allocation2 + $0xb0] sm:$0xf] %vm311, 0
        %357 = vst.msk [vmem:[#allocation2 + $0xb4] sm:$0xf] %vm311, 0
        %vm358 = vcmask 254976
        %359 = vst.msk [vmem:[#allocation2 + $0xb8] sm:$0x3] %vm358, 0
      $region56: #{inception_b_forward.1} parent=51 // pred_fallthru
        _
      %v360 = vld [vmem:[%s300] sm:$0xf]
      %v361 = vld [vmem:[%s300 + $0x4] sm:$0xf]
      %v362 = vld [vmem:[%s300 + $0x8] sm:$0xf]
      %v363 = vld [vmem:[%s300 + $0xc] sm:$0xf]
      %v364 = vld [vmem:[%s300 + $0x10] sm:$0xf]
      %v365 = vld [vmem:[%s300 + $0x14] sm:$0xf]
      %v366 = vld [vmem:[%s300 + $0x18] sm:$0xf]
      %v367 = vld [vmem:[%s300 + $0x1c] sm:$0xf]
      %v368 = vld [vmem:[%s300 + $0x20] sm:$0xf]
      %v369 = vld [vmem:[%s300 + $0x24] sm:$0xf]
      %v370 = vld [vmem:[%s300 + $0x28] sm:$0xf]
      %v371 = vld [vmem:[%s300 + $0x2c] sm:$0xf]
      %v372 = vld [vmem:[%s300 + $0x30] sm:$0xf]
      %v373 = vld [vmem:[%s300 + $0x34] sm:$0xf]
      %v374 = vld [vmem:[%s300 + $0x38] sm:$0xf]
      %v375 = vld [vmem:[%s300 + $0x3c] sm:$0xf]
      %v376 = vld [vmem:[%s300 + $0x40] sm:$0xf]
      %v377 = vld [vmem:[%s300 + $0x44] sm:$0xf]
      %v378 = vld [vmem:[%s300 + $0x48] sm:$0xf]
      %v379 = vld [vmem:[%s300 + $0x4c] sm:$0xf]
      %v380 = vld [vmem:[%s300 + $0x50] sm:$0xf]
      %v381 = vld [vmem:[%s300 + $0x54] sm:$0xf]
      %v382 = vld [vmem:[%s300 + $0x58] sm:$0xf]
      %v383 = vld [vmem:[%s300 + $0x5c] sm:$0xf]
      %v384 = vld [vmem:[%s300 + $0x60] sm:$0xf]
      %v385 = vld [vmem:[%s300 + $0x64] sm:$0xf]
      %v386 = vld [vmem:[%s300 + $0x68] sm:$0xf]
      %v387 = vld [vmem:[%s300 + $0x6c] sm:$0xf]
      %v388 = vld [vmem:[%s300 + $0x70] sm:$0xf]
      %v389 = vld [vmem:[%s300 + $0x74] sm:$0xf]
      %v390 = vld [vmem:[%s300 + $0x78] sm:$0xf]
      %v391 = vld [vmem:[%s300 + $0x7c] sm:$0xf]
      %v392 = vld [vmem:[%s300 + $0x80] sm:$0xf]
      %v393 = vld [vmem:[%s300 + $0x84] sm:$0xf]
      %v394 = vld [vmem:[%s300 + $0x88] sm:$0xf]
      %v395 = vld [vmem:[%s300 + $0x8c] sm:$0xf]
      %v396 = vld [vmem:[%s300 + $0x90] sm:$0xf]
      %v397 = vld [vmem:[%s300 + $0x94] sm:$0xf]
      %v398 = vld [vmem:[%s300 + $0x98] sm:$0xf]
      %v399 = vld [vmem:[%s300 + $0x9c] sm:$0xf]
      %v400 = vld [vmem:[%s300 + $0xa0] sm:$0xf]
      %v401 = vld [vmem:[%s300 + $0xa4] sm:$0xf]
      %v402 = vld [vmem:[%s300 + $0xa8] sm:$0xf]
      %v403 = vld [vmem:[%s300 + $0xac] sm:$0xf]
      %v404 = vld [vmem:[%s300 + $0xb0] sm:$0xf]
      %v405 = vld [vmem:[%s300 + $0xb4] sm:$0xf]
      %v406 = vld [vmem:[%s300 + $0xb8] sm:$0x3]
      %v407 = vld [vmem:[%s1] sm:$0xff]
      %v408 = vld [vmem:[%s1 + $0x8] sm:$0xff]
      %v409 = vld [vmem:[%s1 + $0x10] sm:$0xff]
      %v410 = vld [vmem:[%s1 + $0x18] sm:$0xff]
      %v411 = vld [vmem:[%s1 + $0x20] sm:$0xff]
      %v412 = vld [vmem:[%s1 + $0x28] sm:$0xff]
      %v413 = vld [vmem:[%s1 + $0x30] sm:$0xff]
      %v414 = vld [vmem:[%s1 + $0x38] sm:$0xff]
      %v415 = vld [vmem:[%s1 + $0x40] sm:$0xff]
      %v416 = vld [vmem:[%s1 + $0x48] sm:$0xff]
      %v417 = vld [vmem:[%s1 + $0x50] sm:$0xff]
      %v418 = vld [vmem:[%s1 + $0x58] sm:$0xff]
      %v419 = vld [vmem:[%s1 + $0x60] sm:$0xff]
      %v420 = vld [vmem:[%s1 + $0x68] sm:$0xff]
      %v421 = vld [vmem:[%s1 + $0x70] sm:$0xff]
      %v422 = vld [vmem:[%s1 + $0x78] sm:$0xff]
      %v423 = vld [vmem:[%s1 + $0x80] sm:$0xff]
      %v424 = vld [vmem:[%s1 + $0x88] sm:$0xff]
      %v425 = vld [vmem:[%s1 + $0x90] sm:$0xff]
      %v426 = vld [vmem:[%s1 + $0x98] sm:$0xff]
      %v427 = vld [vmem:[%s1 + $0xa0] sm:$0xff]
      %v428 = vld [vmem:[%s1 + $0xa8] sm:$0xff]
      %v429 = vld [vmem:[%s1 + $0xb0] sm:$0xff]
      %v430 = vld [vmem:[%s1 + $0xb8] sm:$0xff]
      %v431 = vld [vmem:[%s1 + $0xc0] sm:$0xff]
      %v432 = vld [vmem:[%s1 + $0xc8] sm:$0xff]
      %v433 = vld [vmem:[%s1 + $0xd0] sm:$0xff]
      %v434 = vld [vmem:[%s1 + $0xd8] sm:$0xff]
      %v435 = vld [vmem:[%s1 + $0xe0] sm:$0xff]
      %v436 = vld [vmem:[%s1 + $0xe8] sm:$0xff]
      %v437 = vld [vmem:[%s1 + $0xf0] sm:$0xff]
      %v438 = vld [vmem:[%s1 + $0xf8] sm:$0xff]
      %v439 = vld [vmem:[%s1 + $0x100] sm:$0xff]
      %v440 = vld [vmem:[%s1 + $0x108] sm:$0xff]
      %v441 = vld [vmem:[%s1 + $0x110] sm:$0xff]
      %v442 = vld [vmem:[%s1 + $0x118] sm:$0xff]
      %v443 = vld [vmem:[%s1 + $0x120] sm:$0xff]
      %v444 = vld [vmem:[%s1 + $0x128] sm:$0xff]
      %v445 = vld [vmem:[%s1 + $0x130] sm:$0xff]
      %v446 = vld [vmem:[%s1 + $0x138] sm:$0xff]
      %v447 = vld [vmem:[%s1 + $0x140] sm:$0xff]
      %v448 = vld [vmem:[%s1 + $0x148] sm:$0xff]
      %v449 = vld [vmem:[%s1 + $0x150] sm:$0xff]
      %v450 = vld [vmem:[%s1 + $0x158] sm:$0xff]
      %v451 = vld [vmem:[%s1 + $0x160] sm:$0xff]
      %v452 = vld [vmem:[%s1 + $0x168] sm:$0xff]
      %v453 = vld [vmem:[%s2] sm:$0xf]
      %v454 = vld [vmem:[%s2 + $0x4] sm:$0xf]
      %v455 = vld [vmem:[%s2 + $0x8] sm:$0xf]
      %v456 = vld [vmem:[%s2 + $0xc] sm:$0xf]
      %v457 = vld [vmem:[%s2 + $0x10] sm:$0xf]
      %v458 = vld [vmem:[%s2 + $0x14] sm:$0xf]
      %v459 = vld [vmem:[%s2 + $0x18] sm:$0xf]
      %v460 = vld [vmem:[%s2 + $0x1c] sm:$0xf]
      %v461 = vld [vmem:[%s2 + $0x20] sm:$0xf]
      %v462 = vld [vmem:[%s3] sm:$0x1]
      %v464 = vlaneseq
      %v465 = vshrl.u32 %v464, 7
      %v466 = vsub.s32 0, %v465
      %v467 = vrot.slane %v462, %v466
      %v516 = vunpack.c.l.b16 %v360
      %v517 = vunpack.c.l.b16 %v361
      %v518 = vunpack.c.l.b16 %v362
      %v519 = vunpack.c.l.b16 %v363
      %v520 = vunpack.c.l.b16 %v364
      %v521 = vunpack.c.l.b16 %v365
      %v522 = vunpack.c.l.b16 %v366
      %v523 = vunpack.c.l.b16 %v367
      %v524 = vunpack.c.l.b16 %v368
      %v525 = vunpack.c.l.b16 %v369
      %v526 = vunpack.c.l.b16 %v370
      %v527 = vunpack.c.l.b16 %v371
      %v528 = vunpack.c.l.b16 %v372
      %v529 = vunpack.c.l.b16 %v373
      %v530 = vunpack.c.l.b16 %v374
      %v531 = vunpack.c.l.b16 %v375
      %v532 = vunpack.c.l.b16 %v376
      %v533 = vunpack.c.l.b16 %v377
      %v534 = vunpack.c.l.b16 %v378
      %v535 = vunpack.c.l.b16 %v379
      %v536 = vunpack.c.l.b16 %v380
      %v537 = vunpack.c.l.b16 %v381
      %v538 = vunpack.c.l.b16 %v382
      %v539 = vunpack.c.l.b16 %v383
      %v540 = vunpack.c.l.b16 %v384
      %v541 = vunpack.c.l.b16 %v385
      %v542 = vunpack.c.l.b16 %v386
      %v543 = vunpack.c.l.b16 %v387
      %v544 = vunpack.c.l.b16 %v388
      %v545 = vunpack.c.l.b16 %v389
      %v546 = vunpack.c.l.b16 %v390
      %v547 = vunpack.c.l.b16 %v391
      %v548 = vunpack.c.l.b16 %v392
      %v549 = vunpack.c.l.b16 %v393
      %v550 = vunpack.c.l.b16 %v394
      %v551 = vunpack.c.l.b16 %v395
      %v552 = vunpack.c.l.b16 %v396
      %v553 = vunpack.c.l.b16 %v397
      %v554 = vunpack.c.l.b16 %v398
      %v555 = vunpack.c.l.b16 %v399
      %v556 = vunpack.c.l.b16 %v400
      %v557 = vunpack.c.l.b16 %v401
      %v558 = vunpack.c.l.b16 %v402
      %v559 = vunpack.c.l.b16 %v403
      %v560 = vunpack.c.l.b16 %v404
      %v561 = vunpack.c.l.b16 %v405
      %v562 = vunpack.c.l.b16 %v406
      %v563 = vpack.c.b16 %v517, %v516
      %v564 = vpack.c.b16 %v519, %v518
      %v565 = vpack.c.b16 %v521, %v520
      %v566 = vpack.c.b16 %v523, %v522
      %v567 = vpack.c.b16 %v525, %v524
      %v568 = vpack.c.b16 %v527, %v526
      %v569 = vpack.c.b16 %v529, %v528
      %v570 = vpack.c.b16 %v531, %v530
      %v571 = vpack.c.b16 %v533, %v532
      %v572 = vpack.c.b16 %v535, %v534
      %v573 = vpack.c.b16 %v537, %v536
      %v574 = vpack.c.b16 %v539, %v538
      %v575 = vpack.c.b16 %v541, %v540
      %v576 = vpack.c.b16 %v543, %v542
      %v577 = vpack.c.b16 %v545, %v544
      %v578 = vpack.c.b16 %v547, %v546
      %v579 = vpack.c.b16 %v549, %v548
      %v580 = vpack.c.b16 %v551, %v550
      %v581 = vpack.c.b16 %v553, %v552
      %v582 = vpack.c.b16 %v555, %v554
      %v583 = vpack.c.b16 %v557, %v556
      %v584 = vpack.c.b16 %v559, %v558
      %v585 = vpack.c.b16 %v561, %v560
      %v586 = vpack.c.b16 %v562, %v562
      %v596 = vunpack.c.l.b16 %v453
      %v597 = vunpack.c.l.b16 %v454
      %v598 = vunpack.c.l.b16 %v455
      %v599 = vunpack.c.l.b16 %v456
      %v600 = vunpack.c.l.b16 %v457
      %v601 = vunpack.c.l.b16 %v458
      %v602 = vunpack.c.l.b16 %v459
      %v603 = vunpack.c.l.b16 %v460
      %v604 = vunpack.c.l.b16 %v461
      %v605 = vpack.c.b16 %v597, %v596
      %v606 = vpack.c.b16 %v599, %v598
      %v607 = vpack.c.b16 %v601, %v600
      %v608 = vpack.c.b16 %v603, %v602
      %v609 = vpack.c.b16 %v604, %v604
      %vm614 = vcmask 588800
      %v616 = vsel %vm614, %v563, 0
      %v619 = vsel %vm614, %v564, 0
      %v622 = vsel %vm614, %v565, 0
      %v625 = vsel %vm614, %v566, 0
      %v628 = vsel %vm614, %v567, 0
      %v631 = vsel %vm614, %v568, 0
      %v634 = vsel %vm614, %v569, 0
      %v637 = vsel %vm614, %v570, 0
      %v640 = vsel %vm614, %v571, 0
      %v643 = vsel %vm614, %v572, 0
      %v646 = vsel %vm614, %v573, 0
      %v649 = vsel %vm614, %v574, 0
      %v652 = vsel %vm614, %v575, 0
      %v655 = vsel %vm614, %v576, 0
      %v658 = vsel %vm614, %v577, 0
      %v661 = vsel %vm614, %v578, 0
      %v664 = vsel %vm614, %v579, 0
      %v667 = vsel %vm614, %v580, 0
      %v670 = vsel %vm614, %v581, 0
      %v673 = vsel %vm614, %v582, 0
      %v676 = vsel %vm614, %v583, 0
      %v679 = vsel %vm614, %v584, 0
      %v682 = vsel %vm614, %v585, 0
      %v685 = vsel %vm614, %v586, 0
      %vm687 = vcmask 1043456
      %v689 = vsel %vm687, %v609, 0
      %691 = vmatprep.subr.bf16.mxu0 0
      %692 = vmatpush1.bf16.msra.mxu0 0
      %693 = vmatprep.subr.bf16.mxu0 0
      %694 = vmatpush1.bf16.msra.mxu0 0
      %695 = vmatprep.subr.bf16.mxu0 0
      %696 = vmatpush1.bf16.msra.mxu0 0
      %697 = vmatprep.subr.bf16.mxu0 0
      %698 = vmatpush1.bf16.msra.mxu0 %v689
      %699 = vmatprep.subr.bf16.mxu0 0
      %700 = vmatpush1.bf16.msra.mxu0 %v608
      %701 = vmatprep.subr.bf16.mxu0 0
      %702 = vmatpush1.bf16.msra.mxu0 %v607
      %703 = vmatprep.subr.bf16.mxu0 0
      %704 = vmatpush1.bf16.msra.mxu0 %v606
      %705 = vmatprep.subr.bf16.mxu0 0
      %706 = vmatpush1.bf16.msra.mxu0 %v605
      %707 = vmatprep.subr.bf16.mxu0 0
      %708 = vmatpush2.bf16.msra.mxu0 0
      %709 = vmatprep.subr.bf16.mxu0 0
      %710 = vmatpush2.bf16.msra.mxu0 0
      %711 = vmatprep.subr.bf16.mxu0 0
      %712 = vmatpush2.bf16.msra.mxu0 0
      %713 = vmatprep.subr.bf16.mxu0 0
      %714 = vmatpush2.bf16.msra.mxu0 0
      %715 = vmatprep.subr.bf16.mxu0 0
      %716 = vmatpush2.bf16.msra.mxu0 0
      %717 = vmatprep.subr.bf16.mxu0 0
      %718 = vmatpush2.bf16.msra.mxu0 0
      %719 = vmatprep.subr.bf16.mxu0 0
      %720 = vmatpush2.bf16.msra.mxu0 0
      %721 = vmatprep.subr.bf16.mxu0 0
      %722 = vmatpush2.bf16.msra.mxu0 0
      %723 = vmatprep.mubr.bf16.mxu0 0
      %724 = vmatmul.mubr.bf16.gmra.mxu0 %v616
      %v725 = vpop.f32.mrf.mxu0
      %v726 = vadd.f32 %v467, %v725
      %v727 = vpop.f32.mrf.mxu0
      %v728 = vpop.f32.mrf.mxu0
      %v729 = vadd.f32 %v467, %v728
      %v730 = vpop.f32.mrf.mxu0
      %731 = vmatprep.mubr.bf16.mxu0 0
      %732 = vmatmul.mubr.bf16.gmra.mxu0 %v619
      %v733 = vpop.f32.mrf.mxu0
      %v734 = vadd.f32 %v467, %v733
      %v735 = vpop.f32.mrf.mxu0
      %v736 = vpop.f32.mrf.mxu0
      %v737 = vadd.f32 %v467, %v736
      %v738 = vpop.f32.mrf.mxu0
      %739 = vmatprep.mubr.bf16.mxu0 0
      %740 = vmatmul.mubr.bf16.gmra.mxu0 %v622
      %v741 = vpop.f32.mrf.mxu0
      %v742 = vadd.f32 %v467, %v741
      %v743 = vpop.f32.mrf.mxu0
      %v744 = vpop.f32.mrf.mxu0
      %v745 = vadd.f32 %v467, %v744
      %v746 = vpop.f32.mrf.mxu0
      %747 = vmatprep.mubr.bf16.mxu0 0
      %748 = vmatmul.mubr.bf16.gmra.mxu0 %v625
      %v749 = vpop.f32.mrf.mxu0
      %v750 = vadd.f32 %v467, %v749
      %v751 = vpop.f32.mrf.mxu0
      %v752 = vpop.f32.mrf.mxu0
      %v753 = vadd.f32 %v467, %v752
      %v754 = vpop.f32.mrf.mxu0
      %755 = vmatprep.mubr.bf16.mxu0 0
      %756 = vmatmul.mubr.bf16.gmra.mxu0 %v628
      %v757 = vpop.f32.mrf.mxu0
      %v758 = vadd.f32 %v467, %v757
      %v759 = vpop.f32.mrf.mxu0
      %v760 = vpop.f32.mrf.mxu0
      %v761 = vadd.f32 %v467, %v760
      %v762 = vpop.f32.mrf.mxu0
      %763 = vmatprep.mubr.bf16.mxu0 0
      %764 = vmatmul.mubr.bf16.gmra.mxu0 %v631
      %v765 = vpop.f32.mrf.mxu0
      %v766 = vadd.f32 %v467, %v765
      %v767 = vpop.f32.mrf.mxu0
      %v768 = vpop.f32.mrf.mxu0
      %v769 = vadd.f32 %v467, %v768
      %v770 = vpop.f32.mrf.mxu0
      %771 = vmatprep.mubr.bf16.mxu0 0
      %772 = vmatmul.mubr.bf16.gmra.mxu0 %v634
      %v773 = vpop.f32.mrf.mxu0
      %v774 = vadd.f32 %v467, %v773
      %v775 = vpop.f32.mrf.mxu0
      %v776 = vpop.f32.mrf.mxu0
      %v777 = vadd.f32 %v467, %v776
      %v778 = vpop.f32.mrf.mxu0
      %779 = vmatprep.mubr.bf16.mxu0 0
      %780 = vmatmul.mubr.bf16.gmra.mxu0 %v637
      %v781 = vpop.f32.mrf.mxu0
      %v782 = vadd.f32 %v467, %v781
      %v783 = vpop.f32.mrf.mxu0
      %v784 = vpop.f32.mrf.mxu0
      %v785 = vadd.f32 %v467, %v784
      %v786 = vpop.f32.mrf.mxu0
      %787 = vmatprep.mubr.bf16.mxu0 0
      %788 = vmatmul.mubr.bf16.gmra.mxu0 %v640
      %v789 = vpop.f32.mrf.mxu0
      %v790 = vadd.f32 %v467, %v789
      %v791 = vpop.f32.mrf.mxu0
      %v792 = vpop.f32.mrf.mxu0
      %v793 = vadd.f32 %v467, %v792
      %v794 = vpop.f32.mrf.mxu0
      %795 = vmatprep.mubr.bf16.mxu0 0
      %796 = vmatmul.mubr.bf16.gmra.mxu0 %v643
      %v797 = vpop.f32.mrf.mxu0
      %v798 = vadd.f32 %v467, %v797
      %v799 = vpop.f32.mrf.mxu0
      %v800 = vpop.f32.mrf.mxu0
      %v801 = vadd.f32 %v467, %v800
      %v802 = vpop.f32.mrf.mxu0
      %803 = vmatprep.mubr.bf16.mxu0 0
      %804 = vmatmul.mubr.bf16.gmra.mxu0 %v646
      %v805 = vpop.f32.mrf.mxu0
      %v806 = vadd.f32 %v467, %v805
      %v807 = vpop.f32.mrf.mxu0
      %v808 = vpop.f32.mrf.mxu0
      %v809 = vadd.f32 %v467, %v808
      %v810 = vpop.f32.mrf.mxu0
      %811 = vmatprep.mubr.bf16.mxu0 0
      %812 = vmatmul.mubr.bf16.gmra.mxu0 %v649
      %v813 = vpop.f32.mrf.mxu0
      %v814 = vadd.f32 %v467, %v813
      %v815 = vpop.f32.mrf.mxu0
      %v816 = vpop.f32.mrf.mxu0
      %v817 = vadd.f32 %v467, %v816
      %v818 = vpop.f32.mrf.mxu0
      %819 = vmatprep.mubr.bf16.mxu0 0
      %820 = vmatmul.mubr.bf16.gmra.mxu0 %v652
      %v821 = vpop.f32.mrf.mxu0
      %v822 = vadd.f32 %v467, %v821
      %v823 = vpop.f32.mrf.mxu0
      %v824 = vpop.f32.mrf.mxu0
      %v825 = vadd.f32 %v467, %v824
      %v826 = vpop.f32.mrf.mxu0
      %827 = vmatprep.mubr.bf16.mxu0 0
      %828 = vmatmul.mubr.bf16.gmra.mxu0 %v655
      %v829 = vpop.f32.mrf.mxu0
      %v830 = vadd.f32 %v467, %v829
      %v831 = vpop.f32.mrf.mxu0
      %v832 = vpop.f32.mrf.mxu0
      %v833 = vadd.f32 %v467, %v832
      %v834 = vpop.f32.mrf.mxu0
      %835 = vmatprep.mubr.bf16.mxu0 0
      %836 = vmatmul.mubr.bf16.gmra.mxu0 %v658
      %v837 = vpop.f32.mrf.mxu0
      %v838 = vadd.f32 %v467, %v837
      %v839 = vpop.f32.mrf.mxu0
      %v840 = vpop.f32.mrf.mxu0
      %v841 = vadd.f32 %v467, %v840
      %v842 = vpop.f32.mrf.mxu0
      %843 = vmatprep.mubr.bf16.mxu0 0
      %844 = vmatmul.mubr.bf16.gmra.mxu0 %v661
      %v845 = vpop.f32.mrf.mxu0
      %v846 = vadd.f32 %v467, %v845
      %v847 = vpop.f32.mrf.mxu0
      %v848 = vpop.f32.mrf.mxu0
      %v849 = vadd.f32 %v467, %v848
      %v850 = vpop.f32.mrf.mxu0
      %851 = vmatprep.mubr.bf16.mxu0 0
      %852 = vmatmul.mubr.bf16.gmra.mxu0 %v664
      %v853 = vpop.f32.mrf.mxu0
      %v854 = vadd.f32 %v467, %v853
      %v855 = vpop.f32.mrf.mxu0
      %v856 = vpop.f32.mrf.mxu0
      %v857 = vadd.f32 %v467, %v856
      %v858 = vpop.f32.mrf.mxu0
      %859 = vmatprep.mubr.bf16.mxu0 0
      %860 = vmatmul.mubr.bf16.gmra.mxu0 %v667
      %v861 = vpop.f32.mrf.mxu0
      %v862 = vadd.f32 %v467, %v861
      %v863 = vpop.f32.mrf.mxu0
      %v864 = vpop.f32.mrf.mxu0
      %v865 = vadd.f32 %v467, %v864
      %v866 = vpop.f32.mrf.mxu0
      %867 = vmatprep.mubr.bf16.mxu0 0
      %868 = vmatmul.mubr.bf16.gmra.mxu0 %v670
      %v869 = vpop.f32.mrf.mxu0
      %v870 = vadd.f32 %v467, %v869
      %v871 = vpop.f32.mrf.mxu0
      %v872 = vpop.f32.mrf.mxu0
      %v873 = vadd.f32 %v467, %v872
      %v874 = vpop.f32.mrf.mxu0
      %875 = vmatprep.mubr.bf16.mxu0 0
      %876 = vmatmul.mubr.bf16.gmra.mxu0 %v673
      %v877 = vpop.f32.mrf.mxu0
      %v878 = vadd.f32 %v467, %v877
      %v879 = vpop.f32.mrf.mxu0
      %v880 = vpop.f32.mrf.mxu0
      %v881 = vadd.f32 %v467, %v880
      %v882 = vpop.f32.mrf.mxu0
      %883 = vmatprep.mubr.bf16.mxu0 0
      %884 = vmatmul.mubr.bf16.gmra.mxu0 %v676
      %v885 = vpop.f32.mrf.mxu0
      %v886 = vadd.f32 %v467, %v885
      %v887 = vpop.f32.mrf.mxu0
      %v888 = vpop.f32.mrf.mxu0
      %v889 = vadd.f32 %v467, %v888
      %v890 = vpop.f32.mrf.mxu0
      %891 = vmatprep.mubr.bf16.mxu0 0
      %892 = vmatmul.mubr.bf16.gmra.mxu0 %v679
      %v893 = vpop.f32.mrf.mxu0
      %v894 = vadd.f32 %v467, %v893
      %v895 = vpop.f32.mrf.mxu0
      %v896 = vpop.f32.mrf.mxu0
      %v897 = vadd.f32 %v467, %v896
      %v898 = vpop.f32.mrf.mxu0
      %899 = vmatprep.mubr.bf16.mxu0 0
      %900 = vmatmul.mubr.bf16.gmra.mxu0 %v682
      %v901 = vpop.f32.mrf.mxu0
      %v902 = vadd.f32 %v467, %v901
      %v903 = vpop.f32.mrf.mxu0
      %v904 = vpop.f32.mrf.mxu0
      %v905 = vadd.f32 %v467, %v904
      %v906 = vpop.f32.mrf.mxu0
      %907 = vmatprep.mubr.bf16.mxu0 0
      %908 = vmatmul.mubr.bf16.gmra.mxu0 %v685
      %v909 = vpop.f32.mrf.mxu0
      %v910 = vadd.f32 %v467, %v909
      %v911 = vpop.f32.mrf.mxu0
      %v912 = vpop.f32.mrf.mxu0
      %v913 = vpop.f32.mrf.mxu0
      %914 = vdwg.mxu0
      %v915 = vmax.f32 %v726, 0.0
      %v916 = vmax.f32 %v729, 0.0
      %v917 = vmax.f32 %v734, 0.0
      %v918 = vmax.f32 %v737, 0.0
      %v919 = vmax.f32 %v742, 0.0
      %v920 = vmax.f32 %v745, 0.0
      %v921 = vmax.f32 %v750, 0.0
      %v922 = vmax.f32 %v753, 0.0
      %v923 = vmax.f32 %v758, 0.0
      %v924 = vmax.f32 %v761, 0.0
      %v925 = vmax.f32 %v766, 0.0
      %v926 = vmax.f32 %v769, 0.0
      %v927 = vmax.f32 %v774, 0.0
      %v928 = vmax.f32 %v777, 0.0
      %v929 = vmax.f32 %v782, 0.0
      %v930 = vmax.f32 %v785, 0.0
      %v931 = vmax.f32 %v790, 0.0
      %v932 = vmax.f32 %v793, 0.0
      %v933 = vmax.f32 %v798, 0.0
      %v934 = vmax.f32 %v801, 0.0
      %v935 = vmax.f32 %v806, 0.0
      %v936 = vmax.f32 %v809, 0.0
      %v937 = vmax.f32 %v814, 0.0
      %v938 = vmax.f32 %v817, 0.0
      %v939 = vmax.f32 %v822, 0.0
      %v940 = vmax.f32 %v825, 0.0
      %v941 = vmax.f32 %v830, 0.0
      %v942 = vmax.f32 %v833, 0.0
      %v943 = vmax.f32 %v838, 0.0
      %v944 = vmax.f32 %v841, 0.0
      %v945 = vmax.f32 %v846, 0.0
      %v946 = vmax.f32 %v849, 0.0
      %v947 = vmax.f32 %v854, 0.0
      %v948 = vmax.f32 %v857, 0.0
      %v949 = vmax.f32 %v862, 0.0
      %v950 = vmax.f32 %v865, 0.0
      %v951 = vmax.f32 %v870, 0.0
      %v952 = vmax.f32 %v873, 0.0
      %v953 = vmax.f32 %v878, 0.0
      %v954 = vmax.f32 %v881, 0.0
      %v955 = vmax.f32 %v886, 0.0
      %v956 = vmax.f32 %v889, 0.0
      %v957 = vmax.f32 %v894, 0.0
      %v958 = vmax.f32 %v897, 0.0
      %v959 = vmax.f32 %v902, 0.0
      %v960 = vmax.f32 %v905, 0.0
      %962 = vset.pattern.permute.xlu0 0
      %963 = vperm.xlu0 %962, %v407
      %v964 = vpop.permute.xlu0 %963
      %967 = vset.pattern.permute.xlu0 0
      %968 = vperm.xlu0 %967, %v408
      %v969 = vpop.permute.xlu0 %968
      %972 = vset.pattern.permute.xlu0 0
      %973 = vperm.xlu0 %972, %v409
      %v974 = vpop.permute.xlu0 %973
      %977 = vset.pattern.permute.xlu0 0
      %978 = vperm.xlu0 %977, %v410
      %v979 = vpop.permute.xlu0 %978
      %982 = vset.pattern.permute.xlu0 0
      %983 = vperm.xlu0 %982, %v411
      %v984 = vpop.permute.xlu0 %983
      %987 = vset.pattern.permute.xlu0 0
      %988 = vperm.xlu0 %987, %v412
      %v989 = vpop.permute.xlu0 %988
      %992 = vset.pattern.permute.xlu0 0
      %993 = vperm.xlu0 %992, %v413
      %v994 = vpop.permute.xlu0 %993
      %997 = vset.pattern.permute.xlu0 0
      %998 = vperm.xlu0 %997, %v414
      %v999 = vpop.permute.xlu0 %998
      %1002 = vset.pattern.permute.xlu0 0
      %1003 = vperm.xlu0 %1002, %v415
      %v1004 = vpop.permute.xlu0 %1003
      %1007 = vset.pattern.permute.xlu0 0
      %1008 = vperm.xlu0 %1007, %v416
      %v1009 = vpop.permute.xlu0 %1008
      %1012 = vset.pattern.permute.xlu0 0
      %1013 = vperm.xlu0 %1012, %v417
      %v1014 = vpop.permute.xlu0 %1013
      %1017 = vset.pattern.permute.xlu0 0
      %1018 = vperm.xlu0 %1017, %v418
      %v1019 = vpop.permute.xlu0 %1018
      %1022 = vset.pattern.permute.xlu0 0
      %1023 = vperm.xlu0 %1022, %v419
      %v1024 = vpop.permute.xlu0 %1023
      %1027 = vset.pattern.permute.xlu0 0
      %1028 = vperm.xlu0 %1027, %v420
      %v1029 = vpop.permute.xlu0 %1028
      %1032 = vset.pattern.permute.xlu0 0
      %1033 = vperm.xlu0 %1032, %v421
      %v1034 = vpop.permute.xlu0 %1033
      %1037 = vset.pattern.permute.xlu0 0
      %1038 = vperm.xlu0 %1037, %v422
      %v1039 = vpop.permute.xlu0 %1038
      %1042 = vset.pattern.permute.xlu0 0
      %1043 = vperm.xlu0 %1042, %v423
      %v1044 = vpop.permute.xlu0 %1043
      %1047 = vset.pattern.permute.xlu0 0
      %1048 = vperm.xlu0 %1047, %v424
      %v1049 = vpop.permute.xlu0 %1048
      %1052 = vset.pattern.permute.xlu0 0
      %1053 = vperm.xlu0 %1052, %v425
      %v1054 = vpop.permute.xlu0 %1053
      %1057 = vset.pattern.permute.xlu0 0
      %1058 = vperm.xlu0 %1057, %v426
      %v1059 = vpop.permute.xlu0 %1058
      %1062 = vset.pattern.permute.xlu0 0
      %1063 = vperm.xlu0 %1062, %v427
      %v1064 = vpop.permute.xlu0 %1063
      %1067 = vset.pattern.permute.xlu0 0
      %1068 = vperm.xlu0 %1067, %v428
      %v1069 = vpop.permute.xlu0 %1068
      %1072 = vset.pattern.permute.xlu0 0
      %1073 = vperm.xlu0 %1072, %v429
      %v1074 = vpop.permute.xlu0 %1073
      %1077 = vset.pattern.permute.xlu0 0
      %1078 = vperm.xlu0 %1077, %v430
      %v1079 = vpop.permute.xlu0 %1078
      %1082 = vset.pattern.permute.xlu0 0
      %1083 = vperm.xlu0 %1082, %v431
      %v1084 = vpop.permute.xlu0 %1083
      %1087 = vset.pattern.permute.xlu0 0
      %1088 = vperm.xlu0 %1087, %v432
      %v1089 = vpop.permute.xlu0 %1088
      %1092 = vset.pattern.permute.xlu0 0
      %1093 = vperm.xlu0 %1092, %v433
      %v1094 = vpop.permute.xlu0 %1093
      %1097 = vset.pattern.permute.xlu0 0
      %1098 = vperm.xlu0 %1097, %v434
      %v1099 = vpop.permute.xlu0 %1098
      %1102 = vset.pattern.permute.xlu0 0
      %1103 = vperm.xlu0 %1102, %v435
      %v1104 = vpop.permute.xlu0 %1103
      %1107 = vset.pattern.permute.xlu0 0
      %1108 = vperm.xlu0 %1107, %v436
      %v1109 = vpop.permute.xlu0 %1108
      %1112 = vset.pattern.permute.xlu0 0
      %1113 = vperm.xlu0 %1112, %v437
      %v1114 = vpop.permute.xlu0 %1113
      %1117 = vset.pattern.permute.xlu0 0
      %1118 = vperm.xlu0 %1117, %v438
      %v1119 = vpop.permute.xlu0 %1118
      %1122 = vset.pattern.permute.xlu0 0
      %1123 = vperm.xlu0 %1122, %v439
      %v1124 = vpop.permute.xlu0 %1123
      %1127 = vset.pattern.permute.xlu0 0
      %1128 = vperm.xlu0 %1127, %v440
      %v1129 = vpop.permute.xlu0 %1128
      %1132 = vset.pattern.permute.xlu0 0
      %1133 = vperm.xlu0 %1132, %v441
      %v1134 = vpop.permute.xlu0 %1133
      %1137 = vset.pattern.permute.xlu0 0
      %1138 = vperm.xlu0 %1137, %v442
      %v1139 = vpop.permute.xlu0 %1138
      %1142 = vset.pattern.permute.xlu0 0
      %1143 = vperm.xlu0 %1142, %v443
      %v1144 = vpop.permute.xlu0 %1143
      %1147 = vset.pattern.permute.xlu0 0
      %1148 = vperm.xlu0 %1147, %v444
      %v1149 = vpop.permute.xlu0 %1148
      %1152 = vset.pattern.permute.xlu0 0
      %1153 = vperm.xlu0 %1152, %v445
      %v1154 = vpop.permute.xlu0 %1153
      %1157 = vset.pattern.permute.xlu0 0
      %1158 = vperm.xlu0 %1157, %v446
      %v1159 = vpop.permute.xlu0 %1158
      %1162 = vset.pattern.permute.xlu0 0
      %1163 = vperm.xlu0 %1162, %v447
      %v1164 = vpop.permute.xlu0 %1163
      %1167 = vset.pattern.permute.xlu0 0
      %1168 = vperm.xlu0 %1167, %v448
      %v1169 = vpop.permute.xlu0 %1168
      %1172 = vset.pattern.permute.xlu0 0
      %1173 = vperm.xlu0 %1172, %v449
      %v1174 = vpop.permute.xlu0 %1173
      %1177 = vset.pattern.permute.xlu0 0
      %1178 = vperm.xlu0 %1177, %v450
      %v1179 = vpop.permute.xlu0 %1178
      %1182 = vset.pattern.permute.xlu0 0
      %1183 = vperm.xlu0 %1182, %v451
      %v1184 = vpop.permute.xlu0 %1183
      %1187 = vset.pattern.permute.xlu0 0
      %1188 = vperm.xlu0 %1187, %v452
      %v1189 = vpop.permute.xlu0 %1188
      %v1191 = vmul.f32 %v915, %v964
      %v1192 = vmul.f32 %v916, %v969
      %v1193 = vmul.f32 %v917, %v974
      %v1194 = vmul.f32 %v918, %v979
      %v1195 = vmul.f32 %v919, %v984
      %v1196 = vmul.f32 %v920, %v989
      %v1197 = vmul.f32 %v921, %v994
      %v1198 = vmul.f32 %v922, %v999
      %v1199 = vmul.f32 %v923, %v1004
      %v1200 = vmul.f32 %v924, %v1009
      %v1201 = vmul.f32 %v925, %v1014
      %v1202 = vmul.f32 %v926, %v1019
      %v1203 = vmul.f32 %v927, %v1024
      %v1204 = vmul.f32 %v928, %v1029
      %v1205 = vmul.f32 %v929, %v1034
      %v1206 = vmul.f32 %v930, %v1039
      %v1207 = vmul.f32 %v931, %v1044
      %v1208 = vmul.f32 %v932, %v1049
      %v1209 = vmul.f32 %v933, %v1054
      %v1210 = vmul.f32 %v934, %v1059
      %v1211 = vmul.f32 %v935, %v1064
      %v1212 = vmul.f32 %v936, %v1069
      %v1213 = vmul.f32 %v937, %v1074
      %v1214 = vmul.f32 %v938, %v1079
      %v1215 = vmul.f32 %v939, %v1084
      %v1216 = vmul.f32 %v940, %v1089
      %v1217 = vmul.f32 %v941, %v1094
      %v1218 = vmul.f32 %v942, %v1099
      %v1219 = vmul.f32 %v943, %v1104
      %v1220 = vmul.f32 %v944, %v1109
      %v1221 = vmul.f32 %v945, %v1114
      %v1222 = vmul.f32 %v946, %v1119
      %v1223 = vmul.f32 %v947, %v1124
      %v1224 = vmul.f32 %v948, %v1129
      %v1225 = vmul.f32 %v949, %v1134
      %v1226 = vmul.f32 %v950, %v1139
      %v1227 = vmul.f32 %v951, %v1144
      %v1228 = vmul.f32 %v952, %v1149
      %v1229 = vmul.f32 %v953, %v1154
      %v1230 = vmul.f32 %v954, %v1159
      %v1231 = vmul.f32 %v955, %v1164
      %v1232 = vmul.f32 %v956, %v1169
      %v1233 = vmul.f32 %v957, %v1174
      %v1234 = vmul.f32 %v958, %v1179
      %v1235 = vmul.f32 %v959, %v1184
      %v1236 = vmul.f32 %v960, %v1189
      %v1237 = vpack.c.bf16 %v1192, %v1191
      %v1238 = vpack.c.bf16 %v1194, %v1193
      %v1239 = vpack.c.bf16 %v1196, %v1195
      %v1240 = vpack.c.bf16 %v1198, %v1197
      %v1241 = vpack.c.bf16 %v1200, %v1199
      %v1242 = vpack.c.bf16 %v1202, %v1201
      %v1243 = vpack.c.bf16 %v1204, %v1203
      %v1244 = vpack.c.bf16 %v1206, %v1205
      %v1245 = vpack.c.bf16 %v1208, %v1207
      %v1246 = vpack.c.bf16 %v1210, %v1209
      %v1247 = vpack.c.bf16 %v1212, %v1211
      %v1248 = vpack.c.bf16 %v1214, %v1213
      %v1249 = vpack.c.bf16 %v1216, %v1215
      %v1250 = vpack.c.bf16 %v1218, %v1217
      %v1251 = vpack.c.bf16 %v1220, %v1219
      %v1252 = vpack.c.bf16 %v1222, %v1221
      %v1253 = vpack.c.bf16 %v1224, %v1223
      %v1254 = vpack.c.bf16 %v1226, %v1225
      %v1255 = vpack.c.bf16 %v1228, %v1227
      %v1256 = vpack.c.bf16 %v1230, %v1229
      %v1257 = vpack.c.bf16 %v1232, %v1231
      %v1258 = vpack.c.bf16 %v1234, %v1233
      %v1259 = vpack.c.bf16 %v1236, %v1235
      %vm1307 = vcmask 1046528
      %v1308 = vrot.slane %v726, 1
      %v1309 = vrot.slane %v729, 1
      %v1310 = vsel %vm1307, %v1308, %v1309
      %v1311 = vrot.slane %v734, 1
      %v1312 = vsel %vm1307, %v1309, %v1311
      %v1313 = vrot.slane %v737, 1
      %v1314 = vsel %vm1307, %v1311, %v1313
      %v1315 = vrot.slane %v742, 1
      %v1316 = vsel %vm1307, %v1313, %v1315
      %v1317 = vrot.slane %v745, 1
      %v1318 = vsel %vm1307, %v1315, %v1317
      %v1319 = vrot.slane %v750, 1
      %v1320 = vsel %vm1307, %v1317, %v1319
      %v1321 = vrot.slane %v753, 1
      %v1322 = vsel %vm1307, %v1319, %v1321
      %v1323 = vrot.slane %v758, 1
      %v1324 = vsel %vm1307, %v1321, %v1323
      %v1325 = vrot.slane %v761, 1
      %v1326 = vsel %vm1307, %v1323, %v1325
      %v1327 = vrot.slane %v766, 1
      %v1328 = vsel %vm1307, %v1325, %v1327
      %v1329 = vrot.slane %v769, 1
      %v1330 = vsel %vm1307, %v1327, %v1329
      %v1331 = vrot.slane %v774, 1
      %v1332 = vsel %vm1307, %v1329, %v1331
      %v1333 = vrot.slane %v777, 1
      %v1334 = vsel %vm1307, %v1331, %v1333
      %v1335 = vrot.slane %v782, 1
      %v1336 = vsel %vm1307, %v1333, %v1335
      %v1337 = vrot.slane %v785, 1
      %v1338 = vsel %vm1307, %v1335, %v1337
      %v1339 = vrot.slane %v790, 1
      %v1340 = vsel %vm1307, %v1337, %v1339
      %v1341 = vrot.slane %v793, 1
      %v1342 = vsel %vm1307, %v1339, %v1341
      %v1343 = vrot.slane %v798, 1
      %v1344 = vsel %vm1307, %v1341, %v1343
      %v1345 = vrot.slane %v801, 1
      %v1346 = vsel %vm1307, %v1343, %v1345
      %v1347 = vrot.slane %v806, 1
      %v1348 = vsel %vm1307, %v1345, %v1347
      %v1349 = vrot.slane %v809, 1
      %v1350 = vsel %vm1307, %v1347, %v1349
      %v1351 = vrot.slane %v814, 1
      %v1352 = vsel %vm1307, %v1349, %v1351
      %v1353 = vrot.slane %v817, 1
      %v1354 = vsel %vm1307, %v1351, %v1353
      %v1355 = vrot.slane %v822, 1
      %v1356 = vsel %vm1307, %v1353, %v1355
      %v1357 = vrot.slane %v825, 1
      %v1358 = vsel %vm1307, %v1355, %v1357
      %v1359 = vrot.slane %v830, 1
      %v1360 = vsel %vm1307, %v1357, %v1359
      %v1361 = vrot.slane %v833, 1
      %v1362 = vsel %vm1307, %v1359, %v1361
      %v1363 = vrot.slane %v838, 1
      %v1364 = vsel %vm1307, %v1361, %v1363
      %v1365 = vrot.slane %v841, 1
      %v1366 = vsel %vm1307, %v1363, %v1365
      %v1367 = vrot.slane %v846, 1
      %v1368 = vsel %vm1307, %v1365, %v1367
      %v1369 = vrot.slane %v849, 1
      %v1370 = vsel %vm1307, %v1367, %v1369
      %v1371 = vrot.slane %v854, 1
      %v1372 = vsel %vm1307, %v1369, %v1371
      %v1373 = vrot.slane %v857, 1
      %v1374 = vsel %vm1307, %v1371, %v1373
      %v1375 = vrot.slane %v862, 1
      %v1376 = vsel %vm1307, %v1373, %v1375
      %v1377 = vrot.slane %v865, 1
      %v1378 = vsel %vm1307, %v1375, %v1377
      %v1379 = vrot.slane %v870, 1
      %v1380 = vsel %vm1307, %v1377, %v1379
      %v1381 = vrot.slane %v873, 1
      %v1382 = vsel %vm1307, %v1379, %v1381
      %v1383 = vrot.slane %v878, 1
      %v1384 = vsel %vm1307, %v1381, %v1383
      %v1385 = vrot.slane %v881, 1
      %v1386 = vsel %vm1307, %v1383, %v1385
      %v1387 = vrot.slane %v886, 1
      %v1388 = vsel %vm1307, %v1385, %v1387
      %v1389 = vrot.slane %v889, 1
      %v1390 = vsel %vm1307, %v1387, %v1389
      %v1391 = vrot.slane %v894, 1
      %v1392 = vsel %vm1307, %v1389, %v1391
      %v1393 = vrot.slane %v897, 1
      %v1394 = vsel %vm1307, %v1391, %v1393
      %v1395 = vrot.slane %v902, 1
      %v1396 = vsel %vm1307, %v1393, %v1395
      %v1397 = vrot.slane %v905, 1
      %v1398 = vsel %vm1307, %v1395, %v1397
      %v1399 = vrot.slane %v910, 1
      %v1400 = vsel %vm1307, %v1397, %v1399
      %v1447 = vadd.f32 %v726, %v1310
      %v1448 = vadd.f32 %v729, %v1312
      %v1449 = vadd.f32 %v734, %v1314
      %v1450 = vadd.f32 %v737, %v1316
      %v1451 = vadd.f32 %v742, %v1318
      %v1452 = vadd.f32 %v745, %v1320
      %v1453 = vadd.f32 %v750, %v1322
      %v1454 = vadd.f32 %v753, %v1324
      %v1455 = vadd.f32 %v758, %v1326
      %v1456 = vadd.f32 %v761, %v1328
      %v1457 = vadd.f32 %v766, %v1330
      %v1458 = vadd.f32 %v769, %v1332
      %v1459 = vadd.f32 %v774, %v1334
      %v1460 = vadd.f32 %v777, %v1336
      %v1461 = vadd.f32 %v782, %v1338
      %v1462 = vadd.f32 %v785, %v1340
      %v1463 = vadd.f32 %v790, %v1342
      %v1464 = vadd.f32 %v793, %v1344
      %v1465 = vadd.f32 %v798, %v1346
      %v1466 = vadd.f32 %v801, %v1348
      %v1467 = vadd.f32 %v806, %v1350
      %v1468 = vadd.f32 %v809, %v1352
      %v1469 = vadd.f32 %v814, %v1354
      %v1470 = vadd.f32 %v817, %v1356
      %v1471 = vadd.f32 %v822, %v1358
      %v1472 = vadd.f32 %v825, %v1360
      %v1473 = vadd.f32 %v830, %v1362
      %v1474 = vadd.f32 %v833, %v1364
      %v1475 = vadd.f32 %v838, %v1366
      %v1476 = vadd.f32 %v841, %v1368
      %v1477 = vadd.f32 %v846, %v1370
      %v1478 = vadd.f32 %v849, %v1372
      %v1479 = vadd.f32 %v854, %v1374
      %v1480 = vadd.f32 %v857, %v1376
      %v1481 = vadd.f32 %v862, %v1378
      %v1482 = vadd.f32 %v865, %v1380
      %v1483 = vadd.f32 %v870, %v1382
      %v1484 = vadd.f32 %v873, %v1384
      %v1485 = vadd.f32 %v878, %v1386
      %v1486 = vadd.f32 %v881, %v1388
      %v1487 = vadd.f32 %v886, %v1390
      %v1488 = vadd.f32 %v889, %v1392
      %v1489 = vadd.f32 %v894, %v1394
      %v1490 = vadd.f32 %v897, %v1396
      %v1491 = vadd.f32 %v902, %v1398
      %v1492 = vadd.f32 %v905, %v1400
      %vm1493 = vcmask 1045504
      %v1494 = vrot.slane %v726, 2
      %v1495 = vrot.slane %v729, 2
      %v1496 = vsel %vm1493, %v1494, %v1495
      %v1497 = vrot.slane %v734, 2
      %v1498 = vsel %vm1493, %v1495, %v1497
      %v1499 = vrot.slane %v737, 2
      %v1500 = vsel %vm1493, %v1497, %v1499
      %v1501 = vrot.slane %v742, 2
      %v1502 = vsel %vm1493, %v1499, %v1501
      %v1503 = vrot.slane %v745, 2
      %v1504 = vsel %vm1493, %v1501, %v1503
      %v1505 = vrot.slane %v750, 2
      %v1506 = vsel %vm1493, %v1503, %v1505
      %v1507 = vrot.slane %v753, 2
      %v1508 = vsel %vm1493, %v1505, %v1507
      %v1509 = vrot.slane %v758, 2
      %v1510 = vsel %vm1493, %v1507, %v1509
      %v1511 = vrot.slane %v761, 2
      %v1512 = vsel %vm1493, %v1509, %v1511
      %v1513 = vrot.slane %v766, 2
      %v1514 = vsel %vm1493, %v1511, %v1513
      %v1515 = vrot.slane %v769, 2
      %v1516 = vsel %vm1493, %v1513, %v1515
      %v1517 = vrot.slane %v774, 2
      %v1518 = vsel %vm1493, %v1515, %v1517
      %v1519 = vrot.slane %v777, 2
      %v1520 = vsel %vm1493, %v1517, %v1519
      %v1521 = vrot.slane %v782, 2
      %v1522 = vsel %vm1493, %v1519, %v1521
      %v1523 = vrot.slane %v785, 2
      %v1524 = vsel %vm1493, %v1521, %v1523
      %v1525 = vrot.slane %v790, 2
      %v1526 = vsel %vm1493, %v1523, %v1525
      %v1527 = vrot.slane %v793, 2
      %v1528 = vsel %vm1493, %v1525, %v1527
      %v1529 = vrot.slane %v798, 2
      %v1530 = vsel %vm1493, %v1527, %v1529
      %v1531 = vrot.slane %v801, 2
      %v1532 = vsel %vm1493, %v1529, %v1531
      %v1533 = vrot.slane %v806, 2
      %v1534 = vsel %vm1493, %v1531, %v1533
      %v1535 = vrot.slane %v809, 2
      %v1536 = vsel %vm1493, %v1533, %v1535
      %v1537 = vrot.slane %v814, 2
      %v1538 = vsel %vm1493, %v1535, %v1537
      %v1539 = vrot.slane %v817, 2
      %v1540 = vsel %vm1493, %v1537, %v1539
      %v1541 = vrot.slane %v822, 2
      %v1542 = vsel %vm1493, %v1539, %v1541
      %v1543 = vrot.slane %v825, 2
      %v1544 = vsel %vm1493, %v1541, %v1543
      %v1545 = vrot.slane %v830, 2
      %v1546 = vsel %vm1493, %v1543, %v1545
      %v1547 = vrot.slane %v833, 2
      %v1548 = vsel %vm1493, %v1545, %v1547
      %v1549 = vrot.slane %v838, 2
      %v1550 = vsel %vm1493, %v1547, %v1549
      %v1551 = vrot.slane %v841, 2
      %v1552 = vsel %vm1493, %v1549, %v1551
      %v1553 = vrot.slane %v846, 2
      %v1554 = vsel %vm1493, %v1551, %v1553
      %v1555 = vrot.slane %v849, 2
      %v1556 = vsel %vm1493, %v1553, %v1555
      %v1557 = vrot.slane %v854, 2
      %v1558 = vsel %vm1493, %v1555, %v1557
      %v1559 = vrot.slane %v857, 2
      %v1560 = vsel %vm1493, %v1557, %v1559
      %v1561 = vrot.slane %v862, 2
      %v1562 = vsel %vm1493, %v1559, %v1561
      %v1563 = vrot.slane %v865, 2
      %v1564 = vsel %vm1493, %v1561, %v1563
      %v1565 = vrot.slane %v870, 2
      %v1566 = vsel %vm1493, %v1563, %v1565
      %v1567 = vrot.slane %v873, 2
      %v1568 = vsel %vm1493, %v1565, %v1567
      %v1569 = vrot.slane %v878, 2
      %v1570 = vsel %vm1493, %v1567, %v1569
      %v1571 = vrot.slane %v881, 2
      %v1572 = vsel %vm1493, %v1569, %v1571
      %v1573 = vrot.slane %v886, 2
      %v1574 = vsel %vm1493, %v1571, %v1573
      %v1575 = vrot.slane %v889, 2
      %v1576 = vsel %vm1493, %v1573, %v1575
      %v1577 = vrot.slane %v894, 2
      %v1578 = vsel %vm1493, %v1575, %v1577
      %v1579 = vrot.slane %v897, 2
      %v1580 = vsel %vm1493, %v1577, %v1579
      %v1581 = vrot.slane %v902, 2
      %v1582 = vsel %vm1493, %v1579, %v1581
      %v1583 = vrot.slane %v905, 2
      %v1584 = vsel %vm1493, %v1581, %v1583
      %v1585 = vrot.slane %v910, 2
      %v1586 = vsel %vm1493, %v1583, %v1585
      %v1633 = vadd.f32 %v1447, %v1496
      %v1634 = vadd.f32 %v1448, %v1498
      %v1635 = vadd.f32 %v1449, %v1500
      %v1636 = vadd.f32 %v1450, %v1502
      %v1637 = vadd.f32 %v1451, %v1504
      %v1638 = vadd.f32 %v1452, %v1506
      %v1639 = vadd.f32 %v1453, %v1508
      %v1640 = vadd.f32 %v1454, %v1510
      %v1641 = vadd.f32 %v1455, %v1512
      %v1642 = vadd.f32 %v1456, %v1514
      %v1643 = vadd.f32 %v1457, %v1516
      %v1644 = vadd.f32 %v1458, %v1518
      %v1645 = vadd.f32 %v1459, %v1520
      %v1646 = vadd.f32 %v1460, %v1522
      %v1647 = vadd.f32 %v1461, %v1524
      %v1648 = vadd.f32 %v1462, %v1526
      %v1649 = vadd.f32 %v1463, %v1528
      %v1650 = vadd.f32 %v1464, %v1530
      %v1651 = vadd.f32 %v1465, %v1532
      %v1652 = vadd.f32 %v1466, %v1534
      %v1653 = vadd.f32 %v1467, %v1536
      %v1654 = vadd.f32 %v1468, %v1538
      %v1655 = vadd.f32 %v1469, %v1540
      %v1656 = vadd.f32 %v1470, %v1542
      %v1657 = vadd.f32 %v1471, %v1544
      %v1658 = vadd.f32 %v1472, %v1546
      %v1659 = vadd.f32 %v1473, %v1548
      %v1660 = vadd.f32 %v1474, %v1550
      %v1661 = vadd.f32 %v1475, %v1552
      %v1662 = vadd.f32 %v1476, %v1554
      %v1663 = vadd.f32 %v1477, %v1556
      %v1664 = vadd.f32 %v1478, %v1558
      %v1665 = vadd.f32 %v1479, %v1560
      %v1666 = vadd.f32 %v1480, %v1562
      %v1667 = vadd.f32 %v1481, %v1564
      %v1668 = vadd.f32 %v1482, %v1566
      %v1669 = vadd.f32 %v1483, %v1568
      %v1670 = vadd.f32 %v1484, %v1570
      %v1671 = vadd.f32 %v1485, %v1572
      %v1672 = vadd.f32 %v1486, %v1574
      %v1673 = vadd.f32 %v1487, %v1576
      %v1674 = vadd.f32 %v1488, %v1578
      %v1675 = vadd.f32 %v1489, %v1580
      %v1676 = vadd.f32 %v1490, %v1582
      %v1677 = vadd.f32 %v1491, %v1584
      %v1678 = vadd.f32 %v1492, %v1586
      %v1721 = vrot.slane %v1635, 2
      %v1722 = vrot.slane %v1636, 2
      %v1723 = vsel %vm1493, %v1721, %v1722
      %v1724 = vrot.slane %v1637, 2
      %v1725 = vsel %vm1493, %v1722, %v1724
      %v1726 = vrot.slane %v1638, 2
      %v1727 = vsel %vm1493, %v1724, %v1726
      %v1728 = vrot.slane %v1639, 2
      %v1729 = vsel %vm1493, %v1726, %v1728
      %v1730 = vrot.slane %v1640, 2
      %v1731 = vsel %vm1493, %v1728, %v1730
      %v1732 = vrot.slane %v1641, 2
      %v1733 = vsel %vm1493, %v1730, %v1732
      %v1734 = vrot.slane %v1642, 2
      %v1735 = vsel %vm1493, %v1732, %v1734
      %v1736 = vrot.slane %v1643, 2
      %v1737 = vsel %vm1493, %v1734, %v1736
      %v1738 = vrot.slane %v1644, 2
      %v1739 = vsel %vm1493, %v1736, %v1738
      %v1740 = vrot.slane %v1645, 2
      %v1741 = vsel %vm1493, %v1738, %v1740
      %v1742 = vrot.slane %v1646, 2
      %v1743 = vsel %vm1493, %v1740, %v1742
      %v1744 = vrot.slane %v1647, 2
      %v1745 = vsel %vm1493, %v1742, %v1744
      %v1746 = vrot.slane %v1648, 2
      %v1747 = vsel %vm1493, %v1744, %v1746
      %v1748 = vrot.slane %v1649, 2
      %v1749 = vsel %vm1493, %v1746, %v1748
      %v1750 = vrot.slane %v1650, 2
      %v1751 = vsel %vm1493, %v1748, %v1750
      %v1752 = vrot.slane %v1651, 2
      %v1753 = vsel %vm1493, %v1750, %v1752
      %v1754 = vrot.slane %v1652, 2
      %v1755 = vsel %vm1493, %v1752, %v1754
      %v1756 = vrot.slane %v1653, 2
      %v1757 = vsel %vm1493, %v1754, %v1756
      %v1758 = vrot.slane %v1654, 2
      %v1759 = vsel %vm1493, %v1756, %v1758
      %v1760 = vrot.slane %v1655, 2
      %v1761 = vsel %vm1493, %v1758, %v1760
      %v1762 = vrot.slane %v1656, 2
      %v1763 = vsel %vm1493, %v1760, %v1762
      %v1764 = vrot.slane %v1657, 2
      %v1765 = vsel %vm1493, %v1762, %v1764
      %v1766 = vrot.slane %v1658, 2
      %v1767 = vsel %vm1493, %v1764, %v1766
      %v1768 = vrot.slane %v1659, 2
      %v1769 = vsel %vm1493, %v1766, %v1768
      %v1770 = vrot.slane %v1660, 2
      %v1771 = vsel %vm1493, %v1768, %v1770
      %v1772 = vrot.slane %v1661, 2
      %v1773 = vsel %vm1493, %v1770, %v1772
      %v1774 = vrot.slane %v1662, 2
      %v1775 = vsel %vm1493, %v1772, %v1774
      %v1776 = vrot.slane %v1663, 2
      %v1777 = vsel %vm1493, %v1774, %v1776
      %v1778 = vrot.slane %v1664, 2
      %v1779 = vsel %vm1493, %v1776, %v1778
      %v1780 = vrot.slane %v1665, 2
      %v1781 = vsel %vm1493, %v1778, %v1780
      %v1782 = vrot.slane %v1666, 2
      %v1783 = vsel %vm1493, %v1780, %v1782
      %v1784 = vrot.slane %v1667, 2
      %v1785 = vsel %vm1493, %v1782, %v1784
      %v1786 = vrot.slane %v1668, 2
      %v1787 = vsel %vm1493, %v1784, %v1786
      %v1788 = vrot.slane %v1669, 2
      %v1789 = vsel %vm1493, %v1786, %v1788
      %v1790 = vrot.slane %v1670, 2
      %v1791 = vsel %vm1493, %v1788, %v1790
      %v1792 = vrot.slane %v1671, 2
      %v1793 = vsel %vm1493, %v1790, %v1792
      %v1794 = vrot.slane %v1672, 2
      %v1795 = vsel %vm1493, %v1792, %v1794
      %v1796 = vrot.slane %v1673, 2
      %v1797 = vsel %vm1493, %v1794, %v1796
      %v1798 = vrot.slane %v1674, 2
      %v1799 = vsel %vm1493, %v1796, %v1798
      %v1800 = vrot.slane %v1675, 2
      %v1801 = vsel %vm1493, %v1798, %v1800
      %v1802 = vrot.slane %v1676, 2
      %v1803 = vsel %vm1493, %v1800, %v1802
      %v1846 = vadd.f32 %v1633, %v1723
      %v1847 = vadd.f32 %v1634, %v1725
      %v1848 = vadd.f32 %v1635, %v1727
      %v1849 = vadd.f32 %v1636, %v1729
      %v1850 = vadd.f32 %v1637, %v1731
      %v1851 = vadd.f32 %v1638, %v1733
      %v1852 = vadd.f32 %v1639, %v1735
      %v1853 = vadd.f32 %v1640, %v1737
      %v1854 = vadd.f32 %v1641, %v1739
      %v1855 = vadd.f32 %v1642, %v1741
      %v1856 = vadd.f32 %v1643, %v1743
      %v1857 = vadd.f32 %v1644, %v1745
      %v1858 = vadd.f32 %v1645, %v1747
      %v1859 = vadd.f32 %v1646, %v1749
      %v1860 = vadd.f32 %v1647, %v1751
      %v1861 = vadd.f32 %v1648, %v1753
      %v1862 = vadd.f32 %v1649, %v1755
      %v1863 = vadd.f32 %v1650, %v1757
      %v1864 = vadd.f32 %v1651, %v1759
      %v1865 = vadd.f32 %v1652, %v1761
      %v1866 = vadd.f32 %v1653, %v1763
      %v1867 = vadd.f32 %v1654, %v1765
      %v1868 = vadd.f32 %v1655, %v1767
      %v1869 = vadd.f32 %v1656, %v1769
      %v1870 = vadd.f32 %v1657, %v1771
      %v1871 = vadd.f32 %v1658, %v1773
      %v1872 = vadd.f32 %v1659, %v1775
      %v1873 = vadd.f32 %v1660, %v1777
      %v1874 = vadd.f32 %v1661, %v1779
      %v1875 = vadd.f32 %v1662, %v1781
      %v1876 = vadd.f32 %v1663, %v1783
      %v1877 = vadd.f32 %v1664, %v1785
      %v1878 = vadd.f32 %v1665, %v1787
      %v1879 = vadd.f32 %v1666, %v1789
      %v1880 = vadd.f32 %v1667, %v1791
      %v1881 = vadd.f32 %v1668, %v1793
      %v1882 = vadd.f32 %v1669, %v1795
      %v1883 = vadd.f32 %v1670, %v1797
      %v1884 = vadd.f32 %v1671, %v1799
      %v1885 = vadd.f32 %v1672, %v1801
      %v1886 = vadd.f32 %v1673, %v1803
      %v1887 = vadd.f32 %v1674, %v1802
      %v1890 = vrot.slane %v1638, 4
      %v1891 = vrot.slane %v1639, 4
      %v1892 = vsel %vm687, %v1890, %v1891
      %v1893 = vrot.slane %v1640, 4
      %v1894 = vsel %vm687, %v1891, %v1893
      %v1895 = vrot.slane %v1641, 4
      %v1896 = vsel %vm687, %v1893, %v1895
      %v1897 = vrot.slane %v1642, 4
      %v1898 = vsel %vm687, %v1895, %v1897
      %v1899 = vrot.slane %v1643, 4
      %v1900 = vsel %vm687, %v1897, %v1899
      %v1901 = vrot.slane %v1644, 4
      %v1902 = vsel %vm687, %v1899, %v1901
      %v1903 = vrot.slane %v1645, 4
      %v1904 = vsel %vm687, %v1901, %v1903
      %v1905 = vrot.slane %v1646, 4
      %v1906 = vsel %vm687, %v1903, %v1905
      %v1907 = vrot.slane %v1647, 4
      %v1908 = vsel %vm687, %v1905, %v1907
      %v1909 = vrot.slane %v1648, 4
      %v1910 = vsel %vm687, %v1907, %v1909
      %v1911 = vrot.slane %v1649, 4
      %v1912 = vsel %vm687, %v1909, %v1911
      %v1913 = vrot.slane %v1650, 4
      %v1914 = vsel %vm687, %v1911, %v1913
      %v1915 = vrot.slane %v1651, 4
      %v1916 = vsel %vm687, %v1913, %v1915
      %v1917 = vrot.slane %v1652, 4
      %v1918 = vsel %vm687, %v1915, %v1917
      %v1919 = vrot.slane %v1653, 4
      %v1920 = vsel %vm687, %v1917, %v1919
      %v1921 = vrot.slane %v1654, 4
      %v1922 = vsel %vm687, %v1919, %v1921
      %v1923 = vrot.slane %v1655, 4
      %v1924 = vsel %vm687, %v1921, %v1923
      %v1925 = vrot.slane %v1656, 4
      %v1926 = vsel %vm687, %v1923, %v1925
      %v1927 = vrot.slane %v1657, 4
      %v1928 = vsel %vm687, %v1925, %v1927
      %v1929 = vrot.slane %v1658, 4
      %v1930 = vsel %vm687, %v1927, %v1929
      %v1931 = vrot.slane %v1659, 4
      %v1932 = vsel %vm687, %v1929, %v1931
      %v1933 = vrot.slane %v1660, 4
      %v1934 = vsel %vm687, %v1931, %v1933
      %v1935 = vrot.slane %v1661, 4
      %v1936 = vsel %vm687, %v1933, %v1935
      %v1937 = vrot.slane %v1662, 4
      %v1938 = vsel %vm687, %v1935, %v1937
      %v1939 = vrot.slane %v1663, 4
      %v1940 = vsel %vm687, %v1937, %v1939
      %v1941 = vrot.slane %v1664, 4
      %v1942 = vsel %vm687, %v1939, %v1941
      %v1943 = vrot.slane %v1665, 4
      %v1944 = vsel %vm687, %v1941, %v1943
      %v1945 = vrot.slane %v1666, 4
      %v1946 = vsel %vm687, %v1943, %v1945
      %v1947 = vrot.slane %v1667, 4
      %v1948 = vsel %vm687, %v1945, %v1947
      %v1949 = vrot.slane %v1668, 4
      %v1950 = vsel %vm687, %v1947, %v1949
      %v1951 = vrot.slane %v1669, 4
      %v1952 = vsel %vm687, %v1949, %v1951
      %v1953 = vrot.slane %v1670, 4
      %v1954 = vsel %vm687, %v1951, %v1953
      %v1955 = vrot.slane %v1671, 4
      %v1956 = vsel %vm687, %v1953, %v1955
      %v1957 = vrot.slane %v1672, 4
      %v1958 = vsel %vm687, %v1955, %v1957
      %v1959 = vrot.slane %v1673, 4
      %v1960 = vsel %vm687, %v1957, %v1959
      %v1961 = vrot.slane %v1674, 4
      %v1962 = vsel %vm687, %v1959, %v1961
      %v1963 = vrot.slane %v1675, 4
      %v1964 = vsel %vm687, %v1961, %v1963
      %v1965 = vrot.slane %v1676, 4
      %v1966 = vsel %vm687, %v1963, %v1965
      %v1967 = vrot.slane %v1677, 4
      %v1968 = vsel %vm687, %v1965, %v1967
      %v1969 = vrot.slane %v1678, 4
      %v1970 = vsel %vm687, %v1967, %v1969
      %v2013 = vadd.f32 %v1846, %v1890
      %v2014 = vadd.f32 %v1847, %v1892
      %v2015 = vadd.f32 %v1848, %v1894
      %v2016 = vadd.f32 %v1849, %v1896
      %v2017 = vadd.f32 %v1850, %v1898
      %v2018 = vadd.f32 %v1851, %v1900
      %v2019 = vadd.f32 %v1852, %v1902
      %v2020 = vadd.f32 %v1853, %v1904
      %v2021 = vadd.f32 %v1854, %v1906
      %v2022 = vadd.f32 %v1855, %v1908
      %v2023 = vadd.f32 %v1856, %v1910
      %v2024 = vadd.f32 %v1857, %v1912
      %v2025 = vadd.f32 %v1858, %v1914
      %v2026 = vadd.f32 %v1859, %v1916
      %v2027 = vadd.f32 %v1860, %v1918
      %v2028 = vadd.f32 %v1861, %v1920
      %v2029 = vadd.f32 %v1862, %v1922
      %v2030 = vadd.f32 %v1863, %v1924
      %v2031 = vadd.f32 %v1864, %v1926
      %v2032 = vadd.f32 %v1865, %v1928
      %v2033 = vadd.f32 %v1866, %v1930
      %v2034 = vadd.f32 %v1867, %v1932
      %v2035 = vadd.f32 %v1868, %v1934
      %v2036 = vadd.f32 %v1869, %v1936
      %v2037 = vadd.f32 %v1870, %v1938
      %v2038 = vadd.f32 %v1871, %v1940
      %v2039 = vadd.f32 %v1872, %v1942
      %v2040 = vadd.f32 %v1873, %v1944
      %v2041 = vadd.f32 %v1874, %v1946
      %v2042 = vadd.f32 %v1875, %v1948
      %v2043 = vadd.f32 %v1876, %v1950
      %v2044 = vadd.f32 %v1877, %v1952
      %v2045 = vadd.f32 %v1878, %v1954
      %v2046 = vadd.f32 %v1879, %v1956
      %v2047 = vadd.f32 %v1880, %v1958
      %v2048 = vadd.f32 %v1881, %v1960
      %v2049 = vadd.f32 %v1882, %v1962
      %v2050 = vadd.f32 %v1883, %v1964
      %v2051 = vadd.f32 %v1884, %v1966
      %v2052 = vadd.f32 %v1885, %v1968
      %v2053 = vadd.f32 %v1886, %v1970
      %v2054 = vadd.f32 %v1887, %v1969
      %v2055 = vmul.f32 %v2013, 0.11111111
      %v2056 = vmul.f32 %v2014, 0.11111111
      %v2057 = vmul.f32 %v2015, 0.11111111
      %v2058 = vmul.f32 %v2016, 0.11111111
      %v2059 = vmul.f32 %v2017, 0.11111111
      %v2060 = vmul.f32 %v2018, 0.11111111
      %v2061 = vmul.f32 %v2019, 0.11111111
      %v2062 = vmul.f32 %v2020, 0.11111111
      %v2063 = vmul.f32 %v2021, 0.11111111
      %v2064 = vmul.f32 %v2022, 0.11111111
      %v2065 = vmul.f32 %v2023, 0.11111111
      %v2066 = vmul.f32 %v2024, 0.11111111
      %v2067 = vmul.f32 %v2025, 0.11111111
      %v2068 = vmul.f32 %v2026, 0.11111111
      %v2069 = vmul.f32 %v2027, 0.11111111
      %v2070 = vmul.f32 %v2028, 0.11111111
      %v2071 = vmul.f32 %v2029, 0.11111111
      %v2072 = vmul.f32 %v2030, 0.11111111
      %v2073 = vmul.f32 %v2031, 0.11111111
      %v2074 = vmul.f32 %v2032, 0.11111111
      %v2075 = vmul.f32 %v2033, 0.11111111
      %v2076 = vmul.f32 %v2034, 0.11111111
      %v2077 = vmul.f32 %v2035, 0.11111111
      %v2078 = vmul.f32 %v2036, 0.11111111
      %v2079 = vmul.f32 %v2037, 0.11111111
      %v2080 = vmul.f32 %v2038, 0.11111111
      %v2081 = vmul.f32 %v2039, 0.11111111
      %v2082 = vmul.f32 %v2040, 0.11111111
      %v2083 = vmul.f32 %v2041, 0.11111111
      %v2084 = vmul.f32 %v2042, 0.11111111
      %v2085 = vmul.f32 %v2043, 0.11111111
      %v2086 = vmul.f32 %v2044, 0.11111111
      %v2087 = vmul.f32 %v2045, 0.11111111
      %v2088 = vmul.f32 %v2046, 0.11111111
      %v2089 = vmul.f32 %v2047, 0.11111111
      %v2090 = vmul.f32 %v2048, 0.11111111
      %v2091 = vmul.f32 %v2049, 0.11111111
      %v2092 = vmul.f32 %v2050, 0.11111111
      %v2093 = vmul.f32 %v2051, 0.11111111
      %v2094 = vmul.f32 %v2052, 0.11111111
      %v2095 = vmul.f32 %v2053, 0.11111111
      %v2096 = vmul.f32 %v2054, 0.11111111
      %v2097 = vmax.f32 %v2055, 0.0
      %v2098 = vmax.f32 %v2056, 0.0
      %v2099 = vmax.f32 %v2057, 0.0
      %v2100 = vmax.f32 %v2058, 0.0
      %v2101 = vmax.f32 %v2059, 0.0
      %v2102 = vmax.f32 %v2060, 0.0
      %v2103 = vmax.f32 %v2061, 0.0
      %v2104 = vmax.f32 %v2062, 0.0
      %v2105 = vmax.f32 %v2063, 0.0
      %v2106 = vmax.f32 %v2064, 0.0
      %v2107 = vmax.f32 %v2065, 0.0
      %v2108 = vmax.f32 %v2066, 0.0
      %v2109 = vmax.f32 %v2067, 0.0
      %v2110 = vmax.f32 %v2068, 0.0
      %v2111 = vmax.f32 %v2069, 0.0
      %v2112 = vmax.f32 %v2070, 0.0
      %v2113 = vmax.f32 %v2071, 0.0
      %v2114 = vmax.f32 %v2072, 0.0
      %v2115 = vmax.f32 %v2073, 0.0
      %v2116 = vmax.f32 %v2074, 0.0
      %v2117 = vmax.f32 %v2075, 0.0
      %v2118 = vmax.f32 %v2076, 0.0
      %v2119 = vmax.f32 %v2077, 0.0
      %v2120 = vmax.f32 %v2078, 0.0
      %v2121 = vmax.f32 %v2079, 0.0
      %v2122 = vmax.f32 %v2080, 0.0
      %v2123 = vmax.f32 %v2081, 0.0
      %v2124 = vmax.f32 %v2082, 0.0
      %v2125 = vmax.f32 %v2083, 0.0
      %v2126 = vmax.f32 %v2084, 0.0
      %v2127 = vmax.f32 %v2085, 0.0
      %v2128 = vmax.f32 %v2086, 0.0
      %v2129 = vmax.f32 %v2087, 0.0
      %v2130 = vmax.f32 %v2088, 0.0
      %v2131 = vmax.f32 %v2089, 0.0
      %v2132 = vmax.f32 %v2090, 0.0
      %v2133 = vmax.f32 %v2091, 0.0
      %v2134 = vmax.f32 %v2092, 0.0
      %v2135 = vmax.f32 %v2093, 0.0
      %v2136 = vmax.f32 %v2094, 0.0
      %v2137 = vmax.f32 %v2095, 0.0
      %v2138 = vmax.f32 %v2096, 0.0
      %2160 = vrot.lane.b32.xlu0 %v1237, 112
      %v2161 = vpop.permute.xlu0 %2160
      %2162 = vrot.lane.b32.xlu0 %v1238, 112
      %v2163 = vpop.permute.xlu0 %2162
      %2164 = vrot.lane.b32.xlu0 %v1239, 112
      %v2165 = vpop.permute.xlu0 %2164
      %2166 = vrot.lane.b32.xlu0 %v1240, 112
      %v2167 = vpop.permute.xlu0 %2166
      %2168 = vrot.lane.b32.xlu0 %v1241, 112
      %v2169 = vpop.permute.xlu0 %2168
      %2170 = vrot.lane.b32.xlu0 %v1242, 112
      %v2171 = vpop.permute.xlu0 %2170
      %2172 = vrot.lane.b32.xlu0 %v1243, 112
      %v2173 = vpop.permute.xlu0 %2172
      %2174 = vrot.lane.b32.xlu0 %v1244, 112
      %v2175 = vpop.permute.xlu0 %2174
      %2176 = vrot.lane.b32.xlu0 %v1245, 112
      %v2177 = vpop.permute.xlu0 %2176
      %2178 = vrot.lane.b32.xlu0 %v1246, 112
      %v2179 = vpop.permute.xlu0 %2178
      %2180 = vrot.lane.b32.xlu0 %v1247, 112
      %v2181 = vpop.permute.xlu0 %2180
      %2182 = vrot.lane.b32.xlu0 %v1248, 112
      %v2183 = vpop.permute.xlu0 %2182
      %2184 = vrot.lane.b32.xlu0 %v1249, 112
      %v2185 = vpop.permute.xlu0 %2184
      %2186 = vrot.lane.b32.xlu0 %v1250, 112
      %v2187 = vpop.permute.xlu0 %2186
      %2188 = vrot.lane.b32.xlu0 %v1251, 112
      %v2189 = vpop.permute.xlu0 %2188
      %2190 = vrot.lane.b32.xlu0 %v1252, 112
      %v2191 = vpop.permute.xlu0 %2190
      %2192 = vrot.lane.b32.xlu0 %v1253, 112
      %v2193 = vpop.permute.xlu0 %2192
      %2194 = vrot.lane.b32.xlu0 %v1254, 112
      %v2195 = vpop.permute.xlu0 %2194
      %2196 = vrot.lane.b32.xlu0 %v1255, 112
      %v2197 = vpop.permute.xlu0 %2196
      %2198 = vrot.lane.b32.xlu0 %v1256, 112
      %v2199 = vpop.permute.xlu0 %2198
      %2200 = vrot.lane.b32.xlu0 %v1257, 112
      %v2201 = vpop.permute.xlu0 %2200
      %vm2202 = vsmask.f32 7424
      %v2204 = vshrl.u32 %v1237, 16
      %v2206 = vshll.u32 %v1237, 16
      %v2208 = vrot.slane %v2206, 1
      %v2209 = vor.u32 %v2204, %v2208
      %v2211 = vshll.u32 %v1238, 16
      %v2213 = vrot.slane %v2211, 1
      %v2214 = vsel %vm2202, %v2209, %v2213
      %v2215 = vshrl.u32 %v1238, 16
      %v2217 = vor.u32 %v2215, %v2213
      %v2219 = vshll.u32 %v1239, 16
      %v2221 = vrot.slane %v2219, 1
      %v2222 = vsel %vm2202, %v2217, %v2221
      %v2223 = vshrl.u32 %v1239, 16
      %v2225 = vor.u32 %v2223, %v2221
      %v2227 = vshll.u32 %v1240, 16
      %v2229 = vrot.slane %v2227, 1
      %v2230 = vsel %vm2202, %v2225, %v2229
      %v2231 = vshrl.u32 %v1240, 16
      %v2233 = vor.u32 %v2231, %v2229
      %v2235 = vshll.u32 %v1241, 16
      %v2237 = vrot.slane %v2235, 1
      %v2238 = vsel %vm2202, %v2233, %v2237
      %v2239 = vshrl.u32 %v1241, 16
      %v2241 = vor.u32 %v2239, %v2237
      %v2243 = vshll.u32 %v1242, 16
      %v2245 = vrot.slane %v2243, 1
      %v2246 = vsel %vm2202, %v2241, %v2245
      %v2247 = vshrl.u32 %v1242, 16
      %v2249 = vor.u32 %v2247, %v2245
      %v2251 = vshll.u32 %v1243, 16
      %v2253 = vrot.slane %v2251, 1
      %v2254 = vsel %vm2202, %v2249, %v2253
      %v2255 = vshrl.u32 %v1243, 16
      %v2257 = vor.u32 %v2255, %v2253
      %v2259 = vshll.u32 %v1244, 16
      %v2261 = vrot.slane %v2259, 1
      %v2262 = vsel %vm2202, %v2257, %v2261
      %v2263 = vshrl.u32 %v1244, 16
      %v2265 = vor.u32 %v2263, %v2261
      %v2267 = vshll.u32 %v1245, 16
      %v2269 = vrot.slane %v2267, 1
      %v2270 = vsel %vm2202, %v2265, %v2269
      %v2271 = vshrl.u32 %v1245, 16
      %v2273 = vor.u32 %v2271, %v2269
      %v2275 = vshll.u32 %v1246, 16
      %v2277 = vrot.slane %v2275, 1
      %v2278 = vsel %vm2202, %v2273, %v2277
      %v2279 = vshrl.u32 %v1246, 16
      %v2281 = vor.u32 %v2279, %v2277
      %v2283 = vshll.u32 %v1247, 16
      %v2285 = vrot.slane %v2283, 1
      %v2286 = vsel %vm2202, %v2281, %v2285
      %v2287 = vshrl.u32 %v1247, 16
      %v2289 = vor.u32 %v2287, %v2285
      %v2291 = vshll.u32 %v1248, 16
      %v2293 = vrot.slane %v2291, 1
      %v2294 = vsel %vm2202, %v2289, %v2293
      %v2295 = vshrl.u32 %v1248, 16
      %v2297 = vor.u32 %v2295, %v2293
      %v2299 = vshll.u32 %v1249, 16
      %v2301 = vrot.slane %v2299, 1
      %v2302 = vsel %vm2202, %v2297, %v2301
      %v2303 = vshrl.u32 %v1249, 16
      %v2305 = vor.u32 %v2303, %v2301
      %v2307 = vshll.u32 %v1250, 16
      %v2309 = vrot.slane %v2307, 1
      %v2310 = vsel %vm2202, %v2305, %v2309
      %v2311 = vshrl.u32 %v1250, 16
      %v2313 = vor.u32 %v2311, %v2309
      %v2315 = vshll.u32 %v1251, 16
      %v2317 = vrot.slane %v2315, 1
      %v2318 = vsel %vm2202, %v2313, %v2317
      %v2319 = vshrl.u32 %v1251, 16
      %v2321 = vor.u32 %v2319, %v2317
      %v2323 = vshll.u32 %v1252, 16
      %v2325 = vrot.slane %v2323, 1
      %v2326 = vsel %vm2202, %v2321, %v2325
      %v2327 = vshrl.u32 %v1252, 16
      %v2329 = vor.u32 %v2327, %v2325
      %v2331 = vshll.u32 %v1253, 16
      %v2333 = vrot.slane %v2331, 1
      %v2334 = vsel %vm2202, %v2329, %v2333
      %v2335 = vshrl.u32 %v1253, 16
      %v2337 = vor.u32 %v2335, %v2333
      %v2339 = vshll.u32 %v1254, 16
      %v2341 = vrot.slane %v2339, 1
      %v2342 = vsel %vm2202, %v2337, %v2341
      %v2343 = vshrl.u32 %v1254, 16
      %v2345 = vor.u32 %v2343, %v2341
      %v2347 = vshll.u32 %v1255, 16
      %v2349 = vrot.slane %v2347, 1
      %v2350 = vsel %vm2202, %v2345, %v2349
      %v2351 = vshrl.u32 %v1255, 16
      %v2353 = vor.u32 %v2351, %v2349
      %v2355 = vshll.u32 %v1256, 16
      %v2357 = vrot.slane %v2355, 1
      %v2358 = vsel %vm2202, %v2353, %v2357
      %v2359 = vshrl.u32 %v1256, 16
      %v2361 = vor.u32 %v2359, %v2357
      %v2363 = vshll.u32 %v1257, 16
      %v2365 = vrot.slane %v2363, 1
      %v2366 = vsel %vm2202, %v2361, %v2365
      %v2367 = vshrl.u32 %v1257, 16
      %v2369 = vor.u32 %v2367, %v2365
      %2370 = vrot.lane.b32.xlu0 %v2214, 16
      %v2371 = vpop.permute.xlu0 %2370
      %2372 = vrot.lane.b32.xlu0 %v2222, 16
      %v2373 = vpop.permute.xlu0 %2372
      %2374 = vrot.lane.b32.xlu0 %v2230, 16
      %v2375 = vpop.permute.xlu0 %2374
      %2376 = vrot.lane.b32.xlu0 %v2238, 16
      %v2377 = vpop.permute.xlu0 %2376
      %2378 = vrot.lane.b32.xlu0 %v2246, 16
      %v2379 = vpop.permute.xlu0 %2378
      %2380 = vrot.lane.b32.xlu0 %v2254, 16
      %v2381 = vpop.permute.xlu0 %2380
      %2382 = vrot.lane.b32.xlu0 %v2262, 16
      %v2383 = vpop.permute.xlu0 %2382
      %2384 = vrot.lane.b32.xlu0 %v2270, 16
      %v2385 = vpop.permute.xlu0 %2384
      %2386 = vrot.lane.b32.xlu0 %v2278, 16
      %v2387 = vpop.permute.xlu0 %2386
      %2388 = vrot.lane.b32.xlu0 %v2286, 16
      %v2389 = vpop.permute.xlu0 %2388
      %2390 = vrot.lane.b32.xlu0 %v2294, 16
      %v2391 = vpop.permute.xlu0 %2390
      %2392 = vrot.lane.b32.xlu0 %v2302, 16
      %v2393 = vpop.permute.xlu0 %2392
      %2394 = vrot.lane.b32.xlu0 %v2310, 16
      %v2395 = vpop.permute.xlu0 %2394
      %2396 = vrot.lane.b32.xlu0 %v2318, 16
      %v2397 = vpop.permute.xlu0 %2396
      %2398 = vrot.lane.b32.xlu0 %v2326, 16
      %v2399 = vpop.permute.xlu0 %2398
      %2400 = vrot.lane.b32.xlu0 %v2334, 16
      %v2401 = vpop.permute.xlu0 %2400
      %2402 = vrot.lane.b32.xlu0 %v2342, 16
      %v2403 = vpop.permute.xlu0 %2402
      %2404 = vrot.lane.b32.xlu0 %v2350, 16
      %v2405 = vpop.permute.xlu0 %2404
      %2406 = vrot.lane.b32.xlu0 %v2358, 16
      %v2407 = vpop.permute.xlu0 %2406
      %2408 = vrot.lane.b32.xlu0 %v2366, 16
      %v2409 = vpop.permute.xlu0 %2408
      %2410 = vrot.lane.b32.xlu0 %v2369, 16
      %v2411 = vpop.permute.xlu0 %2410
      %vm2412 = vcmask 1046528
      %v2413 = vrot.slane %v1237, 1
      %v2414 = vrot.slane %v1238, 1
      %v2415 = vsel %vm2412, %v2413, %v2414
      %v2416 = vrot.slane %v1239, 1
      %v2417 = vsel %vm2412, %v2414, %v2416
      %v2418 = vrot.slane %v1240, 1
      %v2419 = vsel %vm2412, %v2416, %v2418
      %v2420 = vrot.slane %v1241, 1
      %v2421 = vsel %vm2412, %v2418, %v2420
      %v2422 = vrot.slane %v1242, 1
      %v2423 = vsel %vm2412, %v2420, %v2422
      %v2424 = vrot.slane %v1243, 1
      %v2425 = vsel %vm2412, %v2422, %v2424
      %v2426 = vrot.slane %v1244, 1
      %v2427 = vsel %vm2412, %v2424, %v2426
      %v2428 = vrot.slane %v1245, 1
      %v2429 = vsel %vm2412, %v2426, %v2428
      %v2430 = vrot.slane %v1246, 1
      %v2431 = vsel %vm2412, %v2428, %v2430
      %v2432 = vrot.slane %v1247, 1
      %v2433 = vsel %vm2412, %v2430, %v2432
      %v2434 = vrot.slane %v1248, 1
      %v2435 = vsel %vm2412, %v2432, %v2434
      %v2436 = vrot.slane %v1249, 1
      %v2437 = vsel %vm2412, %v2434, %v2436
      %v2438 = vrot.slane %v1250, 1
      %v2439 = vsel %vm2412, %v2436, %v2438
      %v2440 = vrot.slane %v1251, 1
      %v2441 = vsel %vm2412, %v2438, %v2440
      %v2442 = vrot.slane %v1252, 1
      %v2443 = vsel %vm2412, %v2440, %v2442
      %v2444 = vrot.slane %v1253, 1
      %v2445 = vsel %vm2412, %v2442, %v2444
      %v2446 = vrot.slane %v1254, 1
      %v2447 = vsel %vm2412, %v2444, %v2446
      %v2448 = vrot.slane %v1255, 1
      %v2449 = vsel %vm2412, %v2446, %v2448
      %v2450 = vrot.slane %v1256, 1
      %v2451 = vsel %vm2412, %v2448, %v2450
      %v2452 = vrot.slane %v1257, 1
      %v2453 = vsel %vm2412, %v2450, %v2452
      %2454 = vrot.lane.b32.xlu0 %v2415, 48
      %v2455 = vpop.permute.xlu0 %2454
      %2456 = vrot.lane.b32.xlu0 %v2417, 48
      %v2457 = vpop.permute.xlu0 %2456
      %2458 = vrot.lane.b32.xlu0 %v2419, 48
      %v2459 = vpop.permute.xlu0 %2458
      %2460 = vrot.lane.b32.xlu0 %v2421, 48
      %v2461 = vpop.permute.xlu0 %2460
      %2462 = vrot.lane.b32.xlu0 %v2423, 48
      %v2463 = vpop.permute.xlu0 %2462
      %2464 = vrot.lane.b32.xlu0 %v2425, 48
      %v2465 = vpop.permute.xlu0 %2464
      %2466 = vrot.lane.b32.xlu0 %v2427, 48
      %v2467 = vpop.permute.xlu0 %2466
      %2468 = vrot.lane.b32.xlu0 %v2429, 48
      %v2469 = vpop.permute.xlu0 %2468
      %2470 = vrot.lane.b32.xlu0 %v2431, 48
      %v2471 = vpop.permute.xlu0 %2470
      %2472 = vrot.lane.b32.xlu0 %v2433, 48
      %v2473 = vpop.permute.xlu0 %2472
      %2474 = vrot.lane.b32.xlu0 %v2435, 48
      %v2475 = vpop.permute.xlu0 %2474
      %2476 = vrot.lane.b32.xlu0 %v2437, 48
      %v2477 = vpop.permute.xlu0 %2476
      %2478 = vrot.lane.b32.xlu0 %v2439, 48
      %v2479 = vpop.permute.xlu0 %2478
      %2480 = vrot.lane.b32.xlu0 %v2441, 48
      %v2481 = vpop.permute.xlu0 %2480
      %2482 = vrot.lane.b32.xlu0 %v2443, 48
      %v2483 = vpop.permute.xlu0 %2482
      %2484 = vrot.lane.b32.xlu0 %v2445, 48
      %v2485 = vpop.permute.xlu0 %2484
      %2486 = vrot.lane.b32.xlu0 %v2447, 48
      %v2487 = vpop.permute.xlu0 %2486
      %2488 = vrot.lane.b32.xlu0 %v2449, 48
      %v2489 = vpop.permute.xlu0 %2488
      %2490 = vrot.lane.b32.xlu0 %v2451, 48
      %v2491 = vpop.permute.xlu0 %2490
      %2492 = vrot.lane.b32.xlu0 %v2453, 48
      %v2493 = vpop.permute.xlu0 %2492
      %2494 = vrot.lane.b32.xlu0 %v2452, 48
      %v2495 = vpop.permute.xlu0 %2494
      %v2497 = vrot.slane %v1258, 1
      %v2498 = vsel %vm2412, %v2452, %v2497
      %2499 = vrot.lane.b32.xlu0 %v2417, 80
      %v2500 = vpop.permute.xlu0 %2499
      %2501 = vrot.lane.b32.xlu0 %v2419, 80
      %v2502 = vpop.permute.xlu0 %2501
      %2503 = vrot.lane.b32.xlu0 %v2421, 80
      %v2504 = vpop.permute.xlu0 %2503
      %2505 = vrot.lane.b32.xlu0 %v2423, 80
      %v2506 = vpop.permute.xlu0 %2505
      %2507 = vrot.lane.b32.xlu0 %v2425, 80
      %v2508 = vpop.permute.xlu0 %2507
      %2509 = vrot.lane.b32.xlu0 %v2427, 80
      %v2510 = vpop.permute.xlu0 %2509
      %2511 = vrot.lane.b32.xlu0 %v2429, 80
      %v2512 = vpop.permute.xlu0 %2511
      %2513 = vrot.lane.b32.xlu0 %v2431, 80
      %v2514 = vpop.permute.xlu0 %2513
      %2515 = vrot.lane.b32.xlu0 %v2433, 80
      %v2516 = vpop.permute.xlu0 %2515
      %2517 = vrot.lane.b32.xlu0 %v2435, 80
      %v2518 = vpop.permute.xlu0 %2517
      %2519 = vrot.lane.b32.xlu0 %v2437, 80
      %v2520 = vpop.permute.xlu0 %2519
      %2521 = vrot.lane.b32.xlu0 %v2439, 80
      %v2522 = vpop.permute.xlu0 %2521
      %2523 = vrot.lane.b32.xlu0 %v2441, 80
      %v2524 = vpop.permute.xlu0 %2523
      %2525 = vrot.lane.b32.xlu0 %v2443, 80
      %v2526 = vpop.permute.xlu0 %2525
      %2527 = vrot.lane.b32.xlu0 %v2445, 80
      %v2528 = vpop.permute.xlu0 %2527
      %2529 = vrot.lane.b32.xlu0 %v2447, 80
      %v2530 = vpop.permute.xlu0 %2529
      %2531 = vrot.lane.b32.xlu0 %v2449, 80
      %v2532 = vpop.permute.xlu0 %2531
      %2533 = vrot.lane.b32.xlu0 %v2451, 80
      %v2534 = vpop.permute.xlu0 %2533
      %2535 = vrot.lane.b32.xlu0 %v2453, 80
      %v2536 = vpop.permute.xlu0 %2535
      %2537 = vrot.lane.b32.xlu0 %v2498, 80
      %v2538 = vpop.permute.xlu0 %2537
      %2539 = vrot.lane.b32.xlu0 %v2497, 80
      %v2540 = vpop.permute.xlu0 %2539
      %vm2541 = vsmask.f32 6400
      %v2542 = vrot.slane %v2215, 1
      %v2543 = vrot.slane %v2211, 2
      %v2544 = vor.u32 %v2542, %v2543
      %v2545 = vrot.slane %v2223, 1
      %v2546 = vrot.slane %v2219, 2
      %v2547 = vor.u32 %v2545, %v2546
      %v2548 = vsel %vm2541, %v2544, %v2547
      %v2549 = vrot.slane %v2231, 1
      %v2550 = vrot.slane %v2227, 2
      %v2551 = vor.u32 %v2549, %v2550
      %v2552 = vsel %vm2541, %v2547, %v2551
      %v2553 = vrot.slane %v2239, 1
      %v2554 = vrot.slane %v2235, 2
      %v2555 = vor.u32 %v2553, %v2554
      %v2556 = vsel %vm2541, %v2551, %v2555
      %v2557 = vrot.slane %v2247, 1
      %v2558 = vrot.slane %v2243, 2
      %v2559 = vor.u32 %v2557, %v2558
      %v2560 = vsel %vm2541, %v2555, %v2559
      %v2561 = vrot.slane %v2255, 1
      %v2562 = vrot.slane %v2251, 2
      %v2563 = vor.u32 %v2561, %v2562
      %v2564 = vsel %vm2541, %v2559, %v2563
      %v2565 = vrot.slane %v2263, 1
      %v2566 = vrot.slane %v2259, 2
      %v2567 = vor.u32 %v2565, %v2566
      %v2568 = vsel %vm2541, %v2563, %v2567
      %v2569 = vrot.slane %v2271, 1
      %v2570 = vrot.slane %v2267, 2
      %v2571 = vor.u32 %v2569, %v2570
      %v2572 = vsel %vm2541, %v2567, %v2571
      %v2573 = vrot.slane %v2279, 1
      %v2574 = vrot.slane %v2275, 2
      %v2575 = vor.u32 %v2573, %v2574
      %v2576 = vsel %vm2541, %v2571, %v2575
      %v2577 = vrot.slane %v2287, 1
      %v2578 = vrot.slane %v2283, 2
      %v2579 = vor.u32 %v2577, %v2578
      %v2580 = vsel %vm2541, %v2575, %v2579
      %v2581 = vrot.slane %v2295, 1
      %v2582 = vrot.slane %v2291, 2
      %v2583 = vor.u32 %v2581, %v2582
      %v2584 = vsel %vm2541, %v2579, %v2583
      %v2585 = vrot.slane %v2303, 1
      %v2586 = vrot.slane %v2299, 2
      %v2587 = vor.u32 %v2585, %v2586
      %v2588 = vsel %vm2541, %v2583, %v2587
      %v2589 = vrot.slane %v2311, 1
      %v2590 = vrot.slane %v2307, 2
      %v2591 = vor.u32 %v2589, %v2590
      %v2592 = vsel %vm2541, %v2587, %v2591
      %v2593 = vrot.slane %v2319, 1
      %v2594 = vrot.slane %v2315, 2
      %v2595 = vor.u32 %v2593, %v2594
      %v2596 = vsel %vm2541, %v2591, %v2595
      %v2597 = vrot.slane %v2327, 1
      %v2598 = vrot.slane %v2323, 2
      %v2599 = vor.u32 %v2597, %v2598
      %v2600 = vsel %vm2541, %v2595, %v2599
      %v2601 = vrot.slane %v2335, 1
      %v2602 = vrot.slane %v2331, 2
      %v2603 = vor.u32 %v2601, %v2602
      %v2604 = vsel %vm2541, %v2599, %v2603
      %v2605 = vrot.slane %v2343, 1
      %v2606 = vrot.slane %v2339, 2
      %v2607 = vor.u32 %v2605, %v2606
      %v2608 = vsel %vm2541, %v2603, %v2607
      %v2609 = vrot.slane %v2351, 1
      %v2610 = vrot.slane %v2347, 2
      %v2611 = vor.u32 %v2609, %v2610
      %v2612 = vsel %vm2541, %v2607, %v2611
      %v2613 = vrot.slane %v2359, 1
      %v2614 = vrot.slane %v2355, 2
      %v2615 = vor.u32 %v2613, %v2614
      %v2616 = vsel %vm2541, %v2611, %v2615
      %v2617 = vrot.slane %v2367, 1
      %v2618 = vrot.slane %v2363, 2
      %v2619 = vor.u32 %v2617, %v2618
      %v2620 = vsel %vm2541, %v2615, %v2619
      %v2622 = vshrl.u32 %v1258, 16
      %v2624 = vrot.slane %v2622, 1
      %v2625 = vshll.u32 %v1258, 16
      %v2627 = vrot.slane %v2625, 2
      %v2628 = vor.u32 %v2624, %v2627
      %v2629 = vsel %vm2541, %v2619, %v2628
      %2630 = vrot.lane.b32.xlu0 %v2548, 112
      %v2631 = vpop.permute.xlu0 %2630
      %2632 = vrot.lane.b32.xlu0 %v2552, 112
      %v2633 = vpop.permute.xlu0 %2632
      %2634 = vrot.lane.b32.xlu0 %v2556, 112
      %v2635 = vpop.permute.xlu0 %2634
      %2636 = vrot.lane.b32.xlu0 %v2560, 112
      %v2637 = vpop.permute.xlu0 %2636
      %2638 = vrot.lane.b32.xlu0 %v2564, 112
      %v2639 = vpop.permute.xlu0 %2638
      %2640 = vrot.lane.b32.xlu0 %v2568, 112
      %v2641 = vpop.permute.xlu0 %2640
      %2642 = vrot.lane.b32.xlu0 %v2572, 112
      %v2643 = vpop.permute.xlu0 %2642
      %2644 = vrot.lane.b32.xlu0 %v2576, 112
      %v2645 = vpop.permute.xlu0 %2644
      %2646 = vrot.lane.b32.xlu0 %v2580, 112
      %v2647 = vpop.permute.xlu0 %2646
      %2648 = vrot.lane.b32.xlu0 %v2584, 112
      %v2649 = vpop.permute.xlu0 %2648
      %2650 = vrot.lane.b32.xlu0 %v2588, 112
      %v2651 = vpop.permute.xlu0 %2650
      %2652 = vrot.lane.b32.xlu0 %v2592, 112
      %v2653 = vpop.permute.xlu0 %2652
      %2654 = vrot.lane.b32.xlu0 %v2596, 112
      %v2655 = vpop.permute.xlu0 %2654
      %2656 = vrot.lane.b32.xlu0 %v2600, 112
      %v2657 = vpop.permute.xlu0 %2656
      %2658 = vrot.lane.b32.xlu0 %v2604, 112
      %v2659 = vpop.permute.xlu0 %2658
      %2660 = vrot.lane.b32.xlu0 %v2608, 112
      %v2661 = vpop.permute.xlu0 %2660
      %2662 = vrot.lane.b32.xlu0 %v2612, 112
      %v2663 = vpop.permute.xlu0 %2662
      %2664 = vrot.lane.b32.xlu0 %v2616, 112
      %v2665 = vpop.permute.xlu0 %2664
      %2666 = vrot.lane.b32.xlu0 %v2620, 112
      %v2667 = vpop.permute.xlu0 %2666
      %2668 = vrot.lane.b32.xlu0 %v2629, 112
      %v2669 = vpop.permute.xlu0 %2668
      %2670 = vrot.lane.b32.xlu0 %v2628, 112
      %v2671 = vpop.permute.xlu0 %2670
      %vm2672 = vcmask 1045504
      %v2673 = vrot.slane %v1238, 2
      %v2674 = vrot.slane %v1239, 2
      %v2675 = vsel %vm2672, %v2673, %v2674
      %v2676 = vrot.slane %v1240, 2
      %v2677 = vsel %vm2672, %v2674, %v2676
      %v2678 = vrot.slane %v1241, 2
      %v2679 = vsel %vm2672, %v2676, %v2678
      %v2680 = vrot.slane %v1242, 2
      %v2681 = vsel %vm2672, %v2678, %v2680
      %v2682 = vrot.slane %v1243, 2
      %v2683 = vsel %vm2672, %v2680, %v2682
      %v2684 = vrot.slane %v1244, 2
      %v2685 = vsel %vm2672, %v2682, %v2684
      %v2686 = vrot.slane %v1245, 2
      %v2687 = vsel %vm2672, %v2684, %v2686
      %v2688 = vrot.slane %v1246, 2
      %v2689 = vsel %vm2672, %v2686, %v2688
      %v2690 = vrot.slane %v1247, 2
      %v2691 = vsel %vm2672, %v2688, %v2690
      %v2692 = vrot.slane %v1248, 2
      %v2693 = vsel %vm2672, %v2690, %v2692
      %v2694 = vrot.slane %v1249, 2
      %v2695 = vsel %vm2672, %v2692, %v2694
      %v2696 = vrot.slane %v1250, 2
      %v2697 = vsel %vm2672, %v2694, %v2696
      %v2698 = vrot.slane %v1251, 2
      %v2699 = vsel %vm2672, %v2696, %v2698
      %v2700 = vrot.slane %v1252, 2
      %v2701 = vsel %vm2672, %v2698, %v2700
      %v2702 = vrot.slane %v1253, 2
      %v2703 = vsel %vm2672, %v2700, %v2702
      %v2704 = vrot.slane %v1254, 2
      %v2705 = vsel %vm2672, %v2702, %v2704
      %v2706 = vrot.slane %v1255, 2
      %v2707 = vsel %vm2672, %v2704, %v2706
      %v2708 = vrot.slane %v1256, 2
      %v2709 = vsel %vm2672, %v2706, %v2708
      %v2710 = vrot.slane %v1257, 2
      %v2711 = vsel %vm2672, %v2708, %v2710
      %v2712 = vrot.slane %v1258, 2
      %v2713 = vsel %vm2672, %v2710, %v2712
      %2714 = vrot.lane.b32.xlu0 %v2675, 16
      %v2715 = vpop.permute.xlu0 %2714
      %2716 = vrot.lane.b32.xlu0 %v2677, 16
      %v2717 = vpop.permute.xlu0 %2716
      %2718 = vrot.lane.b32.xlu0 %v2679, 16
      %v2719 = vpop.permute.xlu0 %2718
      %2720 = vrot.lane.b32.xlu0 %v2681, 16
      %v2721 = vpop.permute.xlu0 %2720
      %2722 = vrot.lane.b32.xlu0 %v2683, 16
      %v2723 = vpop.permute.xlu0 %2722
      %2724 = vrot.lane.b32.xlu0 %v2685, 16
      %v2725 = vpop.permute.xlu0 %2724
      %2726 = vrot.lane.b32.xlu0 %v2687, 16
      %v2727 = vpop.permute.xlu0 %2726
      %2728 = vrot.lane.b32.xlu0 %v2689, 16
      %v2729 = vpop.permute.xlu0 %2728
      %2730 = vrot.lane.b32.xlu0 %v2691, 16
      %v2731 = vpop.permute.xlu0 %2730
      %2732 = vrot.lane.b32.xlu0 %v2693, 16
      %v2733 = vpop.permute.xlu0 %2732
      %2734 = vrot.lane.b32.xlu0 %v2695, 16
      %v2735 = vpop.permute.xlu0 %2734
      %2736 = vrot.lane.b32.xlu0 %v2697, 16
      %v2737 = vpop.permute.xlu0 %2736
      %2738 = vrot.lane.b32.xlu0 %v2699, 16
      %v2739 = vpop.permute.xlu0 %2738
      %2740 = vrot.lane.b32.xlu0 %v2701, 16
      %v2741 = vpop.permute.xlu0 %2740
      %2742 = vrot.lane.b32.xlu0 %v2703, 16
      %v2743 = vpop.permute.xlu0 %2742
      %2744 = vrot.lane.b32.xlu0 %v2705, 16
      %v2745 = vpop.permute.xlu0 %2744
      %2746 = vrot.lane.b32.xlu0 %v2707, 16
      %v2747 = vpop.permute.xlu0 %2746
      %2748 = vrot.lane.b32.xlu0 %v2709, 16
      %v2749 = vpop.permute.xlu0 %2748
      %2750 = vrot.lane.b32.xlu0 %v2711, 16
      %v2751 = vpop.permute.xlu0 %2750
      %2752 = vrot.lane.b32.xlu0 %v2713, 16
      %v2753 = vpop.permute.xlu0 %2752
      %2754 = vrot.lane.b32.xlu0 %v2712, 16
      %v2755 = vpop.permute.xlu0 %2754
      %v2757 = vrot.slane %v1259, 2
      %v2758 = vsel %vm2672, %v2712, %v2757
      %2759 = vrot.lane.b32.xlu0 %v2677, 48
      %v2760 = vpop.permute.xlu0 %2759
      %2761 = vrot.lane.b32.xlu0 %v2679, 48
      %v2762 = vpop.permute.xlu0 %2761
      %2763 = vrot.lane.b32.xlu0 %v2681, 48
      %v2764 = vpop.permute.xlu0 %2763
      %2765 = vrot.lane.b32.xlu0 %v2683, 48
      %v2766 = vpop.permute.xlu0 %2765
      %2767 = vrot.lane.b32.xlu0 %v2685, 48
      %v2768 = vpop.permute.xlu0 %2767
      %2769 = vrot.lane.b32.xlu0 %v2687, 48
      %v2770 = vpop.permute.xlu0 %2769
      %2771 = vrot.lane.b32.xlu0 %v2689, 48
      %v2772 = vpop.permute.xlu0 %2771
      %2773 = vrot.lane.b32.xlu0 %v2691, 48
      %v2774 = vpop.permute.xlu0 %2773
      %2775 = vrot.lane.b32.xlu0 %v2693, 48
      %v2776 = vpop.permute.xlu0 %2775
      %2777 = vrot.lane.b32.xlu0 %v2695, 48
      %v2778 = vpop.permute.xlu0 %2777
      %2779 = vrot.lane.b32.xlu0 %v2697, 48
      %v2780 = vpop.permute.xlu0 %2779
      %2781 = vrot.lane.b32.xlu0 %v2699, 48
      %v2782 = vpop.permute.xlu0 %2781
      %2783 = vrot.lane.b32.xlu0 %v2701, 48
      %v2784 = vpop.permute.xlu0 %2783
      %2785 = vrot.lane.b32.xlu0 %v2703, 48
      %v2786 = vpop.permute.xlu0 %2785
      %2787 = vrot.lane.b32.xlu0 %v2705, 48
      %v2788 = vpop.permute.xlu0 %2787
      %2789 = vrot.lane.b32.xlu0 %v2707, 48
      %v2790 = vpop.permute.xlu0 %2789
      %2791 = vrot.lane.b32.xlu0 %v2709, 48
      %v2792 = vpop.permute.xlu0 %2791
      %2793 = vrot.lane.b32.xlu0 %v2711, 48
      %v2794 = vpop.permute.xlu0 %2793
      %2795 = vrot.lane.b32.xlu0 %v2713, 48
      %v2796 = vpop.permute.xlu0 %2795
      %2797 = vrot.lane.b32.xlu0 %v2758, 48
      %v2798 = vpop.permute.xlu0 %2797
      %2799 = vrot.lane.b32.xlu0 %v2757, 48
      %v2800 = vpop.permute.xlu0 %2799
      %vm2801 = vsmask.f32 5376
      %v2802 = vrot.slane %v2223, 2
      %v2803 = vrot.slane %v2219, 3
      %v2804 = vor.u32 %v2802, %v2803
      %v2805 = vrot.slane %v2231, 2
      %v2806 = vrot.slane %v2227, 3
      %v2807 = vor.u32 %v2805, %v2806
      %v2808 = vsel %vm2801, %v2804, %v2807
      %v2809 = vrot.slane %v2239, 2
      %v2810 = vrot.slane %v2235, 3
      %v2811 = vor.u32 %v2809, %v2810
      %v2812 = vsel %vm2801, %v2807, %v2811
      %v2813 = vrot.slane %v2247, 2
      %v2814 = vrot.slane %v2243, 3
      %v2815 = vor.u32 %v2813, %v2814
      %v2816 = vsel %vm2801, %v2811, %v2815
      %v2817 = vrot.slane %v2255, 2
      %v2818 = vrot.slane %v2251, 3
      %v2819 = vor.u32 %v2817, %v2818
      %v2820 = vsel %vm2801, %v2815, %v2819
      %v2821 = vrot.slane %v2263, 2
      %v2822 = vrot.slane %v2259, 3
      %v2823 = vor.u32 %v2821, %v2822
      %v2824 = vsel %vm2801, %v2819, %v2823
      %v2825 = vrot.slane %v2271, 2
      %v2826 = vrot.slane %v2267, 3
      %v2827 = vor.u32 %v2825, %v2826
      %v2828 = vsel %vm2801, %v2823, %v2827
      %v2829 = vrot.slane %v2279, 2
      %v2830 = vrot.slane %v2275, 3
      %v2831 = vor.u32 %v2829, %v2830
      %v2832 = vsel %vm2801, %v2827, %v2831
      %v2833 = vrot.slane %v2287, 2
      %v2834 = vrot.slane %v2283, 3
      %v2835 = vor.u32 %v2833, %v2834
      %v2836 = vsel %vm2801, %v2831, %v2835
      %v2837 = vrot.slane %v2295, 2
      %v2838 = vrot.slane %v2291, 3
      %v2839 = vor.u32 %v2837, %v2838
      %v2840 = vsel %vm2801, %v2835, %v2839
      %v2841 = vrot.slane %v2303, 2
      %v2842 = vrot.slane %v2299, 3
      %v2843 = vor.u32 %v2841, %v2842
      %v2844 = vsel %vm2801, %v2839, %v2843
      %v2845 = vrot.slane %v2311, 2
      %v2846 = vrot.slane %v2307, 3
      %v2847 = vor.u32 %v2845, %v2846
      %v2848 = vsel %vm2801, %v2843, %v2847
      %v2849 = vrot.slane %v2319, 2
      %v2850 = vrot.slane %v2315, 3
      %v2851 = vor.u32 %v2849, %v2850
      %v2852 = vsel %vm2801, %v2847, %v2851
      %v2853 = vrot.slane %v2327, 2
      %v2854 = vrot.slane %v2323, 3
      %v2855 = vor.u32 %v2853, %v2854
      %v2856 = vsel %vm2801, %v2851, %v2855
      %v2857 = vrot.slane %v2335, 2
      %v2858 = vrot.slane %v2331, 3
      %v2859 = vor.u32 %v2857, %v2858
      %v2860 = vsel %vm2801, %v2855, %v2859
      %v2861 = vrot.slane %v2343, 2
      %v2862 = vrot.slane %v2339, 3
      %v2863 = vor.u32 %v2861, %v2862
      %v2864 = vsel %vm2801, %v2859, %v2863
      %v2865 = vrot.slane %v2351, 2
      %v2866 = vrot.slane %v2347, 3
      %v2867 = vor.u32 %v2865, %v2866
      %v2868 = vsel %vm2801, %v2863, %v2867
      %v2869 = vrot.slane %v2359, 2
      %v2870 = vrot.slane %v2355, 3
      %v2871 = vor.u32 %v2869, %v2870
      %v2872 = vsel %vm2801, %v2867, %v2871
      %v2873 = vrot.slane %v2367, 2
      %v2874 = vrot.slane %v2363, 3
      %v2875 = vor.u32 %v2873, %v2874
      %v2876 = vsel %vm2801, %v2871, %v2875
      %v2877 = vrot.slane %v2622, 2
      %v2878 = vrot.slane %v2625, 3
      %v2879 = vor.u32 %v2877, %v2878
      %v2880 = vsel %vm2801, %v2875, %v2879
      %v2882 = vshrl.u32 %v1259, 16
      %v2884 = vrot.slane %v2882, 2
      %v2885 = vshll.u32 %v1259, 16
      %v2887 = vrot.slane %v2885, 3
      %v2888 = vor.u32 %v2884, %v2887
      %v2889 = vsel %vm2801, %v2879, %v2888
      %2890 = vrot.lane.b32.xlu0 %v2808, 80
      %v2891 = vpop.permute.xlu0 %2890
      %2892 = vrot.lane.b32.xlu0 %v2812, 80
      %v2893 = vpop.permute.xlu0 %2892
      %2894 = vrot.lane.b32.xlu0 %v2816, 80
      %v2895 = vpop.permute.xlu0 %2894
      %2896 = vrot.lane.b32.xlu0 %v2820, 80
      %v2897 = vpop.permute.xlu0 %2896
      %2898 = vrot.lane.b32.xlu0 %v2824, 80
      %v2899 = vpop.permute.xlu0 %2898
      %2900 = vrot.lane.b32.xlu0 %v2828, 80
      %v2901 = vpop.permute.xlu0 %2900
      %2902 = vrot.lane.b32.xlu0 %v2832, 80
      %v2903 = vpop.permute.xlu0 %2902
      %2904 = vrot.lane.b32.xlu0 %v2836, 80
      %v2905 = vpop.permute.xlu0 %2904
      %2906 = vrot.lane.b32.xlu0 %v2840, 80
      %v2907 = vpop.permute.xlu0 %2906
      %2908 = vrot.lane.b32.xlu0 %v2844, 80
      %v2909 = vpop.permute.xlu0 %2908
      %2910 = vrot.lane.b32.xlu0 %v2848, 80
      %v2911 = vpop.permute.xlu0 %2910
      %2912 = vrot.lane.b32.xlu0 %v2852, 80
      %v2913 = vpop.permute.xlu0 %2912
      %2914 = vrot.lane.b32.xlu0 %v2856, 80
      %v2915 = vpop.permute.xlu0 %2914
      %2916 = vrot.lane.b32.xlu0 %v2860, 80
      %v2917 = vpop.permute.xlu0 %2916
      %2918 = vrot.lane.b32.xlu0 %v2864, 80
      %v2919 = vpop.permute.xlu0 %2918
      %2920 = vrot.lane.b32.xlu0 %v2868, 80
      %v2921 = vpop.permute.xlu0 %2920
      %2922 = vrot.lane.b32.xlu0 %v2872, 80
      %v2923 = vpop.permute.xlu0 %2922
      %2924 = vrot.lane.b32.xlu0 %v2876, 80
      %v2925 = vpop.permute.xlu0 %2924
      %2926 = vrot.lane.b32.xlu0 %v2880, 80
      %v2927 = vpop.permute.xlu0 %2926
      %2928 = vrot.lane.b32.xlu0 %v2889, 80
      %v2929 = vpop.permute.xlu0 %2928
      %2930 = vrot.lane.b32.xlu0 %v2888, 80
      %v2931 = vpop.permute.xlu0 %2930
      %vm2932 = vcmask 1044480
      %v2933 = vrot.slane %v1239, 3
      %v2934 = vrot.slane %v1240, 3
      %v2935 = vsel %vm2932, %v2933, %v2934
      %v2936 = vrot.slane %v1241, 3
      %v2937 = vsel %vm2932, %v2934, %v2936
      %v2938 = vrot.slane %v1242, 3
      %v2939 = vsel %vm2932, %v2936, %v2938
      %v2940 = vrot.slane %v1243, 3
      %v2941 = vsel %vm2932, %v2938, %v2940
      %v2942 = vrot.slane %v1244, 3
      %v2943 = vsel %vm2932, %v2940, %v2942
      %v2944 = vrot.slane %v1245, 3
      %v2945 = vsel %vm2932, %v2942, %v2944
      %v2946 = vrot.slane %v1246, 3
      %v2947 = vsel %vm2932, %v2944, %v2946
      %v2948 = vrot.slane %v1247, 3
      %v2949 = vsel %vm2932, %v2946, %v2948
      %v2950 = vrot.slane %v1248, 3
      %v2951 = vsel %vm2932, %v2948, %v2950
      %v2952 = vrot.slane %v1249, 3
      %v2953 = vsel %vm2932, %v2950, %v2952
      %v2954 = vrot.slane %v1250, 3
      %v2955 = vsel %vm2932, %v2952, %v2954
      %v2956 = vrot.slane %v1251, 3
      %v2957 = vsel %vm2932, %v2954, %v2956
      %v2958 = vrot.slane %v1252, 3
      %v2959 = vsel %vm2932, %v2956, %v2958
      %v2960 = vrot.slane %v1253, 3
      %v2961 = vsel %vm2932, %v2958, %v2960
      %v2962 = vrot.slane %v1254, 3
      %v2963 = vsel %vm2932, %v2960, %v2962
      %v2964 = vrot.slane %v1255, 3
      %v2965 = vsel %vm2932, %v2962, %v2964
      %v2966 = vrot.slane %v1256, 3
      %v2967 = vsel %vm2932, %v2964, %v2966
      %v2968 = vrot.slane %v1257, 3
      %v2969 = vsel %vm2932, %v2966, %v2968
      %v2970 = vrot.slane %v1258, 3
      %v2971 = vsel %vm2932, %v2968, %v2970
      %v2972 = vrot.slane %v1259, 3
      %v2973 = vsel %vm2932, %v2970, %v2972
      %2974 = vrot.lane.b32.xlu0 %v2935, 112
      %v2975 = vpop.permute.xlu0 %2974
      %2976 = vrot.lane.b32.xlu0 %v2937, 112
      %v2977 = vpop.permute.xlu0 %2976
      %2978 = vrot.lane.b32.xlu0 %v2939, 112
      %v2979 = vpop.permute.xlu0 %2978
      %2980 = vrot.lane.b32.xlu0 %v2941, 112
      %v2981 = vpop.permute.xlu0 %2980
      %2982 = vrot.lane.b32.xlu0 %v2943, 112
      %v2983 = vpop.permute.xlu0 %2982
      %2984 = vrot.lane.b32.xlu0 %v2945, 112
      %v2985 = vpop.permute.xlu0 %2984
      %2986 = vrot.lane.b32.xlu0 %v2947, 112
      %v2987 = vpop.permute.xlu0 %2986
      %2988 = vrot.lane.b32.xlu0 %v2949, 112
      %v2989 = vpop.permute.xlu0 %2988
      %2990 = vrot.lane.b32.xlu0 %v2951, 112
      %v2991 = vpop.permute.xlu0 %2990
      %2992 = vrot.lane.b32.xlu0 %v2953, 112
      %v2993 = vpop.permute.xlu0 %2992
      %2994 = vrot.lane.b32.xlu0 %v2955, 112
      %v2995 = vpop.permute.xlu0 %2994
      %2996 = vrot.lane.b32.xlu0 %v2957, 112
      %v2997 = vpop.permute.xlu0 %2996
      %2998 = vrot.lane.b32.xlu0 %v2959, 112
      %v2999 = vpop.permute.xlu0 %2998
      %3000 = vrot.lane.b32.xlu0 %v2961, 112
      %v3001 = vpop.permute.xlu0 %3000
      %3002 = vrot.lane.b32.xlu0 %v2963, 112
      %v3003 = vpop.permute.xlu0 %3002
      %3004 = vrot.lane.b32.xlu0 %v2965, 112
      %v3005 = vpop.permute.xlu0 %3004
      %3006 = vrot.lane.b32.xlu0 %v2967, 112
      %v3007 = vpop.permute.xlu0 %3006
      %3008 = vrot.lane.b32.xlu0 %v2969, 112
      %v3009 = vpop.permute.xlu0 %3008
      %3010 = vrot.lane.b32.xlu0 %v2971, 112
      %v3011 = vpop.permute.xlu0 %3010
      %3012 = vrot.lane.b32.xlu0 %v2973, 112
      %v3013 = vpop.permute.xlu0 %3012
      %3014 = vrot.lane.b32.xlu0 %v2972, 112
      %v3015 = vpop.permute.xlu0 %3014
      %vm3016 = vcmask 261120
      %v3019 = vsel %vm3016, %v2161, %v2371
      %v3022 = vsel %vm3016, %v2163, %v2373
      %v3025 = vsel %vm3016, %v2165, %v2375
      %v3028 = vsel %vm3016, %v2167, %v2377
      %v3031 = vsel %vm3016, %v2169, %v2379
      %v3034 = vsel %vm3016, %v2171, %v2381
      %v3037 = vsel %vm3016, %v2173, %v2383
      %v3040 = vsel %vm3016, %v2175, %v2385
      %v3043 = vsel %vm3016, %v2177, %v2387
      %v3046 = vsel %vm3016, %v2179, %v2389
      %v3049 = vsel %vm3016, %v2181, %v2391
      %v3052 = vsel %vm3016, %v2183, %v2393
      %v3055 = vsel %vm3016, %v2185, %v2395
      %v3058 = vsel %vm3016, %v2187, %v2397
      %v3061 = vsel %vm3016, %v2189, %v2399
      %v3064 = vsel %vm3016, %v2191, %v2401
      %v3067 = vsel %vm3016, %v2193, %v2403
      %v3070 = vsel %vm3016, %v2195, %v2405
      %v3073 = vsel %vm3016, %v2197, %v2407
      %v3076 = vsel %vm3016, %v2199, %v2409
      %v3079 = vsel %vm3016, %v2201, %v2411
      %vm3080 = vcmask 523264
      %v3082 = vsel %vm3080, %v3019, %v2455
      %v3084 = vsel %vm3080, %v3022, %v2457
      %v3086 = vsel %vm3080, %v3025, %v2459
      %v3088 = vsel %vm3080, %v3028, %v2461
      %v3090 = vsel %vm3080, %v3031, %v2463
      %v3092 = vsel %vm3080, %v3034, %v2465
      %v3094 = vsel %vm3080, %v3037, %v2467
      %v3096 = vsel %vm3080, %v3040, %v2469
      %v3098 = vsel %vm3080, %v3043, %v2471
      %v3100 = vsel %vm3080, %v3046, %v2473
      %v3102 = vsel %vm3080, %v3049, %v2475
      %v3104 = vsel %vm3080, %v3052, %v2477
      %v3106 = vsel %vm3080, %v3055, %v2479
      %v3108 = vsel %vm3080, %v3058, %v2481
      %v3110 = vsel %vm3080, %v3061, %v2483
      %v3112 = vsel %vm3080, %v3064, %v2485
      %v3114 = vsel %vm3080, %v3067, %v2487
      %v3116 = vsel %vm3080, %v3070, %v2489
      %v3118 = vsel %vm3080, %v3073, %v2491
      %v3120 = vsel %vm3080, %v3076, %v2493
      %v3122 = vsel %vm3080, %v3079, %v2495
      %vm3123 = vcmask 785408
      %v3125 = vsel %vm3123, %v3082, %v2500
      %v3127 = vsel %vm3123, %v3084, %v2502
      %v3129 = vsel %vm3123, %v3086, %v2504
      %v3131 = vsel %vm3123, %v3088, %v2506
      %v3133 = vsel %vm3123, %v3090, %v2508
      %v3135 = vsel %vm3123, %v3092, %v2510
      %v3137 = vsel %vm3123, %v3094, %v2512
      %v3139 = vsel %vm3123, %v3096, %v2514
      %v3141 = vsel %vm3123, %v3098, %v2516
      %v3143 = vsel %vm3123, %v3100, %v2518
      %v3145 = vsel %vm3123, %v3102, %v2520
      %v3147 = vsel %vm3123, %v3104, %v2522
      %v3149 = vsel %vm3123, %v3106, %v2524
      %v3151 = vsel %vm3123, %v3108, %v2526
      %v3153 = vsel %vm3123, %v3110, %v2528
      %v3155 = vsel %vm3123, %v3112, %v2530
      %v3157 = vsel %vm3123, %v3114, %v2532
      %v3159 = vsel %vm3123, %v3116, %v2534
      %v3161 = vsel %vm3123, %v3118, %v2536
      %v3163 = vsel %vm3123, %v3120, %v2538
      %v3165 = vsel %vm3123, %v3122, %v2540
      %v3168 = vsel %vm3016, %v2631, %v2715
      %v3171 = vsel %vm3016, %v2633, %v2717
      %v3174 = vsel %vm3016, %v2635, %v2719
      %v3177 = vsel %vm3016, %v2637, %v2721
      %v3180 = vsel %vm3016, %v2639, %v2723
      %v3183 = vsel %vm3016, %v2641, %v2725
      %v3186 = vsel %vm3016, %v2643, %v2727
      %v3189 = vsel %vm3016, %v2645, %v2729
      %v3192 = vsel %vm3016, %v2647, %v2731
      %v3195 = vsel %vm3016, %v2649, %v2733
      %v3198 = vsel %vm3016, %v2651, %v2735
      %v3201 = vsel %vm3016, %v2653, %v2737
      %v3204 = vsel %vm3016, %v2655, %v2739
      %v3207 = vsel %vm3016, %v2657, %v2741
      %v3210 = vsel %vm3016, %v2659, %v2743
      %v3213 = vsel %vm3016, %v2661, %v2745
      %v3216 = vsel %vm3016, %v2663, %v2747
      %v3219 = vsel %vm3016, %v2665, %v2749
      %v3222 = vsel %vm3016, %v2667, %v2751
      %v3225 = vsel %vm3016, %v2669, %v2753
      %v3228 = vsel %vm3016, %v2671, %v2755
      %v3230 = vsel %vm3080, %v3168, %v2760
      %v3232 = vsel %vm3080, %v3171, %v2762
      %v3234 = vsel %vm3080, %v3174, %v2764
      %v3236 = vsel %vm3080, %v3177, %v2766
      %v3238 = vsel %vm3080, %v3180, %v2768
      %v3240 = vsel %vm3080, %v3183, %v2770
      %v3242 = vsel %vm3080, %v3186, %v2772
      %v3244 = vsel %vm3080, %v3189, %v2774
      %v3246 = vsel %vm3080, %v3192, %v2776
      %v3248 = vsel %vm3080, %v3195, %v2778
      %v3250 = vsel %vm3080, %v3198, %v2780
      %v3252 = vsel %vm3080, %v3201, %v2782
      %v3254 = vsel %vm3080, %v3204, %v2784
      %v3256 = vsel %vm3080, %v3207, %v2786
      %v3258 = vsel %vm3080, %v3210, %v2788
      %v3260 = vsel %vm3080, %v3213, %v2790
      %v3262 = vsel %vm3080, %v3216, %v2792
      %v3264 = vsel %vm3080, %v3219, %v2794
      %v3266 = vsel %vm3080, %v3222, %v2796
      %v3268 = vsel %vm3080, %v3225, %v2798
      %v3270 = vsel %vm3080, %v3228, %v2800
      %v3272 = vsel %vm3123, %v3230, %v2891
      %v3274 = vsel %vm3123, %v3232, %v2893
      %v3276 = vsel %vm3123, %v3234, %v2895
      %v3278 = vsel %vm3123, %v3236, %v2897
      %v3280 = vsel %vm3123, %v3238, %v2899
      %v3282 = vsel %vm3123, %v3240, %v2901
      %v3284 = vsel %vm3123, %v3242, %v2903
      %v3286 = vsel %vm3123, %v3244, %v2905
      %v3288 = vsel %vm3123, %v3246, %v2907
      %v3290 = vsel %vm3123, %v3248, %v2909
      %v3292 = vsel %vm3123, %v3250, %v2911
      %v3294 = vsel %vm3123, %v3252, %v2913
      %v3296 = vsel %vm3123, %v3254, %v2915
      %v3298 = vsel %vm3123, %v3256, %v2917
      %v3300 = vsel %vm3123, %v3258, %v2919
      %v3302 = vsel %vm3123, %v3260, %v2921
      %v3304 = vsel %vm3123, %v3262, %v2923
      %v3306 = vsel %vm3123, %v3264, %v2925
      %v3308 = vsel %vm3123, %v3266, %v2927
      %v3310 = vsel %vm3123, %v3268, %v2929
      %v3312 = vsel %vm3123, %v3270, %v2931
      %v3313 = vld [vmem:[%s4] sm:$0xf]
      %v3314 = vld [vmem:[%s4 + $0x4] sm:$0xf]
      %v3315 = vld [vmem:[%s4 + $0x8] sm:$0xf]
      %v3316 = vld [vmem:[%s4 + $0xc] sm:$0xf]
      %v3317 = vld [vmem:[%s4 + $0x10] sm:$0xf]
      %v3318 = vld [vmem:[%s4 + $0x14] sm:$0xf]
      %v3319 = vld [vmem:[%s4 + $0x18] sm:$0xf]
      %v3320 = vld [vmem:[%s4 + $0x1c] sm:$0xf]
      %v3321 = vld [vmem:[%s4 + $0x20] sm:$0xf]
      %v3322 = vld [vmem:[%s4 + $0x24] sm:$0xf]
      %v3323 = vld [vmem:[%s4 + $0x28] sm:$0xf]
      %v3324 = vld [vmem:[%s4 + $0x2c] sm:$0xf]
      %v3325 = vld [vmem:[%s4 + $0x30] sm:$0xf]
      %v3326 = vld [vmem:[%s4 + $0x34] sm:$0xf]
      %v3327 = vld [vmem:[%s4 + $0x38] sm:$0xf]
      %v3328 = vld [vmem:[%s4 + $0x3c] sm:$0xf]
      %v3329 = vld [vmem:[%s4 + $0x40] sm:$0xf]
      %v3330 = vld [vmem:[%s4 + $0x44] sm:$0xf]
      %v3331 = vld [vmem:[%s4 + $0x48] sm:$0xf]
      %v3332 = vld [vmem:[%s4 + $0x4c] sm:$0xf]
      %v3333 = vld [vmem:[%s4 + $0x50] sm:$0xf]
      %v3334 = vld [vmem:[%s4 + $0x54] sm:$0xf]
      %v3335 = vld [vmem:[%s4 + $0x58] sm:$0xf]
      %v3336 = vld [vmem:[%s4 + $0x5c] sm:$0xf]
      %v3337 = vld [vmem:[%s4 + $0x60] sm:$0xf]
      %v3338 = vld [vmem:[%s4 + $0x64] sm:$0xf]
      %v3339 = vld [vmem:[%s4 + $0x68] sm:$0xf]
      %v3340 = vld [vmem:[%s4 + $0x6c] sm:$0xf]
      %v3341 = vld [vmem:[%s4 + $0x70] sm:$0xf]
      %v3342 = vld [vmem:[%s4 + $0x74] sm:$0xf]
      %v3343 = vld [vmem:[%s4 + $0x78] sm:$0xf]
      %v3344 = vld [vmem:[%s4 + $0x7c] sm:$0xf]
      %v3345 = vld [vmem:[%s4 + $0x80] sm:$0xf]
      %v3346 = vld [vmem:[%s4 + $0x84] sm:$0xf]
      %v3347 = vld [vmem:[%s4 + $0x88] sm:$0xf]
      %v3348 = vld [vmem:[%s4 + $0x8c] sm:$0xf]
      %v3349 = vld [vmem:[%s5] sm:$0x1]
      %v3351 = vlaneseq
      %v3352 = vshrl.u32 %v3351, 7
      %v3353 = vsub.s32 0, %v3352
      %v3354 = vrot.slane %v3349, %v3353
      %v3356 = vshrl.u32 %v3125, 16
      %v3358 = vrot.slane %v3356, 2
      %v3359 = vshll.u32 %v3125, 16
      %v3361 = vrot.slane %v3359, 3
      %v3362 = vor.u32 %v3358, %v3361
      %v3363 = vshrl.u32 %v3127, 16
      %v3365 = vrot.slane %v3363, 2
      %v3366 = vshll.u32 %v3127, 16
      %v3368 = vrot.slane %v3366, 3
      %v3369 = vor.u32 %v3365, %v3368
      %v3370 = vsel %vm2801, %v3362, %v3369
      %v3371 = vshrl.u32 %v3272, 16
      %v3373 = vrot.slane %v3371, 2
      %v3374 = vshll.u32 %v3272, 16
      %v3376 = vrot.slane %v3374, 3
      %v3377 = vor.u32 %v3373, %v3376
      %v3378 = vshrl.u32 %v3274, 16
      %v3380 = vrot.slane %v3378, 2
      %v3381 = vshll.u32 %v3274, 16
      %v3383 = vrot.slane %v3381, 3
      %v3384 = vor.u32 %v3380, %v3383
      %v3385 = vsel %vm2801, %v3377, %v3384
      %v3387 = vshrl.u32 %v2975, 16
      %v3389 = vrot.slane %v3387, 2
      %v3390 = vshll.u32 %v2975, 16
      %v3392 = vrot.slane %v3390, 3
      %v3393 = vor.u32 %v3389, %v3392
      %v3395 = vshrl.u32 %v2977, 16
      %v3397 = vrot.slane %v3395, 2
      %v3398 = vshll.u32 %v2977, 16
      %v3400 = vrot.slane %v3398, 3
      %v3401 = vor.u32 %v3397, %v3400
      %v3402 = vsel %vm2801, %v3393, %v3401
      %v3403 = vshrl.u32 %v3129, 16
      %v3405 = vrot.slane %v3403, 2
      %v3406 = vshll.u32 %v3129, 16
      %v3408 = vrot.slane %v3406, 3
      %v3409 = vor.u32 %v3405, %v3408
      %v3410 = vsel %vm2801, %v3369, %v3409
      %v3411 = vshrl.u32 %v3276, 16
      %v3413 = vrot.slane %v3411, 2
      %v3414 = vshll.u32 %v3276, 16
      %v3416 = vrot.slane %v3414, 3
      %v3417 = vor.u32 %v3413, %v3416
      %v3418 = vsel %vm2801, %v3384, %v3417
      %v3420 = vshrl.u32 %v2979, 16
      %v3422 = vrot.slane %v3420, 2
      %v3423 = vshll.u32 %v2979, 16
      %v3425 = vrot.slane %v3423, 3
      %v3426 = vor.u32 %v3422, %v3425
      %v3427 = vsel %vm2801, %v3401, %v3426
      %v3428 = vshrl.u32 %v3131, 16
      %v3430 = vrot.slane %v3428, 2
      %v3431 = vshll.u32 %v3131, 16
      %v3433 = vrot.slane %v3431, 3
      %v3434 = vor.u32 %v3430, %v3433
      %v3435 = vsel %vm2801, %v3409, %v3434
      %v3436 = vshrl.u32 %v3278, 16
      %v3438 = vrot.slane %v3436, 2
      %v3439 = vshll.u32 %v3278, 16
      %v3441 = vrot.slane %v3439, 3
      %v3442 = vor.u32 %v3438, %v3441
      %v3443 = vsel %vm2801, %v3417, %v3442
      %v3445 = vshrl.u32 %v2981, 16
      %v3447 = vrot.slane %v3445, 2
      %v3448 = vshll.u32 %v2981, 16
      %v3450 = vrot.slane %v3448, 3
      %v3451 = vor.u32 %v3447, %v3450
      %v3452 = vsel %vm2801, %v3426, %v3451
      %v3453 = vshrl.u32 %v3133, 16
      %v3455 = vrot.slane %v3453, 2
      %v3456 = vshll.u32 %v3133, 16
      %v3458 = vrot.slane %v3456, 3
      %v3459 = vor.u32 %v3455, %v3458
      %v3460 = vsel %vm2801, %v3434, %v3459
      %v3461 = vshrl.u32 %v3280, 16
      %v3463 = vrot.slane %v3461, 2
      %v3464 = vshll.u32 %v3280, 16
      %v3466 = vrot.slane %v3464, 3
      %v3467 = vor.u32 %v3463, %v3466
      %v3468 = vsel %vm2801, %v3442, %v3467
      %v3470 = vshrl.u32 %v2983, 16
      %v3472 = vrot.slane %v3470, 2
      %v3473 = vshll.u32 %v2983, 16
      %v3475 = vrot.slane %v3473, 3
      %v3476 = vor.u32 %v3472, %v3475
      %v3477 = vsel %vm2801, %v3451, %v3476
      %v3478 = vshrl.u32 %v3135, 16
      %v3480 = vrot.slane %v3478, 2
      %v3481 = vshll.u32 %v3135, 16
      %v3483 = vrot.slane %v3481, 3
      %v3484 = vor.u32 %v3480, %v3483
      %v3485 = vsel %vm2801, %v3459, %v3484
      %v3486 = vshrl.u32 %v3282, 16
      %v3488 = vrot.slane %v3486, 2
      %v3489 = vshll.u32 %v3282, 16
      %v3491 = vrot.slane %v3489, 3
      %v3492 = vor.u32 %v3488, %v3491
      %v3493 = vsel %vm2801, %v3467, %v3492
      %v3495 = vshrl.u32 %v2985, 16
      %v3497 = vrot.slane %v3495, 2
      %v3498 = vshll.u32 %v2985, 16
      %v3500 = vrot.slane %v3498, 3
      %v3501 = vor.u32 %v3497, %v3500
      %v3502 = vsel %vm2801, %v3476, %v3501
      %v3503 = vshrl.u32 %v3137, 16
      %v3505 = vrot.slane %v3503, 2
      %v3506 = vshll.u32 %v3137, 16
      %v3508 = vrot.slane %v3506, 3
      %v3509 = vor.u32 %v3505, %v3508
      %v3510 = vsel %vm2801, %v3484, %v3509
      %v3511 = vshrl.u32 %v3284, 16
      %v3513 = vrot.slane %v3511, 2
      %v3514 = vshll.u32 %v3284, 16
      %v3516 = vrot.slane %v3514, 3
      %v3517 = vor.u32 %v3513, %v3516
      %v3518 = vsel %vm2801, %v3492, %v3517
      %v3520 = vshrl.u32 %v2987, 16
      %v3522 = vrot.slane %v3520, 2
      %v3523 = vshll.u32 %v2987, 16
      %v3525 = vrot.slane %v3523, 3
      %v3526 = vor.u32 %v3522, %v3525
      %v3527 = vsel %vm2801, %v3501, %v3526
      %v3528 = vshrl.u32 %v3139, 16
      %v3530 = vrot.slane %v3528, 2
      %v3531 = vshll.u32 %v3139, 16
      %v3533 = vrot.slane %v3531, 3
      %v3534 = vor.u32 %v3530, %v3533
      %v3535 = vsel %vm2801, %v3509, %v3534
      %v3536 = vshrl.u32 %v3286, 16
      %v3538 = vrot.slane %v3536, 2
      %v3539 = vshll.u32 %v3286, 16
      %v3541 = vrot.slane %v3539, 3
      %v3542 = vor.u32 %v3538, %v3541
      %v3543 = vsel %vm2801, %v3517, %v3542
      %v3545 = vshrl.u32 %v2989, 16
      %v3547 = vrot.slane %v3545, 2
      %v3548 = vshll.u32 %v2989, 16
      %v3550 = vrot.slane %v3548, 3
      %v3551 = vor.u32 %v3547, %v3550
      %v3552 = vsel %vm2801, %v3526, %v3551
      %v3553 = vshrl.u32 %v3141, 16
      %v3555 = vrot.slane %v3553, 2
      %v3556 = vshll.u32 %v3141, 16
      %v3558 = vrot.slane %v3556, 3
      %v3559 = vor.u32 %v3555, %v3558
      %v3560 = vsel %vm2801, %v3534, %v3559
      %v3561 = vshrl.u32 %v3288, 16
      %v3563 = vrot.slane %v3561, 2
      %v3564 = vshll.u32 %v3288, 16
      %v3566 = vrot.slane %v3564, 3
      %v3567 = vor.u32 %v3563, %v3566
      %v3568 = vsel %vm2801, %v3542, %v3567
      %v3570 = vshrl.u32 %v2991, 16
      %v3572 = vrot.slane %v3570, 2
      %v3573 = vshll.u32 %v2991, 16
      %v3575 = vrot.slane %v3573, 3
      %v3576 = vor.u32 %v3572, %v3575
      %v3577 = vsel %vm2801, %v3551, %v3576
      %v3578 = vshrl.u32 %v3143, 16
      %v3580 = vrot.slane %v3578, 2
      %v3581 = vshll.u32 %v3143, 16
      %v3583 = vrot.slane %v3581, 3
      %v3584 = vor.u32 %v3580, %v3583
      %v3585 = vsel %vm2801, %v3559, %v3584
      %v3586 = vshrl.u32 %v3290, 16
      %v3588 = vrot.slane %v3586, 2
      %v3589 = vshll.u32 %v3290, 16
      %v3591 = vrot.slane %v3589, 3
      %v3592 = vor.u32 %v3588, %v3591
      %v3593 = vsel %vm2801, %v3567, %v3592
      %v3595 = vshrl.u32 %v2993, 16
      %v3597 = vrot.slane %v3595, 2
      %v3598 = vshll.u32 %v2993, 16
      %v3600 = vrot.slane %v3598, 3
      %v3601 = vor.u32 %v3597, %v3600
      %v3602 = vsel %vm2801, %v3576, %v3601
      %v3603 = vshrl.u32 %v3145, 16
      %v3605 = vrot.slane %v3603, 2
      %v3606 = vshll.u32 %v3145, 16
      %v3608 = vrot.slane %v3606, 3
      %v3609 = vor.u32 %v3605, %v3608
      %v3610 = vsel %vm2801, %v3584, %v3609
      %v3611 = vshrl.u32 %v3292, 16
      %v3613 = vrot.slane %v3611, 2
      %v3614 = vshll.u32 %v3292, 16
      %v3616 = vrot.slane %v3614, 3
      %v3617 = vor.u32 %v3613, %v3616
      %v3618 = vsel %vm2801, %v3592, %v3617
      %v3620 = vshrl.u32 %v2995, 16
      %v3622 = vrot.slane %v3620, 2
      %v3623 = vshll.u32 %v2995, 16
      %v3625 = vrot.slane %v3623, 3
      %v3626 = vor.u32 %v3622, %v3625
      %v3627 = vsel %vm2801, %v3601, %v3626
      %v3628 = vshrl.u32 %v3147, 16
      %v3630 = vrot.slane %v3628, 2
      %v3631 = vshll.u32 %v3147, 16
      %v3633 = vrot.slane %v3631, 3
      %v3634 = vor.u32 %v3630, %v3633
      %v3635 = vsel %vm2801, %v3609, %v3634
      %v3636 = vshrl.u32 %v3294, 16
      %v3638 = vrot.slane %v3636, 2
      %v3639 = vshll.u32 %v3294, 16
      %v3641 = vrot.slane %v3639, 3
      %v3642 = vor.u32 %v3638, %v3641
      %v3643 = vsel %vm2801, %v3617, %v3642
      %v3645 = vshrl.u32 %v2997, 16
      %v3647 = vrot.slane %v3645, 2
      %v3648 = vshll.u32 %v2997, 16
      %v3650 = vrot.slane %v3648, 3
      %v3651 = vor.u32 %v3647, %v3650
      %v3652 = vsel %vm2801, %v3626, %v3651
      %v3653 = vshrl.u32 %v3149, 16
      %v3655 = vrot.slane %v3653, 2
      %v3656 = vshll.u32 %v3149, 16
      %v3658 = vrot.slane %v3656, 3
      %v3659 = vor.u32 %v3655, %v3658
      %v3660 = vsel %vm2801, %v3634, %v3659
      %v3661 = vshrl.u32 %v3296, 16
      %v3663 = vrot.slane %v3661, 2
      %v3664 = vshll.u32 %v3296, 16
      %v3666 = vrot.slane %v3664, 3
      %v3667 = vor.u32 %v3663, %v3666
      %v3668 = vsel %vm2801, %v3642, %v3667
      %v3670 = vshrl.u32 %v2999, 16
      %v3672 = vrot.slane %v3670, 2
      %v3673 = vshll.u32 %v2999, 16
      %v3675 = vrot.slane %v3673, 3
      %v3676 = vor.u32 %v3672, %v3675
      %v3677 = vsel %vm2801, %v3651, %v3676
      %v3678 = vshrl.u32 %v3151, 16
      %v3680 = vrot.slane %v3678, 2
      %v3681 = vshll.u32 %v3151, 16
      %v3683 = vrot.slane %v3681, 3
      %v3684 = vor.u32 %v3680, %v3683
      %v3685 = vsel %vm2801, %v3659, %v3684
      %v3686 = vshrl.u32 %v3298, 16
      %v3688 = vrot.slane %v3686, 2
      %v3689 = vshll.u32 %v3298, 16
      %v3691 = vrot.slane %v3689, 3
      %v3692 = vor.u32 %v3688, %v3691
      %v3693 = vsel %vm2801, %v3667, %v3692
      %v3695 = vshrl.u32 %v3001, 16
      %v3697 = vrot.slane %v3695, 2
      %v3698 = vshll.u32 %v3001, 16
      %v3700 = vrot.slane %v3698, 3
      %v3701 = vor.u32 %v3697, %v3700
      %v3702 = vsel %vm2801, %v3676, %v3701
      %v3703 = vshrl.u32 %v3153, 16
      %v3705 = vrot.slane %v3703, 2
      %v3706 = vshll.u32 %v3153, 16
      %v3708 = vrot.slane %v3706, 3
      %v3709 = vor.u32 %v3705, %v3708
      %v3710 = vsel %vm2801, %v3684, %v3709
      %v3711 = vshrl.u32 %v3300, 16
      %v3713 = vrot.slane %v3711, 2
      %v3714 = vshll.u32 %v3300, 16
      %v3716 = vrot.slane %v3714, 3
      %v3717 = vor.u32 %v3713, %v3716
      %v3718 = vsel %vm2801, %v3692, %v3717
      %v3720 = vshrl.u32 %v3003, 16
      %v3722 = vrot.slane %v3720, 2
      %v3723 = vshll.u32 %v3003, 16
      %v3725 = vrot.slane %v3723, 3
      %v3726 = vor.u32 %v3722, %v3725
      %v3727 = vsel %vm2801, %v3701, %v3726
      %v3728 = vshrl.u32 %v3155, 16
      %v3730 = vrot.slane %v3728, 2
      %v3731 = vshll.u32 %v3155, 16
      %v3733 = vrot.slane %v3731, 3
      %v3734 = vor.u32 %v3730, %v3733
      %v3735 = vsel %vm2801, %v3709, %v3734
      %v3736 = vshrl.u32 %v3302, 16
      %v3738 = vrot.slane %v3736, 2
      %v3739 = vshll.u32 %v3302, 16
      %v3741 = vrot.slane %v3739, 3
      %v3742 = vor.u32 %v3738, %v3741
      %v3743 = vsel %vm2801, %v3717, %v3742
      %v3745 = vshrl.u32 %v3005, 16
      %v3747 = vrot.slane %v3745, 2
      %v3748 = vshll.u32 %v3005, 16
      %v3750 = vrot.slane %v3748, 3
      %v3751 = vor.u32 %v3747, %v3750
      %v3752 = vsel %vm2801, %v3726, %v3751
      %v3753 = vshrl.u32 %v3157, 16
      %v3755 = vrot.slane %v3753, 2
      %v3756 = vshll.u32 %v3157, 16
      %v3758 = vrot.slane %v3756, 3
      %v3759 = vor.u32 %v3755, %v3758
      %v3760 = vsel %vm2801, %v3734, %v3759
      %v3761 = vshrl.u32 %v3304, 16
      %v3763 = vrot.slane %v3761, 2
      %v3764 = vshll.u32 %v3304, 16
      %v3766 = vrot.slane %v3764, 3
      %v3767 = vor.u32 %v3763, %v3766
      %v3768 = vsel %vm2801, %v3742, %v3767
      %v3770 = vshrl.u32 %v3007, 16
      %v3772 = vrot.slane %v3770, 2
      %v3773 = vshll.u32 %v3007, 16
      %v3775 = vrot.slane %v3773, 3
      %v3776 = vor.u32 %v3772, %v3775
      %v3777 = vsel %vm2801, %v3751, %v3776
      %v3778 = vshrl.u32 %v3159, 16
      %v3780 = vrot.slane %v3778, 2
      %v3781 = vshll.u32 %v3159, 16
      %v3783 = vrot.slane %v3781, 3
      %v3784 = vor.u32 %v3780, %v3783
      %v3785 = vsel %vm2801, %v3759, %v3784
      %v3786 = vshrl.u32 %v3306, 16
      %v3788 = vrot.slane %v3786, 2
      %v3789 = vshll.u32 %v3306, 16
      %v3791 = vrot.slane %v3789, 3
      %v3792 = vor.u32 %v3788, %v3791
      %v3793 = vsel %vm2801, %v3767, %v3792
      %v3795 = vshrl.u32 %v3009, 16
      %v3797 = vrot.slane %v3795, 2
      %v3798 = vshll.u32 %v3009, 16
      %v3800 = vrot.slane %v3798, 3
      %v3801 = vor.u32 %v3797, %v3800
      %v3802 = vsel %vm2801, %v3776, %v3801
      %v3803 = vshrl.u32 %v3161, 16
      %v3805 = vrot.slane %v3803, 2
      %v3806 = vshll.u32 %v3161, 16
      %v3808 = vrot.slane %v3806, 3
      %v3809 = vor.u32 %v3805, %v3808
      %v3810 = vsel %vm2801, %v3784, %v3809
      %v3811 = vshrl.u32 %v3308, 16
      %v3813 = vrot.slane %v3811, 2
      %v3814 = vshll.u32 %v3308, 16
      %v3816 = vrot.slane %v3814, 3
      %v3817 = vor.u32 %v3813, %v3816
      %v3818 = vsel %vm2801, %v3792, %v3817
      %v3820 = vshrl.u32 %v3011, 16
      %v3822 = vrot.slane %v3820, 2
      %v3823 = vshll.u32 %v3011, 16
      %v3825 = vrot.slane %v3823, 3
      %v3826 = vor.u32 %v3822, %v3825
      %v3827 = vsel %vm2801, %v3801, %v3826
      %v3828 = vshrl.u32 %v3163, 16
      %v3830 = vrot.slane %v3828, 2
      %v3831 = vshll.u32 %v3163, 16
      %v3833 = vrot.slane %v3831, 3
      %v3834 = vor.u32 %v3830, %v3833
      %v3835 = vsel %vm2801, %v3809, %v3834
      %v3836 = vshrl.u32 %v3310, 16
      %v3838 = vrot.slane %v3836, 2
      %v3839 = vshll.u32 %v3310, 16
      %v3841 = vrot.slane %v3839, 3
      %v3842 = vor.u32 %v3838, %v3841
      %v3843 = vsel %vm2801, %v3817, %v3842
      %v3845 = vshrl.u32 %v3013, 16
      %v3847 = vrot.slane %v3845, 2
      %v3848 = vshll.u32 %v3013, 16
      %v3850 = vrot.slane %v3848, 3
      %v3851 = vor.u32 %v3847, %v3850
      %v3852 = vsel %vm2801, %v3826, %v3851
      %v3853 = vshrl.u32 %v3165, 16
      %v3855 = vrot.slane %v3853, 2
      %v3856 = vshll.u32 %v3165, 16
      %v3858 = vrot.slane %v3856, 3
      %v3859 = vor.u32 %v3855, %v3858
      %v3860 = vsel %vm2801, %v3834, %v3859
      %v3861 = vshrl.u32 %v3312, 16
      %v3863 = vrot.slane %v3861, 2
      %v3864 = vshll.u32 %v3312, 16
      %v3866 = vrot.slane %v3864, 3
      %v3867 = vor.u32 %v3863, %v3866
      %v3868 = vsel %vm2801, %v3842, %v3867
      %v3870 = vshrl.u32 %v3015, 16
      %v3872 = vrot.slane %v3870, 2
      %v3873 = vshll.u32 %v3015, 16
      %v3875 = vrot.slane %v3873, 3
      %v3876 = vor.u32 %v3872, %v3875
      %v3877 = vsel %vm2801, %v3851, %v3876
      %v3956 = vunpack.c.l.b16 %v3313
      %v3957 = vunpack.c.l.b16 %v3314
      %v3958 = vunpack.c.l.b16 %v3315
      %v3959 = vunpack.c.l.b16 %v3316
      %v3960 = vunpack.c.l.b16 %v3317
      %v3961 = vunpack.c.l.b16 %v3318
      %v3962 = vunpack.c.l.b16 %v3319
      %v3963 = vunpack.c.l.b16 %v3320
      %v3964 = vunpack.c.l.b16 %v3321
      %v3965 = vunpack.c.l.b16 %v3322
      %v3966 = vunpack.c.l.b16 %v3323
      %v3967 = vunpack.c.l.b16 %v3324
      %v3968 = vunpack.c.l.b16 %v3325
      %v3969 = vunpack.c.l.b16 %v3326
      %v3970 = vunpack.c.l.b16 %v3327
      %v3971 = vunpack.c.l.b16 %v3328
      %v3972 = vunpack.c.l.b16 %v3329
      %v3973 = vunpack.c.l.b16 %v3330
      %v3974 = vunpack.c.l.b16 %v3331
      %v3975 = vunpack.c.l.b16 %v3332
      %v3976 = vunpack.c.l.b16 %v3333
      %v3977 = vunpack.c.l.b16 %v3334
      %v3978 = vunpack.c.l.b16 %v3335
      %v3979 = vunpack.c.l.b16 %v3336
      %v3980 = vunpack.c.l.b16 %v3337
      %v3981 = vunpack.c.l.b16 %v3338
      %v3982 = vunpack.c.l.b16 %v3339
      %v3983 = vunpack.c.l.b16 %v3340
      %v3984 = vunpack.c.l.b16 %v3341
      %v3985 = vunpack.c.l.b16 %v3342
      %v3986 = vunpack.c.l.b16 %v3343
      %v3987 = vunpack.c.l.b16 %v3344
      %v3988 = vunpack.c.l.b16 %v3345
      %v3989 = vunpack.c.l.b16 %v3346
      %v3990 = vunpack.c.l.b16 %v3347
      %v3991 = vunpack.c.l.b16 %v3348
      %v3992 = vpack.c.b16 %v3957, %v3956
      %v3993 = vpack.c.b16 %v3959, %v3958
      %v3994 = vpack.c.b16 %v3961, %v3960
      %v3995 = vpack.c.b16 %v3963, %v3962
      %v3996 = vpack.c.b16 %v3965, %v3964
      %v3997 = vpack.c.b16 %v3967, %v3966
      %v3998 = vpack.c.b16 %v3969, %v3968
      %v3999 = vpack.c.b16 %v3971, %v3970
      %v4000 = vpack.c.b16 %v3973, %v3972
      %v4001 = vpack.c.b16 %v3975, %v3974
      %v4002 = vpack.c.b16 %v3977, %v3976
      %v4003 = vpack.c.b16 %v3979, %v3978
      %v4004 = vpack.c.b16 %v3981, %v3980
      %v4005 = vpack.c.b16 %v3983, %v3982
      %v4006 = vpack.c.b16 %v3985, %v3984
      %v4007 = vpack.c.b16 %v3987, %v3986
      %v4008 = vpack.c.b16 %v3989, %v3988
      %v4009 = vpack.c.b16 %v3991, %v3990
      %v4029 = vsel %vm3016, %v3402, 0
      %v4032 = vsel %vm3016, %v3427, 0
      %v4035 = vsel %vm3016, %v3452, 0
      %v4038 = vsel %vm3016, %v3477, 0
      %v4041 = vsel %vm3016, %v3502, 0
      %v4044 = vsel %vm3016, %v3527, 0
      %v4047 = vsel %vm3016, %v3552, 0
      %v4050 = vsel %vm3016, %v3577, 0
      %v4053 = vsel %vm3016, %v3602, 0
      %v4056 = vsel %vm3016, %v3627, 0
      %v4059 = vsel %vm3016, %v3652, 0
      %v4062 = vsel %vm3016, %v3677, 0
      %v4065 = vsel %vm3016, %v3702, 0
      %v4068 = vsel %vm3016, %v3727, 0
      %v4071 = vsel %vm3016, %v3752, 0
      %v4074 = vsel %vm3016, %v3777, 0
      %v4077 = vsel %vm3016, %v3802, 0
      %v4080 = vsel %vm3016, %v3827, 0
      %v4083 = vsel %vm3016, %v3852, 0
      %v4086 = vsel %vm3016, %v3877, 0
      %v4089 = vsel %vm3016, %v3876, 0
      %4091 = vmatprep.subr.bf16.mxu0 0
      %4092 = vmatpush1.bf16.msra.mxu0 %v3999
      %4093 = vmatprep.subr.bf16.mxu0 0
      %4094 = vmatpush1.bf16.msra.mxu0 %v3998
      %4095 = vmatprep.subr.bf16.mxu0 0
      %4096 = vmatpush1.bf16.msra.mxu0 %v3997
      %4097 = vmatprep.subr.bf16.mxu0 0
      %4098 = vmatpush1.bf16.msra.mxu0 %v3996
      %4099 = vmatprep.subr.bf16.mxu0 0
      %4100 = vmatpush1.bf16.msra.mxu0 %v3995
      %4101 = vmatprep.subr.bf16.mxu0 0
      %4102 = vmatpush1.bf16.msra.mxu0 %v3994
      %4103 = vmatprep.subr.bf16.mxu0 0
      %4104 = vmatpush1.bf16.msra.mxu0 %v3993
      %4105 = vmatprep.subr.bf16.mxu0 0
      %4106 = vmatpush1.bf16.msra.mxu0 %v3992
      %4107 = vmatprep.subr.bf16.mxu0 0
      %4108 = vmatpush2.bf16.msra.mxu0 %v4007
      %4109 = vmatprep.subr.bf16.mxu0 0
      %4110 = vmatpush2.bf16.msra.mxu0 %v4006
      %4111 = vmatprep.subr.bf16.mxu0 0
      %4112 = vmatpush2.bf16.msra.mxu0 %v4005
      %4113 = vmatprep.subr.bf16.mxu0 0
      %4114 = vmatpush2.bf16.msra.mxu0 %v4004
      %4115 = vmatprep.subr.bf16.mxu0 0
      %4116 = vmatpush2.bf16.msra.mxu0 %v4003
      %4117 = vmatprep.subr.bf16.mxu0 0
      %4118 = vmatpush2.bf16.msra.mxu0 %v4002
      %4119 = vmatprep.subr.bf16.mxu0 0
      %4120 = vmatpush2.bf16.msra.mxu0 %v4001
      %4121 = vmatprep.subr.bf16.mxu0 0
      %4122 = vmatpush2.bf16.msra.mxu0 %v4000
      %4123 = vmatprep.mubr.bf16.mxu0 %v3385
      %4124 = vmatmul.mubr.bf16.gmra.mxu0 %v3370
      %v4125 = vpop.f32.mrf.mxu0
      %v4126 = vadd.f32 %v3354, %v4125
      %v4127 = vpop.f32.mrf.mxu0
      %v4128 = vpop.f32.mrf.mxu0
      %v4129 = vadd.f32 %v3354, %v4128
      %v4130 = vpop.f32.mrf.mxu0
      %4131 = vmatprep.mubr.bf16.mxu0 %v3418
      %4132 = vmatmul.mubr.bf16.gmra.mxu0 %v3410
      %v4133 = vpop.f32.mrf.mxu0
      %v4134 = vadd.f32 %v3354, %v4133
      %v4135 = vpop.f32.mrf.mxu0
      %v4136 = vpop.f32.mrf.mxu0
      %v4137 = vadd.f32 %v3354, %v4136
      %v4138 = vpop.f32.mrf.mxu0
      %4139 = vmatprep.mubr.bf16.mxu0 %v3443
      %4140 = vmatmul.mubr.bf16.gmra.mxu0 %v3435
      %v4141 = vpop.f32.mrf.mxu0
      %v4142 = vadd.f32 %v3354, %v4141
      %v4143 = vpop.f32.mrf.mxu0
      %v4144 = vpop.f32.mrf.mxu0
      %v4145 = vadd.f32 %v3354, %v4144
      %v4146 = vpop.f32.mrf.mxu0
      %4147 = vmatprep.mubr.bf16.mxu0 %v3468
      %4148 = vmatmul.mubr.bf16.gmra.mxu0 %v3460
      %v4149 = vpop.f32.mrf.mxu0
      %v4150 = vadd.f32 %v3354, %v4149
      %v4151 = vpop.f32.mrf.mxu0
      %v4152 = vpop.f32.mrf.mxu0
      %v4153 = vadd.f32 %v3354, %v4152
      %v4154 = vpop.f32.mrf.mxu0
      %4155 = vmatprep.mubr.bf16.mxu0 %v3493
      %4156 = vmatmul.mubr.bf16.gmra.mxu0 %v3485
      %v4157 = vpop.f32.mrf.mxu0
      %v4158 = vadd.f32 %v3354, %v4157
      %v4159 = vpop.f32.mrf.mxu0
      %v4160 = vpop.f32.mrf.mxu0
      %v4161 = vadd.f32 %v3354, %v4160
      %v4162 = vpop.f32.mrf.mxu0
      %4163 = vmatprep.mubr.bf16.mxu0 %v3518
      %4164 = vmatmul.mubr.bf16.gmra.mxu0 %v3510
      %v4165 = vpop.f32.mrf.mxu0
      %v4166 = vadd.f32 %v3354, %v4165
      %v4167 = vpop.f32.mrf.mxu0
      %v4168 = vpop.f32.mrf.mxu0
      %v4169 = vadd.f32 %v3354, %v4168
      %v4170 = vpop.f32.mrf.mxu0
      %4171 = vmatprep.mubr.bf16.mxu0 %v3543
      %4172 = vmatmul.mubr.bf16.gmra.mxu0 %v3535
      %v4173 = vpop.f32.mrf.mxu0
      %v4174 = vadd.f32 %v3354, %v4173
      %v4175 = vpop.f32.mrf.mxu0
      %v4176 = vpop.f32.mrf.mxu0
      %v4177 = vadd.f32 %v3354, %v4176
      %v4178 = vpop.f32.mrf.mxu0
      %4179 = vmatprep.mubr.bf16.mxu0 %v3568
      %4180 = vmatmul.mubr.bf16.gmra.mxu0 %v3560
      %v4181 = vpop.f32.mrf.mxu0
      %v4182 = vadd.f32 %v3354, %v4181
      %v4183 = vpop.f32.mrf.mxu0
      %v4184 = vpop.f32.mrf.mxu0
      %v4185 = vadd.f32 %v3354, %v4184
      %v4186 = vpop.f32.mrf.mxu0
      %4187 = vmatprep.mubr.bf16.mxu0 %v3593
      %4188 = vmatmul.mubr.bf16.gmra.mxu0 %v3585
      %v4189 = vpop.f32.mrf.mxu0
      %v4190 = vadd.f32 %v3354, %v4189
      %v4191 = vpop.f32.mrf.mxu0
      %v4192 = vpop.f32.mrf.mxu0
      %v4193 = vadd.f32 %v3354, %v4192
      %v4194 = vpop.f32.mrf.mxu0
      %4195 = vmatprep.mubr.bf16.mxu0 %v3618
      %4196 = vmatmul.mubr.bf16.gmra.mxu0 %v3610
      %v4197 = vpop.f32.mrf.mxu0
      %v4198 = vadd.f32 %v3354, %v4197
      %v4199 = vpop.f32.mrf.mxu0
      %v4200 = vpop.f32.mrf.mxu0
      %v4201 = vadd.f32 %v3354, %v4200
      %v4202 = vpop.f32.mrf.mxu0
      %4203 = vmatprep.mubr.bf16.mxu0 %v3643
      %4204 = vmatmul.mubr.bf16.gmra.mxu0 %v3635
      %v4205 = vpop.f32.mrf.mxu0
      %v4206 = vadd.f32 %v3354, %v4205
      %v4207 = vpop.f32.mrf.mxu0
      %v4208 = vpop.f32.mrf.mxu0
      %v4209 = vadd.f32 %v3354, %v4208
      %v4210 = vpop.f32.mrf.mxu0
      %4211 = vmatprep.mubr.bf16.mxu0 %v3668
      %4212 = vmatmul.mubr.bf16.gmra.mxu0 %v3660
      %v4213 = vpop.f32.mrf.mxu0
      %v4214 = vadd.f32 %v3354, %v4213
      %v4215 = vpop.f32.mrf.mxu0
      %v4216 = vpop.f32.mrf.mxu0
      %v4217 = vadd.f32 %v3354, %v4216
      %v4218 = vpop.f32.mrf.mxu0
      %4219 = vmatprep.mubr.bf16.mxu0 %v3693
      %4220 = vmatmul.mubr.bf16.gmra.mxu0 %v3685
      %v4221 = vpop.f32.mrf.mxu0
      %v4222 = vadd.f32 %v3354, %v4221
      %v4223 = vpop.f32.mrf.mxu0
      %v4224 = vpop.f32.mrf.mxu0
      %v4225 = vadd.f32 %v3354, %v4224
      %v4226 = vpop.f32.mrf.mxu0
      %4227 = vmatprep.mubr.bf16.mxu0 %v3718
      %4228 = vmatmul.mubr.bf16.gmra.mxu0 %v3710
      %v4229 = vpop.f32.mrf.mxu0
      %v4230 = vadd.f32 %v3354, %v4229
      %v4231 = vpop.f32.mrf.mxu0
      %v4232 = vpop.f32.mrf.mxu0
      %v4233 = vadd.f32 %v3354, %v4232
      %v4234 = vpop.f32.mrf.mxu0
      %4235 = vmatprep.mubr.bf16.mxu0 %v3743
      %4236 = vmatmul.mubr.bf16.gmra.mxu0 %v3735
      %v4237 = vpop.f32.mrf.mxu0
      %v4238 = vadd.f32 %v3354, %v4237
      %v4239 = vpop.f32.mrf.mxu0
      %v4240 = vpop.f32.mrf.mxu0
      %v4241 = vadd.f32 %v3354, %v4240
      %v4242 = vpop.f32.mrf.mxu0
      %4243 = vmatprep.mubr.bf16.mxu0 %v3768
      %4244 = vmatmul.mubr.bf16.gmra.mxu0 %v3760
      %v4245 = vpop.f32.mrf.mxu0
      %v4246 = vadd.f32 %v3354, %v4245
      %v4247 = vpop.f32.mrf.mxu0
      %v4248 = vpop.f32.mrf.mxu0
      %v4249 = vadd.f32 %v3354, %v4248
      %v4250 = vpop.f32.mrf.mxu0
      %4251 = vmatprep.mubr.bf16.mxu0 %v3793
      %4252 = vmatmul.mubr.bf16.gmra.mxu0 %v3785
      %v4253 = vpop.f32.mrf.mxu0
      %v4254 = vadd.f32 %v3354, %v4253
      %v4255 = vpop.f32.mrf.mxu0
      %v4256 = vpop.f32.mrf.mxu0
      %v4257 = vadd.f32 %v3354, %v4256
      %v4258 = vpop.f32.mrf.mxu0
      %4259 = vmatprep.mubr.bf16.mxu0 %v3818
      %4260 = vmatmul.mubr.bf16.gmra.mxu0 %v3810
      %v4261 = vpop.f32.mrf.mxu0
      %v4262 = vadd.f32 %v3354, %v4261
      %v4263 = vpop.f32.mrf.mxu0
      %v4264 = vpop.f32.mrf.mxu0
      %v4265 = vadd.f32 %v3354, %v4264
      %v4266 = vpop.f32.mrf.mxu0
      %4267 = vmatprep.mubr.bf16.mxu0 %v3843
      %4268 = vmatmul.mubr.bf16.gmra.mxu0 %v3835
      %v4269 = vpop.f32.mrf.mxu0
      %v4270 = vadd.f32 %v3354, %v4269
      %v4271 = vpop.f32.mrf.mxu0
      %v4272 = vpop.f32.mrf.mxu0
      %v4273 = vadd.f32 %v3354, %v4272
      %v4274 = vpop.f32.mrf.mxu0
      %4275 = vmatprep.mubr.bf16.mxu0 %v3868
      %4276 = vmatmul.mubr.bf16.gmra.mxu0 %v3860
      %v4277 = vpop.f32.mrf.mxu0
      %v4278 = vadd.f32 %v3354, %v4277
      %v4279 = vpop.f32.mrf.mxu0
      %v4280 = vpop.f32.mrf.mxu0
      %v4281 = vadd.f32 %v3354, %v4280
      %v4282 = vpop.f32.mrf.mxu0
      %4283 = vmatprep.mubr.bf16.mxu0 %v3867
      %4284 = vmatmul.mubr.bf16.gmra.mxu0 %v3859
      %v4285 = vpop.f32.mrf.mxu0
      %v4286 = vadd.f32 %v3354, %v4285
      %v4287 = vpop.f32.mrf.mxu0
      %v4288 = vpop.f32.mrf.mxu0
      %v4289 = vpop.f32.mrf.mxu0
      %4290 = vdwg.mxu0
      %4291 = vmatprep.subr.bf16.mxu0 0
      %4292 = vmatpush1.bf16.msra.mxu0 0
      %4293 = vmatprep.subr.bf16.mxu0 0
      %4294 = vmatpush1.bf16.msra.mxu0 0
      %4295 = vmatprep.subr.bf16.mxu0 0
      %4296 = vmatpush1.bf16.msra.mxu0 0
      %4297 = vmatprep.subr.bf16.mxu0 0
      %4298 = vmatpush1.bf16.msra.mxu0 0
      %4299 = vmatprep.subr.bf16.mxu0 0
      %4300 = vmatpush1.bf16.msra.mxu0 0
      %4301 = vmatprep.subr.bf16.mxu0 0
      %4302 = vmatpush1.bf16.msra.mxu0 0
      %4303 = vmatprep.subr.bf16.mxu0 0
      %4304 = vmatpush1.bf16.msra.mxu0 %v4009
      %4305 = vmatprep.subr.bf16.mxu0 0
      %4306 = vmatpush1.bf16.msra.mxu0 %v4008
      %4307 = vmatprep.subr.bf16.mxu0 0
      %4308 = vmatpush2.bf16.msra.mxu0 0
      %4309 = vmatprep.subr.bf16.mxu0 0
      %4310 = vmatpush2.bf16.msra.mxu0 0
      %4311 = vmatprep.subr.bf16.mxu0 0
      %4312 = vmatpush2.bf16.msra.mxu0 0
      %4313 = vmatprep.subr.bf16.mxu0 0
      %4314 = vmatpush2.bf16.msra.mxu0 0
      %4315 = vmatprep.subr.bf16.mxu0 0
      %4316 = vmatpush2.bf16.msra.mxu0 0
      %4317 = vmatprep.subr.bf16.mxu0 0
      %4318 = vmatpush2.bf16.msra.mxu0 0
      %4319 = vmatprep.subr.bf16.mxu0 0
      %4320 = vmatpush2.bf16.msra.mxu0 0
      %4321 = vmatprep.subr.bf16.mxu0 0
      %4322 = vmatpush2.bf16.msra.mxu0 0
      %4323 = vmatprep.mubr.bf16.mxu0 0
      %4324 = vmatmul.mubr.bf16.gmra.mxu0 %v4029
      %v4325 = vpop.f32.mrf.mxu0
      %v4326 = vadd.f32 %v4126, %v4325
      %v4327 = vpop.f32.mrf.mxu0
      %v4328 = vpop.f32.mrf.mxu0
      %v4329 = vadd.f32 %v4129, %v4328
      %v4330 = vpop.f32.mrf.mxu0
      %4331 = vmatprep.mubr.bf16.mxu0 0
      %4332 = vmatmul.mubr.bf16.gmra.mxu0 %v4032
      %v4333 = vpop.f32.mrf.mxu0
      %v4334 = vadd.f32 %v4134, %v4333
      %v4335 = vpop.f32.mrf.mxu0
      %v4336 = vpop.f32.mrf.mxu0
      %v4337 = vadd.f32 %v4137, %v4336
      %v4338 = vpop.f32.mrf.mxu0
      %4339 = vmatprep.mubr.bf16.mxu0 0
      %4340 = vmatmul.mubr.bf16.gmra.mxu0 %v4035
      %v4341 = vpop.f32.mrf.mxu0
      %v4342 = vadd.f32 %v4142, %v4341
      %v4343 = vpop.f32.mrf.mxu0
      %v4344 = vpop.f32.mrf.mxu0
      %v4345 = vadd.f32 %v4145, %v4344
      %v4346 = vpop.f32.mrf.mxu0
      %4347 = vmatprep.mubr.bf16.mxu0 0
      %4348 = vmatmul.mubr.bf16.gmra.mxu0 %v4038
      %v4349 = vpop.f32.mrf.mxu0
      %v4350 = vadd.f32 %v4150, %v4349
      %v4351 = vpop.f32.mrf.mxu0
      %v4352 = vpop.f32.mrf.mxu0
      %v4353 = vadd.f32 %v4153, %v4352
      %v4354 = vpop.f32.mrf.mxu0
      %4355 = vmatprep.mubr.bf16.mxu0 0
      %4356 = vmatmul.mubr.bf16.gmra.mxu0 %v4041
      %v4357 = vpop.f32.mrf.mxu0
      %v4358 = vadd.f32 %v4158, %v4357
      %v4359 = vpop.f32.mrf.mxu0
      %v4360 = vpop.f32.mrf.mxu0
      %v4361 = vadd.f32 %v4161, %v4360
      %v4362 = vpop.f32.mrf.mxu0
      %4363 = vmatprep.mubr.bf16.mxu0 0
      %4364 = vmatmul.mubr.bf16.gmra.mxu0 %v4044
      %v4365 = vpop.f32.mrf.mxu0
      %v4366 = vadd.f32 %v4166, %v4365
      %v4367 = vpop.f32.mrf.mxu0
      %v4368 = vpop.f32.mrf.mxu0
      %v4369 = vadd.f32 %v4169, %v4368
      %v4370 = vpop.f32.mrf.mxu0
      %4371 = vmatprep.mubr.bf16.mxu0 0
      %4372 = vmatmul.mubr.bf16.gmra.mxu0 %v4047
      %v4373 = vpop.f32.mrf.mxu0
      %v4374 = vadd.f32 %v4174, %v4373
      %v4375 = vpop.f32.mrf.mxu0
      %v4376 = vpop.f32.mrf.mxu0
      %v4377 = vadd.f32 %v4177, %v4376
      %v4378 = vpop.f32.mrf.mxu0
      %4379 = vmatprep.mubr.bf16.mxu0 0
      %4380 = vmatmul.mubr.bf16.gmra.mxu0 %v4050
      %v4381 = vpop.f32.mrf.mxu0
      %v4382 = vadd.f32 %v4182, %v4381
      %v4383 = vpop.f32.mrf.mxu0
      %v4384 = vpop.f32.mrf.mxu0
      %v4385 = vadd.f32 %v4185, %v4384
      %v4386 = vpop.f32.mrf.mxu0
      %4387 = vmatprep.mubr.bf16.mxu0 0
      %4388 = vmatmul.mubr.bf16.gmra.mxu0 %v4053
      %v4389 = vpop.f32.mrf.mxu0
      %v4390 = vadd.f32 %v4190, %v4389
      %v4391 = vpop.f32.mrf.mxu0
      %v4392 = vpop.f32.mrf.mxu0
      %v4393 = vadd.f32 %v4193, %v4392
      %v4394 = vpop.f32.mrf.mxu0
      %4395 = vmatprep.mubr.bf16.mxu0 0
      %4396 = vmatmul.mubr.bf16.gmra.mxu0 %v4056
      %v4397 = vpop.f32.mrf.mxu0
      %v4398 = vadd.f32 %v4198, %v4397
      %v4399 = vpop.f32.mrf.mxu0
      %v4400 = vpop.f32.mrf.mxu0
      %v4401 = vadd.f32 %v4201, %v4400
      %v4402 = vpop.f32.mrf.mxu0
      %4403 = vmatprep.mubr.bf16.mxu0 0
      %4404 = vmatmul.mubr.bf16.gmra.mxu0 %v4059
      %v4405 = vpop.f32.mrf.mxu0
      %v4406 = vadd.f32 %v4206, %v4405
      %v4407 = vpop.f32.mrf.mxu0
      %v4408 = vpop.f32.mrf.mxu0
      %v4409 = vadd.f32 %v4209, %v4408
      %v4410 = vpop.f32.mrf.mxu0
      %4411 = vmatprep.mubr.bf16.mxu0 0
      %4412 = vmatmul.mubr.bf16.gmra.mxu0 %v4062
      %v4413 = vpop.f32.mrf.mxu0
      %v4414 = vadd.f32 %v4214, %v4413
      %v4415 = vpop.f32.mrf.mxu0
      %v4416 = vpop.f32.mrf.mxu0
      %v4417 = vadd.f32 %v4217, %v4416
      %v4418 = vpop.f32.mrf.mxu0
      %4419 = vmatprep.mubr.bf16.mxu0 0
      %4420 = vmatmul.mubr.bf16.gmra.mxu0 %v4065
      %v4421 = vpop.f32.mrf.mxu0
      %v4422 = vadd.f32 %v4222, %v4421
      %v4423 = vpop.f32.mrf.mxu0
      %v4424 = vpop.f32.mrf.mxu0
      %v4425 = vadd.f32 %v4225, %v4424
      %v4426 = vpop.f32.mrf.mxu0
      %4427 = vmatprep.mubr.bf16.mxu0 0
      %4428 = vmatmul.mubr.bf16.gmra.mxu0 %v4068
      %v4429 = vpop.f32.mrf.mxu0
      %v4430 = vadd.f32 %v4230, %v4429
      %v4431 = vpop.f32.mrf.mxu0
      %v4432 = vpop.f32.mrf.mxu0
      %v4433 = vadd.f32 %v4233, %v4432
      %v4434 = vpop.f32.mrf.mxu0
      %4435 = vmatprep.mubr.bf16.mxu0 0
      %4436 = vmatmul.mubr.bf16.gmra.mxu0 %v4071
      %v4437 = vpop.f32.mrf.mxu0
      %v4438 = vadd.f32 %v4238, %v4437
      %v4439 = vpop.f32.mrf.mxu0
      %v4440 = vpop.f32.mrf.mxu0
      %v4441 = vadd.f32 %v4241, %v4440
      %v4442 = vpop.f32.mrf.mxu0
      %4443 = vmatprep.mubr.bf16.mxu0 0
      %4444 = vmatmul.mubr.bf16.gmra.mxu0 %v4074
      %v4445 = vpop.f32.mrf.mxu0
      %v4446 = vadd.f32 %v4246, %v4445
      %v4447 = vpop.f32.mrf.mxu0
      %v4448 = vpop.f32.mrf.mxu0
      %v4449 = vadd.f32 %v4249, %v4448
      %v4450 = vpop.f32.mrf.mxu0
      %4451 = vmatprep.mubr.bf16.mxu0 0
      %4452 = vmatmul.mubr.bf16.gmra.mxu0 %v4077
      %v4453 = vpop.f32.mrf.mxu0
      %v4454 = vadd.f32 %v4254, %v4453
      %v4455 = vpop.f32.mrf.mxu0
      %v4456 = vpop.f32.mrf.mxu0
      %v4457 = vadd.f32 %v4257, %v4456
      %v4458 = vpop.f32.mrf.mxu0
      %4459 = vmatprep.mubr.bf16.mxu0 0
      %4460 = vmatmul.mubr.bf16.gmra.mxu0 %v4080
      %v4461 = vpop.f32.mrf.mxu0
      %v4462 = vadd.f32 %v4262, %v4461
      %v4463 = vpop.f32.mrf.mxu0
      %v4464 = vpop.f32.mrf.mxu0
      %v4465 = vadd.f32 %v4265, %v4464
      %v4466 = vpop.f32.mrf.mxu0
      %4467 = vmatprep.mubr.bf16.mxu0 0
      %4468 = vmatmul.mubr.bf16.gmra.mxu0 %v4083
      %v4469 = vpop.f32.mrf.mxu0
      %v4470 = vadd.f32 %v4270, %v4469
      %v4471 = vpop.f32.mrf.mxu0
      %v4472 = vpop.f32.mrf.mxu0
      %v4473 = vadd.f32 %v4273, %v4472
      %v4474 = vpop.f32.mrf.mxu0
      %4475 = vmatprep.mubr.bf16.mxu0 0
      %4476 = vmatmul.mubr.bf16.gmra.mxu0 %v4086
      %v4477 = vpop.f32.mrf.mxu0
      %v4478 = vadd.f32 %v4278, %v4477
      %v4479 = vpop.f32.mrf.mxu0
      %v4480 = vpop.f32.mrf.mxu0
      %v4481 = vadd.f32 %v4281, %v4480
      %v4482 = vpop.f32.mrf.mxu0
      %4483 = vmatprep.mubr.bf16.mxu0 0
      %4484 = vmatmul.mubr.bf16.gmra.mxu0 %v4089
      %v4485 = vpop.f32.mrf.mxu0
      %v4486 = vadd.f32 %v4286, %v4485
      %v4487 = vpop.f32.mrf.mxu0
      %v4488 = vpop.f32.mrf.mxu0
      %v4489 = vpop.f32.mrf.mxu0
      %4490 = vdwg.mxu0
      %v4491 = vmax.f32 %v4326, 0.0
      %v4492 = vmax.f32 %v4329, 0.0
      %v4493 = vmax.f32 %v4334, 0.0
      %v4494 = vmax.f32 %v4337, 0.0
      %v4495 = vmax.f32 %v4342, 0.0
      %v4496 = vmax.f32 %v4345, 0.0
      %v4497 = vmax.f32 %v4350, 0.0
      %v4498 = vmax.f32 %v4353, 0.0
      %v4499 = vmax.f32 %v4358, 0.0
      %v4500 = vmax.f32 %v4361, 0.0
      %v4501 = vmax.f32 %v4366, 0.0
      %v4502 = vmax.f32 %v4369, 0.0
      %v4503 = vmax.f32 %v4374, 0.0
      %v4504 = vmax.f32 %v4377, 0.0
      %v4505 = vmax.f32 %v4382, 0.0
      %v4506 = vmax.f32 %v4385, 0.0
      %v4507 = vmax.f32 %v4390, 0.0
      %v4508 = vmax.f32 %v4393, 0.0
      %v4509 = vmax.f32 %v4398, 0.0
      %v4510 = vmax.f32 %v4401, 0.0
      %v4511 = vmax.f32 %v4406, 0.0
      %v4512 = vmax.f32 %v4409, 0.0
      %v4513 = vmax.f32 %v4414, 0.0
      %v4514 = vmax.f32 %v4417, 0.0
      %v4515 = vmax.f32 %v4422, 0.0
      %v4516 = vmax.f32 %v4425, 0.0
      %v4517 = vmax.f32 %v4430, 0.0
      %v4518 = vmax.f32 %v4433, 0.0
      %v4519 = vmax.f32 %v4438, 0.0
      %v4520 = vmax.f32 %v4441, 0.0
      %v4521 = vmax.f32 %v4446, 0.0
      %v4522 = vmax.f32 %v4449, 0.0
      %v4523 = vmax.f32 %v4454, 0.0
      %v4524 = vmax.f32 %v4457, 0.0
      %v4525 = vmax.f32 %v4462, 0.0
      %v4526 = vmax.f32 %v4465, 0.0
      %v4527 = vmax.f32 %v4470, 0.0
      %v4528 = vmax.f32 %v4473, 0.0
      %v4529 = vmax.f32 %v4478, 0.0
      %v4530 = vmax.f32 %v4481, 0.0
      %v4531 = vmax.f32 %v4486, 0.0
      %v4532 = vmul.f32 %v4491, %v979
      %v4533 = vmul.f32 %v4492, %v984
      %v4534 = vmul.f32 %v4493, %v989
      %v4535 = vmul.f32 %v4494, %v994
      %v4536 = vmul.f32 %v4495, %v999
      %v4537 = vmul.f32 %v4496, %v1004
      %v4538 = vmul.f32 %v4497, %v1009
      %v4539 = vmul.f32 %v4498, %v1014
      %v4540 = vmul.f32 %v4499, %v1019
      %v4541 = vmul.f32 %v4500, %v1024
      %v4542 = vmul.f32 %v4501, %v1029
      %v4543 = vmul.f32 %v4502, %v1034
      %v4544 = vmul.f32 %v4503, %v1039
      %v4545 = vmul.f32 %v4504, %v1044
      %v4546 = vmul.f32 %v4505, %v1049
      %v4547 = vmul.f32 %v4506, %v1054
      %v4548 = vmul.f32 %v4507, %v1059
      %v4549 = vmul.f32 %v4508, %v1064
      %v4550 = vmul.f32 %v4509, %v1069
      %v4551 = vmul.f32 %v4510, %v1074
      %v4552 = vmul.f32 %v4511, %v1079
      %v4553 = vmul.f32 %v4512, %v1084
      %v4554 = vmul.f32 %v4513, %v1089
      %v4555 = vmul.f32 %v4514, %v1094
      %v4556 = vmul.f32 %v4515, %v1099
      %v4557 = vmul.f32 %v4516, %v1104
      %v4558 = vmul.f32 %v4517, %v1109
      %v4559 = vmul.f32 %v4518, %v1114
      %v4560 = vmul.f32 %v4519, %v1119
      %v4561 = vmul.f32 %v4520, %v1124
      %v4562 = vmul.f32 %v4521, %v1129
      %v4563 = vmul.f32 %v4522, %v1134
      %v4564 = vmul.f32 %v4523, %v1139
      %v4565 = vmul.f32 %v4524, %v1144
      %v4566 = vmul.f32 %v4525, %v1149
      %v4567 = vmul.f32 %v4526, %v1154
      %v4568 = vmul.f32 %v4527, %v1159
      %v4569 = vmul.f32 %v4528, %v1164
      %v4570 = vmul.f32 %v4529, %v1169
      %v4571 = vmul.f32 %v4530, %v1174
      %v4572 = vmul.f32 %v4531, %v1179
      %v4573 = vpack.c.bf16 %v4533, %v4532
      %v4574 = vpack.c.bf16 %v4535, %v4534
      %v4575 = vpack.c.bf16 %v4537, %v4536
      %v4576 = vpack.c.bf16 %v4539, %v4538
      %v4577 = vpack.c.bf16 %v4541, %v4540
      %v4578 = vpack.c.bf16 %v4543, %v4542
      %v4579 = vpack.c.bf16 %v4545, %v4544
      %v4580 = vpack.c.bf16 %v4547, %v4546
      %v4581 = vpack.c.bf16 %v4549, %v4548
      %v4582 = vpack.c.bf16 %v4551, %v4550
      %v4583 = vpack.c.bf16 %v4553, %v4552
      %v4584 = vpack.c.bf16 %v4555, %v4554
      %v4585 = vpack.c.bf16 %v4557, %v4556
      %v4586 = vpack.c.bf16 %v4559, %v4558
      %v4587 = vpack.c.bf16 %v4561, %v4560
      %v4588 = vpack.c.bf16 %v4563, %v4562
      %v4589 = vpack.c.bf16 %v4565, %v4564
      %v4590 = vpack.c.bf16 %v4567, %v4566
      %v4591 = vpack.c.bf16 %v4569, %v4568
      %v4592 = vpack.c.bf16 %v4571, %v4570
      %v4593 = vpack.c.bf16 %v4572, %v4572
      %v4615 = vunpack.c.l.b16 %v4573
      %v4616 = vunpack.c.h.b16 %v4573
      %v4617 = vunpack.c.l.b16 %v4574
      %v4618 = vunpack.c.h.b16 %v4574
      %v4619 = vunpack.c.l.b16 %v4575
      %v4620 = vunpack.c.h.b16 %v4575
      %v4621 = vunpack.c.l.b16 %v4576
      %v4622 = vunpack.c.h.b16 %v4576
      %v4623 = vunpack.c.l.b16 %v4577
      %v4624 = vunpack.c.h.b16 %v4577
      %v4625 = vunpack.c.l.b16 %v4578
      %v4626 = vunpack.c.h.b16 %v4578
      %v4627 = vunpack.c.l.b16 %v4579
      %v4628 = vunpack.c.h.b16 %v4579
      %v4629 = vunpack.c.l.b16 %v4580
      %v4630 = vunpack.c.h.b16 %v4580
      %v4631 = vunpack.c.l.b16 %v4581
      %v4632 = vunpack.c.h.b16 %v4581
      %v4633 = vunpack.c.l.b16 %v4582
      %v4634 = vunpack.c.h.b16 %v4582
      %v4635 = vunpack.c.l.b16 %v4583
      %v4636 = vunpack.c.h.b16 %v4583
      %v4637 = vunpack.c.l.b16 %v4584
      %v4638 = vunpack.c.h.b16 %v4584
      %v4639 = vunpack.c.l.b16 %v4585
      %v4640 = vunpack.c.h.b16 %v4585
      %v4641 = vunpack.c.l.b16 %v4586
      %v4642 = vunpack.c.h.b16 %v4586
      %v4643 = vunpack.c.l.b16 %v4587
      %v4644 = vunpack.c.h.b16 %v4587
      %v4645 = vunpack.c.l.b16 %v4588
      %v4646 = vunpack.c.h.b16 %v4588
      %v4647 = vunpack.c.l.b16 %v4589
      %v4648 = vunpack.c.h.b16 %v4589
      %v4649 = vunpack.c.l.b16 %v4590
      %v4650 = vunpack.c.h.b16 %v4590
      %v4651 = vunpack.c.l.b16 %v4591
      %v4652 = vunpack.c.h.b16 %v4591
      %v4653 = vunpack.c.l.b16 %v4592
      %v4654 = vunpack.c.h.b16 %v4592
      %v4655 = vunpack.c.l.b16 %v4593
      %v4656 = vpack.c.b16 %v4615, %v4615
      %v4657 = vpack.c.b16 %v4616, %v4616
      %v4658 = vpack.c.b16 %v4617, %v4617
      %v4659 = vpack.c.b16 %v4618, %v4618
      %v4660 = vpack.c.b16 %v4619, %v4619
      %v4661 = vpack.c.b16 %v4620, %v4620
      %v4662 = vpack.c.b16 %v4621, %v4621
      %v4663 = vpack.c.b16 %v4622, %v4622
      %v4664 = vpack.c.b16 %v4623, %v4623
      %v4665 = vpack.c.b16 %v4624, %v4624
      %v4666 = vpack.c.b16 %v4625, %v4625
      %v4667 = vpack.c.b16 %v4626, %v4626
      %v4668 = vpack.c.b16 %v4627, %v4627
      %v4669 = vpack.c.b16 %v4628, %v4628
      %v4670 = vpack.c.b16 %v4629, %v4629
      %v4671 = vpack.c.b16 %v4630, %v4630
      %v4672 = vpack.c.b16 %v4631, %v4631
      %v4673 = vpack.c.b16 %v4632, %v4632
      %v4674 = vpack.c.b16 %v4633, %v4633
      %v4675 = vpack.c.b16 %v4634, %v4634
      %v4676 = vpack.c.b16 %v4635, %v4635
      %v4677 = vpack.c.b16 %v4636, %v4636
      %v4678 = vpack.c.b16 %v4637, %v4637
      %v4679 = vpack.c.b16 %v4638, %v4638
      %v4680 = vpack.c.b16 %v4639, %v4639
      %v4681 = vpack.c.b16 %v4640, %v4640
      %v4682 = vpack.c.b16 %v4641, %v4641
      %v4683 = vpack.c.b16 %v4642, %v4642
      %v4684 = vpack.c.b16 %v4643, %v4643
      %v4685 = vpack.c.b16 %v4644, %v4644
      %v4686 = vpack.c.b16 %v4645, %v4645
      %v4687 = vpack.c.b16 %v4646, %v4646
      %v4688 = vpack.c.b16 %v4647, %v4647
      %v4689 = vpack.c.b16 %v4648, %v4648
      %v4690 = vpack.c.b16 %v4649, %v4649
      %v4691 = vpack.c.b16 %v4650, %v4650
      %v4692 = vpack.c.b16 %v4651, %v4651
      %v4693 = vpack.c.b16 %v4652, %v4652
      %v4694 = vpack.c.b16 %v4653, %v4653
      %v4695 = vpack.c.b16 %v4654, %v4654
      %v4696 = vpack.c.b16 %v4655, %v4655
      %4697 = vrot.lane.b32.xlu0 %v4656, 96
      %v4698 = vpop.permute.xlu0 %4697
      %4699 = vrot.lane.b32.xlu0 %v4657, 96
      %v4700 = vpop.permute.xlu0 %4699
      %4701 = vrot.lane.b32.xlu0 %v4658, 96
      %v4702 = vpop.permute.xlu0 %4701
      %4703 = vrot.lane.b32.xlu0 %v4659, 96
      %v4704 = vpop.permute.xlu0 %4703
      %4705 = vrot.lane.b32.xlu0 %v4660, 96
      %v4706 = vpop.permute.xlu0 %4705
      %4707 = vrot.lane.b32.xlu0 %v4661, 96
      %v4708 = vpop.permute.xlu0 %4707
      %4709 = vrot.lane.b32.xlu0 %v4662, 96
      %v4710 = vpop.permute.xlu0 %4709
      %4711 = vrot.lane.b32.xlu0 %v4663, 96
      %v4712 = vpop.permute.xlu0 %4711
      %4713 = vrot.lane.b32.xlu0 %v4664, 96
      %v4714 = vpop.permute.xlu0 %4713
      %4715 = vrot.lane.b32.xlu0 %v4665, 96
      %v4716 = vpop.permute.xlu0 %4715
      %4717 = vrot.lane.b32.xlu0 %v4666, 96
      %v4718 = vpop.permute.xlu0 %4717
      %4719 = vrot.lane.b32.xlu0 %v4667, 96
      %v4720 = vpop.permute.xlu0 %4719
      %4721 = vrot.lane.b32.xlu0 %v4668, 96
      %v4722 = vpop.permute.xlu0 %4721
      %4723 = vrot.lane.b32.xlu0 %v4669, 96
      %v4724 = vpop.permute.xlu0 %4723
      %4725 = vrot.lane.b32.xlu0 %v4670, 96
      %v4726 = vpop.permute.xlu0 %4725
      %4727 = vrot.lane.b32.xlu0 %v4671, 96
      %v4728 = vpop.permute.xlu0 %4727
      %4729 = vrot.lane.b32.xlu0 %v4672, 96
      %v4730 = vpop.permute.xlu0 %4729
      %4731 = vrot.lane.b32.xlu0 %v4673, 96
      %v4732 = vpop.permute.xlu0 %4731
      %4733 = vrot.lane.b32.xlu0 %v4674, 96
      %v4734 = vpop.permute.xlu0 %4733
      %4735 = vrot.lane.b32.xlu0 %v4675, 96
      %v4736 = vpop.permute.xlu0 %4735
      %4737 = vrot.lane.b32.xlu0 %v4676, 96
      %v4738 = vpop.permute.xlu0 %4737
      %4739 = vrot.lane.b32.xlu0 %v4677, 96
      %v4740 = vpop.permute.xlu0 %4739
      %4741 = vrot.lane.b32.xlu0 %v4678, 96
      %v4742 = vpop.permute.xlu0 %4741
      %4743 = vrot.lane.b32.xlu0 %v4679, 96
      %v4744 = vpop.permute.xlu0 %4743
      %4745 = vrot.lane.b32.xlu0 %v4680, 96
      %v4746 = vpop.permute.xlu0 %4745
      %4747 = vrot.lane.b32.xlu0 %v4681, 96
      %v4748 = vpop.permute.xlu0 %4747
      %4749 = vrot.lane.b32.xlu0 %v4682, 96
      %v4750 = vpop.permute.xlu0 %4749
      %4751 = vrot.lane.b32.xlu0 %v4683, 96
      %v4752 = vpop.permute.xlu0 %4751
      %4753 = vrot.lane.b32.xlu0 %v4684, 96
      %v4754 = vpop.permute.xlu0 %4753
      %4755 = vrot.lane.b32.xlu0 %v4685, 96
      %v4756 = vpop.permute.xlu0 %4755
      %4757 = vrot.lane.b32.xlu0 %v4686, 96
      %v4758 = vpop.permute.xlu0 %4757
      %4759 = vrot.lane.b32.xlu0 %v4687, 96
      %v4760 = vpop.permute.xlu0 %4759
      %4761 = vrot.lane.b32.xlu0 %v4688, 96
      %v4762 = vpop.permute.xlu0 %4761
      %4763 = vrot.lane.b32.xlu0 %v4689, 96
      %v4764 = vpop.permute.xlu0 %4763
      %4765 = vrot.lane.b32.xlu0 %v4690, 96
      %v4766 = vpop.permute.xlu0 %4765
      %4767 = vrot.lane.b32.xlu0 %v4691, 96
      %v4768 = vpop.permute.xlu0 %4767
      %4769 = vrot.lane.b32.xlu0 %v4692, 96
      %v4770 = vpop.permute.xlu0 %4769
      %4771 = vrot.lane.b32.xlu0 %v4693, 96
      %v4772 = vpop.permute.xlu0 %4771
      %4773 = vrot.lane.b32.xlu0 %v4694, 96
      %v4774 = vpop.permute.xlu0 %4773
      %4775 = vrot.lane.b32.xlu0 %v4695, 96
      %v4776 = vpop.permute.xlu0 %4775
      %4777 = vrot.lane.b32.xlu0 %v4696, 96
      %v4778 = vpop.permute.xlu0 %4777
      %vm4820 = vcmask 257024
      %4821 = vst.msk [vmem:[#allocation2 + $0xc] sm:$0xf] %vm4820, %v4698
      %4822 = vst.msk [vmem:[#allocation2 + $0x10] sm:$0xf] %vm4820, %v4700
      %4823 = vst.msk [vmem:[#allocation2 + $0x14] sm:$0xf] %vm4820, %v4702
      %4824 = vst.msk [vmem:[#allocation2 + $0x18] sm:$0xf] %vm4820, %v4704
      %4825 = vst.msk [vmem:[#allocation2 + $0x1c] sm:$0xf] %vm4820, %v4706
      %4826 = vst.msk [vmem:[#allocation2 + $0x20] sm:$0xf] %vm4820, %v4708
      %4827 = vst.msk [vmem:[#allocation2 + $0x24] sm:$0xf] %vm4820, %v4710
      %4828 = vst.msk [vmem:[#allocation2 + $0x28] sm:$0xf] %vm4820, %v4712
      %4829 = vst.msk [vmem:[#allocation2 + $0x2c] sm:$0xf] %vm4820, %v4714
      %4830 = vst.msk [vmem:[#allocation2 + $0x30] sm:$0xf] %vm4820, %v4716
      %4831 = vst.msk [vmem:[#allocation2 + $0x34] sm:$0xf] %vm4820, %v4718
      %4832 = vst.msk [vmem:[#allocation2 + $0x38] sm:$0xf] %vm4820, %v4720
      %4833 = vst.msk [vmem:[#allocation2 + $0x3c] sm:$0xf] %vm4820, %v4722
      %4834 = vst.msk [vmem:[#allocation2 + $0x40] sm:$0xf] %vm4820, %v4724
      %4835 = vst.msk [vmem:[#allocation2 + $0x44] sm:$0xf] %vm4820, %v4726
      %4836 = vst.msk [vmem:[#allocation2 + $0x48] sm:$0xf] %vm4820, %v4728
      %4837 = vst.msk [vmem:[#allocation2 + $0x4c] sm:$0xf] %vm4820, %v4730
      %4838 = vst.msk [vmem:[#allocation2 + $0x50] sm:$0xf] %vm4820, %v4732
      %4839 = vst.msk [vmem:[#allocation2 + $0x54] sm:$0xf] %vm4820, %v4734
      %4840 = vst.msk [vmem:[#allocation2 + $0x58] sm:$0xf] %vm4820, %v4736
      %4841 = vst.msk [vmem:[#allocation2 + $0x5c] sm:$0xf] %vm4820, %v4738
      %4842 = vst.msk [vmem:[#allocation2 + $0x60] sm:$0xf] %vm4820, %v4740
      %4843 = vst.msk [vmem:[#allocation2 + $0x64] sm:$0xf] %vm4820, %v4742
      %4844 = vst.msk [vmem:[#allocation2 + $0x68] sm:$0xf] %vm4820, %v4744
      %4845 = vst.msk [vmem:[#allocation2 + $0x6c] sm:$0xf] %vm4820, %v4746
      %4846 = vst.msk [vmem:[#allocation2 + $0x70] sm:$0xf] %vm4820, %v4748
      %4847 = vst.msk [vmem:[#allocation2 + $0x74] sm:$0xf] %vm4820, %v4750
      %4848 = vst.msk [vmem:[#allocation2 + $0x78] sm:$0xf] %vm4820, %v4752
      %4849 = vst.msk [vmem:[#allocation2 + $0x7c] sm:$0xf] %vm4820, %v4754
      %4850 = vst.msk [vmem:[#allocation2 + $0x80] sm:$0xf] %vm4820, %v4756
      %4851 = vst.msk [vmem:[#allocation2 + $0x84] sm:$0xf] %vm4820, %v4758
      %4852 = vst.msk [vmem:[#allocation2 + $0x88] sm:$0xf] %vm4820, %v4760
      %4853 = vst.msk [vmem:[#allocation2 + $0x8c] sm:$0xf] %vm4820, %v4762
      %4854 = vst.msk [vmem:[#allocation2 + $0x90] sm:$0xf] %vm4820, %v4764
      %4855 = vst.msk [vmem:[#allocation2 + $0x94] sm:$0xf] %vm4820, %v4766
      %4856 = vst.msk [vmem:[#allocation2 + $0x98] sm:$0xf] %vm4820, %v4768
      %4857 = vst.msk [vmem:[#allocation2 + $0x9c] sm:$0xf] %vm4820, %v4770
      %4858 = vst.msk [vmem:[#allocation2 + $0xa0] sm:$0xf] %vm4820, %v4772
      %4859 = vst.msk [vmem:[#allocation2 + $0xa4] sm:$0xf] %vm4820, %v4774
      %4860 = vst.msk [vmem:[#allocation2 + $0xa8] sm:$0xf] %vm4820, %v4776
      %vm4861 = vcmask 254976
      %4862 = vst.msk [vmem:[#allocation2 + $0xac] sm:$0x3] %vm4861, %v4778
      %v4863 = vld [vmem:[#allocation2] sm:$0xf]
      %v4864 = vld [vmem:[#allocation2 + $0x4] sm:$0xf]
      %v4865 = vld [vmem:[#allocation2 + $0x8] sm:$0xf]
      %v4866 = vld [vmem:[#allocation2 + $0xc] sm:$0xf]
      %v4867 = vld [vmem:[#allocation2 + $0x10] sm:$0xf]
      %v4868 = vld [vmem:[#allocation2 + $0x14] sm:$0xf]
      %v4869 = vld [vmem:[#allocation2 + $0x18] sm:$0xf]
      %v4870 = vld [vmem:[#allocation2 + $0x1c] sm:$0xf]
      %v4871 = vld [vmem:[#allocation2 + $0x20] sm:$0xf]
      %v4872 = vld [vmem:[#allocation2 + $0x24] sm:$0xf]
      %v4873 = vld [vmem:[#allocation2 + $0x28] sm:$0xf]
      %v4874 = vld [vmem:[#allocation2 + $0x2c] sm:$0xf]
      %v4875 = vld [vmem:[#allocation2 + $0x30] sm:$0xf]
      %v4876 = vld [vmem:[#allocation2 + $0x34] sm:$0xf]
      %v4877 = vld [vmem:[#allocation2 + $0x38] sm:$0xf]
      %v4878 = vld [vmem:[#allocation2 + $0x3c] sm:$0xf]
      %v4879 = vld [vmem:[#allocation2 + $0x40] sm:$0xf]
      %v4880 = vld [vmem:[#allocation2 + $0x44] sm:$0xf]
      %v4881 = vld [vmem:[#allocation2 + $0x48] sm:$0xf]
      %v4882 = vld [vmem:[#allocation2 + $0x4c] sm:$0xf]
      %v4883 = vld [vmem:[#allocation2 + $0x50] sm:$0xf]
      %v4884 = vld [vmem:[#allocation2 + $0x54] sm:$0xf]
      %v4885 = vld [vmem:[#allocation2 + $0x58] sm:$0xf]
      %v4886 = vld [vmem:[#allocation2 + $0x5c] sm:$0xf]
      %v4887 = vld [vmem:[#allocation2 + $0x60] sm:$0xf]
      %v4888 = vld [vmem:[#allocation2 + $0x64] sm:$0xf]
      %v4889 = vld [vmem:[#allocation2 + $0x68] sm:$0xf]
      %v4890 = vld [vmem:[#allocation2 + $0x6c] sm:$0xf]
      %v4891 = vld [vmem:[#allocation2 + $0x70] sm:$0xf]
      %v4892 = vld [vmem:[#allocation2 + $0x74] sm:$0xf]
      %v4893 = vld [vmem:[#allocation2 + $0x78] sm:$0xf]
      %v4894 = vld [vmem:[#allocation2 + $0x7c] sm:$0xf]
      %v4895 = vld [vmem:[#allocation2 + $0x80] sm:$0xf]
      %v4896 = vld [vmem:[#allocation2 + $0x84] sm:$0xf]
      %v4897 = vld [vmem:[#allocation2 + $0x88] sm:$0xf]
      %v4898 = vld [vmem:[#allocation2 + $0x8c] sm:$0xf]
      %v4899 = vld [vmem:[#allocation2 + $0x90] sm:$0xf]
      %v4900 = vld [vmem:[#allocation2 + $0x94] sm:$0xf]
      %v4901 = vld [vmem:[#allocation2 + $0x98] sm:$0xf]
      %v4902 = vld [vmem:[#allocation2 + $0x9c] sm:$0xf]
      %v4903 = vld [vmem:[#allocation2 + $0xa0] sm:$0xf]
      %v4904 = vld [vmem:[#allocation2 + $0xa4] sm:$0xf]
      %v4905 = vld [vmem:[#allocation2 + $0xa8] sm:$0xf]
      %v4906 = vld [vmem:[#allocation2 + $0xac] sm:$0xf]
      %v4907 = vld [vmem:[#allocation2 + $0xb0] sm:$0xf]
      %v4908 = vld [vmem:[#allocation2 + $0xb4] sm:$0xf]
      %v4951 = vunpack.c.l.b16 %v4863
      %v4952 = vunpack.c.l.b16 %v4864
      %v4953 = vunpack.c.l.b16 %v4865
      %v4954 = vunpack.c.l.b16 %v4866
      %v4955 = vunpack.c.l.b16 %v4867
      %v4956 = vunpack.c.l.b16 %v4868
      %v4957 = vunpack.c.l.b16 %v4869
      %v4958 = vunpack.c.l.b16 %v4870
      %v4959 = vunpack.c.l.b16 %v4871
      %v4960 = vunpack.c.l.b16 %v4872
      %v4961 = vunpack.c.l.b16 %v4873
      %v4962 = vunpack.c.l.b16 %v4874
      %v4963 = vunpack.c.l.b16 %v4875
      %v4964 = vunpack.c.l.b16 %v4876
      %v4965 = vunpack.c.l.b16 %v4877
      %v4966 = vunpack.c.l.b16 %v4878
      %v4967 = vunpack.c.l.b16 %v4879
      %v4968 = vunpack.c.l.b16 %v4880
      %v4969 = vunpack.c.l.b16 %v4881
      %v4970 = vunpack.c.l.b16 %v4882
      %v4971 = vunpack.c.l.b16 %v4883
      %v4972 = vunpack.c.l.b16 %v4884
      %v4973 = vunpack.c.l.b16 %v4885
      %v4974 = vunpack.c.l.b16 %v4886
      %v4975 = vunpack.c.l.b16 %v4887
      %v4976 = vunpack.c.l.b16 %v4888
      %v4977 = vunpack.c.l.b16 %v4889
      %v4978 = vunpack.c.l.b16 %v4890
      %v4979 = vunpack.c.l.b16 %v4891
      %v4980 = vunpack.c.l.b16 %v4892
      %v4981 = vunpack.c.l.b16 %v4893
      %v4982 = vunpack.c.l.b16 %v4894
      %v4983 = vunpack.c.l.b16 %v4895
      %v4984 = vunpack.c.l.b16 %v4896
      %v4985 = vunpack.c.l.b16 %v4897
      %v4986 = vunpack.c.l.b16 %v4898
      %v4987 = vunpack.c.l.b16 %v4899
      %v4988 = vunpack.c.l.b16 %v4900
      %v4989 = vunpack.c.l.b16 %v4901
      %v4990 = vunpack.c.l.b16 %v4902
      %v4991 = vunpack.c.l.b16 %v4903
      %v4992 = vunpack.c.l.b16 %v4904
      %v4993 = vpack.c.b16 %v4952, %v4951
      %v4994 = vpack.c.b16 %v4954, %v4953
      %v4995 = vpack.c.b16 %v4956, %v4955
      %v4996 = vpack.c.b16 %v4958, %v4957
      %v4997 = vpack.c.b16 %v4960, %v4959
      %v4998 = vpack.c.b16 %v4962, %v4961
      %v4999 = vpack.c.b16 %v4964, %v4963
      %v5000 = vpack.c.b16 %v4966, %v4965
      %v5001 = vpack.c.b16 %v4968, %v4967
      %v5002 = vpack.c.b16 %v4970, %v4969
      %v5003 = vpack.c.b16 %v4972, %v4971
      %v5004 = vpack.c.b16 %v4974, %v4973
      %v5005 = vpack.c.b16 %v4976, %v4975
      %v5006 = vpack.c.b16 %v4978, %v4977
      %v5007 = vpack.c.b16 %v4980, %v4979
      %v5008 = vpack.c.b16 %v4982, %v4981
      %v5009 = vpack.c.b16 %v4984, %v4983
      %v5010 = vpack.c.b16 %v4986, %v4985
      %v5011 = vpack.c.b16 %v4988, %v4987
      %v5012 = vpack.c.b16 %v4990, %v4989
      %v5013 = vpack.c.b16 %v4992, %v4991
      %v5015 = vshrl.u32 %v4993, 16
      %v5017 = vshll.u32 %v4993, 16
      %v5019 = vrot.slane %v5017, 1
      %v5020 = vor.u32 %v5015, %v5019
      %v5022 = vshll.u32 %v4994, 16
      %v5024 = vrot.slane %v5022, 1
      %v5025 = vsel %vm2202, %v5020, %v5024
      %v5026 = vshrl.u32 %v4994, 16
      %v5028 = vor.u32 %v5026, %v5024
      %v5030 = vshll.u32 %v4995, 16
      %v5032 = vrot.slane %v5030, 1
      %v5033 = vsel %vm2202, %v5028, %v5032
      %v5034 = vshrl.u32 %v4995, 16
      %v5036 = vor.u32 %v5034, %v5032
      %v5038 = vshll.u32 %v4996, 16
      %v5040 = vrot.slane %v5038, 1
      %v5041 = vsel %vm2202, %v5036, %v5040
      %v5042 = vshrl.u32 %v4996, 16
      %v5044 = vor.u32 %v5042, %v5040
      %v5046 = vshll.u32 %v4997, 16
      %v5048 = vrot.slane %v5046, 1
      %v5049 = vsel %vm2202, %v5044, %v5048
      %v5050 = vshrl.u32 %v4997, 16
      %v5052 = vor.u32 %v5050, %v5048
      %v5054 = vshll.u32 %v4998, 16
      %v5056 = vrot.slane %v5054, 1
      %v5057 = vsel %vm2202, %v5052, %v5056
      %v5058 = vshrl.u32 %v4998, 16
      %v5060 = vor.u32 %v5058, %v5056
      %v5062 = vshll.u32 %v4999, 16
      %v5064 = vrot.slane %v5062, 1
      %v5065 = vsel %vm2202, %v5060, %v5064
      %v5066 = vshrl.u32 %v4999, 16
      %v5068 = vor.u32 %v5066, %v5064
      %v5070 = vshll.u32 %v5000, 16
      %v5072 = vrot.slane %v5070, 1
      %v5073 = vsel %vm2202, %v5068, %v5072
      %v5074 = vshrl.u32 %v5000, 16
      %v5076 = vor.u32 %v5074, %v5072
      %v5078 = vshll.u32 %v5001, 16
      %v5080 = vrot.slane %v5078, 1
      %v5081 = vsel %vm2202, %v5076, %v5080
      %v5082 = vshrl.u32 %v5001, 16
      %v5084 = vor.u32 %v5082, %v5080
      %v5086 = vshll.u32 %v5002, 16
      %v5088 = vrot.slane %v5086, 1
      %v5089 = vsel %vm2202, %v5084, %v5088
      %v5090 = vshrl.u32 %v5002, 16
      %v5092 = vor.u32 %v5090, %v5088
      %v5094 = vshll.u32 %v5003, 16
      %v5096 = vrot.slane %v5094, 1
      %v5097 = vsel %vm2202, %v5092, %v5096
      %v5098 = vshrl.u32 %v5003, 16
      %v5100 = vor.u32 %v5098, %v5096
      %v5102 = vshll.u32 %v5004, 16
      %v5104 = vrot.slane %v5102, 1
      %v5105 = vsel %vm2202, %v5100, %v5104
      %v5106 = vshrl.u32 %v5004, 16
      %v5108 = vor.u32 %v5106, %v5104
      %v5110 = vshll.u32 %v5005, 16
      %v5112 = vrot.slane %v5110, 1
      %v5113 = vsel %vm2202, %v5108, %v5112
      %v5114 = vshrl.u32 %v5005, 16
      %v5116 = vor.u32 %v5114, %v5112
      %v5118 = vshll.u32 %v5006, 16
      %v5120 = vrot.slane %v5118, 1
      %v5121 = vsel %vm2202, %v5116, %v5120
      %v5122 = vshrl.u32 %v5006, 16
      %v5124 = vor.u32 %v5122, %v5120
      %v5126 = vshll.u32 %v5007, 16
      %v5128 = vrot.slane %v5126, 1
      %v5129 = vsel %vm2202, %v5124, %v5128
      %v5130 = vshrl.u32 %v5007, 16
      %v5132 = vor.u32 %v5130, %v5128
      %v5134 = vshll.u32 %v5008, 16
      %v5136 = vrot.slane %v5134, 1
      %v5137 = vsel %vm2202, %v5132, %v5136
      %v5138 = vshrl.u32 %v5008, 16
      %v5140 = vor.u32 %v5138, %v5136
      %v5142 = vshll.u32 %v5009, 16
      %v5144 = vrot.slane %v5142, 1
      %v5145 = vsel %vm2202, %v5140, %v5144
      %v5146 = vshrl.u32 %v5009, 16
      %v5148 = vor.u32 %v5146, %v5144
      %v5150 = vshll.u32 %v5010, 16
      %v5152 = vrot.slane %v5150, 1
      %v5153 = vsel %vm2202, %v5148, %v5152
      %v5154 = vshrl.u32 %v5010, 16
      %v5156 = vor.u32 %v5154, %v5152
      %v5158 = vshll.u32 %v5011, 16
      %v5160 = vrot.slane %v5158, 1
      %v5161 = vsel %vm2202, %v5156, %v5160
      %v5162 = vshrl.u32 %v5011, 16
      %v5164 = vor.u32 %v5162, %v5160
      %v5166 = vshll.u32 %v5012, 16
      %v5168 = vrot.slane %v5166, 1
      %v5169 = vsel %vm2202, %v5164, %v5168
      %v5170 = vshrl.u32 %v5012, 16
      %v5172 = vor.u32 %v5170, %v5168
      %v5174 = vshll.u32 %v5013, 16
      %v5176 = vrot.slane %v5174, 1
      %v5177 = vsel %vm2202, %v5172, %v5176
      %v5178 = vshrl.u32 %v5013, 16
      %v5180 = vor.u32 %v5178, %v5176
      %5181 = vrot.lane.b32.xlu0 %v5025, 32
      %v5182 = vpop.permute.xlu0 %5181
      %5183 = vrot.lane.b32.xlu0 %v5033, 32
      %v5184 = vpop.permute.xlu0 %5183
      %5185 = vrot.lane.b32.xlu0 %v5041, 32
      %v5186 = vpop.permute.xlu0 %5185
      %5187 = vrot.lane.b32.xlu0 %v5049, 32
      %v5188 = vpop.permute.xlu0 %5187
      %5189 = vrot.lane.b32.xlu0 %v5057, 32
      %v5190 = vpop.permute.xlu0 %5189
      %5191 = vrot.lane.b32.xlu0 %v5065, 32
      %v5192 = vpop.permute.xlu0 %5191
      %5193 = vrot.lane.b32.xlu0 %v5073, 32
      %v5194 = vpop.permute.xlu0 %5193
      %5195 = vrot.lane.b32.xlu0 %v5081, 32
      %v5196 = vpop.permute.xlu0 %5195
      %5197 = vrot.lane.b32.xlu0 %v5089, 32
      %v5198 = vpop.permute.xlu0 %5197
      %5199 = vrot.lane.b32.xlu0 %v5097, 32
      %v5200 = vpop.permute.xlu0 %5199
      %5201 = vrot.lane.b32.xlu0 %v5105, 32
      %v5202 = vpop.permute.xlu0 %5201
      %5203 = vrot.lane.b32.xlu0 %v5113, 32
      %v5204 = vpop.permute.xlu0 %5203
      %5205 = vrot.lane.b32.xlu0 %v5121, 32
      %v5206 = vpop.permute.xlu0 %5205
      %5207 = vrot.lane.b32.xlu0 %v5129, 32
      %v5208 = vpop.permute.xlu0 %5207
      %5209 = vrot.lane.b32.xlu0 %v5137, 32
      %v5210 = vpop.permute.xlu0 %5209
      %5211 = vrot.lane.b32.xlu0 %v5145, 32
      %v5212 = vpop.permute.xlu0 %5211
      %5213 = vrot.lane.b32.xlu0 %v5153, 32
      %v5214 = vpop.permute.xlu0 %5213
      %5215 = vrot.lane.b32.xlu0 %v5161, 32
      %v5216 = vpop.permute.xlu0 %5215
      %5217 = vrot.lane.b32.xlu0 %v5169, 32
      %v5218 = vpop.permute.xlu0 %5217
      %5219 = vrot.lane.b32.xlu0 %v5177, 32
      %v5220 = vpop.permute.xlu0 %5219
      %5221 = vrot.lane.b32.xlu0 %v5180, 32
      %v5222 = vpop.permute.xlu0 %5221
      %v5223 = vrot.slane %v4993, 1
      %v5224 = vrot.slane %v4994, 1
      %v5225 = vsel %vm2412, %v5223, %v5224
      %v5226 = vrot.slane %v4995, 1
      %v5227 = vsel %vm2412, %v5224, %v5226
      %v5228 = vrot.slane %v4996, 1
      %v5229 = vsel %vm2412, %v5226, %v5228
      %v5230 = vrot.slane %v4997, 1
      %v5231 = vsel %vm2412, %v5228, %v5230
      %v5232 = vrot.slane %v4998, 1
      %v5233 = vsel %vm2412, %v5230, %v5232
      %v5234 = vrot.slane %v4999, 1
      %v5235 = vsel %vm2412, %v5232, %v5234
      %v5236 = vrot.slane %v5000, 1
      %v5237 = vsel %vm2412, %v5234, %v5236
      %v5238 = vrot.slane %v5001, 1
      %v5239 = vsel %vm2412, %v5236, %v5238
      %v5240 = vrot.slane %v5002, 1
      %v5241 = vsel %vm2412, %v5238, %v5240
      %v5242 = vrot.slane %v5003, 1
      %v5243 = vsel %vm2412, %v5240, %v5242
      %v5244 = vrot.slane %v5004, 1
      %v5245 = vsel %vm2412, %v5242, %v5244
      %v5246 = vrot.slane %v5005, 1
      %v5247 = vsel %vm2412, %v5244, %v5246
      %v5248 = vrot.slane %v5006, 1
      %v5249 = vsel %vm2412, %v5246, %v5248
      %v5250 = vrot.slane %v5007, 1
      %v5251 = vsel %vm2412, %v5248, %v5250
      %v5252 = vrot.slane %v5008, 1
      %v5253 = vsel %vm2412, %v5250, %v5252
      %v5254 = vrot.slane %v5009, 1
      %v5255 = vsel %vm2412, %v5252, %v5254
      %v5256 = vrot.slane %v5010, 1
      %v5257 = vsel %vm2412, %v5254, %v5256
      %v5258 = vrot.slane %v5011, 1
      %v5259 = vsel %vm2412, %v5256, %v5258
      %v5260 = vrot.slane %v5012, 1
      %v5261 = vsel %vm2412, %v5258, %v5260
      %v5262 = vrot.slane %v5013, 1
      %v5263 = vsel %vm2412, %v5260, %v5262
      %5264 = vrot.lane.b32.xlu0 %v5225, 64
      %v5265 = vpop.permute.xlu0 %5264
      %5266 = vrot.lane.b32.xlu0 %v5227, 64
      %v5267 = vpop.permute.xlu0 %5266
      %5268 = vrot.lane.b32.xlu0 %v5229, 64
      %v5269 = vpop.permute.xlu0 %5268
      %5270 = vrot.lane.b32.xlu0 %v5231, 64
      %v5271 = vpop.permute.xlu0 %5270
      %5272 = vrot.lane.b32.xlu0 %v5233, 64
      %v5273 = vpop.permute.xlu0 %5272
      %5274 = vrot.lane.b32.xlu0 %v5235, 64
      %v5275 = vpop.permute.xlu0 %5274
      %5276 = vrot.lane.b32.xlu0 %v5237, 64
      %v5277 = vpop.permute.xlu0 %5276
      %5278 = vrot.lane.b32.xlu0 %v5239, 64
      %v5279 = vpop.permute.xlu0 %5278
      %5280 = vrot.lane.b32.xlu0 %v5241, 64
      %v5281 = vpop.permute.xlu0 %5280
      %5282 = vrot.lane.b32.xlu0 %v5243, 64
      %v5283 = vpop.permute.xlu0 %5282
      %5284 = vrot.lane.b32.xlu0 %v5245, 64
      %v5285 = vpop.permute.xlu0 %5284
      %5286 = vrot.lane.b32.xlu0 %v5247, 64
      %v5287 = vpop.permute.xlu0 %5286
      %5288 = vrot.lane.b32.xlu0 %v5249, 64
      %v5289 = vpop.permute.xlu0 %5288
      %5290 = vrot.lane.b32.xlu0 %v5251, 64
      %v5291 = vpop.permute.xlu0 %5290
      %5292 = vrot.lane.b32.xlu0 %v5253, 64
      %v5293 = vpop.permute.xlu0 %5292
      %5294 = vrot.lane.b32.xlu0 %v5255, 64
      %v5295 = vpop.permute.xlu0 %5294
      %5296 = vrot.lane.b32.xlu0 %v5257, 64
      %v5297 = vpop.permute.xlu0 %5296
      %5298 = vrot.lane.b32.xlu0 %v5259, 64
      %v5299 = vpop.permute.xlu0 %5298
      %5300 = vrot.lane.b32.xlu0 %v5261, 64
      %v5301 = vpop.permute.xlu0 %5300
      %5302 = vrot.lane.b32.xlu0 %v5263, 64
      %v5303 = vpop.permute.xlu0 %5302
      %5304 = vrot.lane.b32.xlu0 %v5262, 64
      %v5305 = vpop.permute.xlu0 %5304
      %v5308 = vunpack.c.l.b16 %v4905
      %v5309 = vunpack.c.l.b16 %v4906
      %v5310 = vpack.c.b16 %v5309, %v5308
      %v5311 = vrot.slane %v5310, 1
      %v5312 = vsel %vm2412, %v5262, %v5311
      %5313 = vrot.lane.b32.xlu0 %v5227, 96
      %v5314 = vpop.permute.xlu0 %5313
      %5315 = vrot.lane.b32.xlu0 %v5229, 96
      %v5316 = vpop.permute.xlu0 %5315
      %5317 = vrot.lane.b32.xlu0 %v5231, 96
      %v5318 = vpop.permute.xlu0 %5317
      %5319 = vrot.lane.b32.xlu0 %v5233, 96
      %v5320 = vpop.permute.xlu0 %5319
      %5321 = vrot.lane.b32.xlu0 %v5235, 96
      %v5322 = vpop.permute.xlu0 %5321
      %5323 = vrot.lane.b32.xlu0 %v5237, 96
      %v5324 = vpop.permute.xlu0 %5323
      %5325 = vrot.lane.b32.xlu0 %v5239, 96
      %v5326 = vpop.permute.xlu0 %5325
      %5327 = vrot.lane.b32.xlu0 %v5241, 96
      %v5328 = vpop.permute.xlu0 %5327
      %5329 = vrot.lane.b32.xlu0 %v5243, 96
      %v5330 = vpop.permute.xlu0 %5329
      %5331 = vrot.lane.b32.xlu0 %v5245, 96
      %v5332 = vpop.permute.xlu0 %5331
      %5333 = vrot.lane.b32.xlu0 %v5247, 96
      %v5334 = vpop.permute.xlu0 %5333
      %5335 = vrot.lane.b32.xlu0 %v5249, 96
      %v5336 = vpop.permute.xlu0 %5335
      %5337 = vrot.lane.b32.xlu0 %v5251, 96
      %v5338 = vpop.permute.xlu0 %5337
      %5339 = vrot.lane.b32.xlu0 %v5253, 96
      %v5340 = vpop.permute.xlu0 %5339
      %5341 = vrot.lane.b32.xlu0 %v5255, 96
      %v5342 = vpop.permute.xlu0 %5341
      %5343 = vrot.lane.b32.xlu0 %v5257, 96
      %v5344 = vpop.permute.xlu0 %5343
      %5345 = vrot.lane.b32.xlu0 %v5259, 96
      %v5346 = vpop.permute.xlu0 %5345
      %5347 = vrot.lane.b32.xlu0 %v5261, 96
      %v5348 = vpop.permute.xlu0 %5347
      %5349 = vrot.lane.b32.xlu0 %v5263, 96
      %v5350 = vpop.permute.xlu0 %5349
      %5351 = vrot.lane.b32.xlu0 %v5312, 96
      %v5352 = vpop.permute.xlu0 %5351
      %5353 = vrot.lane.b32.xlu0 %v5311, 96
      %v5354 = vpop.permute.xlu0 %5353
      %v5355 = vpack.c.b16 %v4955, %v4954
      %v5356 = vpack.c.b16 %v4957, %v4956
      %v5357 = vpack.c.b16 %v4959, %v4958
      %v5358 = vpack.c.b16 %v4961, %v4960
      %v5359 = vpack.c.b16 %v4963, %v4962
      %v5360 = vpack.c.b16 %v4965, %v4964
      %v5361 = vpack.c.b16 %v4967, %v4966
      %v5362 = vpack.c.b16 %v4969, %v4968
      %v5363 = vpack.c.b16 %v4971, %v4970
      %v5364 = vpack.c.b16 %v4973, %v4972
      %v5365 = vpack.c.b16 %v4975, %v4974
      %v5366 = vpack.c.b16 %v4977, %v4976
      %v5367 = vpack.c.b16 %v4979, %v4978
      %v5368 = vpack.c.b16 %v4981, %v4980
      %v5369 = vpack.c.b16 %v4983, %v4982
      %v5370 = vpack.c.b16 %v4985, %v4984
      %v5371 = vpack.c.b16 %v4987, %v4986
      %v5372 = vpack.c.b16 %v4989, %v4988
      %v5373 = vpack.c.b16 %v4991, %v4990
      %v5374 = vpack.c.b16 %v5308, %v4992
      %v5375 = vpack.c.b16 %v5309, %v5309
      %vm5376 = vsmask.f32 2304
      %v5378 = vshrl.u32 %v5355, 16
      %v5380 = vrot.slane %v5378, 5
      %v5381 = vshll.u32 %v5355, 16
      %v5383 = vrot.slane %v5381, 6
      %v5384 = vor.u32 %v5380, %v5383
      %v5386 = vshrl.u32 %v5356, 16
      %v5388 = vrot.slane %v5386, 5
      %v5389 = vshll.u32 %v5356, 16
      %v5391 = vrot.slane %v5389, 6
      %v5392 = vor.u32 %v5388, %v5391
      %v5393 = vsel %vm5376, %v5384, %v5392
      %v5395 = vshrl.u32 %v5357, 16
      %v5397 = vrot.slane %v5395, 5
      %v5398 = vshll.u32 %v5357, 16
      %v5400 = vrot.slane %v5398, 6
      %v5401 = vor.u32 %v5397, %v5400
      %v5402 = vsel %vm5376, %v5392, %v5401
      %v5404 = vshrl.u32 %v5358, 16
      %v5406 = vrot.slane %v5404, 5
      %v5407 = vshll.u32 %v5358, 16
      %v5409 = vrot.slane %v5407, 6
      %v5410 = vor.u32 %v5406, %v5409
      %v5411 = vsel %vm5376, %v5401, %v5410
      %v5413 = vshrl.u32 %v5359, 16
      %v5415 = vrot.slane %v5413, 5
      %v5416 = vshll.u32 %v5359, 16
      %v5418 = vrot.slane %v5416, 6
      %v5419 = vor.u32 %v5415, %v5418
      %v5420 = vsel %vm5376, %v5410, %v5419
      %v5422 = vshrl.u32 %v5360, 16
      %v5424 = vrot.slane %v5422, 5
      %v5425 = vshll.u32 %v5360, 16
      %v5427 = vrot.slane %v5425, 6
      %v5428 = vor.u32 %v5424, %v5427
      %v5429 = vsel %vm5376, %v5419, %v5428
      %v5431 = vshrl.u32 %v5361, 16
      %v5433 = vrot.slane %v5431, 5
      %v5434 = vshll.u32 %v5361, 16
      %v5436 = vrot.slane %v5434, 6
      %v5437 = vor.u32 %v5433, %v5436
      %v5438 = vsel %vm5376, %v5428, %v5437
      %v5440 = vshrl.u32 %v5362, 16
      %v5442 = vrot.slane %v5440, 5
      %v5443 = vshll.u32 %v5362, 16
      %v5445 = vrot.slane %v5443, 6
      %v5446 = vor.u32 %v5442, %v5445
      %v5447 = vsel %vm5376, %v5437, %v5446
      %v5449 = vshrl.u32 %v5363, 16
      %v5451 = vrot.slane %v5449, 5
      %v5452 = vshll.u32 %v5363, 16
      %v5454 = vrot.slane %v5452, 6
      %v5455 = vor.u32 %v5451, %v5454
      %v5456 = vsel %vm5376, %v5446, %v5455
      %v5458 = vshrl.u32 %v5364, 16
      %v5460 = vrot.slane %v5458, 5
      %v5461 = vshll.u32 %v5364, 16
      %v5463 = vrot.slane %v5461, 6
      %v5464 = vor.u32 %v5460, %v5463
      %v5465 = vsel %vm5376, %v5455, %v5464
      %v5467 = vshrl.u32 %v5365, 16
      %v5469 = vrot.slane %v5467, 5
      %v5470 = vshll.u32 %v5365, 16
      %v5472 = vrot.slane %v5470, 6
      %v5473 = vor.u32 %v5469, %v5472
      %v5474 = vsel %vm5376, %v5464, %v5473
      %v5476 = vshrl.u32 %v5366, 16
      %v5478 = vrot.slane %v5476, 5
      %v5479 = vshll.u32 %v5366, 16
      %v5481 = vrot.slane %v5479, 6
      %v5482 = vor.u32 %v5478, %v5481
      %v5483 = vsel %vm5376, %v5473, %v5482
      %v5485 = vshrl.u32 %v5367, 16
      %v5487 = vrot.slane %v5485, 5
      %v5488 = vshll.u32 %v5367, 16
      %v5490 = vrot.slane %v5488, 6
      %v5491 = vor.u32 %v5487, %v5490
      %v5492 = vsel %vm5376, %v5482, %v5491
      %v5494 = vshrl.u32 %v5368, 16
      %v5496 = vrot.slane %v5494, 5
      %v5497 = vshll.u32 %v5368, 16
      %v5499 = vrot.slane %v5497, 6
      %v5500 = vor.u32 %v5496, %v5499
      %v5501 = vsel %vm5376, %v5491, %v5500
      %v5503 = vshrl.u32 %v5369, 16
      %v5505 = vrot.slane %v5503, 5
      %v5506 = vshll.u32 %v5369, 16
      %v5508 = vrot.slane %v5506, 6
      %v5509 = vor.u32 %v5505, %v5508
      %v5510 = vsel %vm5376, %v5500, %v5509
      %v5512 = vshrl.u32 %v5370, 16
      %v5514 = vrot.slane %v5512, 5
      %v5515 = vshll.u32 %v5370, 16
      %v5517 = vrot.slane %v5515, 6
      %v5518 = vor.u32 %v5514, %v5517
      %v5519 = vsel %vm5376, %v5509, %v5518
      %v5521 = vshrl.u32 %v5371, 16
      %v5523 = vrot.slane %v5521, 5
      %v5524 = vshll.u32 %v5371, 16
      %v5526 = vrot.slane %v5524, 6
      %v5527 = vor.u32 %v5523, %v5526
      %v5528 = vsel %vm5376, %v5518, %v5527
      %v5530 = vshrl.u32 %v5372, 16
      %v5532 = vrot.slane %v5530, 5
      %v5533 = vshll.u32 %v5372, 16
      %v5535 = vrot.slane %v5533, 6
      %v5536 = vor.u32 %v5532, %v5535
      %v5537 = vsel %vm5376, %v5527, %v5536
      %v5539 = vshrl.u32 %v5373, 16
      %v5541 = vrot.slane %v5539, 5
      %v5542 = vshll.u32 %v5373, 16
      %v5544 = vrot.slane %v5542, 6
      %v5545 = vor.u32 %v5541, %v5544
      %v5546 = vsel %vm5376, %v5536, %v5545
      %v5548 = vshrl.u32 %v5374, 16
      %v5550 = vrot.slane %v5548, 5
      %v5551 = vshll.u32 %v5374, 16
      %v5553 = vrot.slane %v5551, 6
      %v5554 = vor.u32 %v5550, %v5553
      %v5555 = vsel %vm5376, %v5545, %v5554
      %v5557 = vshrl.u32 %v5375, 16
      %v5559 = vrot.slane %v5557, 5
      %v5560 = vshll.u32 %v5375, 16
      %v5562 = vrot.slane %v5560, 6
      %v5563 = vor.u32 %v5559, %v5562
      %v5564 = vsel %vm5376, %v5554, %v5563
      %vm5565 = vcmask 1041408
      %v5566 = vrot.slane %v5355, 6
      %v5567 = vrot.slane %v5356, 6
      %v5568 = vsel %vm5565, %v5566, %v5567
      %v5569 = vrot.slane %v5357, 6
      %v5570 = vsel %vm5565, %v5567, %v5569
      %v5571 = vrot.slane %v5358, 6
      %v5572 = vsel %vm5565, %v5569, %v5571
      %v5573 = vrot.slane %v5359, 6
      %v5574 = vsel %vm5565, %v5571, %v5573
      %v5575 = vrot.slane %v5360, 6
      %v5576 = vsel %vm5565, %v5573, %v5575
      %v5577 = vrot.slane %v5361, 6
      %v5578 = vsel %vm5565, %v5575, %v5577
      %v5579 = vrot.slane %v5362, 6
      %v5580 = vsel %vm5565, %v5577, %v5579
      %v5581 = vrot.slane %v5363, 6
      %v5582 = vsel %vm5565, %v5579, %v5581
      %v5583 = vrot.slane %v5364, 6
      %v5584 = vsel %vm5565, %v5581, %v5583
      %v5585 = vrot.slane %v5365, 6
      %v5586 = vsel %vm5565, %v5583, %v5585
      %v5587 = vrot.slane %v5366, 6
      %v5588 = vsel %vm5565, %v5585, %v5587
      %v5589 = vrot.slane %v5367, 6
      %v5590 = vsel %vm5565, %v5587, %v5589
      %v5591 = vrot.slane %v5368, 6
      %v5592 = vsel %vm5565, %v5589, %v5591
      %v5593 = vrot.slane %v5369, 6
      %v5594 = vsel %vm5565, %v5591, %v5593
      %v5595 = vrot.slane %v5370, 6
      %v5596 = vsel %vm5565, %v5593, %v5595
      %v5597 = vrot.slane %v5371, 6
      %v5598 = vsel %vm5565, %v5595, %v5597
      %v5599 = vrot.slane %v5372, 6
      %v5600 = vsel %vm5565, %v5597, %v5599
      %v5601 = vrot.slane %v5373, 6
      %v5602 = vsel %vm5565, %v5599, %v5601
      %v5603 = vrot.slane %v5374, 6
      %v5604 = vsel %vm5565, %v5601, %v5603
      %v5605 = vrot.slane %v5375, 6
      %v5606 = vsel %vm5565, %v5603, %v5605
      %5607 = vrot.lane.b32.xlu0 %v5566, 32
      %v5608 = vpop.permute.xlu0 %5607
      %5609 = vrot.lane.b32.xlu0 %v5568, 32
      %v5610 = vpop.permute.xlu0 %5609
      %5611 = vrot.lane.b32.xlu0 %v5570, 32
      %v5612 = vpop.permute.xlu0 %5611
      %5613 = vrot.lane.b32.xlu0 %v5572, 32
      %v5614 = vpop.permute.xlu0 %5613
      %5615 = vrot.lane.b32.xlu0 %v5574, 32
      %v5616 = vpop.permute.xlu0 %5615
      %5617 = vrot.lane.b32.xlu0 %v5576, 32
      %v5618 = vpop.permute.xlu0 %5617
      %5619 = vrot.lane.b32.xlu0 %v5578, 32
      %v5620 = vpop.permute.xlu0 %5619
      %5621 = vrot.lane.b32.xlu0 %v5580, 32
      %v5622 = vpop.permute.xlu0 %5621
      %5623 = vrot.lane.b32.xlu0 %v5582, 32
      %v5624 = vpop.permute.xlu0 %5623
      %5625 = vrot.lane.b32.xlu0 %v5584, 32
      %v5626 = vpop.permute.xlu0 %5625
      %5627 = vrot.lane.b32.xlu0 %v5586, 32
      %v5628 = vpop.permute.xlu0 %5627
      %5629 = vrot.lane.b32.xlu0 %v5588, 32
      %v5630 = vpop.permute.xlu0 %5629
      %5631 = vrot.lane.b32.xlu0 %v5590, 32
      %v5632 = vpop.permute.xlu0 %5631
      %5633 = vrot.lane.b32.xlu0 %v5592, 32
      %v5634 = vpop.permute.xlu0 %5633
      %5635 = vrot.lane.b32.xlu0 %v5594, 32
      %v5636 = vpop.permute.xlu0 %5635
      %5637 = vrot.lane.b32.xlu0 %v5596, 32
      %v5638 = vpop.permute.xlu0 %5637
      %5639 = vrot.lane.b32.xlu0 %v5598, 32
      %v5640 = vpop.permute.xlu0 %5639
      %5641 = vrot.lane.b32.xlu0 %v5600, 32
      %v5642 = vpop.permute.xlu0 %5641
      %5643 = vrot.lane.b32.xlu0 %v5602, 32
      %v5644 = vpop.permute.xlu0 %5643
      %5645 = vrot.lane.b32.xlu0 %v5604, 32
      %v5646 = vpop.permute.xlu0 %5645
      %5647 = vrot.lane.b32.xlu0 %v5606, 32
      %v5648 = vpop.permute.xlu0 %5647
      %v5651 = vunpack.c.l.b16 %v4907
      %v5652 = vunpack.c.l.b16 %v4908
      %v5653 = vpack.c.b16 %v5651, %v5309
      %v5654 = vpack.c.b16 %v5652, %v5652
      %v5655 = vrot.slane %v5653, 6
      %v5656 = vsel %vm5565, %v5603, %v5655
      %v5657 = vrot.slane %v5654, 6
      %v5658 = vsel %vm5565, %v5655, %v5657
      %5659 = vrot.lane.b32.xlu0 %v5567, 64
      %v5660 = vpop.permute.xlu0 %5659
      %5661 = vrot.lane.b32.xlu0 %v5570, 64
      %v5662 = vpop.permute.xlu0 %5661
      %5663 = vrot.lane.b32.xlu0 %v5572, 64
      %v5664 = vpop.permute.xlu0 %5663
      %5665 = vrot.lane.b32.xlu0 %v5574, 64
      %v5666 = vpop.permute.xlu0 %5665
      %5667 = vrot.lane.b32.xlu0 %v5576, 64
      %v5668 = vpop.permute.xlu0 %5667
      %5669 = vrot.lane.b32.xlu0 %v5578, 64
      %v5670 = vpop.permute.xlu0 %5669
      %5671 = vrot.lane.b32.xlu0 %v5580, 64
      %v5672 = vpop.permute.xlu0 %5671
      %5673 = vrot.lane.b32.xlu0 %v5582, 64
      %v5674 = vpop.permute.xlu0 %5673
      %5675 = vrot.lane.b32.xlu0 %v5584, 64
      %v5676 = vpop.permute.xlu0 %5675
      %5677 = vrot.lane.b32.xlu0 %v5586, 64
      %v5678 = vpop.permute.xlu0 %5677
      %5679 = vrot.lane.b32.xlu0 %v5588, 64
      %v5680 = vpop.permute.xlu0 %5679
      %5681 = vrot.lane.b32.xlu0 %v5590, 64
      %v5682 = vpop.permute.xlu0 %5681
      %5683 = vrot.lane.b32.xlu0 %v5592, 64
      %v5684 = vpop.permute.xlu0 %5683
      %5685 = vrot.lane.b32.xlu0 %v5594, 64
      %v5686 = vpop.permute.xlu0 %5685
      %5687 = vrot.lane.b32.xlu0 %v5596, 64
      %v5688 = vpop.permute.xlu0 %5687
      %5689 = vrot.lane.b32.xlu0 %v5598, 64
      %v5690 = vpop.permute.xlu0 %5689
      %5691 = vrot.lane.b32.xlu0 %v5600, 64
      %v5692 = vpop.permute.xlu0 %5691
      %5693 = vrot.lane.b32.xlu0 %v5602, 64
      %v5694 = vpop.permute.xlu0 %5693
      %5695 = vrot.lane.b32.xlu0 %v5604, 64
      %v5696 = vpop.permute.xlu0 %5695
      %5697 = vrot.lane.b32.xlu0 %v5656, 64
      %v5698 = vpop.permute.xlu0 %5697
      %5699 = vrot.lane.b32.xlu0 %v5658, 64
      %v5700 = vpop.permute.xlu0 %5699
      %vm5701 = vsmask.f32 1280
      %v5702 = vrot.slane %v5386, 6
      %v5703 = vrot.slane %v5389, 7
      %v5704 = vor.u32 %v5702, %v5703
      %v5705 = vrot.slane %v5395, 6
      %v5706 = vrot.slane %v5398, 7
      %v5707 = vor.u32 %v5705, %v5706
      %v5708 = vsel %vm5701, %v5704, %v5707
      %v5709 = vrot.slane %v5404, 6
      %v5710 = vrot.slane %v5407, 7
      %v5711 = vor.u32 %v5709, %v5710
      %v5712 = vsel %vm5701, %v5707, %v5711
      %v5713 = vrot.slane %v5413, 6
      %v5714 = vrot.slane %v5416, 7
      %v5715 = vor.u32 %v5713, %v5714
      %v5716 = vsel %vm5701, %v5711, %v5715
      %v5717 = vrot.slane %v5422, 6
      %v5718 = vrot.slane %v5425, 7
      %v5719 = vor.u32 %v5717, %v5718
      %v5720 = vsel %vm5701, %v5715, %v5719
      %v5721 = vrot.slane %v5431, 6
      %v5722 = vrot.slane %v5434, 7
      %v5723 = vor.u32 %v5721, %v5722
      %v5724 = vsel %vm5701, %v5719, %v5723
      %v5725 = vrot.slane %v5440, 6
      %v5726 = vrot.slane %v5443, 7
      %v5727 = vor.u32 %v5725, %v5726
      %v5728 = vsel %vm5701, %v5723, %v5727
      %v5729 = vrot.slane %v5449, 6
      %v5730 = vrot.slane %v5452, 7
      %v5731 = vor.u32 %v5729, %v5730
      %v5732 = vsel %vm5701, %v5727, %v5731
      %v5733 = vrot.slane %v5458, 6
      %v5734 = vrot.slane %v5461, 7
      %v5735 = vor.u32 %v5733, %v5734
      %v5736 = vsel %vm5701, %v5731, %v5735
      %v5737 = vrot.slane %v5467, 6
      %v5738 = vrot.slane %v5470, 7
      %v5739 = vor.u32 %v5737, %v5738
      %v5740 = vsel %vm5701, %v5735, %v5739
      %v5741 = vrot.slane %v5476, 6
      %v5742 = vrot.slane %v5479, 7
      %v5743 = vor.u32 %v5741, %v5742
      %v5744 = vsel %vm5701, %v5739, %v5743
      %v5745 = vrot.slane %v5485, 6
      %v5746 = vrot.slane %v5488, 7
      %v5747 = vor.u32 %v5745, %v5746
      %v5748 = vsel %vm5701, %v5743, %v5747
      %v5749 = vrot.slane %v5494, 6
      %v5750 = vrot.slane %v5497, 7
      %v5751 = vor.u32 %v5749, %v5750
      %v5752 = vsel %vm5701, %v5747, %v5751
      %v5753 = vrot.slane %v5503, 6
      %v5754 = vrot.slane %v5506, 7
      %v5755 = vor.u32 %v5753, %v5754
      %v5756 = vsel %vm5701, %v5751, %v5755
      %v5757 = vrot.slane %v5512, 6
      %v5758 = vrot.slane %v5515, 7
      %v5759 = vor.u32 %v5757, %v5758
      %v5760 = vsel %vm5701, %v5755, %v5759
      %v5761 = vrot.slane %v5521, 6
      %v5762 = vrot.slane %v5524, 7
      %v5763 = vor.u32 %v5761, %v5762
      %v5764 = vsel %vm5701, %v5759, %v5763
      %v5765 = vrot.slane %v5530, 6
      %v5766 = vrot.slane %v5533, 7
      %v5767 = vor.u32 %v5765, %v5766
      %v5768 = vsel %vm5701, %v5763, %v5767
      %v5769 = vrot.slane %v5539, 6
      %v5770 = vrot.slane %v5542, 7
      %v5771 = vor.u32 %v5769, %v5770
      %v5772 = vsel %vm5701, %v5767, %v5771
      %v5773 = vrot.slane %v5548, 6
      %v5774 = vrot.slane %v5551, 7
      %v5775 = vor.u32 %v5773, %v5774
      %v5776 = vsel %vm5701, %v5771, %v5775
      %v5778 = vshrl.u32 %v5653, 16
      %v5780 = vrot.slane %v5778, 6
      %v5781 = vshll.u32 %v5653, 16
      %v5783 = vrot.slane %v5781, 7
      %v5784 = vor.u32 %v5780, %v5783
      %v5785 = vsel %vm5701, %v5775, %v5784
      %v5787 = vshrl.u32 %v5654, 16
      %v5789 = vrot.slane %v5787, 6
      %v5790 = vshll.u32 %v5654, 16
      %v5792 = vrot.slane %v5790, 7
      %v5793 = vor.u32 %v5789, %v5792
      %v5794 = vsel %vm5701, %v5784, %v5793
      %5795 = vrot.lane.b32.xlu0 %v5704, 96
      %v5796 = vpop.permute.xlu0 %5795
      %5797 = vrot.lane.b32.xlu0 %v5708, 96
      %v5798 = vpop.permute.xlu0 %5797
      %5799 = vrot.lane.b32.xlu0 %v5712, 96
      %v5800 = vpop.permute.xlu0 %5799
      %5801 = vrot.lane.b32.xlu0 %v5716, 96
      %v5802 = vpop.permute.xlu0 %5801
      %5803 = vrot.lane.b32.xlu0 %v5720, 96
      %v5804 = vpop.permute.xlu0 %5803
      %5805 = vrot.lane.b32.xlu0 %v5724, 96
      %v5806 = vpop.permute.xlu0 %5805
      %5807 = vrot.lane.b32.xlu0 %v5728, 96
      %v5808 = vpop.permute.xlu0 %5807
      %5809 = vrot.lane.b32.xlu0 %v5732, 96
      %v5810 = vpop.permute.xlu0 %5809
      %5811 = vrot.lane.b32.xlu0 %v5736, 96
      %v5812 = vpop.permute.xlu0 %5811
      %5813 = vrot.lane.b32.xlu0 %v5740, 96
      %v5814 = vpop.permute.xlu0 %5813
      %5815 = vrot.lane.b32.xlu0 %v5744, 96
      %v5816 = vpop.permute.xlu0 %5815
      %5817 = vrot.lane.b32.xlu0 %v5748, 96
      %v5818 = vpop.permute.xlu0 %5817
      %5819 = vrot.lane.b32.xlu0 %v5752, 96
      %v5820 = vpop.permute.xlu0 %5819
      %5821 = vrot.lane.b32.xlu0 %v5756, 96
      %v5822 = vpop.permute.xlu0 %5821
      %5823 = vrot.lane.b32.xlu0 %v5760, 96
      %v5824 = vpop.permute.xlu0 %5823
      %5825 = vrot.lane.b32.xlu0 %v5764, 96
      %v5826 = vpop.permute.xlu0 %5825
      %5827 = vrot.lane.b32.xlu0 %v5768, 96
      %v5828 = vpop.permute.xlu0 %5827
      %5829 = vrot.lane.b32.xlu0 %v5772, 96
      %v5830 = vpop.permute.xlu0 %5829
      %5831 = vrot.lane.b32.xlu0 %v5776, 96
      %v5832 = vpop.permute.xlu0 %5831
      %5833 = vrot.lane.b32.xlu0 %v5785, 96
      %v5834 = vpop.permute.xlu0 %5833
      %5835 = vrot.lane.b32.xlu0 %v5794, 96
      %v5836 = vpop.permute.xlu0 %5835
      %vm5837 = vcmask 1040384
      %v5838 = vrot.slane %v5356, 7
      %v5839 = vrot.slane %v5357, 7
      %v5840 = vsel %vm5837, %v5838, %v5839
      %v5841 = vrot.slane %v5358, 7
      %v5842 = vsel %vm5837, %v5839, %v5841
      %v5843 = vrot.slane %v5359, 7
      %v5844 = vsel %vm5837, %v5841, %v5843
      %v5845 = vrot.slane %v5360, 7
      %v5846 = vsel %vm5837, %v5843, %v5845
      %v5847 = vrot.slane %v5361, 7
      %v5848 = vsel %vm5837, %v5845, %v5847
      %v5849 = vrot.slane %v5362, 7
      %v5850 = vsel %vm5837, %v5847, %v5849
      %v5851 = vrot.slane %v5363, 7
      %v5852 = vsel %vm5837, %v5849, %v5851
      %v5853 = vrot.slane %v5364, 7
      %v5854 = vsel %vm5837, %v5851, %v5853
      %v5855 = vrot.slane %v5365, 7
      %v5856 = vsel %vm5837, %v5853, %v5855
      %v5857 = vrot.slane %v5366, 7
      %v5858 = vsel %vm5837, %v5855, %v5857
      %v5859 = vrot.slane %v5367, 7
      %v5860 = vsel %vm5837, %v5857, %v5859
      %v5861 = vrot.slane %v5368, 7
      %v5862 = vsel %vm5837, %v5859, %v5861
      %v5863 = vrot.slane %v5369, 7
      %v5864 = vsel %vm5837, %v5861, %v5863
      %v5865 = vrot.slane %v5370, 7
      %v5866 = vsel %vm5837, %v5863, %v5865
      %v5867 = vrot.slane %v5371, 7
      %v5868 = vsel %vm5837, %v5865, %v5867
      %v5869 = vrot.slane %v5372, 7
      %v5870 = vsel %vm5837, %v5867, %v5869
      %v5871 = vrot.slane %v5373, 7
      %v5872 = vsel %vm5837, %v5869, %v5871
      %v5873 = vrot.slane %v5374, 7
      %v5874 = vsel %vm5837, %v5871, %v5873
      %v5875 = vrot.slane %v5653, 7
      %v5876 = vsel %vm5837, %v5873, %v5875
      %v5877 = vrot.slane %v5654, 7
      %v5878 = vsel %vm5837, %v5875, %v5877
      %v5880 = vsel %vm3016, %v4993, %v5182
      %v5882 = vsel %vm3016, %v4994, %v5184
      %v5884 = vsel %vm3016, %v4995, %v5186
      %v5886 = vsel %vm3016, %v4996, %v5188
      %v5888 = vsel %vm3016, %v4997, %v5190
      %v5890 = vsel %vm3016, %v4998, %v5192
      %v5892 = vsel %vm3016, %v4999, %v5194
      %v5894 = vsel %vm3016, %v5000, %v5196
      %v5896 = vsel %vm3016, %v5001, %v5198
      %v5898 = vsel %vm3016, %v5002, %v5200
      %v5900 = vsel %vm3016, %v5003, %v5202
      %v5902 = vsel %vm3016, %v5004, %v5204
      %v5904 = vsel %vm3016, %v5005, %v5206
      %v5906 = vsel %vm3016, %v5006, %v5208
      %v5908 = vsel %vm3016, %v5007, %v5210
      %v5910 = vsel %vm3016, %v5008, %v5212
      %v5912 = vsel %vm3016, %v5009, %v5214
      %v5914 = vsel %vm3016, %v5010, %v5216
      %v5916 = vsel %vm3016, %v5011, %v5218
      %v5918 = vsel %vm3016, %v5012, %v5220
      %v5920 = vsel %vm3016, %v5013, %v5222
      %v5922 = vsel %vm3080, %v5880, %v5265
      %v5924 = vsel %vm3080, %v5882, %v5267
      %v5926 = vsel %vm3080, %v5884, %v5269
      %v5928 = vsel %vm3080, %v5886, %v5271
      %v5930 = vsel %vm3080, %v5888, %v5273
      %v5932 = vsel %vm3080, %v5890, %v5275
      %v5934 = vsel %vm3080, %v5892, %v5277
      %v5936 = vsel %vm3080, %v5894, %v5279
      %v5938 = vsel %vm3080, %v5896, %v5281
      %v5940 = vsel %vm3080, %v5898, %v5283
      %v5942 = vsel %vm3080, %v5900, %v5285
      %v5944 = vsel %vm3080, %v5902, %v5287
      %v5946 = vsel %vm3080, %v5904, %v5289
      %v5948 = vsel %vm3080, %v5906, %v5291
      %v5950 = vsel %vm3080, %v5908, %v5293
      %v5952 = vsel %vm3080, %v5910, %v5295
      %v5954 = vsel %vm3080, %v5912, %v5297
      %v5956 = vsel %vm3080, %v5914, %v5299
      %v5958 = vsel %vm3080, %v5916, %v5301
      %v5960 = vsel %vm3080, %v5918, %v5303
      %v5962 = vsel %vm3080, %v5920, %v5305
      %v5964 = vsel %vm3123, %v5922, %v5314
      %v5966 = vsel %vm3123, %v5924, %v5316
      %v5968 = vsel %vm3123, %v5926, %v5318
      %v5970 = vsel %vm3123, %v5928, %v5320
      %v5972 = vsel %vm3123, %v5930, %v5322
      %v5974 = vsel %vm3123, %v5932, %v5324
      %v5976 = vsel %vm3123, %v5934, %v5326
      %v5978 = vsel %vm3123, %v5936, %v5328
      %v5980 = vsel %vm3123, %v5938, %v5330
      %v5982 = vsel %vm3123, %v5940, %v5332
      %v5984 = vsel %vm3123, %v5942, %v5334
      %v5986 = vsel %vm3123, %v5944, %v5336
      %v5988 = vsel %vm3123, %v5946, %v5338
      %v5990 = vsel %vm3123, %v5948, %v5340
      %v5992 = vsel %vm3123, %v5950, %v5342
      %v5994 = vsel %vm3123, %v5952, %v5344
      %v5996 = vsel %vm3123, %v5954, %v5346
      %v5998 = vsel %vm3123, %v5956, %v5348
      %v6000 = vsel %vm3123, %v5958, %v5350
      %v6002 = vsel %vm3123, %v5960, %v5352
      %v6004 = vsel %vm3123, %v5962, %v5354
      %v6007 = vsel %vm3016, %v5384, %v5608
      %v6010 = vsel %vm3016, %v5393, %v5610
      %v6013 = vsel %vm3016, %v5402, %v5612
      %v6016 = vsel %vm3016, %v5411, %v5614
      %v6019 = vsel %vm3016, %v5420, %v5616
      %v6022 = vsel %vm3016, %v5429, %v5618
      %v6025 = vsel %vm3016, %v5438, %v5620
      %v6028 = vsel %vm3016, %v5447, %v5622
      %v6031 = vsel %vm3016, %v5456, %v5624
      %v6034 = vsel %vm3016, %v5465, %v5626
      %v6037 = vsel %vm3016, %v5474, %v5628
      %v6040 = vsel %vm3016, %v5483, %v5630
      %v6043 = vsel %vm3016, %v5492, %v5632
      %v6046 = vsel %vm3016, %v5501, %v5634
      %v6049 = vsel %vm3016, %v5510, %v5636
      %v6052 = vsel %vm3016, %v5519, %v5638
      %v6055 = vsel %vm3016, %v5528, %v5640
      %v6058 = vsel %vm3016, %v5537, %v5642
      %v6061 = vsel %vm3016, %v5546, %v5644
      %v6064 = vsel %vm3016, %v5555, %v5646
      %v6067 = vsel %vm3016, %v5564, %v5648
      %v6069 = vsel %vm3080, %v6007, %v5660
      %v6071 = vsel %vm3080, %v6010, %v5662
      %v6073 = vsel %vm3080, %v6013, %v5664
      %v6075 = vsel %vm3080, %v6016, %v5666
      %v6077 = vsel %vm3080, %v6019, %v5668
      %v6079 = vsel %vm3080, %v6022, %v5670
      %v6081 = vsel %vm3080, %v6025, %v5672
      %v6083 = vsel %vm3080, %v6028, %v5674
      %v6085 = vsel %vm3080, %v6031, %v5676
      %v6087 = vsel %vm3080, %v6034, %v5678
      %v6089 = vsel %vm3080, %v6037, %v5680
      %v6091 = vsel %vm3080, %v6040, %v5682
      %v6093 = vsel %vm3080, %v6043, %v5684
      %v6095 = vsel %vm3080, %v6046, %v5686
      %v6097 = vsel %vm3080, %v6049, %v5688
      %v6099 = vsel %vm3080, %v6052, %v5690
      %v6101 = vsel %vm3080, %v6055, %v5692
      %v6103 = vsel %vm3080, %v6058, %v5694
      %v6105 = vsel %vm3080, %v6061, %v5696
      %v6107 = vsel %vm3080, %v6064, %v5698
      %v6109 = vsel %vm3080, %v6067, %v5700
      %v6111 = vsel %vm3123, %v6069, %v5796
      %v6113 = vsel %vm3123, %v6071, %v5798
      %v6115 = vsel %vm3123, %v6073, %v5800
      %v6117 = vsel %vm3123, %v6075, %v5802
      %v6119 = vsel %vm3123, %v6077, %v5804
      %v6121 = vsel %vm3123, %v6079, %v5806
      %v6123 = vsel %vm3123, %v6081, %v5808
      %v6125 = vsel %vm3123, %v6083, %v5810
      %v6127 = vsel %vm3123, %v6085, %v5812
      %v6129 = vsel %vm3123, %v6087, %v5814
      %v6131 = vsel %vm3123, %v6089, %v5816
      %v6133 = vsel %vm3123, %v6091, %v5818
      %v6135 = vsel %vm3123, %v6093, %v5820
      %v6137 = vsel %vm3123, %v6095, %v5822
      %v6139 = vsel %vm3123, %v6097, %v5824
      %v6141 = vsel %vm3123, %v6099, %v5826
      %v6143 = vsel %vm3123, %v6101, %v5828
      %v6145 = vsel %vm3123, %v6103, %v5830
      %v6147 = vsel %vm3123, %v6105, %v5832
      %v6149 = vsel %vm3123, %v6107, %v5834
      %v6151 = vsel %vm3123, %v6109, %v5836
      %v6152 = vld [vmem:[%s6] sm:$0xf]
      %v6153 = vld [vmem:[%s6 + $0x4] sm:$0xf]
      %v6154 = vld [vmem:[%s6 + $0x8] sm:$0xf]
      %v6155 = vld [vmem:[%s6 + $0xc] sm:$0xf]
      %v6156 = vld [vmem:[%s6 + $0x10] sm:$0xf]
      %v6157 = vld [vmem:[%s6 + $0x14] sm:$0xf]
      %v6158 = vld [vmem:[%s6 + $0x18] sm:$0xf]
      %v6159 = vld [vmem:[%s6 + $0x1c] sm:$0xf]
      %v6160 = vld [vmem:[%s6 + $0x20] sm:$0xf]
      %v6161 = vld [vmem:[%s6 + $0x24] sm:$0xf]
      %v6162 = vld [vmem:[%s6 + $0x28] sm:$0xf]
      %v6163 = vld [vmem:[%s6 + $0x2c] sm:$0xf]
      %v6164 = vld [vmem:[%s6 + $0x30] sm:$0xf]
      %v6165 = vld [vmem:[%s6 + $0x34] sm:$0xf]
      %v6166 = vld [vmem:[%s6 + $0x38] sm:$0xf]
      %v6167 = vld [vmem:[%s6 + $0x3c] sm:$0xf]
      %v6168 = vld [vmem:[%s6 + $0x40] sm:$0xf]
      %v6169 = vld [vmem:[%s6 + $0x44] sm:$0xf]
      %v6170 = vld [vmem:[%s6 + $0x48] sm:$0xf]
      %v6171 = vld [vmem:[%s6 + $0x4c] sm:$0xf]
      %v6172 = vld [vmem:[%s6 + $0x50] sm:$0xf]
      %v6173 = vld [vmem:[%s6 + $0x54] sm:$0xf]
      %v6174 = vld [vmem:[%s6 + $0x58] sm:$0xf]
      %v6175 = vld [vmem:[%s6 + $0x5c] sm:$0xf]
      %v6176 = vld [vmem:[%s6 + $0x60] sm:$0xf]
      %v6177 = vld [vmem:[%s6 + $0x64] sm:$0xf]
      %v6178 = vld [vmem:[%s6 + $0x68] sm:$0xf]
      %v6179 = vld [vmem:[%s6 + $0x6c] sm:$0xf]
      %v6180 = vld [vmem:[%s6 + $0x70] sm:$0xf]
      %v6181 = vld [vmem:[%s6 + $0x74] sm:$0xf]
      %v6182 = vld [vmem:[%s6 + $0x78] sm:$0xf]
      %v6183 = vld [vmem:[%s6 + $0x7c] sm:$0xf]
      %v6184 = vld [vmem:[%s6 + $0x80] sm:$0xf]
      %v6185 = vld [vmem:[%s6 + $0x84] sm:$0xf]
      %v6186 = vld [vmem:[%s6 + $0x88] sm:$0xf]
      %v6187 = vld [vmem:[%s6 + $0x8c] sm:$0xf]
      %v6188 = vld [vmem:[%s7] sm:$0x1]
      %v6190 = vlaneseq
      %v6191 = vshrl.u32 %v6190, 7
      %v6192 = vsub.s32 0, %v6191
      %v6193 = vrot.slane %v6188, %v6192
      %v6195 = vshrl.u32 %v5964, 16
      %v6197 = vrot.slane %v6195, 2
      %v6198 = vshll.u32 %v5964, 16
      %v6200 = vrot.slane %v6198, 3
      %v6201 = vor.u32 %v6197, %v6200
      %v6202 = vshrl.u32 %v5966, 16
      %v6204 = vrot.slane %v6202, 2
      %v6205 = vshll.u32 %v5966, 16
      %v6207 = vrot.slane %v6205, 3
      %v6208 = vor.u32 %v6204, %v6207
      %v6209 = vsel %vm2801, %v6201, %v6208
      %v6210 = vshrl.u32 %v6111, 16
      %v6212 = vrot.slane %v6210, 2
      %v6213 = vshll.u32 %v6111, 16
      %v6215 = vrot.slane %v6213, 3
      %v6216 = vor.u32 %v6212, %v6215
      %v6217 = vshrl.u32 %v6113, 16
      %v6219 = vrot.slane %v6217, 2
      %v6220 = vshll.u32 %v6113, 16
      %v6222 = vrot.slane %v6220, 3
      %v6223 = vor.u32 %v6219, %v6222
      %v6224 = vsel %vm2801, %v6216, %v6223
      %v6226 = vshrl.u32 %v5838, 16
      %v6228 = vrot.slane %v6226, 2
      %v6229 = vshll.u32 %v5838, 16
      %v6231 = vrot.slane %v6229, 3
      %v6232 = vor.u32 %v6228, %v6231
      %v6234 = vshrl.u32 %v5840, 16
      %v6236 = vrot.slane %v6234, 2
      %v6237 = vshll.u32 %v5840, 16
      %v6239 = vrot.slane %v6237, 3
      %v6240 = vor.u32 %v6236, %v6239
      %v6241 = vsel %vm2801, %v6232, %v6240
      %v6242 = vshrl.u32 %v5968, 16
      %v6244 = vrot.slane %v6242, 2
      %v6245 = vshll.u32 %v5968, 16
      %v6247 = vrot.slane %v6245, 3
      %v6248 = vor.u32 %v6244, %v6247
      %v6249 = vsel %vm2801, %v6208, %v6248
      %v6250 = vshrl.u32 %v6115, 16
      %v6252 = vrot.slane %v6250, 2
      %v6253 = vshll.u32 %v6115, 16
      %v6255 = vrot.slane %v6253, 3
      %v6256 = vor.u32 %v6252, %v6255
      %v6257 = vsel %vm2801, %v6223, %v6256
      %v6259 = vshrl.u32 %v5842, 16
      %v6261 = vrot.slane %v6259, 2
      %v6262 = vshll.u32 %v5842, 16
      %v6264 = vrot.slane %v6262, 3
      %v6265 = vor.u32 %v6261, %v6264
      %v6266 = vsel %vm2801, %v6240, %v6265
      %v6267 = vshrl.u32 %v5970, 16
      %v6269 = vrot.slane %v6267, 2
      %v6270 = vshll.u32 %v5970, 16
      %v6272 = vrot.slane %v6270, 3
      %v6273 = vor.u32 %v6269, %v6272
      %v6274 = vsel %vm2801, %v6248, %v6273
      %v6275 = vshrl.u32 %v6117, 16
      %v6277 = vrot.slane %v6275, 2
      %v6278 = vshll.u32 %v6117, 16
      %v6280 = vrot.slane %v6278, 3
      %v6281 = vor.u32 %v6277, %v6280
      %v6282 = vsel %vm2801, %v6256, %v6281
      %v6284 = vshrl.u32 %v5844, 16
      %v6286 = vrot.slane %v6284, 2
      %v6287 = vshll.u32 %v5844, 16
      %v6289 = vrot.slane %v6287, 3
      %v6290 = vor.u32 %v6286, %v6289
      %v6291 = vsel %vm2801, %v6265, %v6290
      %v6292 = vshrl.u32 %v5972, 16
      %v6294 = vrot.slane %v6292, 2
      %v6295 = vshll.u32 %v5972, 16
      %v6297 = vrot.slane %v6295, 3
      %v6298 = vor.u32 %v6294, %v6297
      %v6299 = vsel %vm2801, %v6273, %v6298
      %v6300 = vshrl.u32 %v6119, 16
      %v6302 = vrot.slane %v6300, 2
      %v6303 = vshll.u32 %v6119, 16
      %v6305 = vrot.slane %v6303, 3
      %v6306 = vor.u32 %v6302, %v6305
      %v6307 = vsel %vm2801, %v6281, %v6306
      %v6309 = vshrl.u32 %v5846, 16
      %v6311 = vrot.slane %v6309, 2
      %v6312 = vshll.u32 %v5846, 16
      %v6314 = vrot.slane %v6312, 3
      %v6315 = vor.u32 %v6311, %v6314
      %v6316 = vsel %vm2801, %v6290, %v6315
      %v6317 = vshrl.u32 %v5974, 16
      %v6319 = vrot.slane %v6317, 2
      %v6320 = vshll.u32 %v5974, 16
      %v6322 = vrot.slane %v6320, 3
      %v6323 = vor.u32 %v6319, %v6322
      %v6324 = vsel %vm2801, %v6298, %v6323
      %v6325 = vshrl.u32 %v6121, 16
      %v6327 = vrot.slane %v6325, 2
      %v6328 = vshll.u32 %v6121, 16
      %v6330 = vrot.slane %v6328, 3
      %v6331 = vor.u32 %v6327, %v6330
      %v6332 = vsel %vm2801, %v6306, %v6331
      %v6334 = vshrl.u32 %v5848, 16
      %v6336 = vrot.slane %v6334, 2
      %v6337 = vshll.u32 %v5848, 16
      %v6339 = vrot.slane %v6337, 3
      %v6340 = vor.u32 %v6336, %v6339
      %v6341 = vsel %vm2801, %v6315, %v6340
      %v6342 = vshrl.u32 %v5976, 16
      %v6344 = vrot.slane %v6342, 2
      %v6345 = vshll.u32 %v5976, 16
      %v6347 = vrot.slane %v6345, 3
      %v6348 = vor.u32 %v6344, %v6347
      %v6349 = vsel %vm2801, %v6323, %v6348
      %v6350 = vshrl.u32 %v6123, 16
      %v6352 = vrot.slane %v6350, 2
      %v6353 = vshll.u32 %v6123, 16
      %v6355 = vrot.slane %v6353, 3
      %v6356 = vor.u32 %v6352, %v6355
      %v6357 = vsel %vm2801, %v6331, %v6356
      %v6359 = vshrl.u32 %v5850, 16
      %v6361 = vrot.slane %v6359, 2
      %v6362 = vshll.u32 %v5850, 16
      %v6364 = vrot.slane %v6362, 3
      %v6365 = vor.u32 %v6361, %v6364
      %v6366 = vsel %vm2801, %v6340, %v6365
      %v6367 = vshrl.u32 %v5978, 16
      %v6369 = vrot.slane %v6367, 2
      %v6370 = vshll.u32 %v5978, 16
      %v6372 = vrot.slane %v6370, 3
      %v6373 = vor.u32 %v6369, %v6372
      %v6374 = vsel %vm2801, %v6348, %v6373
      %v6375 = vshrl.u32 %v6125, 16
      %v6377 = vrot.slane %v6375, 2
      %v6378 = vshll.u32 %v6125, 16
      %v6380 = vrot.slane %v6378, 3
      %v6381 = vor.u32 %v6377, %v6380
      %v6382 = vsel %vm2801, %v6356, %v6381
      %v6384 = vshrl.u32 %v5852, 16
      %v6386 = vrot.slane %v6384, 2
      %v6387 = vshll.u32 %v5852, 16
      %v6389 = vrot.slane %v6387, 3
      %v6390 = vor.u32 %v6386, %v6389
      %v6391 = vsel %vm2801, %v6365, %v6390
      %v6392 = vshrl.u32 %v5980, 16
      %v6394 = vrot.slane %v6392, 2
      %v6395 = vshll.u32 %v5980, 16
      %v6397 = vrot.slane %v6395, 3
      %v6398 = vor.u32 %v6394, %v6397
      %v6399 = vsel %vm2801, %v6373, %v6398
      %v6400 = vshrl.u32 %v6127, 16
      %v6402 = vrot.slane %v6400, 2
      %v6403 = vshll.u32 %v6127, 16
      %v6405 = vrot.slane %v6403, 3
      %v6406 = vor.u32 %v6402, %v6405
      %v6407 = vsel %vm2801, %v6381, %v6406
      %v6409 = vshrl.u32 %v5854, 16
      %v6411 = vrot.slane %v6409, 2
      %v6412 = vshll.u32 %v5854, 16
      %v6414 = vrot.slane %v6412, 3
      %v6415 = vor.u32 %v6411, %v6414
      %v6416 = vsel %vm2801, %v6390, %v6415
      %v6417 = vshrl.u32 %v5982, 16
      %v6419 = vrot.slane %v6417, 2
      %v6420 = vshll.u32 %v5982, 16
      %v6422 = vrot.slane %v6420, 3
      %v6423 = vor.u32 %v6419, %v6422
      %v6424 = vsel %vm2801, %v6398, %v6423
      %v6425 = vshrl.u32 %v6129, 16
      %v6427 = vrot.slane %v6425, 2
      %v6428 = vshll.u32 %v6129, 16
      %v6430 = vrot.slane %v6428, 3
      %v6431 = vor.u32 %v6427, %v6430
      %v6432 = vsel %vm2801, %v6406, %v6431
      %v6434 = vshrl.u32 %v5856, 16
      %v6436 = vrot.slane %v6434, 2
      %v6437 = vshll.u32 %v5856, 16
      %v6439 = vrot.slane %v6437, 3
      %v6440 = vor.u32 %v6436, %v6439
      %v6441 = vsel %vm2801, %v6415, %v6440
      %v6442 = vshrl.u32 %v5984, 16
      %v6444 = vrot.slane %v6442, 2
      %v6445 = vshll.u32 %v5984, 16
      %v6447 = vrot.slane %v6445, 3
      %v6448 = vor.u32 %v6444, %v6447
      %v6449 = vsel %vm2801, %v6423, %v6448
      %v6450 = vshrl.u32 %v6131, 16
      %v6452 = vrot.slane %v6450, 2
      %v6453 = vshll.u32 %v6131, 16
      %v6455 = vrot.slane %v6453, 3
      %v6456 = vor.u32 %v6452, %v6455
      %v6457 = vsel %vm2801, %v6431, %v6456
      %v6459 = vshrl.u32 %v5858, 16
      %v6461 = vrot.slane %v6459, 2
      %v6462 = vshll.u32 %v5858, 16
      %v6464 = vrot.slane %v6462, 3
      %v6465 = vor.u32 %v6461, %v6464
      %v6466 = vsel %vm2801, %v6440, %v6465
      %v6467 = vshrl.u32 %v5986, 16
      %v6469 = vrot.slane %v6467, 2
      %v6470 = vshll.u32 %v5986, 16
      %v6472 = vrot.slane %v6470, 3
      %v6473 = vor.u32 %v6469, %v6472
      %v6474 = vsel %vm2801, %v6448, %v6473
      %v6475 = vshrl.u32 %v6133, 16
      %v6477 = vrot.slane %v6475, 2
      %v6478 = vshll.u32 %v6133, 16
      %v6480 = vrot.slane %v6478, 3
      %v6481 = vor.u32 %v6477, %v6480
      %v6482 = vsel %vm2801, %v6456, %v6481
      %v6484 = vshrl.u32 %v5860, 16
      %v6486 = vrot.slane %v6484, 2
      %v6487 = vshll.u32 %v5860, 16
      %v6489 = vrot.slane %v6487, 3
      %v6490 = vor.u32 %v6486, %v6489
      %v6491 = vsel %vm2801, %v6465, %v6490
      %v6492 = vshrl.u32 %v5988, 16
      %v6494 = vrot.slane %v6492, 2
      %v6495 = vshll.u32 %v5988, 16
      %v6497 = vrot.slane %v6495, 3
      %v6498 = vor.u32 %v6494, %v6497
      %v6499 = vsel %vm2801, %v6473, %v6498
      %v6500 = vshrl.u32 %v6135, 16
      %v6502 = vrot.slane %v6500, 2
      %v6503 = vshll.u32 %v6135, 16
      %v6505 = vrot.slane %v6503, 3
      %v6506 = vor.u32 %v6502, %v6505
      %v6507 = vsel %vm2801, %v6481, %v6506
      %v6509 = vshrl.u32 %v5862, 16
      %v6511 = vrot.slane %v6509, 2
      %v6512 = vshll.u32 %v5862, 16
      %v6514 = vrot.slane %v6512, 3
      %v6515 = vor.u32 %v6511, %v6514
      %v6516 = vsel %vm2801, %v6490, %v6515
      %v6517 = vshrl.u32 %v5990, 16
      %v6519 = vrot.slane %v6517, 2
      %v6520 = vshll.u32 %v5990, 16
      %v6522 = vrot.slane %v6520, 3
      %v6523 = vor.u32 %v6519, %v6522
      %v6524 = vsel %vm2801, %v6498, %v6523
      %v6525 = vshrl.u32 %v6137, 16
      %v6527 = vrot.slane %v6525, 2
      %v6528 = vshll.u32 %v6137, 16
      %v6530 = vrot.slane %v6528, 3
      %v6531 = vor.u32 %v6527, %v6530
      %v6532 = vsel %vm2801, %v6506, %v6531
      %v6534 = vshrl.u32 %v5864, 16
      %v6536 = vrot.slane %v6534, 2
      %v6537 = vshll.u32 %v5864, 16
      %v6539 = vrot.slane %v6537, 3
      %v6540 = vor.u32 %v6536, %v6539
      %v6541 = vsel %vm2801, %v6515, %v6540
      %v6542 = vshrl.u32 %v5992, 16
      %v6544 = vrot.slane %v6542, 2
      %v6545 = vshll.u32 %v5992, 16
      %v6547 = vrot.slane %v6545, 3
      %v6548 = vor.u32 %v6544, %v6547
      %v6549 = vsel %vm2801, %v6523, %v6548
      %v6550 = vshrl.u32 %v6139, 16
      %v6552 = vrot.slane %v6550, 2
      %v6553 = vshll.u32 %v6139, 16
      %v6555 = vrot.slane %v6553, 3
      %v6556 = vor.u32 %v6552, %v6555
      %v6557 = vsel %vm2801, %v6531, %v6556
      %v6559 = vshrl.u32 %v5866, 16
      %v6561 = vrot.slane %v6559, 2
      %v6562 = vshll.u32 %v5866, 16
      %v6564 = vrot.slane %v6562, 3
      %v6565 = vor.u32 %v6561, %v6564
      %v6566 = vsel %vm2801, %v6540, %v6565
      %v6567 = vshrl.u32 %v5994, 16
      %v6569 = vrot.slane %v6567, 2
      %v6570 = vshll.u32 %v5994, 16
      %v6572 = vrot.slane %v6570, 3
      %v6573 = vor.u32 %v6569, %v6572
      %v6574 = vsel %vm2801, %v6548, %v6573
      %v6575 = vshrl.u32 %v6141, 16
      %v6577 = vrot.slane %v6575, 2
      %v6578 = vshll.u32 %v6141, 16
      %v6580 = vrot.slane %v6578, 3
      %v6581 = vor.u32 %v6577, %v6580
      %v6582 = vsel %vm2801, %v6556, %v6581
      %v6584 = vshrl.u32 %v5868, 16
      %v6586 = vrot.slane %v6584, 2
      %v6587 = vshll.u32 %v5868, 16
      %v6589 = vrot.slane %v6587, 3
      %v6590 = vor.u32 %v6586, %v6589
      %v6591 = vsel %vm2801, %v6565, %v6590
      %v6592 = vshrl.u32 %v5996, 16
      %v6594 = vrot.slane %v6592, 2
      %v6595 = vshll.u32 %v5996, 16
      %v6597 = vrot.slane %v6595, 3
      %v6598 = vor.u32 %v6594, %v6597
      %v6599 = vsel %vm2801, %v6573, %v6598
      %v6600 = vshrl.u32 %v6143, 16
      %v6602 = vrot.slane %v6600, 2
      %v6603 = vshll.u32 %v6143, 16
      %v6605 = vrot.slane %v6603, 3
      %v6606 = vor.u32 %v6602, %v6605
      %v6607 = vsel %vm2801, %v6581, %v6606
      %v6609 = vshrl.u32 %v5870, 16
      %v6611 = vrot.slane %v6609, 2
      %v6612 = vshll.u32 %v5870, 16
      %v6614 = vrot.slane %v6612, 3
      %v6615 = vor.u32 %v6611, %v6614
      %v6616 = vsel %vm2801, %v6590, %v6615
      %v6617 = vshrl.u32 %v5998, 16
      %v6619 = vrot.slane %v6617, 2
      %v6620 = vshll.u32 %v5998, 16
      %v6622 = vrot.slane %v6620, 3
      %v6623 = vor.u32 %v6619, %v6622
      %v6624 = vsel %vm2801, %v6598, %v6623
      %v6625 = vshrl.u32 %v6145, 16
      %v6627 = vrot.slane %v6625, 2
      %v6628 = vshll.u32 %v6145, 16
      %v6630 = vrot.slane %v6628, 3
      %v6631 = vor.u32 %v6627, %v6630
      %v6632 = vsel %vm2801, %v6606, %v6631
      %v6634 = vshrl.u32 %v5872, 16
      %v6636 = vrot.slane %v6634, 2
      %v6637 = vshll.u32 %v5872, 16
      %v6639 = vrot.slane %v6637, 3
      %v6640 = vor.u32 %v6636, %v6639
      %v6641 = vsel %vm2801, %v6615, %v6640
      %v6642 = vshrl.u32 %v6000, 16
      %v6644 = vrot.slane %v6642, 2
      %v6645 = vshll.u32 %v6000, 16
      %v6647 = vrot.slane %v6645, 3
      %v6648 = vor.u32 %v6644, %v6647
      %v6649 = vsel %vm2801, %v6623, %v6648
      %v6650 = vshrl.u32 %v6147, 16
      %v6652 = vrot.slane %v6650, 2
      %v6653 = vshll.u32 %v6147, 16
      %v6655 = vrot.slane %v6653, 3
      %v6656 = vor.u32 %v6652, %v6655
      %v6657 = vsel %vm2801, %v6631, %v6656
      %v6659 = vshrl.u32 %v5874, 16
      %v6661 = vrot.slane %v6659, 2
      %v6662 = vshll.u32 %v5874, 16
      %v6664 = vrot.slane %v6662, 3
      %v6665 = vor.u32 %v6661, %v6664
      %v6666 = vsel %vm2801, %v6640, %v6665
      %v6667 = vshrl.u32 %v6002, 16
      %v6669 = vrot.slane %v6667, 2
      %v6670 = vshll.u32 %v6002, 16
      %v6672 = vrot.slane %v6670, 3
      %v6673 = vor.u32 %v6669, %v6672
      %v6674 = vsel %vm2801, %v6648, %v6673
      %v6675 = vshrl.u32 %v6149, 16
      %v6677 = vrot.slane %v6675, 2
      %v6678 = vshll.u32 %v6149, 16
      %v6680 = vrot.slane %v6678, 3
      %v6681 = vor.u32 %v6677, %v6680
      %v6682 = vsel %vm2801, %v6656, %v6681
      %v6684 = vshrl.u32 %v5876, 16
      %v6686 = vrot.slane %v6684, 2
      %v6687 = vshll.u32 %v5876, 16
      %v6689 = vrot.slane %v6687, 3
      %v6690 = vor.u32 %v6686, %v6689
      %v6691 = vsel %vm2801, %v6665, %v6690
      %v6692 = vshrl.u32 %v6004, 16
      %v6694 = vrot.slane %v6692, 2
      %v6695 = vshll.u32 %v6004, 16
      %v6697 = vrot.slane %v6695, 3
      %v6698 = vor.u32 %v6694, %v6697
      %v6699 = vsel %vm2801, %v6673, %v6698
      %v6700 = vshrl.u32 %v6151, 16
      %v6702 = vrot.slane %v6700, 2
      %v6703 = vshll.u32 %v6151, 16
      %v6705 = vrot.slane %v6703, 3
      %v6706 = vor.u32 %v6702, %v6705
      %v6707 = vsel %vm2801, %v6681, %v6706
      %v6709 = vshrl.u32 %v5878, 16
      %v6711 = vrot.slane %v6709, 2
      %v6712 = vshll.u32 %v5878, 16
      %v6714 = vrot.slane %v6712, 3
      %v6715 = vor.u32 %v6711, %v6714
      %v6716 = vsel %vm2801, %v6690, %v6715
      %v6795 = vunpack.c.l.b16 %v6152
      %v6796 = vunpack.c.l.b16 %v6153
      %v6797 = vunpack.c.l.b16 %v6154
      %v6798 = vunpack.c.l.b16 %v6155
      %v6799 = vunpack.c.l.b16 %v6156
      %v6800 = vunpack.c.l.b16 %v6157
      %v6801 = vunpack.c.l.b16 %v6158
      %v6802 = vunpack.c.l.b16 %v6159
      %v6803 = vunpack.c.l.b16 %v6160
      %v6804 = vunpack.c.l.b16 %v6161
      %v6805 = vunpack.c.l.b16 %v6162
      %v6806 = vunpack.c.l.b16 %v6163
      %v6807 = vunpack.c.l.b16 %v6164
      %v6808 = vunpack.c.l.b16 %v6165
      %v6809 = vunpack.c.l.b16 %v6166
      %v6810 = vunpack.c.l.b16 %v6167
      %v6811 = vunpack.c.l.b16 %v6168
      %v6812 = vunpack.c.l.b16 %v6169
      %v6813 = vunpack.c.l.b16 %v6170
      %v6814 = vunpack.c.l.b16 %v6171
      %v6815 = vunpack.c.l.b16 %v6172
      %v6816 = vunpack.c.l.b16 %v6173
      %v6817 = vunpack.c.l.b16 %v6174
      %v6818 = vunpack.c.l.b16 %v6175
      %v6819 = vunpack.c.l.b16 %v6176
      %v6820 = vunpack.c.l.b16 %v6177
      %v6821 = vunpack.c.l.b16 %v6178
      %v6822 = vunpack.c.l.b16 %v6179
      %v6823 = vunpack.c.l.b16 %v6180
      %v6824 = vunpack.c.l.b16 %v6181
      %v6825 = vunpack.c.l.b16 %v6182
      %v6826 = vunpack.c.l.b16 %v6183
      %v6827 = vunpack.c.l.b16 %v6184
      %v6828 = vunpack.c.l.b16 %v6185
      %v6829 = vunpack.c.l.b16 %v6186
      %v6830 = vunpack.c.l.b16 %v6187
      %v6831 = vpack.c.b16 %v6796, %v6795
      %v6832 = vpack.c.b16 %v6798, %v6797
      %v6833 = vpack.c.b16 %v6800, %v6799
      %v6834 = vpack.c.b16 %v6802, %v6801
      %v6835 = vpack.c.b16 %v6804, %v6803
      %v6836 = vpack.c.b16 %v6806, %v6805
      %v6837 = vpack.c.b16 %v6808, %v6807
      %v6838 = vpack.c.b16 %v6810, %v6809
      %v6839 = vpack.c.b16 %v6812, %v6811
      %v6840 = vpack.c.b16 %v6814, %v6813
      %v6841 = vpack.c.b16 %v6816, %v6815
      %v6842 = vpack.c.b16 %v6818, %v6817
      %v6843 = vpack.c.b16 %v6820, %v6819
      %v6844 = vpack.c.b16 %v6822, %v6821
      %v6845 = vpack.c.b16 %v6824, %v6823
      %v6846 = vpack.c.b16 %v6826, %v6825
      %v6847 = vpack.c.b16 %v6828, %v6827
      %v6848 = vpack.c.b16 %v6830, %v6829
      %v6868 = vsel %vm3016, %v6241, 0
      %v6871 = vsel %vm3016, %v6266, 0
      %v6874 = vsel %vm3016, %v6291, 0
      %v6877 = vsel %vm3016, %v6316, 0
      %v6880 = vsel %vm3016, %v6341, 0
      %v6883 = vsel %vm3016, %v6366, 0
      %v6886 = vsel %vm3016, %v6391, 0
      %v6889 = vsel %vm3016, %v6416, 0
      %v6892 = vsel %vm3016, %v6441, 0
      %v6895 = vsel %vm3016, %v6466, 0
      %v6898 = vsel %vm3016, %v6491, 0
      %v6901 = vsel %vm3016, %v6516, 0
      %v6904 = vsel %vm3016, %v6541, 0
      %v6907 = vsel %vm3016, %v6566, 0
      %v6910 = vsel %vm3016, %v6591, 0
      %v6913 = vsel %vm3016, %v6616, 0
      %v6916 = vsel %vm3016, %v6641, 0
      %v6919 = vsel %vm3016, %v6666, 0
      %v6922 = vsel %vm3016, %v6691, 0
      %v6925 = vsel %vm3016, %v6716, 0
      %v6928 = vsel %vm3016, %v6715, 0
      %6930 = vmatprep.subr.bf16.mxu0 0
      %6931 = vmatpush1.bf16.msra.mxu0 %v6838
      %6932 = vmatprep.subr.bf16.mxu0 0
      %6933 = vmatpush1.bf16.msra.mxu0 %v6837
      %6934 = vmatprep.subr.bf16.mxu0 0
      %6935 = vmatpush1.bf16.msra.mxu0 %v6836
      %6936 = vmatprep.subr.bf16.mxu0 0
      %6937 = vmatpush1.bf16.msra.mxu0 %v6835
      %6938 = vmatprep.subr.bf16.mxu0 0
      %6939 = vmatpush1.bf16.msra.mxu0 %v6834
      %6940 = vmatprep.subr.bf16.mxu0 0
      %6941 = vmatpush1.bf16.msra.mxu0 %v6833
      %6942 = vmatprep.subr.bf16.mxu0 0
      %6943 = vmatpush1.bf16.msra.mxu0 %v6832
      %6944 = vmatprep.subr.bf16.mxu0 0
      %6945 = vmatpush1.bf16.msra.mxu0 %v6831
      %6946 = vmatprep.subr.bf16.mxu0 0
      %6947 = vmatpush2.bf16.msra.mxu0 %v6846
      %6948 = vmatprep.subr.bf16.mxu0 0
      %6949 = vmatpush2.bf16.msra.mxu0 %v6845
      %6950 = vmatprep.subr.bf16.mxu0 0
      %6951 = vmatpush2.bf16.msra.mxu0 %v6844
      %6952 = vmatprep.subr.bf16.mxu0 0
      %6953 = vmatpush2.bf16.msra.mxu0 %v6843
      %6954 = vmatprep.subr.bf16.mxu0 0
      %6955 = vmatpush2.bf16.msra.mxu0 %v6842
      %6956 = vmatprep.subr.bf16.mxu0 0
      %6957 = vmatpush2.bf16.msra.mxu0 %v6841
      %6958 = vmatprep.subr.bf16.mxu0 0
      %6959 = vmatpush2.bf16.msra.mxu0 %v6840
      %6960 = vmatprep.subr.bf16.mxu0 0
      %6961 = vmatpush2.bf16.msra.mxu0 %v6839
      %6962 = vmatprep.mubr.bf16.mxu0 %v6224
      %6963 = vmatmul.mubr.bf16.gmra.mxu0 %v6209
      %v6964 = vpop.f32.mrf.mxu0
      %v6965 = vadd.f32 %v6193, %v6964
      %v6966 = vpop.f32.mrf.mxu0
      %v6967 = vpop.f32.mrf.mxu0
      %v6968 = vadd.f32 %v6193, %v6967
      %v6969 = vpop.f32.mrf.mxu0
      %6970 = vmatprep.mubr.bf16.mxu0 %v6257
      %6971 = vmatmul.mubr.bf16.gmra.mxu0 %v6249
      %v6972 = vpop.f32.mrf.mxu0
      %v6973 = vadd.f32 %v6193, %v6972
      %v6974 = vpop.f32.mrf.mxu0
      %v6975 = vpop.f32.mrf.mxu0
      %v6976 = vadd.f32 %v6193, %v6975
      %v6977 = vpop.f32.mrf.mxu0
      %6978 = vmatprep.mubr.bf16.mxu0 %v6282
      %6979 = vmatmul.mubr.bf16.gmra.mxu0 %v6274
      %v6980 = vpop.f32.mrf.mxu0
      %v6981 = vadd.f32 %v6193, %v6980
      %v6982 = vpop.f32.mrf.mxu0
      %v6983 = vpop.f32.mrf.mxu0
      %v6984 = vadd.f32 %v6193, %v6983
      %v6985 = vpop.f32.mrf.mxu0
      %6986 = vmatprep.mubr.bf16.mxu0 %v6307
      %6987 = vmatmul.mubr.bf16.gmra.mxu0 %v6299
      %v6988 = vpop.f32.mrf.mxu0
      %v6989 = vadd.f32 %v6193, %v6988
      %v6990 = vpop.f32.mrf.mxu0
      %v6991 = vpop.f32.mrf.mxu0
      %v6992 = vadd.f32 %v6193, %v6991
      %v6993 = vpop.f32.mrf.mxu0
      %6994 = vmatprep.mubr.bf16.mxu0 %v6332
      %6995 = vmatmul.mubr.bf16.gmra.mxu0 %v6324
      %v6996 = vpop.f32.mrf.mxu0
      %v6997 = vadd.f32 %v6193, %v6996
      %v6998 = vpop.f32.mrf.mxu0
      %v6999 = vpop.f32.mrf.mxu0
      %v7000 = vadd.f32 %v6193, %v6999
      %v7001 = vpop.f32.mrf.mxu0
      %7002 = vmatprep.mubr.bf16.mxu0 %v6357
      %7003 = vmatmul.mubr.bf16.gmra.mxu0 %v6349
      %v7004 = vpop.f32.mrf.mxu0
      %v7005 = vadd.f32 %v6193, %v7004
      %v7006 = vpop.f32.mrf.mxu0
      %v7007 = vpop.f32.mrf.mxu0
      %v7008 = vadd.f32 %v6193, %v7007
      %v7009 = vpop.f32.mrf.mxu0
      %7010 = vmatprep.mubr.bf16.mxu0 %v6382
      %7011 = vmatmul.mubr.bf16.gmra.mxu0 %v6374
      %v7012 = vpop.f32.mrf.mxu0
      %v7013 = vadd.f32 %v6193, %v7012
      %v7014 = vpop.f32.mrf.mxu0
      %v7015 = vpop.f32.mrf.mxu0
      %v7016 = vadd.f32 %v6193, %v7015
      %v7017 = vpop.f32.mrf.mxu0
      %7018 = vmatprep.mubr.bf16.mxu0 %v6407
      %7019 = vmatmul.mubr.bf16.gmra.mxu0 %v6399
      %v7020 = vpop.f32.mrf.mxu0
      %v7021 = vadd.f32 %v6193, %v7020
      %v7022 = vpop.f32.mrf.mxu0
      %v7023 = vpop.f32.mrf.mxu0
      %v7024 = vadd.f32 %v6193, %v7023
      %v7025 = vpop.f32.mrf.mxu0
      %7026 = vmatprep.mubr.bf16.mxu0 %v6432
      %7027 = vmatmul.mubr.bf16.gmra.mxu0 %v6424
      %v7028 = vpop.f32.mrf.mxu0
      %v7029 = vadd.f32 %v6193, %v7028
      %v7030 = vpop.f32.mrf.mxu0
      %v7031 = vpop.f32.mrf.mxu0
      %v7032 = vadd.f32 %v6193, %v7031
      %v7033 = vpop.f32.mrf.mxu0
      %7034 = vmatprep.mubr.bf16.mxu0 %v6457
      %7035 = vmatmul.mubr.bf16.gmra.mxu0 %v6449
      %v7036 = vpop.f32.mrf.mxu0
      %v7037 = vadd.f32 %v6193, %v7036
      %v7038 = vpop.f32.mrf.mxu0
      %v7039 = vpop.f32.mrf.mxu0
      %v7040 = vadd.f32 %v6193, %v7039
      %v7041 = vpop.f32.mrf.mxu0
      %7042 = vmatprep.mubr.bf16.mxu0 %v6482
      %7043 = vmatmul.mubr.bf16.gmra.mxu0 %v6474
      %v7044 = vpop.f32.mrf.mxu0
      %v7045 = vadd.f32 %v6193, %v7044
      %v7046 = vpop.f32.mrf.mxu0
      %v7047 = vpop.f32.mrf.mxu0
      %v7048 = vadd.f32 %v6193, %v7047
      %v7049 = vpop.f32.mrf.mxu0
      %7050 = vmatprep.mubr.bf16.mxu0 %v6507
      %7051 = vmatmul.mubr.bf16.gmra.mxu0 %v6499
      %v7052 = vpop.f32.mrf.mxu0
      %v7053 = vadd.f32 %v6193, %v7052
      %v7054 = vpop.f32.mrf.mxu0
      %v7055 = vpop.f32.mrf.mxu0
      %v7056 = vadd.f32 %v6193, %v7055
      %v7057 = vpop.f32.mrf.mxu0
      %7058 = vmatprep.mubr.bf16.mxu0 %v6532
      %7059 = vmatmul.mubr.bf16.gmra.mxu0 %v6524
      %v7060 = vpop.f32.mrf.mxu0
      %v7061 = vadd.f32 %v6193, %v7060
      %v7062 = vpop.f32.mrf.mxu0
      %v7063 = vpop.f32.mrf.mxu0
      %v7064 = vadd.f32 %v6193, %v7063
      %v7065 = vpop.f32.mrf.mxu0
      %7066 = vmatprep.mubr.bf16.mxu0 %v6557
      %7067 = vmatmul.mubr.bf16.gmra.mxu0 %v6549
      %v7068 = vpop.f32.mrf.mxu0
      %v7069 = vadd.f32 %v6193, %v7068
      %v7070 = vpop.f32.mrf.mxu0
      %v7071 = vpop.f32.mrf.mxu0
      %v7072 = vadd.f32 %v6193, %v7071
      %v7073 = vpop.f32.mrf.mxu0
      %7074 = vmatprep.mubr.bf16.mxu0 %v6582
      %7075 = vmatmul.mubr.bf16.gmra.mxu0 %v6574
      %v7076 = vpop.f32.mrf.mxu0
      %v7077 = vadd.f32 %v6193, %v7076
      %v7078 = vpop.f32.mrf.mxu0
      %v7079 = vpop.f32.mrf.mxu0
      %v7080 = vadd.f32 %v6193, %v7079
      %v7081 = vpop.f32.mrf.mxu0
      %7082 = vmatprep.mubr.bf16.mxu0 %v6607
      %7083 = vmatmul.mubr.bf16.gmra.mxu0 %v6599
      %v7084 = vpop.f32.mrf.mxu0
      %v7085 = vadd.f32 %v6193, %v7084
      %v7086 = vpop.f32.mrf.mxu0
      %v7087 = vpop.f32.mrf.mxu0
      %v7088 = vadd.f32 %v6193, %v7087
      %v7089 = vpop.f32.mrf.mxu0
      %7090 = vmatprep.mubr.bf16.mxu0 %v6632
      %7091 = vmatmul.mubr.bf16.gmra.mxu0 %v6624
      %v7092 = vpop.f32.mrf.mxu0
      %v7093 = vadd.f32 %v6193, %v7092
      %v7094 = vpop.f32.mrf.mxu0
      %v7095 = vpop.f32.mrf.mxu0
      %v7096 = vadd.f32 %v6193, %v7095
      %v7097 = vpop.f32.mrf.mxu0
      %7098 = vmatprep.mubr.bf16.mxu0 %v6657
      %7099 = vmatmul.mubr.bf16.gmra.mxu0 %v6649
      %v7100 = vpop.f32.mrf.mxu0
      %v7101 = vadd.f32 %v6193, %v7100
      %v7102 = vpop.f32.mrf.mxu0
      %v7103 = vpop.f32.mrf.mxu0
      %v7104 = vadd.f32 %v6193, %v7103
      %v7105 = vpop.f32.mrf.mxu0
      %7106 = vmatprep.mubr.bf16.mxu0 %v6682
      %7107 = vmatmul.mubr.bf16.gmra.mxu0 %v6674
      %v7108 = vpop.f32.mrf.mxu0
      %v7109 = vadd.f32 %v6193, %v7108
      %v7110 = vpop.f32.mrf.mxu0
      %v7111 = vpop.f32.mrf.mxu0
      %v7112 = vadd.f32 %v6193, %v7111
      %v7113 = vpop.f32.mrf.mxu0
      %7114 = vmatprep.mubr.bf16.mxu0 %v6707
      %7115 = vmatmul.mubr.bf16.gmra.mxu0 %v6699
      %v7116 = vpop.f32.mrf.mxu0
      %v7117 = vadd.f32 %v6193, %v7116
      %v7118 = vpop.f32.mrf.mxu0
      %v7119 = vpop.f32.mrf.mxu0
      %v7120 = vadd.f32 %v6193, %v7119
      %v7121 = vpop.f32.mrf.mxu0
      %7122 = vmatprep.mubr.bf16.mxu0 %v6706
      %7123 = vmatmul.mubr.bf16.gmra.mxu0 %v6698
      %v7124 = vpop.f32.mrf.mxu0
      %v7125 = vadd.f32 %v6193, %v7124
      %v7126 = vpop.f32.mrf.mxu0
      %v7127 = vpop.f32.mrf.mxu0
      %v7128 = vpop.f32.mrf.mxu0
      %7129 = vdwg.mxu0
      %7130 = vmatprep.subr.bf16.mxu0 0
      %7131 = vmatpush1.bf16.msra.mxu0 0
      %7132 = vmatprep.subr.bf16.mxu0 0
      %7133 = vmatpush1.bf16.msra.mxu0 0
      %7134 = vmatprep.subr.bf16.mxu0 0
      %7135 = vmatpush1.bf16.msra.mxu0 0
      %7136 = vmatprep.subr.bf16.mxu0 0
      %7137 = vmatpush1.bf16.msra.mxu0 0
      %7138 = vmatprep.subr.bf16.mxu0 0
      %7139 = vmatpush1.bf16.msra.mxu0 0
      %7140 = vmatprep.subr.bf16.mxu0 0
      %7141 = vmatpush1.bf16.msra.mxu0 0
      %7142 = vmatprep.subr.bf16.mxu0 0
      %7143 = vmatpush1.bf16.msra.mxu0 %v6848
      %7144 = vmatprep.subr.bf16.mxu0 0
      %7145 = vmatpush1.bf16.msra.mxu0 %v6847
      %7146 = vmatprep.subr.bf16.mxu0 0
      %7147 = vmatpush2.bf16.msra.mxu0 0
      %7148 = vmatprep.subr.bf16.mxu0 0
      %7149 = vmatpush2.bf16.msra.mxu0 0
      %7150 = vmatprep.subr.bf16.mxu0 0
      %7151 = vmatpush2.bf16.msra.mxu0 0
      %7152 = vmatprep.subr.bf16.mxu0 0
      %7153 = vmatpush2.bf16.msra.mxu0 0
      %7154 = vmatprep.subr.bf16.mxu0 0
      %7155 = vmatpush2.bf16.msra.mxu0 0
      %7156 = vmatprep.subr.bf16.mxu0 0
      %7157 = vmatpush2.bf16.msra.mxu0 0
      %7158 = vmatprep.subr.bf16.mxu0 0
      %7159 = vmatpush2.bf16.msra.mxu0 0
      %7160 = vmatprep.subr.bf16.mxu0 0
      %7161 = vmatpush2.bf16.msra.mxu0 0
      %7162 = vmatprep.mubr.bf16.mxu0 0
      %7163 = vmatmul.mubr.bf16.gmra.mxu0 %v6868
      %v7164 = vpop.f32.mrf.mxu0
      %v7165 = vadd.f32 %v6965, %v7164
      %v7166 = vpop.f32.mrf.mxu0
      %v7167 = vpop.f32.mrf.mxu0
      %v7168 = vadd.f32 %v6968, %v7167
      %v7169 = vpop.f32.mrf.mxu0
      %7170 = vmatprep.mubr.bf16.mxu0 0
      %7171 = vmatmul.mubr.bf16.gmra.mxu0 %v6871
      %v7172 = vpop.f32.mrf.mxu0
      %v7173 = vadd.f32 %v6973, %v7172
      %v7174 = vpop.f32.mrf.mxu0
      %v7175 = vpop.f32.mrf.mxu0
      %v7176 = vadd.f32 %v6976, %v7175
      %v7177 = vpop.f32.mrf.mxu0
      %7178 = vmatprep.mubr.bf16.mxu0 0
      %7179 = vmatmul.mubr.bf16.gmra.mxu0 %v6874
      %v7180 = vpop.f32.mrf.mxu0
      %v7181 = vadd.f32 %v6981, %v7180
      %v7182 = vpop.f32.mrf.mxu0
      %v7183 = vpop.f32.mrf.mxu0
      %v7184 = vadd.f32 %v6984, %v7183
      %v7185 = vpop.f32.mrf.mxu0
      %7186 = vmatprep.mubr.bf16.mxu0 0
      %7187 = vmatmul.mubr.bf16.gmra.mxu0 %v6877
      %v7188 = vpop.f32.mrf.mxu0
      %v7189 = vadd.f32 %v6989, %v7188
      %v7190 = vpop.f32.mrf.mxu0
      %v7191 = vpop.f32.mrf.mxu0
      %v7192 = vadd.f32 %v6992, %v7191
      %v7193 = vpop.f32.mrf.mxu0
      %7194 = vmatprep.mubr.bf16.mxu0 0
      %7195 = vmatmul.mubr.bf16.gmra.mxu0 %v6880
      %v7196 = vpop.f32.mrf.mxu0
      %v7197 = vadd.f32 %v6997, %v7196
      %v7198 = vpop.f32.mrf.mxu0
      %v7199 = vpop.f32.mrf.mxu0
      %v7200 = vadd.f32 %v7000, %v7199
      %v7201 = vpop.f32.mrf.mxu0
      %7202 = vmatprep.mubr.bf16.mxu0 0
      %7203 = vmatmul.mubr.bf16.gmra.mxu0 %v6883
      %v7204 = vpop.f32.mrf.mxu0
      %v7205 = vadd.f32 %v7005, %v7204
      %v7206 = vpop.f32.mrf.mxu0
      %v7207 = vpop.f32.mrf.mxu0
      %v7208 = vadd.f32 %v7008, %v7207
      %v7209 = vpop.f32.mrf.mxu0
      %7210 = vmatprep.mubr.bf16.mxu0 0
      %7211 = vmatmul.mubr.bf16.gmra.mxu0 %v6886
      %v7212 = vpop.f32.mrf.mxu0
      %v7213 = vadd.f32 %v7013, %v7212
      %v7214 = vpop.f32.mrf.mxu0
      %v7215 = vpop.f32.mrf.mxu0
      %v7216 = vadd.f32 %v7016, %v7215
      %v7217 = vpop.f32.mrf.mxu0
      %7218 = vmatprep.mubr.bf16.mxu0 0
      %7219 = vmatmul.mubr.bf16.gmra.mxu0 %v6889
      %v7220 = vpop.f32.mrf.mxu0
      %v7221 = vadd.f32 %v7021, %v7220
      %v7222 = vpop.f32.mrf.mxu0
      %v7223 = vpop.f32.mrf.mxu0
      %v7224 = vadd.f32 %v7024, %v7223
      %v7225 = vpop.f32.mrf.mxu0
      %7226 = vmatprep.mubr.bf16.mxu0 0
      %7227 = vmatmul.mubr.bf16.gmra.mxu0 %v6892
      %v7228 = vpop.f32.mrf.mxu0
      %v7229 = vadd.f32 %v7029, %v7228
      %v7230 = vpop.f32.mrf.mxu0
      %v7231 = vpop.f32.mrf.mxu0
      %v7232 = vadd.f32 %v7032, %v7231
      %v7233 = vpop.f32.mrf.mxu0
      %7234 = vmatprep.mubr.bf16.mxu0 0
      %7235 = vmatmul.mubr.bf16.gmra.mxu0 %v6895
      %v7236 = vpop.f32.mrf.mxu0
      %v7237 = vadd.f32 %v7037, %v7236
      %v7238 = vpop.f32.mrf.mxu0
      %v7239 = vpop.f32.mrf.mxu0
      %v7240 = vadd.f32 %v7040, %v7239
      %v7241 = vpop.f32.mrf.mxu0
      %7242 = vmatprep.mubr.bf16.mxu0 0
      %7243 = vmatmul.mubr.bf16.gmra.mxu0 %v6898
      %v7244 = vpop.f32.mrf.mxu0
      %v7245 = vadd.f32 %v7045, %v7244
      %v7246 = vpop.f32.mrf.mxu0
      %v7247 = vpop.f32.mrf.mxu0
      %v7248 = vadd.f32 %v7048, %v7247
      %v7249 = vpop.f32.mrf.mxu0
      %7250 = vmatprep.mubr.bf16.mxu0 0
      %7251 = vmatmul.mubr.bf16.gmra.mxu0 %v6901
      %v7252 = vpop.f32.mrf.mxu0
      %v7253 = vadd.f32 %v7053, %v7252
      %v7254 = vpop.f32.mrf.mxu0
      %v7255 = vpop.f32.mrf.mxu0
      %v7256 = vadd.f32 %v7056, %v7255
      %v7257 = vpop.f32.mrf.mxu0
      %7258 = vmatprep.mubr.bf16.mxu0 0
      %7259 = vmatmul.mubr.bf16.gmra.mxu0 %v6904
      %v7260 = vpop.f32.mrf.mxu0
      %v7261 = vadd.f32 %v7061, %v7260
      %v7262 = vpop.f32.mrf.mxu0
      %v7263 = vpop.f32.mrf.mxu0
      %v7264 = vadd.f32 %v7064, %v7263
      %v7265 = vpop.f32.mrf.mxu0
      %7266 = vmatprep.mubr.bf16.mxu0 0
      %7267 = vmatmul.mubr.bf16.gmra.mxu0 %v6907
      %v7268 = vpop.f32.mrf.mxu0
      %v7269 = vadd.f32 %v7069, %v7268
      %v7270 = vpop.f32.mrf.mxu0
      %v7271 = vpop.f32.mrf.mxu0
      %v7272 = vadd.f32 %v7072, %v7271
      %v7273 = vpop.f32.mrf.mxu0
      %7274 = vmatprep.mubr.bf16.mxu0 0
      %7275 = vmatmul.mubr.bf16.gmra.mxu0 %v6910
      %v7276 = vpop.f32.mrf.mxu0
      %v7277 = vadd.f32 %v7077, %v7276
      %v7278 = vpop.f32.mrf.mxu0
      %v7279 = vpop.f32.mrf.mxu0
      %v7280 = vadd.f32 %v7080, %v7279
      %v7281 = vpop.f32.mrf.mxu0
      %7282 = vmatprep.mubr.bf16.mxu0 0
      %7283 = vmatmul.mubr.bf16.gmra.mxu0 %v6913
      %v7284 = vpop.f32.mrf.mxu0
      %v7285 = vadd.f32 %v7085, %v7284
      %v7286 = vpop.f32.mrf.mxu0
      %v7287 = vpop.f32.mrf.mxu0
      %v7288 = vadd.f32 %v7088, %v7287
      %v7289 = vpop.f32.mrf.mxu0
      %7290 = vmatprep.mubr.bf16.mxu0 0
      %7291 = vmatmul.mubr.bf16.gmra.mxu0 %v6916
      %v7292 = vpop.f32.mrf.mxu0
      %v7293 = vadd.f32 %v7093, %v7292
      %v7294 = vpop.f32.mrf.mxu0
      %v7295 = vpop.f32.mrf.mxu0
      %v7296 = vadd.f32 %v7096, %v7295
      %v7297 = vpop.f32.mrf.mxu0
      %7298 = vmatprep.mubr.bf16.mxu0 0
      %7299 = vmatmul.mubr.bf16.gmra.mxu0 %v6919
      %v7300 = vpop.f32.mrf.mxu0
      %v7301 = vadd.f32 %v7101, %v7300
      %v7302 = vpop.f32.mrf.mxu0
      %v7303 = vpop.f32.mrf.mxu0
      %v7304 = vadd.f32 %v7104, %v7303
      %v7305 = vpop.f32.mrf.mxu0
      %7306 = vmatprep.mubr.bf16.mxu0 0
      %7307 = vmatmul.mubr.bf16.gmra.mxu0 %v6922
      %v7308 = vpop.f32.mrf.mxu0
      %v7309 = vadd.f32 %v7109, %v7308
      %v7310 = vpop.f32.mrf.mxu0
      %v7311 = vpop.f32.mrf.mxu0
      %v7312 = vadd.f32 %v7112, %v7311
      %v7313 = vpop.f32.mrf.mxu0
      %7314 = vmatprep.mubr.bf16.mxu0 0
      %7315 = vmatmul.mubr.bf16.gmra.mxu0 %v6925
      %v7316 = vpop.f32.mrf.mxu0
      %v7317 = vadd.f32 %v7117, %v7316
      %v7318 = vpop.f32.mrf.mxu0
      %v7319 = vpop.f32.mrf.mxu0
      %v7320 = vadd.f32 %v7120, %v7319
      %v7321 = vpop.f32.mrf.mxu0
      %7322 = vmatprep.mubr.bf16.mxu0 0
      %7323 = vmatmul.mubr.bf16.gmra.mxu0 %v6928
      %v7324 = vpop.f32.mrf.mxu0
      %v7325 = vadd.f32 %v7125, %v7324
      %v7326 = vpop.f32.mrf.mxu0
      %v7327 = vpop.f32.mrf.mxu0
      %v7328 = vpop.f32.mrf.mxu0
      %7329 = vdwg.mxu0
      %v7330 = vmax.f32 %v7165, 0.0
      %v7331 = vmax.f32 %v7168, 0.0
      %v7332 = vmax.f32 %v7173, 0.0
      %v7333 = vmax.f32 %v7176, 0.0
      %v7334 = vmax.f32 %v7181, 0.0
      %v7335 = vmax.f32 %v7184, 0.0
      %v7336 = vmax.f32 %v7189, 0.0
      %v7337 = vmax.f32 %v7192, 0.0
      %v7338 = vmax.f32 %v7197, 0.0
      %v7339 = vmax.f32 %v7200, 0.0
      %v7340 = vmax.f32 %v7205, 0.0
      %v7341 = vmax.f32 %v7208, 0.0
      %v7342 = vmax.f32 %v7213, 0.0
      %v7343 = vmax.f32 %v7216, 0.0
      %v7344 = vmax.f32 %v7221, 0.0
      %v7345 = vmax.f32 %v7224, 0.0
      %v7346 = vmax.f32 %v7229, 0.0
      %v7347 = vmax.f32 %v7232, 0.0
      %v7348 = vmax.f32 %v7237, 0.0
      %v7349 = vmax.f32 %v7240, 0.0
      %v7350 = vmax.f32 %v7245, 0.0
      %v7351 = vmax.f32 %v7248, 0.0
      %v7352 = vmax.f32 %v7253, 0.0
      %v7353 = vmax.f32 %v7256, 0.0
      %v7354 = vmax.f32 %v7261, 0.0
      %v7355 = vmax.f32 %v7264, 0.0
      %v7356 = vmax.f32 %v7269, 0.0
      %v7357 = vmax.f32 %v7272, 0.0
      %v7358 = vmax.f32 %v7277, 0.0
      %v7359 = vmax.f32 %v7280, 0.0
      %v7360 = vmax.f32 %v7285, 0.0
      %v7361 = vmax.f32 %v7288, 0.0
      %v7362 = vmax.f32 %v7293, 0.0
      %v7363 = vmax.f32 %v7296, 0.0
      %v7364 = vmax.f32 %v7301, 0.0
      %v7365 = vmax.f32 %v7304, 0.0
      %v7366 = vmax.f32 %v7309, 0.0
      %v7367 = vmax.f32 %v7312, 0.0
      %v7368 = vmax.f32 %v7317, 0.0
      %v7369 = vmax.f32 %v7320, 0.0
      %v7370 = vmax.f32 %v7325, 0.0
      %v7371 = vpack.c.bf16 %v919, %v918
      %v7372 = vpack.c.bf16 %v921, %v920
      %v7373 = vpack.c.bf16 %v923, %v922
      %v7374 = vpack.c.bf16 %v925, %v924
      %v7375 = vpack.c.bf16 %v927, %v926
      %v7376 = vpack.c.bf16 %v929, %v928
      %v7377 = vpack.c.bf16 %v931, %v930
      %v7378 = vpack.c.bf16 %v933, %v932
      %v7379 = vpack.c.bf16 %v935, %v934
      %v7380 = vpack.c.bf16 %v937, %v936
      %v7381 = vpack.c.bf16 %v939, %v938
      %v7382 = vpack.c.bf16 %v941, %v940
      %v7383 = vpack.c.bf16 %v943, %v942
      %v7384 = vpack.c.bf16 %v945, %v944
      %v7385 = vpack.c.bf16 %v947, %v946
      %v7386 = vpack.c.bf16 %v949, %v948
      %v7387 = vpack.c.bf16 %v951, %v950
      %v7388 = vpack.c.bf16 %v953, %v952
      %v7389 = vpack.c.bf16 %v955, %v954
      %v7390 = vpack.c.bf16 %v957, %v956
      %v7391 = vpack.c.bf16 %v958, %v958
      %v7413 = vunpack.c.l.b16 %v7371
      %v7414 = vunpack.c.h.b16 %v7371
      %v7415 = vunpack.c.l.b16 %v7372
      %v7416 = vunpack.c.h.b16 %v7372
      %v7417 = vunpack.c.l.b16 %v7373
      %v7418 = vunpack.c.h.b16 %v7373
      %v7419 = vunpack.c.l.b16 %v7374
      %v7420 = vunpack.c.h.b16 %v7374
      %v7421 = vunpack.c.l.b16 %v7375
      %v7422 = vunpack.c.h.b16 %v7375
      %v7423 = vunpack.c.l.b16 %v7376
      %v7424 = vunpack.c.h.b16 %v7376
      %v7425 = vunpack.c.l.b16 %v7377
      %v7426 = vunpack.c.h.b16 %v7377
      %v7427 = vunpack.c.l.b16 %v7378
      %v7428 = vunpack.c.h.b16 %v7378
      %v7429 = vunpack.c.l.b16 %v7379
      %v7430 = vunpack.c.h.b16 %v7379
      %v7431 = vunpack.c.l.b16 %v7380
      %v7432 = vunpack.c.h.b16 %v7380
      %v7433 = vunpack.c.l.b16 %v7381
      %v7434 = vunpack.c.h.b16 %v7381
      %v7435 = vunpack.c.l.b16 %v7382
      %v7436 = vunpack.c.h.b16 %v7382
      %v7437 = vunpack.c.l.b16 %v7383
      %v7438 = vunpack.c.h.b16 %v7383
      %v7439 = vunpack.c.l.b16 %v7384
      %v7440 = vunpack.c.h.b16 %v7384
      %v7441 = vunpack.c.l.b16 %v7385
      %v7442 = vunpack.c.h.b16 %v7385
      %v7443 = vunpack.c.l.b16 %v7386
      %v7444 = vunpack.c.h.b16 %v7386
      %v7445 = vunpack.c.l.b16 %v7387
      %v7446 = vunpack.c.h.b16 %v7387
      %v7447 = vunpack.c.l.b16 %v7388
      %v7448 = vunpack.c.h.b16 %v7388
      %v7449 = vunpack.c.l.b16 %v7389
      %v7450 = vunpack.c.h.b16 %v7389
      %v7451 = vunpack.c.l.b16 %v7390
      %v7452 = vunpack.c.h.b16 %v7390
      %v7453 = vunpack.c.l.b16 %v7391
      %v7454 = vpack.c.b16 %v7413, %v7413
      %v7455 = vpack.c.b16 %v7414, %v7414
      %v7456 = vpack.c.b16 %v7415, %v7415
      %v7457 = vpack.c.b16 %v7416, %v7416
      %v7458 = vpack.c.b16 %v7417, %v7417
      %v7459 = vpack.c.b16 %v7418, %v7418
      %v7460 = vpack.c.b16 %v7419, %v7419
      %v7461 = vpack.c.b16 %v7420, %v7420
      %v7462 = vpack.c.b16 %v7421, %v7421
      %v7463 = vpack.c.b16 %v7422, %v7422
      %v7464 = vpack.c.b16 %v7423, %v7423
      %v7465 = vpack.c.b16 %v7424, %v7424
      %v7466 = vpack.c.b16 %v7425, %v7425
      %v7467 = vpack.c.b16 %v7426, %v7426
      %v7468 = vpack.c.b16 %v7427, %v7427
      %v7469 = vpack.c.b16 %v7428, %v7428
      %v7470 = vpack.c.b16 %v7429, %v7429
      %v7471 = vpack.c.b16 %v7430, %v7430
      %v7472 = vpack.c.b16 %v7431, %v7431
      %v7473 = vpack.c.b16 %v7432, %v7432
      %v7474 = vpack.c.b16 %v7433, %v7433
      %v7475 = vpack.c.b16 %v7434, %v7434
      %v7476 = vpack.c.b16 %v7435, %v7435
      %v7477 = vpack.c.b16 %v7436, %v7436
      %v7478 = vpack.c.b16 %v7437, %v7437
      %v7479 = vpack.c.b16 %v7438, %v7438
      %v7480 = vpack.c.b16 %v7439, %v7439
      %v7481 = vpack.c.b16 %v7440, %v7440
      %v7482 = vpack.c.b16 %v7441, %v7441
      %v7483 = vpack.c.b16 %v7442, %v7442
      %v7484 = vpack.c.b16 %v7443, %v7443
      %v7485 = vpack.c.b16 %v7444, %v7444
      %v7486 = vpack.c.b16 %v7445, %v7445
      %v7487 = vpack.c.b16 %v7446, %v7446
      %v7488 = vpack.c.b16 %v7447, %v7447
      %v7489 = vpack.c.b16 %v7448, %v7448
      %v7490 = vpack.c.b16 %v7449, %v7449
      %v7491 = vpack.c.b16 %v7450, %v7450
      %v7492 = vpack.c.b16 %v7451, %v7451
      %v7493 = vpack.c.b16 %v7452, %v7452
      %v7494 = vpack.c.b16 %v7453, %v7453
      %vm7536 = vcmask 125952
      %7537 = vst.msk [vmem:[%s305] sm:$0xf] %vm7536, %v7454
      %7538 = vst.msk [vmem:[%s305 + $0x4] sm:$0xf] %vm7536, %v7455
      %7539 = vst.msk [vmem:[%s305 + $0x8] sm:$0xf] %vm7536, %v7456
      %7540 = vst.msk [vmem:[%s305 + $0xc] sm:$0xf] %vm7536, %v7457
      %7541 = vst.msk [vmem:[%s305 + $0x10] sm:$0xf] %vm7536, %v7458
      %7542 = vst.msk [vmem:[%s305 + $0x14] sm:$0xf] %vm7536, %v7459
      %7543 = vst.msk [vmem:[%s305 + $0x18] sm:$0xf] %vm7536, %v7460
      %7544 = vst.msk [vmem:[%s305 + $0x1c] sm:$0xf] %vm7536, %v7461
      %7545 = vst.msk [vmem:[%s305 + $0x20] sm:$0xf] %vm7536, %v7462
      %7546 = vst.msk [vmem:[%s305 + $0x24] sm:$0xf] %vm7536, %v7463
      %7547 = vst.msk [vmem:[%s305 + $0x28] sm:$0xf] %vm7536, %v7464
      %7548 = vst.msk [vmem:[%s305 + $0x2c] sm:$0xf] %vm7536, %v7465
      %7549 = vst.msk [vmem:[%s305 + $0x30] sm:$0xf] %vm7536, %v7466
      %7550 = vst.msk [vmem:[%s305 + $0x34] sm:$0xf] %vm7536, %v7467
      %7551 = vst.msk [vmem:[%s305 + $0x38] sm:$0xf] %vm7536, %v7468
      %7552 = vst.msk [vmem:[%s305 + $0x3c] sm:$0xf] %vm7536, %v7469
      %7553 = vst.msk [vmem:[%s305 + $0x40] sm:$0xf] %vm7536, %v7470
      %7554 = vst.msk [vmem:[%s305 + $0x44] sm:$0xf] %vm7536, %v7471
      %7555 = vst.msk [vmem:[%s305 + $0x48] sm:$0xf] %vm7536, %v7472
      %7556 = vst.msk [vmem:[%s305 + $0x4c] sm:$0xf] %vm7536, %v7473
      %7557 = vst.msk [vmem:[%s305 + $0x50] sm:$0xf] %vm7536, %v7474
      %7558 = vst.msk [vmem:[%s305 + $0x54] sm:$0xf] %vm7536, %v7475
      %7559 = vst.msk [vmem:[%s305 + $0x58] sm:$0xf] %vm7536, %v7476
      %7560 = vst.msk [vmem:[%s305 + $0x5c] sm:$0xf] %vm7536, %v7477
      %7561 = vst.msk [vmem:[%s305 + $0x60] sm:$0xf] %vm7536, %v7478
      %7562 = vst.msk [vmem:[%s305 + $0x64] sm:$0xf] %vm7536, %v7479
      %7563 = vst.msk [vmem:[%s305 + $0x68] sm:$0xf] %vm7536, %v7480
      %7564 = vst.msk [vmem:[%s305 + $0x6c] sm:$0xf] %vm7536, %v7481
      %7565 = vst.msk [vmem:[%s305 + $0x70] sm:$0xf] %vm7536, %v7482
      %7566 = vst.msk [vmem:[%s305 + $0x74] sm:$0xf] %vm7536, %v7483
      %7567 = vst.msk [vmem:[%s305 + $0x78] sm:$0xf] %vm7536, %v7484
      %7568 = vst.msk [vmem:[%s305 + $0x7c] sm:$0xf] %vm7536, %v7485
      %7569 = vst.msk [vmem:[%s305 + $0x80] sm:$0xf] %vm7536, %v7486
      %7570 = vst.msk [vmem:[%s305 + $0x84] sm:$0xf] %vm7536, %v7487
      %7571 = vst.msk [vmem:[%s305 + $0x88] sm:$0xf] %vm7536, %v7488
      %7572 = vst.msk [vmem:[%s305 + $0x8c] sm:$0xf] %vm7536, %v7489
      %7573 = vst.msk [vmem:[%s305 + $0x90] sm:$0xf] %vm7536, %v7490
      %7574 = vst.msk [vmem:[%s305 + $0x94] sm:$0xf] %vm7536, %v7491
      %7575 = vst.msk [vmem:[%s305 + $0x98] sm:$0xf] %vm7536, %v7492
      %7576 = vst.msk [vmem:[%s305 + $0x9c] sm:$0xf] %vm7536, %v7493
      %vm7577 = vcmask 123904
      %7578 = vst.msk [vmem:[%s305 + $0xa0] sm:$0x3] %vm7577, %v7494
      %v7579 = vpack.c.bf16 %v4492, %v4491
      %v7580 = vpack.c.bf16 %v4494, %v4493
      %v7581 = vpack.c.bf16 %v4496, %v4495
      %v7582 = vpack.c.bf16 %v4498, %v4497
      %v7583 = vpack.c.bf16 %v4500, %v4499
      %v7584 = vpack.c.bf16 %v4502, %v4501
      %v7585 = vpack.c.bf16 %v4504, %v4503
      %v7586 = vpack.c.bf16 %v4506, %v4505
      %v7587 = vpack.c.bf16 %v4508, %v4507
      %v7588 = vpack.c.bf16 %v4510, %v4509
      %v7589 = vpack.c.bf16 %v4512, %v4511
      %v7590 = vpack.c.bf16 %v4514, %v4513
      %v7591 = vpack.c.bf16 %v4516, %v4515
      %v7592 = vpack.c.bf16 %v4518, %v4517
      %v7593 = vpack.c.bf16 %v4520, %v4519
      %v7594 = vpack.c.bf16 %v4522, %v4521
      %v7595 = vpack.c.bf16 %v4524, %v4523
      %v7596 = vpack.c.bf16 %v4526, %v4525
      %v7597 = vpack.c.bf16 %v4528, %v4527
      %v7598 = vpack.c.bf16 %v4530, %v4529
      %v7599 = vpack.c.bf16 %v4531, %v4531
      %v7621 = vunpack.c.l.b16 %v7579
      %v7622 = vunpack.c.h.b16 %v7579
      %v7623 = vunpack.c.l.b16 %v7580
      %v7624 = vunpack.c.h.b16 %v7580
      %v7625 = vunpack.c.l.b16 %v7581
      %v7626 = vunpack.c.h.b16 %v7581
      %v7627 = vunpack.c.l.b16 %v7582
      %v7628 = vunpack.c.h.b16 %v7582
      %v7629 = vunpack.c.l.b16 %v7583
      %v7630 = vunpack.c.h.b16 %v7583
      %v7631 = vunpack.c.l.b16 %v7584
      %v7632 = vunpack.c.h.b16 %v7584
      %v7633 = vunpack.c.l.b16 %v7585
      %v7634 = vunpack.c.h.b16 %v7585
      %v7635 = vunpack.c.l.b16 %v7586
      %v7636 = vunpack.c.h.b16 %v7586
      %v7637 = vunpack.c.l.b16 %v7587
      %v7638 = vunpack.c.h.b16 %v7587
      %v7639 = vunpack.c.l.b16 %v7588
      %v7640 = vunpack.c.h.b16 %v7588
      %v7641 = vunpack.c.l.b16 %v7589
      %v7642 = vunpack.c.h.b16 %v7589
      %v7643 = vunpack.c.l.b16 %v7590
      %v7644 = vunpack.c.h.b16 %v7590
      %v7645 = vunpack.c.l.b16 %v7591
      %v7646 = vunpack.c.h.b16 %v7591
      %v7647 = vunpack.c.l.b16 %v7592
      %v7648 = vunpack.c.h.b16 %v7592
      %v7649 = vunpack.c.l.b16 %v7593
      %v7650 = vunpack.c.h.b16 %v7593
      %v7651 = vunpack.c.l.b16 %v7594
      %v7652 = vunpack.c.h.b16 %v7594
      %v7653 = vunpack.c.l.b16 %v7595
      %v7654 = vunpack.c.h.b16 %v7595
      %v7655 = vunpack.c.l.b16 %v7596
      %v7656 = vunpack.c.h.b16 %v7596
      %v7657 = vunpack.c.l.b16 %v7597
      %v7658 = vunpack.c.h.b16 %v7597
      %v7659 = vunpack.c.l.b16 %v7598
      %v7660 = vunpack.c.h.b16 %v7598
      %v7661 = vunpack.c.l.b16 %v7599
      %v7662 = vpack.c.b16 %v7621, %v7621
      %v7663 = vpack.c.b16 %v7622, %v7622
      %v7664 = vpack.c.b16 %v7623, %v7623
      %v7665 = vpack.c.b16 %v7624, %v7624
      %v7666 = vpack.c.b16 %v7625, %v7625
      %v7667 = vpack.c.b16 %v7626, %v7626
      %v7668 = vpack.c.b16 %v7627, %v7627
      %v7669 = vpack.c.b16 %v7628, %v7628
      %v7670 = vpack.c.b16 %v7629, %v7629
      %v7671 = vpack.c.b16 %v7630, %v7630
      %v7672 = vpack.c.b16 %v7631, %v7631
      %v7673 = vpack.c.b16 %v7632, %v7632
      %v7674 = vpack.c.b16 %v7633, %v7633
      %v7675 = vpack.c.b16 %v7634, %v7634
      %v7676 = vpack.c.b16 %v7635, %v7635
      %v7677 = vpack.c.b16 %v7636, %v7636
      %v7678 = vpack.c.b16 %v7637, %v7637
      %v7679 = vpack.c.b16 %v7638, %v7638
      %v7680 = vpack.c.b16 %v7639, %v7639
      %v7681 = vpack.c.b16 %v7640, %v7640
      %v7682 = vpack.c.b16 %v7641, %v7641
      %v7683 = vpack.c.b16 %v7642, %v7642
      %v7684 = vpack.c.b16 %v7643, %v7643
      %v7685 = vpack.c.b16 %v7644, %v7644
      %v7686 = vpack.c.b16 %v7645, %v7645
      %v7687 = vpack.c.b16 %v7646, %v7646
      %v7688 = vpack.c.b16 %v7647, %v7647
      %v7689 = vpack.c.b16 %v7648, %v7648
      %v7690 = vpack.c.b16 %v7649, %v7649
      %v7691 = vpack.c.b16 %v7650, %v7650
      %v7692 = vpack.c.b16 %v7651, %v7651
      %v7693 = vpack.c.b16 %v7652, %v7652
      %v7694 = vpack.c.b16 %v7653, %v7653
      %v7695 = vpack.c.b16 %v7654, %v7654
      %v7696 = vpack.c.b16 %v7655, %v7655
      %v7697 = vpack.c.b16 %v7656, %v7656
      %v7698 = vpack.c.b16 %v7657, %v7657
      %v7699 = vpack.c.b16 %v7658, %v7658
      %v7700 = vpack.c.b16 %v7659, %v7659
      %v7701 = vpack.c.b16 %v7660, %v7660
      %v7702 = vpack.c.b16 %v7661, %v7661
      %7703 = vrot.lane.b32.xlu0 %v7662, 16
      %v7704 = vpop.permute.xlu0 %7703
      %7705 = vrot.lane.b32.xlu0 %v7663, 16
      %v7706 = vpop.permute.xlu0 %7705
      %7707 = vrot.lane.b32.xlu0 %v7664, 16
      %v7708 = vpop.permute.xlu0 %7707
      %7709 = vrot.lane.b32.xlu0 %v7665, 16
      %v7710 = vpop.permute.xlu0 %7709
      %7711 = vrot.lane.b32.xlu0 %v7666, 16
      %v7712 = vpop.permute.xlu0 %7711
      %7713 = vrot.lane.b32.xlu0 %v7667, 16
      %v7714 = vpop.permute.xlu0 %7713
      %7715 = vrot.lane.b32.xlu0 %v7668, 16
      %v7716 = vpop.permute.xlu0 %7715
      %7717 = vrot.lane.b32.xlu0 %v7669, 16
      %v7718 = vpop.permute.xlu0 %7717
      %7719 = vrot.lane.b32.xlu0 %v7670, 16
      %v7720 = vpop.permute.xlu0 %7719
      %7721 = vrot.lane.b32.xlu0 %v7671, 16
      %v7722 = vpop.permute.xlu0 %7721
      %7723 = vrot.lane.b32.xlu0 %v7672, 16
      %v7724 = vpop.permute.xlu0 %7723
      %7725 = vrot.lane.b32.xlu0 %v7673, 16
      %v7726 = vpop.permute.xlu0 %7725
      %7727 = vrot.lane.b32.xlu0 %v7674, 16
      %v7728 = vpop.permute.xlu0 %7727
      %7729 = vrot.lane.b32.xlu0 %v7675, 16
      %v7730 = vpop.permute.xlu0 %7729
      %7731 = vrot.lane.b32.xlu0 %v7676, 16
      %v7732 = vpop.permute.xlu0 %7731
      %7733 = vrot.lane.b32.xlu0 %v7677, 16
      %v7734 = vpop.permute.xlu0 %7733
      %7735 = vrot.lane.b32.xlu0 %v7678, 16
      %v7736 = vpop.permute.xlu0 %7735
      %7737 = vrot.lane.b32.xlu0 %v7679, 16
      %v7738 = vpop.permute.xlu0 %7737
      %7739 = vrot.lane.b32.xlu0 %v7680, 16
      %v7740 = vpop.permute.xlu0 %7739
      %7741 = vrot.lane.b32.xlu0 %v7681, 16
      %v7742 = vpop.permute.xlu0 %7741
      %7743 = vrot.lane.b32.xlu0 %v7682, 16
      %v7744 = vpop.permute.xlu0 %7743
      %7745 = vrot.lane.b32.xlu0 %v7683, 16
      %v7746 = vpop.permute.xlu0 %7745
      %7747 = vrot.lane.b32.xlu0 %v7684, 16
      %v7748 = vpop.permute.xlu0 %7747
      %7749 = vrot.lane.b32.xlu0 %v7685, 16
      %v7750 = vpop.permute.xlu0 %7749
      %7751 = vrot.lane.b32.xlu0 %v7686, 16
      %v7752 = vpop.permute.xlu0 %7751
      %7753 = vrot.lane.b32.xlu0 %v7687, 16
      %v7754 = vpop.permute.xlu0 %7753
      %7755 = vrot.lane.b32.xlu0 %v7688, 16
      %v7756 = vpop.permute.xlu0 %7755
      %7757 = vrot.lane.b32.xlu0 %v7689, 16
      %v7758 = vpop.permute.xlu0 %7757
      %7759 = vrot.lane.b32.xlu0 %v7690, 16
      %v7760 = vpop.permute.xlu0 %7759
      %7761 = vrot.lane.b32.xlu0 %v7691, 16
      %v7762 = vpop.permute.xlu0 %7761
      %7763 = vrot.lane.b32.xlu0 %v7692, 16
      %v7764 = vpop.permute.xlu0 %7763
      %7765 = vrot.lane.b32.xlu0 %v7693, 16
      %v7766 = vpop.permute.xlu0 %7765
      %7767 = vrot.lane.b32.xlu0 %v7694, 16
      %v7768 = vpop.permute.xlu0 %7767
      %7769 = vrot.lane.b32.xlu0 %v7695, 16
      %v7770 = vpop.permute.xlu0 %7769
      %7771 = vrot.lane.b32.xlu0 %v7696, 16
      %v7772 = vpop.permute.xlu0 %7771
      %7773 = vrot.lane.b32.xlu0 %v7697, 16
      %v7774 = vpop.permute.xlu0 %7773
      %7775 = vrot.lane.b32.xlu0 %v7698, 16
      %v7776 = vpop.permute.xlu0 %7775
      %7777 = vrot.lane.b32.xlu0 %v7699, 16
      %v7778 = vpop.permute.xlu0 %7777
      %7779 = vrot.lane.b32.xlu0 %v7700, 16
      %v7780 = vpop.permute.xlu0 %7779
      %7781 = vrot.lane.b32.xlu0 %v7701, 16
      %v7782 = vpop.permute.xlu0 %7781
      %7783 = vrot.lane.b32.xlu0 %v7702, 16
      %v7784 = vpop.permute.xlu0 %7783
      %vm7826 = vcmask 388224
      %7827 = vst.msk [vmem:[%s305] sm:$0xf] %vm7826, %v7704
      %7828 = vst.msk [vmem:[%s305 + $0x4] sm:$0xf] %vm7826, %v7706
      %7829 = vst.msk [vmem:[%s305 + $0x8] sm:$0xf] %vm7826, %v7708
      %7830 = vst.msk [vmem:[%s305 + $0xc] sm:$0xf] %vm7826, %v7710
      %7831 = vst.msk [vmem:[%s305 + $0x10] sm:$0xf] %vm7826, %v7712
      %7832 = vst.msk [vmem:[%s305 + $0x14] sm:$0xf] %vm7826, %v7714
      %7833 = vst.msk [vmem:[%s305 + $0x18] sm:$0xf] %vm7826, %v7716
      %7834 = vst.msk [vmem:[%s305 + $0x1c] sm:$0xf] %vm7826, %v7718
      %7835 = vst.msk [vmem:[%s305 + $0x20] sm:$0xf] %vm7826, %v7720
      %7836 = vst.msk [vmem:[%s305 + $0x24] sm:$0xf] %vm7826, %v7722
      %7837 = vst.msk [vmem:[%s305 + $0x28] sm:$0xf] %vm7826, %v7724
      %7838 = vst.msk [vmem:[%s305 + $0x2c] sm:$0xf] %vm7826, %v7726
      %7839 = vst.msk [vmem:[%s305 + $0x30] sm:$0xf] %vm7826, %v7728
      %7840 = vst.msk [vmem:[%s305 + $0x34] sm:$0xf] %vm7826, %v7730
      %7841 = vst.msk [vmem:[%s305 + $0x38] sm:$0xf] %vm7826, %v7732
      %7842 = vst.msk [vmem:[%s305 + $0x3c] sm:$0xf] %vm7826, %v7734
      %7843 = vst.msk [vmem:[%s305 + $0x40] sm:$0xf] %vm7826, %v7736
      %7844 = vst.msk [vmem:[%s305 + $0x44] sm:$0xf] %vm7826, %v7738
      %7845 = vst.msk [vmem:[%s305 + $0x48] sm:$0xf] %vm7826, %v7740
      %7846 = vst.msk [vmem:[%s305 + $0x4c] sm:$0xf] %vm7826, %v7742
      %7847 = vst.msk [vmem:[%s305 + $0x50] sm:$0xf] %vm7826, %v7744
      %7848 = vst.msk [vmem:[%s305 + $0x54] sm:$0xf] %vm7826, %v7746
      %7849 = vst.msk [vmem:[%s305 + $0x58] sm:$0xf] %vm7826, %v7748
      %7850 = vst.msk [vmem:[%s305 + $0x5c] sm:$0xf] %vm7826, %v7750
      %7851 = vst.msk [vmem:[%s305 + $0x60] sm:$0xf] %vm7826, %v7752
      %7852 = vst.msk [vmem:[%s305 + $0x64] sm:$0xf] %vm7826, %v7754
      %7853 = vst.msk [vmem:[%s305 + $0x68] sm:$0xf] %vm7826, %v7756
      %7854 = vst.msk [vmem:[%s305 + $0x6c] sm:$0xf] %vm7826, %v7758
      %7855 = vst.msk [vmem:[%s305 + $0x70] sm:$0xf] %vm7826, %v7760
      %7856 = vst.msk [vmem:[%s305 + $0x74] sm:$0xf] %vm7826, %v7762
      %7857 = vst.msk [vmem:[%s305 + $0x78] sm:$0xf] %vm7826, %v7764
      %7858 = vst.msk [vmem:[%s305 + $0x7c] sm:$0xf] %vm7826, %v7766
      %7859 = vst.msk [vmem:[%s305 + $0x80] sm:$0xf] %vm7826, %v7768
      %7860 = vst.msk [vmem:[%s305 + $0x84] sm:$0xf] %vm7826, %v7770
      %7861 = vst.msk [vmem:[%s305 + $0x88] sm:$0xf] %vm7826, %v7772
      %7862 = vst.msk [vmem:[%s305 + $0x8c] sm:$0xf] %vm7826, %v7774
      %7863 = vst.msk [vmem:[%s305 + $0x90] sm:$0xf] %vm7826, %v7776
      %7864 = vst.msk [vmem:[%s305 + $0x94] sm:$0xf] %vm7826, %v7778
      %7865 = vst.msk [vmem:[%s305 + $0x98] sm:$0xf] %vm7826, %v7780
      %7866 = vst.msk [vmem:[%s305 + $0x9c] sm:$0xf] %vm7826, %v7782
      %vm7867 = vcmask 386176
      %7868 = vst.msk [vmem:[%s305 + $0xa0] sm:$0x3] %vm7867, %v7784
      %v7869 = vpack.c.bf16 %v7331, %v7330
      %v7870 = vpack.c.bf16 %v7333, %v7332
      %v7871 = vpack.c.bf16 %v7335, %v7334
      %v7872 = vpack.c.bf16 %v7337, %v7336
      %v7873 = vpack.c.bf16 %v7339, %v7338
      %v7874 = vpack.c.bf16 %v7341, %v7340
      %v7875 = vpack.c.bf16 %v7343, %v7342
      %v7876 = vpack.c.bf16 %v7345, %v7344
      %v7877 = vpack.c.bf16 %v7347, %v7346
      %v7878 = vpack.c.bf16 %v7349, %v7348
      %v7879 = vpack.c.bf16 %v7351, %v7350
      %v7880 = vpack.c.bf16 %v7353, %v7352
      %v7881 = vpack.c.bf16 %v7355, %v7354
      %v7882 = vpack.c.bf16 %v7357, %v7356
      %v7883 = vpack.c.bf16 %v7359, %v7358
      %v7884 = vpack.c.bf16 %v7361, %v7360
      %v7885 = vpack.c.bf16 %v7363, %v7362
      %v7886 = vpack.c.bf16 %v7365, %v7364
      %v7887 = vpack.c.bf16 %v7367, %v7366
      %v7888 = vpack.c.bf16 %v7369, %v7368
      %v7889 = vpack.c.bf16 %v7370, %v7370
      %v7911 = vunpack.c.l.b16 %v7869
      %v7912 = vunpack.c.h.b16 %v7869
      %v7913 = vunpack.c.l.b16 %v7870
      %v7914 = vunpack.c.h.b16 %v7870
      %v7915 = vunpack.c.l.b16 %v7871
      %v7916 = vunpack.c.h.b16 %v7871
      %v7917 = vunpack.c.l.b16 %v7872
      %v7918 = vunpack.c.h.b16 %v7872
      %v7919 = vunpack.c.l.b16 %v7873
      %v7920 = vunpack.c.h.b16 %v7873
      %v7921 = vunpack.c.l.b16 %v7874
      %v7922 = vunpack.c.h.b16 %v7874
      %v7923 = vunpack.c.l.b16 %v7875
      %v7924 = vunpack.c.h.b16 %v7875
      %v7925 = vunpack.c.l.b16 %v7876
      %v7926 = vunpack.c.h.b16 %v7876
      %v7927 = vunpack.c.l.b16 %v7877
      %v7928 = vunpack.c.h.b16 %v7877
      %v7929 = vunpack.c.l.b16 %v7878
      %v7930 = vunpack.c.h.b16 %v7878
      %v7931 = vunpack.c.l.b16 %v7879
      %v7932 = vunpack.c.h.b16 %v7879
      %v7933 = vunpack.c.l.b16 %v7880
      %v7934 = vunpack.c.h.b16 %v7880
      %v7935 = vunpack.c.l.b16 %v7881
      %v7936 = vunpack.c.h.b16 %v7881
      %v7937 = vunpack.c.l.b16 %v7882
      %v7938 = vunpack.c.h.b16 %v7882
      %v7939 = vunpack.c.l.b16 %v7883
      %v7940 = vunpack.c.h.b16 %v7883
      %v7941 = vunpack.c.l.b16 %v7884
      %v7942 = vunpack.c.h.b16 %v7884
      %v7943 = vunpack.c.l.b16 %v7885
      %v7944 = vunpack.c.h.b16 %v7885
      %v7945 = vunpack.c.l.b16 %v7886
      %v7946 = vunpack.c.h.b16 %v7886
      %v7947 = vunpack.c.l.b16 %v7887
      %v7948 = vunpack.c.h.b16 %v7887
      %v7949 = vunpack.c.l.b16 %v7888
      %v7950 = vunpack.c.h.b16 %v7888
      %v7951 = vunpack.c.l.b16 %v7889
      %v7952 = vpack.c.b16 %v7911, %v7911
      %v7953 = vpack.c.b16 %v7912, %v7912
      %v7954 = vpack.c.b16 %v7913, %v7913
      %v7955 = vpack.c.b16 %v7914, %v7914
      %v7956 = vpack.c.b16 %v7915, %v7915
      %v7957 = vpack.c.b16 %v7916, %v7916
      %v7958 = vpack.c.b16 %v7917, %v7917
      %v7959 = vpack.c.b16 %v7918, %v7918
      %v7960 = vpack.c.b16 %v7919, %v7919
      %v7961 = vpack.c.b16 %v7920, %v7920
      %v7962 = vpack.c.b16 %v7921, %v7921
      %v7963 = vpack.c.b16 %v7922, %v7922
      %v7964 = vpack.c.b16 %v7923, %v7923
      %v7965 = vpack.c.b16 %v7924, %v7924
      %v7966 = vpack.c.b16 %v7925, %v7925
      %v7967 = vpack.c.b16 %v7926, %v7926
      %v7968 = vpack.c.b16 %v7927, %v7927
      %v7969 = vpack.c.b16 %v7928, %v7928
      %v7970 = vpack.c.b16 %v7929, %v7929
      %v7971 = vpack.c.b16 %v7930, %v7930
      %v7972 = vpack.c.b16 %v7931, %v7931
      %v7973 = vpack.c.b16 %v7932, %v7932
      %v7974 = vpack.c.b16 %v7933, %v7933
      %v7975 = vpack.c.b16 %v7934, %v7934
      %v7976 = vpack.c.b16 %v7935, %v7935
      %v7977 = vpack.c.b16 %v7936, %v7936
      %v7978 = vpack.c.b16 %v7937, %v7937
      %v7979 = vpack.c.b16 %v7938, %v7938
      %v7980 = vpack.c.b16 %v7939, %v7939
      %v7981 = vpack.c.b16 %v7940, %v7940
      %v7982 = vpack.c.b16 %v7941, %v7941
      %v7983 = vpack.c.b16 %v7942, %v7942
      %v7984 = vpack.c.b16 %v7943, %v7943
      %v7985 = vpack.c.b16 %v7944, %v7944
      %v7986 = vpack.c.b16 %v7945, %v7945
      %v7987 = vpack.c.b16 %v7946, %v7946
      %v7988 = vpack.c.b16 %v7947, %v7947
      %v7989 = vpack.c.b16 %v7948, %v7948
      %v7990 = vpack.c.b16 %v7949, %v7949
      %v7991 = vpack.c.b16 %v7950, %v7950
      %v7992 = vpack.c.b16 %v7951, %v7951
      %7993 = vrot.lane.b32.xlu0 %v7952, 48
      %v7994 = vpop.permute.xlu0 %7993
      %7995 = vrot.lane.b32.xlu0 %v7953, 48
      %v7996 = vpop.permute.xlu0 %7995
      %7997 = vrot.lane.b32.xlu0 %v7954, 48
      %v7998 = vpop.permute.xlu0 %7997
      %7999 = vrot.lane.b32.xlu0 %v7955, 48
      %v8000 = vpop.permute.xlu0 %7999
      %8001 = vrot.lane.b32.xlu0 %v7956, 48
      %v8002 = vpop.permute.xlu0 %8001
      %8003 = vrot.lane.b32.xlu0 %v7957, 48
      %v8004 = vpop.permute.xlu0 %8003
      %8005 = vrot.lane.b32.xlu0 %v7958, 48
      %v8006 = vpop.permute.xlu0 %8005
      %8007 = vrot.lane.b32.xlu0 %v7959, 48
      %v8008 = vpop.permute.xlu0 %8007
      %8009 = vrot.lane.b32.xlu0 %v7960, 48
      %v8010 = vpop.permute.xlu0 %8009
      %8011 = vrot.lane.b32.xlu0 %v7961, 48
      %v8012 = vpop.permute.xlu0 %8011
      %8013 = vrot.lane.b32.xlu0 %v7962, 48
      %v8014 = vpop.permute.xlu0 %8013
      %8015 = vrot.lane.b32.xlu0 %v7963, 48
      %v8016 = vpop.permute.xlu0 %8015
      %8017 = vrot.lane.b32.xlu0 %v7964, 48
      %v8018 = vpop.permute.xlu0 %8017
      %8019 = vrot.lane.b32.xlu0 %v7965, 48
      %v8020 = vpop.permute.xlu0 %8019
      %8021 = vrot.lane.b32.xlu0 %v7966, 48
      %v8022 = vpop.permute.xlu0 %8021
      %8023 = vrot.lane.b32.xlu0 %v7967, 48
      %v8024 = vpop.permute.xlu0 %8023
      %8025 = vrot.lane.b32.xlu0 %v7968, 48
      %v8026 = vpop.permute.xlu0 %8025
      %8027 = vrot.lane.b32.xlu0 %v7969, 48
      %v8028 = vpop.permute.xlu0 %8027
      %8029 = vrot.lane.b32.xlu0 %v7970, 48
      %v8030 = vpop.permute.xlu0 %8029
      %8031 = vrot.lane.b32.xlu0 %v7971, 48
      %v8032 = vpop.permute.xlu0 %8031
      %8033 = vrot.lane.b32.xlu0 %v7972, 48
      %v8034 = vpop.permute.xlu0 %8033
      %8035 = vrot.lane.b32.xlu0 %v7973, 48
      %v8036 = vpop.permute.xlu0 %8035
      %8037 = vrot.lane.b32.xlu0 %v7974, 48
      %v8038 = vpop.permute.xlu0 %8037
      %8039 = vrot.lane.b32.xlu0 %v7975, 48
      %v8040 = vpop.permute.xlu0 %8039
      %8041 = vrot.lane.b32.xlu0 %v7976, 48
      %v8042 = vpop.permute.xlu0 %8041
      %8043 = vrot.lane.b32.xlu0 %v7977, 48
      %v8044 = vpop.permute.xlu0 %8043
      %8045 = vrot.lane.b32.xlu0 %v7978, 48
      %v8046 = vpop.permute.xlu0 %8045
      %8047 = vrot.lane.b32.xlu0 %v7979, 48
      %v8048 = vpop.permute.xlu0 %8047
      %8049 = vrot.lane.b32.xlu0 %v7980, 48
      %v8050 = vpop.permute.xlu0 %8049
      %8051 = vrot.lane.b32.xlu0 %v7981, 48
      %v8052 = vpop.permute.xlu0 %8051
      %8053 = vrot.lane.b32.xlu0 %v7982, 48
      %v8054 = vpop.permute.xlu0 %8053
      %8055 = vrot.lane.b32.xlu0 %v7983, 48
      %v8056 = vpop.permute.xlu0 %8055
      %8057 = vrot.lane.b32.xlu0 %v7984, 48
      %v8058 = vpop.permute.xlu0 %8057
      %8059 = vrot.lane.b32.xlu0 %v7985, 48
      %v8060 = vpop.permute.xlu0 %8059
      %8061 = vrot.lane.b32.xlu0 %v7986, 48
      %v8062 = vpop.permute.xlu0 %8061
      %8063 = vrot.lane.b32.xlu0 %v7987, 48
      %v8064 = vpop.permute.xlu0 %8063
      %8065 = vrot.lane.b32.xlu0 %v7988, 48
      %v8066 = vpop.permute.xlu0 %8065
      %8067 = vrot.lane.b32.xlu0 %v7989, 48
      %v8068 = vpop.permute.xlu0 %8067
      %8069 = vrot.lane.b32.xlu0 %v7990, 48
      %v8070 = vpop.permute.xlu0 %8069
      %8071 = vrot.lane.b32.xlu0 %v7991, 48
      %v8072 = vpop.permute.xlu0 %8071
      %8073 = vrot.lane.b32.xlu0 %v7992, 48
      %v8074 = vpop.permute.xlu0 %8073
      %vm8116 = vcmask 650624
      %8117 = vst.msk [vmem:[%s305] sm:$0xf] %vm8116, %v7994
      %8118 = vst.msk [vmem:[%s305 + $0x4] sm:$0xf] %vm8116, %v7996
      %8119 = vst.msk [vmem:[%s305 + $0x8] sm:$0xf] %vm8116, %v7998
      %8120 = vst.msk [vmem:[%s305 + $0xc] sm:$0xf] %vm8116, %v8000
      %8121 = vst.msk [vmem:[%s305 + $0x10] sm:$0xf] %vm8116, %v8002
      %8122 = vst.msk [vmem:[%s305 + $0x14] sm:$0xf] %vm8116, %v8004
      %8123 = vst.msk [vmem:[%s305 + $0x18] sm:$0xf] %vm8116, %v8006
      %8124 = vst.msk [vmem:[%s305 + $0x1c] sm:$0xf] %vm8116, %v8008
      %8125 = vst.msk [vmem:[%s305 + $0x20] sm:$0xf] %vm8116, %v8010
      %8126 = vst.msk [vmem:[%s305 + $0x24] sm:$0xf] %vm8116, %v8012
      %8127 = vst.msk [vmem:[%s305 + $0x28] sm:$0xf] %vm8116, %v8014
      %8128 = vst.msk [vmem:[%s305 + $0x2c] sm:$0xf] %vm8116, %v8016
      %8129 = vst.msk [vmem:[%s305 + $0x30] sm:$0xf] %vm8116, %v8018
      %8130 = vst.msk [vmem:[%s305 + $0x34] sm:$0xf] %vm8116, %v8020
      %8131 = vst.msk [vmem:[%s305 + $0x38] sm:$0xf] %vm8116, %v8022
      %8132 = vst.msk [vmem:[%s305 + $0x3c] sm:$0xf] %vm8116, %v8024
      %8133 = vst.msk [vmem:[%s305 + $0x40] sm:$0xf] %vm8116, %v8026
      %8134 = vst.msk [vmem:[%s305 + $0x44] sm:$0xf] %vm8116, %v8028
      %8135 = vst.msk [vmem:[%s305 + $0x48] sm:$0xf] %vm8116, %v8030
      %8136 = vst.msk [vmem:[%s305 + $0x4c] sm:$0xf] %vm8116, %v8032
      %8137 = vst.msk [vmem:[%s305 + $0x50] sm:$0xf] %vm8116, %v8034
      %8138 = vst.msk [vmem:[%s305 + $0x54] sm:$0xf] %vm8116, %v8036
      %8139 = vst.msk [vmem:[%s305 + $0x58] sm:$0xf] %vm8116, %v8038
      %8140 = vst.msk [vmem:[%s305 + $0x5c] sm:$0xf] %vm8116, %v8040
      %8141 = vst.msk [vmem:[%s305 + $0x60] sm:$0xf] %vm8116, %v8042
      %8142 = vst.msk [vmem:[%s305 + $0x64] sm:$0xf] %vm8116, %v8044
      %8143 = vst.msk [vmem:[%s305 + $0x68] sm:$0xf] %vm8116, %v8046
      %8144 = vst.msk [vmem:[%s305 + $0x6c] sm:$0xf] %vm8116, %v8048
      %8145 = vst.msk [vmem:[%s305 + $0x70] sm:$0xf] %vm8116, %v8050
      %8146 = vst.msk [vmem:[%s305 + $0x74] sm:$0xf] %vm8116, %v8052
      %8147 = vst.msk [vmem:[%s305 + $0x78] sm:$0xf] %vm8116, %v8054
      %8148 = vst.msk [vmem:[%s305 + $0x7c] sm:$0xf] %vm8116, %v8056
      %8149 = vst.msk [vmem:[%s305 + $0x80] sm:$0xf] %vm8116, %v8058
      %8150 = vst.msk [vmem:[%s305 + $0x84] sm:$0xf] %vm8116, %v8060
      %8151 = vst.msk [vmem:[%s305 + $0x88] sm:$0xf] %vm8116, %v8062
      %8152 = vst.msk [vmem:[%s305 + $0x8c] sm:$0xf] %vm8116, %v8064
      %8153 = vst.msk [vmem:[%s305 + $0x90] sm:$0xf] %vm8116, %v8066
      %8154 = vst.msk [vmem:[%s305 + $0x94] sm:$0xf] %vm8116, %v8068
      %8155 = vst.msk [vmem:[%s305 + $0x98] sm:$0xf] %vm8116, %v8070
      %8156 = vst.msk [vmem:[%s305 + $0x9c] sm:$0xf] %vm8116, %v8072
      %vm8157 = vcmask 648576
      %8158 = vst.msk [vmem:[%s305 + $0xa0] sm:$0x3] %vm8157, %v8074
      %v8159 = vpack.c.bf16 %v2098, %v2097
      %v8160 = vpack.c.bf16 %v2100, %v2099
      %v8161 = vpack.c.bf16 %v2102, %v2101
      %v8162 = vpack.c.bf16 %v2104, %v2103
      %v8163 = vpack.c.bf16 %v2106, %v2105
      %v8164 = vpack.c.bf16 %v2108, %v2107
      %v8165 = vpack.c.bf16 %v2110, %v2109
      %v8166 = vpack.c.bf16 %v2112, %v2111
      %v8167 = vpack.c.bf16 %v2114, %v2113
      %v8168 = vpack.c.bf16 %v2116, %v2115
      %v8169 = vpack.c.bf16 %v2118, %v2117
      %v8170 = vpack.c.bf16 %v2120, %v2119
      %v8171 = vpack.c.bf16 %v2122, %v2121
      %v8172 = vpack.c.bf16 %v2124, %v2123
      %v8173 = vpack.c.bf16 %v2126, %v2125
      %v8174 = vpack.c.bf16 %v2128, %v2127
      %v8175 = vpack.c.bf16 %v2130, %v2129
      %v8176 = vpack.c.bf16 %v2132, %v2131
      %v8177 = vpack.c.bf16 %v2134, %v2133
      %v8178 = vpack.c.bf16 %v2136, %v2135
      %v8179 = vpack.c.bf16 %v2138, %v2137
      %v8201 = vunpack.c.l.b16 %v8159
      %v8202 = vunpack.c.h.b16 %v8159
      %v8203 = vunpack.c.l.b16 %v8160
      %v8204 = vunpack.c.h.b16 %v8160
      %v8205 = vunpack.c.l.b16 %v8161
      %v8206 = vunpack.c.h.b16 %v8161
      %v8207 = vunpack.c.l.b16 %v8162
      %v8208 = vunpack.c.h.b16 %v8162
      %v8209 = vunpack.c.l.b16 %v8163
      %v8210 = vunpack.c.h.b16 %v8163
      %v8211 = vunpack.c.l.b16 %v8164
      %v8212 = vunpack.c.h.b16 %v8164
      %v8213 = vunpack.c.l.b16 %v8165
      %v8214 = vunpack.c.h.b16 %v8165
      %v8215 = vunpack.c.l.b16 %v8166
      %v8216 = vunpack.c.h.b16 %v8166
      %v8217 = vunpack.c.l.b16 %v8167
      %v8218 = vunpack.c.h.b16 %v8167
      %v8219 = vunpack.c.l.b16 %v8168
      %v8220 = vunpack.c.h.b16 %v8168
      %v8221 = vunpack.c.l.b16 %v8169
      %v8222 = vunpack.c.h.b16 %v8169
      %v8223 = vunpack.c.l.b16 %v8170
      %v8224 = vunpack.c.h.b16 %v8170
      %v8225 = vunpack.c.l.b16 %v8171
      %v8226 = vunpack.c.h.b16 %v8171
      %v8227 = vunpack.c.l.b16 %v8172
      %v8228 = vunpack.c.h.b16 %v8172
      %v8229 = vunpack.c.l.b16 %v8173
      %v8230 = vunpack.c.h.b16 %v8173
      %v8231 = vunpack.c.l.b16 %v8174
      %v8232 = vunpack.c.h.b16 %v8174
      %v8233 = vunpack.c.l.b16 %v8175
      %v8234 = vunpack.c.h.b16 %v8175
      %v8235 = vunpack.c.l.b16 %v8176
      %v8236 = vunpack.c.h.b16 %v8176
      %v8237 = vunpack.c.l.b16 %v8177
      %v8238 = vunpack.c.h.b16 %v8177
      %v8239 = vunpack.c.l.b16 %v8178
      %v8240 = vunpack.c.h.b16 %v8178
      %v8241 = vunpack.c.l.b16 %v8179
      %v8242 = vunpack.c.h.b16 %v8179
      %v8243 = vpack.c.b16 %v8201, %v8201
      %v8244 = vpack.c.b16 %v8202, %v8202
      %v8245 = vpack.c.b16 %v8203, %v8203
      %v8246 = vpack.c.b16 %v8204, %v8204
      %v8247 = vpack.c.b16 %v8205, %v8205
      %v8248 = vpack.c.b16 %v8206, %v8206
      %v8249 = vpack.c.b16 %v8207, %v8207
      %v8250 = vpack.c.b16 %v8208, %v8208
      %v8251 = vpack.c.b16 %v8209, %v8209
      %v8252 = vpack.c.b16 %v8210, %v8210
      %v8253 = vpack.c.b16 %v8211, %v8211
      %v8254 = vpack.c.b16 %v8212, %v8212
      %v8255 = vpack.c.b16 %v8213, %v8213
      %v8256 = vpack.c.b16 %v8214, %v8214
      %v8257 = vpack.c.b16 %v8215, %v8215
      %v8258 = vpack.c.b16 %v8216, %v8216
      %v8259 = vpack.c.b16 %v8217, %v8217
      %v8260 = vpack.c.b16 %v8218, %v8218
      %v8261 = vpack.c.b16 %v8219, %v8219
      %v8262 = vpack.c.b16 %v8220, %v8220
      %v8263 = vpack.c.b16 %v8221, %v8221
      %v8264 = vpack.c.b16 %v8222, %v8222
      %v8265 = vpack.c.b16 %v8223, %v8223
      %v8266 = vpack.c.b16 %v8224, %v8224
      %v8267 = vpack.c.b16 %v8225, %v8225
      %v8268 = vpack.c.b16 %v8226, %v8226
      %v8269 = vpack.c.b16 %v8227, %v8227
      %v8270 = vpack.c.b16 %v8228, %v8228
      %v8271 = vpack.c.b16 %v8229, %v8229
      %v8272 = vpack.c.b16 %v8230, %v8230
      %v8273 = vpack.c.b16 %v8231, %v8231
      %v8274 = vpack.c.b16 %v8232, %v8232
      %v8275 = vpack.c.b16 %v8233, %v8233
      %v8276 = vpack.c.b16 %v8234, %v8234
      %v8277 = vpack.c.b16 %v8235, %v8235
      %v8278 = vpack.c.b16 %v8236, %v8236
      %v8279 = vpack.c.b16 %v8237, %v8237
      %v8280 = vpack.c.b16 %v8238, %v8238
      %v8281 = vpack.c.b16 %v8239, %v8239
      %v8282 = vpack.c.b16 %v8240, %v8240
      %v8283 = vpack.c.b16 %v8241, %v8241
      %v8284 = vpack.c.b16 %v8242, %v8242
      %vm8285 = vsmask.f32 5392
      %vm8286 = vmor %vm5701, %vm8285
      %v8288 = vshrl.u32 %v8243, 16
      %v8290 = vrot.slane %v8288, 6
      %v8291 = vshll.u32 %v8243, 16
      %v8293 = vrot.slane %v8291, 7
      %v8294 = vor.u32 %v8290, %v8293
      %v8295 = vrot.slane %v8294, 4
      %v8297 = vshrl.u32 %v8244, 16
      %v8299 = vrot.slane %v8297, 6
      %v8300 = vshll.u32 %v8244, 16
      %v8302 = vrot.slane %v8300, 7
      %v8303 = vor.u32 %v8299, %v8302
      %v8304 = vsel %vm8286, %v8295, %v8303
      %v8305 = vrot.slane %v8303, 4
      %v8307 = vshrl.u32 %v8245, 16
      %v8309 = vrot.slane %v8307, 6
      %v8310 = vshll.u32 %v8245, 16
      %v8312 = vrot.slane %v8310, 7
      %v8313 = vor.u32 %v8309, %v8312
      %v8314 = vsel %vm8286, %v8305, %v8313
      %v8315 = vrot.slane %v8313, 4
      %v8317 = vshrl.u32 %v8246, 16
      %v8319 = vrot.slane %v8317, 6
      %v8320 = vshll.u32 %v8246, 16
      %v8322 = vrot.slane %v8320, 7
      %v8323 = vor.u32 %v8319, %v8322
      %v8324 = vsel %vm8286, %v8315, %v8323
      %v8325 = vrot.slane %v8323, 4
      %v8327 = vshrl.u32 %v8247, 16
      %v8329 = vrot.slane %v8327, 6
      %v8330 = vshll.u32 %v8247, 16
      %v8332 = vrot.slane %v8330, 7
      %v8333 = vor.u32 %v8329, %v8332
      %v8334 = vsel %vm8286, %v8325, %v8333
      %v8335 = vrot.slane %v8333, 4
      %v8337 = vshrl.u32 %v8248, 16
      %v8339 = vrot.slane %v8337, 6
      %v8340 = vshll.u32 %v8248, 16
      %v8342 = vrot.slane %v8340, 7
      %v8343 = vor.u32 %v8339, %v8342
      %v8344 = vsel %vm8286, %v8335, %v8343
      %v8345 = vrot.slane %v8343, 4
      %v8347 = vshrl.u32 %v8249, 16
      %v8349 = vrot.slane %v8347, 6
      %v8350 = vshll.u32 %v8249, 16
      %v8352 = vrot.slane %v8350, 7
      %v8353 = vor.u32 %v8349, %v8352
      %v8354 = vsel %vm8286, %v8345, %v8353
      %v8355 = vrot.slane %v8353, 4
      %v8357 = vshrl.u32 %v8250, 16
      %v8359 = vrot.slane %v8357, 6
      %v8360 = vshll.u32 %v8250, 16
      %v8362 = vrot.slane %v8360, 7
      %v8363 = vor.u32 %v8359, %v8362
      %v8364 = vsel %vm8286, %v8355, %v8363
      %v8365 = vrot.slane %v8363, 4
      %v8367 = vshrl.u32 %v8251, 16
      %v8369 = vrot.slane %v8367, 6
      %v8370 = vshll.u32 %v8251, 16
      %v8372 = vrot.slane %v8370, 7
      %v8373 = vor.u32 %v8369, %v8372
      %v8374 = vsel %vm8286, %v8365, %v8373
      %v8375 = vrot.slane %v8373, 4
      %v8377 = vshrl.u32 %v8252, 16
      %v8379 = vrot.slane %v8377, 6
      %v8380 = vshll.u32 %v8252, 16
      %v8382 = vrot.slane %v8380, 7
      %v8383 = vor.u32 %v8379, %v8382
      %v8384 = vsel %vm8286, %v8375, %v8383
      %v8385 = vrot.slane %v8383, 4
      %v8387 = vshrl.u32 %v8253, 16
      %v8389 = vrot.slane %v8387, 6
      %v8390 = vshll.u32 %v8253, 16
      %v8392 = vrot.slane %v8390, 7
      %v8393 = vor.u32 %v8389, %v8392
      %v8394 = vsel %vm8286, %v8385, %v8393
      %v8395 = vrot.slane %v8393, 4
      %v8397 = vshrl.u32 %v8254, 16
      %v8399 = vrot.slane %v8397, 6
      %v8400 = vshll.u32 %v8254, 16
      %v8402 = vrot.slane %v8400, 7
      %v8403 = vor.u32 %v8399, %v8402
      %v8404 = vsel %vm8286, %v8395, %v8403
      %v8405 = vrot.slane %v8403, 4
      %v8407 = vshrl.u32 %v8255, 16
      %v8409 = vrot.slane %v8407, 6
      %v8410 = vshll.u32 %v8255, 16
      %v8412 = vrot.slane %v8410, 7
      %v8413 = vor.u32 %v8409, %v8412
      %v8414 = vsel %vm8286, %v8405, %v8413
      %v8415 = vrot.slane %v8413, 4
      %v8417 = vshrl.u32 %v8256, 16
      %v8419 = vrot.slane %v8417, 6
      %v8420 = vshll.u32 %v8256, 16
      %v8422 = vrot.slane %v8420, 7
      %v8423 = vor.u32 %v8419, %v8422
      %v8424 = vsel %vm8286, %v8415, %v8423
      %v8425 = vrot.slane %v8423, 4
      %v8427 = vshrl.u32 %v8257, 16
      %v8429 = vrot.slane %v8427, 6
      %v8430 = vshll.u32 %v8257, 16
      %v8432 = vrot.slane %v8430, 7
      %v8433 = vor.u32 %v8429, %v8432
      %v8434 = vsel %vm8286, %v8425, %v8433
      %v8435 = vrot.slane %v8433, 4
      %v8437 = vshrl.u32 %v8258, 16
      %v8439 = vrot.slane %v8437, 6
      %v8440 = vshll.u32 %v8258, 16
      %v8442 = vrot.slane %v8440, 7
      %v8443 = vor.u32 %v8439, %v8442
      %v8444 = vsel %vm8286, %v8435, %v8443
      %v8445 = vrot.slane %v8443, 4
      %v8447 = vshrl.u32 %v8259, 16
      %v8449 = vrot.slane %v8447, 6
      %v8450 = vshll.u32 %v8259, 16
      %v8452 = vrot.slane %v8450, 7
      %v8453 = vor.u32 %v8449, %v8452
      %v8454 = vsel %vm8286, %v8445, %v8453
      %v8455 = vrot.slane %v8453, 4
      %v8457 = vshrl.u32 %v8260, 16
      %v8459 = vrot.slane %v8457, 6
      %v8460 = vshll.u32 %v8260, 16
      %v8462 = vrot.slane %v8460, 7
      %v8463 = vor.u32 %v8459, %v8462
      %v8464 = vsel %vm8286, %v8455, %v8463
      %v8465 = vrot.slane %v8463, 4
      %v8467 = vshrl.u32 %v8261, 16
      %v8469 = vrot.slane %v8467, 6
      %v8470 = vshll.u32 %v8261, 16
      %v8472 = vrot.slane %v8470, 7
      %v8473 = vor.u32 %v8469, %v8472
      %v8474 = vsel %vm8286, %v8465, %v8473
      %v8475 = vrot.slane %v8473, 4
      %v8477 = vshrl.u32 %v8262, 16
      %v8479 = vrot.slane %v8477, 6
      %v8480 = vshll.u32 %v8262, 16
      %v8482 = vrot.slane %v8480, 7
      %v8483 = vor.u32 %v8479, %v8482
      %v8484 = vsel %vm8286, %v8475, %v8483
      %v8485 = vrot.slane %v8483, 4
      %v8487 = vshrl.u32 %v8263, 16
      %v8489 = vrot.slane %v8487, 6
      %v8490 = vshll.u32 %v8263, 16
      %v8492 = vrot.slane %v8490, 7
      %v8493 = vor.u32 %v8489, %v8492
      %v8494 = vsel %vm8286, %v8485, %v8493
      %v8495 = vrot.slane %v8493, 4
      %v8497 = vshrl.u32 %v8264, 16
      %v8499 = vrot.slane %v8497, 6
      %v8500 = vshll.u32 %v8264, 16
      %v8502 = vrot.slane %v8500, 7
      %v8503 = vor.u32 %v8499, %v8502
      %v8504 = vsel %vm8286, %v8495, %v8503
      %v8505 = vrot.slane %v8503, 4
      %v8507 = vshrl.u32 %v8265, 16
      %v8509 = vrot.slane %v8507, 6
      %v8510 = vshll.u32 %v8265, 16
      %v8512 = vrot.slane %v8510, 7
      %v8513 = vor.u32 %v8509, %v8512
      %v8514 = vsel %vm8286, %v8505, %v8513
      %v8515 = vrot.slane %v8513, 4
      %v8517 = vshrl.u32 %v8266, 16
      %v8519 = vrot.slane %v8517, 6
      %v8520 = vshll.u32 %v8266, 16
      %v8522 = vrot.slane %v8520, 7
      %v8523 = vor.u32 %v8519, %v8522
      %v8524 = vsel %vm8286, %v8515, %v8523
      %v8525 = vrot.slane %v8523, 4
      %v8527 = vshrl.u32 %v8267, 16
      %v8529 = vrot.slane %v8527, 6
      %v8530 = vshll.u32 %v8267, 16
      %v8532 = vrot.slane %v8530, 7
      %v8533 = vor.u32 %v8529, %v8532
      %v8534 = vsel %vm8286, %v8525, %v8533
      %v8535 = vrot.slane %v8533, 4
      %v8537 = vshrl.u32 %v8268, 16
      %v8539 = vrot.slane %v8537, 6
      %v8540 = vshll.u32 %v8268, 16
      %v8542 = vrot.slane %v8540, 7
      %v8543 = vor.u32 %v8539, %v8542
      %v8544 = vsel %vm8286, %v8535, %v8543
      %v8545 = vrot.slane %v8543, 4
      %v8547 = vshrl.u32 %v8269, 16
      %v8549 = vrot.slane %v8547, 6
      %v8550 = vshll.u32 %v8269, 16
      %v8552 = vrot.slane %v8550, 7
      %v8553 = vor.u32 %v8549, %v8552
      %v8554 = vsel %vm8286, %v8545, %v8553
      %v8555 = vrot.slane %v8553, 4
      %v8557 = vshrl.u32 %v8270, 16
      %v8559 = vrot.slane %v8557, 6
      %v8560 = vshll.u32 %v8270, 16
      %v8562 = vrot.slane %v8560, 7
      %v8563 = vor.u32 %v8559, %v8562
      %v8564 = vsel %vm8286, %v8555, %v8563
      %v8565 = vrot.slane %v8563, 4
      %v8567 = vshrl.u32 %v8271, 16
      %v8569 = vrot.slane %v8567, 6
      %v8570 = vshll.u32 %v8271, 16
      %v8572 = vrot.slane %v8570, 7
      %v8573 = vor.u32 %v8569, %v8572
      %v8574 = vsel %vm8286, %v8565, %v8573
      %v8575 = vrot.slane %v8573, 4
      %v8577 = vshrl.u32 %v8272, 16
      %v8579 = vrot.slane %v8577, 6
      %v8580 = vshll.u32 %v8272, 16
      %v8582 = vrot.slane %v8580, 7
      %v8583 = vor.u32 %v8579, %v8582
      %v8584 = vsel %vm8286, %v8575, %v8583
      %v8585 = vrot.slane %v8583, 4
      %v8587 = vshrl.u32 %v8273, 16
      %v8589 = vrot.slane %v8587, 6
      %v8590 = vshll.u32 %v8273, 16
      %v8592 = vrot.slane %v8590, 7
      %v8593 = vor.u32 %v8589, %v8592
      %v8594 = vsel %vm8286, %v8585, %v8593
      %v8595 = vrot.slane %v8593, 4
      %v8597 = vshrl.u32 %v8274, 16
      %v8599 = vrot.slane %v8597, 6
      %v8600 = vshll.u32 %v8274, 16
      %v8602 = vrot.slane %v8600, 7
      %v8603 = vor.u32 %v8599, %v8602
      %v8604 = vsel %vm8286, %v8595, %v8603
      %v8605 = vrot.slane %v8603, 4
      %v8607 = vshrl.u32 %v8275, 16
      %v8609 = vrot.slane %v8607, 6
      %v8610 = vshll.u32 %v8275, 16
      %v8612 = vrot.slane %v8610, 7
      %v8613 = vor.u32 %v8609, %v8612
      %v8614 = vsel %vm8286, %v8605, %v8613
      %v8615 = vrot.slane %v8613, 4
      %v8617 = vshrl.u32 %v8276, 16
      %v8619 = vrot.slane %v8617, 6
      %v8620 = vshll.u32 %v8276, 16
      %v8622 = vrot.slane %v8620, 7
      %v8623 = vor.u32 %v8619, %v8622
      %v8624 = vsel %vm8286, %v8615, %v8623
      %v8625 = vrot.slane %v8623, 4
      %v8627 = vshrl.u32 %v8277, 16
      %v8629 = vrot.slane %v8627, 6
      %v8630 = vshll.u32 %v8277, 16
      %v8632 = vrot.slane %v8630, 7
      %v8633 = vor.u32 %v8629, %v8632
      %v8634 = vsel %vm8286, %v8625, %v8633
      %v8635 = vrot.slane %v8633, 4
      %v8637 = vshrl.u32 %v8278, 16
      %v8639 = vrot.slane %v8637, 6
      %v8640 = vshll.u32 %v8278, 16
      %v8642 = vrot.slane %v8640, 7
      %v8643 = vor.u32 %v8639, %v8642
      %v8644 = vsel %vm8286, %v8635, %v8643
      %v8645 = vrot.slane %v8643, 4
      %v8647 = vshrl.u32 %v8279, 16
      %v8649 = vrot.slane %v8647, 6
      %v8650 = vshll.u32 %v8279, 16
      %v8652 = vrot.slane %v8650, 7
      %v8653 = vor.u32 %v8649, %v8652
      %v8654 = vsel %vm8286, %v8645, %v8653
      %v8655 = vrot.slane %v8653, 4
      %v8657 = vshrl.u32 %v8280, 16
      %v8659 = vrot.slane %v8657, 6
      %v8660 = vshll.u32 %v8280, 16
      %v8662 = vrot.slane %v8660, 7
      %v8663 = vor.u32 %v8659, %v8662
      %v8664 = vsel %vm8286, %v8655, %v8663
      %v8665 = vrot.slane %v8663, 4
      %v8667 = vshrl.u32 %v8281, 16
      %v8669 = vrot.slane %v8667, 6
      %v8670 = vshll.u32 %v8281, 16
      %v8672 = vrot.slane %v8670, 7
      %v8673 = vor.u32 %v8669, %v8672
      %v8674 = vsel %vm8286, %v8665, %v8673
      %v8675 = vrot.slane %v8673, 4
      %v8677 = vshrl.u32 %v8282, 16
      %v8679 = vrot.slane %v8677, 6
      %v8680 = vshll.u32 %v8282, 16
      %v8682 = vrot.slane %v8680, 7
      %v8683 = vor.u32 %v8679, %v8682
      %v8684 = vsel %vm8286, %v8675, %v8683
      %v8685 = vrot.slane %v8683, 4
      %v8687 = vshrl.u32 %v8283, 16
      %v8689 = vrot.slane %v8687, 6
      %v8690 = vshll.u32 %v8283, 16
      %v8692 = vrot.slane %v8690, 7
      %v8693 = vor.u32 %v8689, %v8692
      %v8694 = vsel %vm8286, %v8685, %v8693
      %v8695 = vrot.slane %v8693, 4
      %v8697 = vshll.u32 %v8284, 16
      %v8699 = vrot.slane %v8697, 7
      %v8700 = vsel %vm8286, %v8695, %v8699
      %8701 = vrot.lane.b32.xlu0 %v8304, 32
      %v8702 = vpop.permute.xlu0 %8701
      %8703 = vrot.lane.b32.xlu0 %v8314, 32
      %v8704 = vpop.permute.xlu0 %8703
      %8705 = vrot.lane.b32.xlu0 %v8324, 32
      %v8706 = vpop.permute.xlu0 %8705
      %8707 = vrot.lane.b32.xlu0 %v8334, 32
      %v8708 = vpop.permute.xlu0 %8707
      %8709 = vrot.lane.b32.xlu0 %v8344, 32
      %v8710 = vpop.permute.xlu0 %8709
      %8711 = vrot.lane.b32.xlu0 %v8354, 32
      %v8712 = vpop.permute.xlu0 %8711
      %8713 = vrot.lane.b32.xlu0 %v8364, 32
      %v8714 = vpop.permute.xlu0 %8713
      %8715 = vrot.lane.b32.xlu0 %v8374, 32
      %v8716 = vpop.permute.xlu0 %8715
      %8717 = vrot.lane.b32.xlu0 %v8384, 32
      %v8718 = vpop.permute.xlu0 %8717
      %8719 = vrot.lane.b32.xlu0 %v8394, 32
      %v8720 = vpop.permute.xlu0 %8719
      %8721 = vrot.lane.b32.xlu0 %v8404, 32
      %v8722 = vpop.permute.xlu0 %8721
      %8723 = vrot.lane.b32.xlu0 %v8414, 32
      %v8724 = vpop.permute.xlu0 %8723
      %8725 = vrot.lane.b32.xlu0 %v8424, 32
      %v8726 = vpop.permute.xlu0 %8725
      %8727 = vrot.lane.b32.xlu0 %v8434, 32
      %v8728 = vpop.permute.xlu0 %8727
      %8729 = vrot.lane.b32.xlu0 %v8444, 32
      %v8730 = vpop.permute.xlu0 %8729
      %8731 = vrot.lane.b32.xlu0 %v8454, 32
      %v8732 = vpop.permute.xlu0 %8731
      %8733 = vrot.lane.b32.xlu0 %v8464, 32
      %v8734 = vpop.permute.xlu0 %8733
      %8735 = vrot.lane.b32.xlu0 %v8474, 32
      %v8736 = vpop.permute.xlu0 %8735
      %8737 = vrot.lane.b32.xlu0 %v8484, 32
      %v8738 = vpop.permute.xlu0 %8737
      %8739 = vrot.lane.b32.xlu0 %v8494, 32
      %v8740 = vpop.permute.xlu0 %8739
      %8741 = vrot.lane.b32.xlu0 %v8504, 32
      %v8742 = vpop.permute.xlu0 %8741
      %8743 = vrot.lane.b32.xlu0 %v8514, 32
      %v8744 = vpop.permute.xlu0 %8743
      %8745 = vrot.lane.b32.xlu0 %v8524, 32
      %v8746 = vpop.permute.xlu0 %8745
      %8747 = vrot.lane.b32.xlu0 %v8534, 32
      %v8748 = vpop.permute.xlu0 %8747
      %8749 = vrot.lane.b32.xlu0 %v8544, 32
      %v8750 = vpop.permute.xlu0 %8749
      %8751 = vrot.lane.b32.xlu0 %v8554, 32
      %v8752 = vpop.permute.xlu0 %8751
      %8753 = vrot.lane.b32.xlu0 %v8564, 32
      %v8754 = vpop.permute.xlu0 %8753
      %8755 = vrot.lane.b32.xlu0 %v8574, 32
      %v8756 = vpop.permute.xlu0 %8755
      %8757 = vrot.lane.b32.xlu0 %v8584, 32
      %v8758 = vpop.permute.xlu0 %8757
      %8759 = vrot.lane.b32.xlu0 %v8594, 32
      %v8760 = vpop.permute.xlu0 %8759
      %8761 = vrot.lane.b32.xlu0 %v8604, 32
      %v8762 = vpop.permute.xlu0 %8761
      %8763 = vrot.lane.b32.xlu0 %v8614, 32
      %v8764 = vpop.permute.xlu0 %8763
      %8765 = vrot.lane.b32.xlu0 %v8624, 32
      %v8766 = vpop.permute.xlu0 %8765
      %8767 = vrot.lane.b32.xlu0 %v8634, 32
      %v8768 = vpop.permute.xlu0 %8767
      %8769 = vrot.lane.b32.xlu0 %v8644, 32
      %v8770 = vpop.permute.xlu0 %8769
      %8771 = vrot.lane.b32.xlu0 %v8654, 32
      %v8772 = vpop.permute.xlu0 %8771
      %8773 = vrot.lane.b32.xlu0 %v8664, 32
      %v8774 = vpop.permute.xlu0 %8773
      %8775 = vrot.lane.b32.xlu0 %v8674, 32
      %v8776 = vpop.permute.xlu0 %8775
      %8777 = vrot.lane.b32.xlu0 %v8684, 32
      %v8778 = vpop.permute.xlu0 %8777
      %8779 = vrot.lane.b32.xlu0 %v8694, 32
      %v8780 = vpop.permute.xlu0 %8779
      %8781 = vrot.lane.b32.xlu0 %v8700, 32
      %v8782 = vpop.permute.xlu0 %8781
      %vm8824 = vcmask 781952
      %8825 = vst.msk [vmem:[%s305] sm:$0xf] %vm8824, %v8702
      %8826 = vst.msk [vmem:[%s305 + $0x4] sm:$0xf] %vm8824, %v8704
      %8827 = vst.msk [vmem:[%s305 + $0x8] sm:$0xf] %vm8824, %v8706
      %8828 = vst.msk [vmem:[%s305 + $0xc] sm:$0xf] %vm8824, %v8708
      %8829 = vst.msk [vmem:[%s305 + $0x10] sm:$0xf] %vm8824, %v8710
      %8830 = vst.msk [vmem:[%s305 + $0x14] sm:$0xf] %vm8824, %v8712
      %8831 = vst.msk [vmem:[%s305 + $0x18] sm:$0xf] %vm8824, %v8714
      %8832 = vst.msk [vmem:[%s305 + $0x1c] sm:$0xf] %vm8824, %v8716
      %8833 = vst.msk [vmem:[%s305 + $0x20] sm:$0xf] %vm8824, %v8718
      %8834 = vst.msk [vmem:[%s305 + $0x24] sm:$0xf] %vm8824, %v8720
      %8835 = vst.msk [vmem:[%s305 + $0x28] sm:$0xf] %vm8824, %v8722
      %8836 = vst.msk [vmem:[%s305 + $0x2c] sm:$0xf] %vm8824, %v8724
      %8837 = vst.msk [vmem:[%s305 + $0x30] sm:$0xf] %vm8824, %v8726
      %8838 = vst.msk [vmem:[%s305 + $0x34] sm:$0xf] %vm8824, %v8728
      %8839 = vst.msk [vmem:[%s305 + $0x38] sm:$0xf] %vm8824, %v8730
      %8840 = vst.msk [vmem:[%s305 + $0x3c] sm:$0xf] %vm8824, %v8732
      %8841 = vst.msk [vmem:[%s305 + $0x40] sm:$0xf] %vm8824, %v8734
      %8842 = vst.msk [vmem:[%s305 + $0x44] sm:$0xf] %vm8824, %v8736
      %8843 = vst.msk [vmem:[%s305 + $0x48] sm:$0xf] %vm8824, %v8738
      %8844 = vst.msk [vmem:[%s305 + $0x4c] sm:$0xf] %vm8824, %v8740
      %8845 = vst.msk [vmem:[%s305 + $0x50] sm:$0xf] %vm8824, %v8742
      %8846 = vst.msk [vmem:[%s305 + $0x54] sm:$0xf] %vm8824, %v8744
      %8847 = vst.msk [vmem:[%s305 + $0x58] sm:$0xf] %vm8824, %v8746
      %8848 = vst.msk [vmem:[%s305 + $0x5c] sm:$0xf] %vm8824, %v8748
      %8849 = vst.msk [vmem:[%s305 + $0x60] sm:$0xf] %vm8824, %v8750
      %8850 = vst.msk [vmem:[%s305 + $0x64] sm:$0xf] %vm8824, %v8752
      %8851 = vst.msk [vmem:[%s305 + $0x68] sm:$0xf] %vm8824, %v8754
      %8852 = vst.msk [vmem:[%s305 + $0x6c] sm:$0xf] %vm8824, %v8756
      %8853 = vst.msk [vmem:[%s305 + $0x70] sm:$0xf] %vm8824, %v8758
      %8854 = vst.msk [vmem:[%s305 + $0x74] sm:$0xf] %vm8824, %v8760
      %8855 = vst.msk [vmem:[%s305 + $0x78] sm:$0xf] %vm8824, %v8762
      %8856 = vst.msk [vmem:[%s305 + $0x7c] sm:$0xf] %vm8824, %v8764
      %8857 = vst.msk [vmem:[%s305 + $0x80] sm:$0xf] %vm8824, %v8766
      %8858 = vst.msk [vmem:[%s305 + $0x84] sm:$0xf] %vm8824, %v8768
      %8859 = vst.msk [vmem:[%s305 + $0x88] sm:$0xf] %vm8824, %v8770
      %8860 = vst.msk [vmem:[%s305 + $0x8c] sm:$0xf] %vm8824, %v8772
      %8861 = vst.msk [vmem:[%s305 + $0x90] sm:$0xf] %vm8824, %v8774
      %8862 = vst.msk [vmem:[%s305 + $0x94] sm:$0xf] %vm8824, %v8776
      %8863 = vst.msk [vmem:[%s305 + $0x98] sm:$0xf] %vm8824, %v8778
      %8864 = vst.msk [vmem:[%s305 + $0x9c] sm:$0xf] %vm8824, %v8780
      %vm8865 = vcmask 779904
      %8866 = vst.msk [vmem:[%s305 + $0xa0] sm:$0x3] %vm8865, %v8782
      %p8867 = scmp.lt.s32.totalorder %s19, 1
      %s8868 = scalar_select %p8867, %s19, 1
      %s8869 = smul.addr %s8868, 41
      %s8870 = smul.addr %s8869, 4
      %s8871 = scalar_lea.vmem %s8, %s8870
      // Predicated region
      $region57: #{inception_b_forward.1} parent=51 // pred_check
        %p8872 = pneg %p210
      $region58: #{inception_b_forward.1} parent=51 // pred_check_branch
        %8874 = sbr.rel (%p8872) target = $region60
      $region59: #{inception_b_forward.1} parent=51 // pred_region
        _
      $region60: #{inception_b_forward.1} parent=51 // pred_fallthru
        _
    $region52: #{inception_b_forward.1} parent=5 // pred_fallthru
      _
    %p8875 = scmp.le.s32.totalorder 2, %s14
    // Predicated region
    $region61: #{inception_b_forward.1} parent=5 // pred_check
      %p8876 = pneg %p8875
    $region62: #{inception_b_forward.1} parent=5 // pred_check_branch
      %8878 = sbr.rel (%p8876) target = $region64
    $region63: #{inception_b_forward.1} parent=5 // pred_region
      %s8879 = ssub.s32 %s14, 2
      // Predicated region
      $region65: #{inception_b_forward.1} parent=63 // pred_check
        %p8880 = pneg %p216
      $region66: #{inception_b_forward.1} parent=63 // pred_check_branch
        %8882 = sbr.rel (%p8880) target = $region68
      $region67: #{inception_b_forward.1} parent=63 // pred_region
        %p8883 = scmp.lt.s32.totalorder %s20, 1
        %s8884 = scalar_select %p8883, %s20, 1
        %s8885 = smul.addr %s8884, 41
        %s8886 = smul.addr %s8885, 4
        %s8887 = scalar_lea.vmem %s8, %s8886
      $region68: #{inception_b_forward.1} parent=63 // pred_fallthru
        _
    $region64: #{inception_b_forward.1} parent=5 // pred_fallthru
      _
  $region6: #{inception_b_forward.1} parent=0 // loop_footer
    %s18 = sadd.s32 1, %s14
  $region7: #{inception_b_forward.1} parent=0 // loop_footer_branch
    %13 = sbr.rel target = $region3
  $region8: #{inception_b_forward.1} parent=0 // loop_exit
    _

</llo_original>
